<compile_context>
chip_gen: v5e
topology: v5e:2x2
jax: 0.10.0
libtpu: 0.0.40
codegen_flags: <defaults>
</compile_context>

<pallas_src>
import numpy as np
import jax
import jax.numpy as jnp
from jax import lax
from jax.experimental import pallas as pl
from jax.experimental.pallas import tpu as pltpu


# ------------------------- architecture configuration -----------------------

# (cin, cout, kernel, padding, dilation) -- matches the torch module exactly.
BLOCK_CFG = [
    (1, 10, 3, 0, 1),    # convblock1
    (10, 10, 3, 0, 1),   # convblock2
    (10, 15, 3, 0, 1),   # convblock3
    (15, 10, 1, 0, 1),   # convblock4 (1x1), after MaxPool2d(2,2)
    (10, 10, 3, 1, 2),   # convblock5 (dilated)
    (10, 10, 3, 1, 2),   # convblock6 (dilated)
    (10, 10, 3, 1, 2),   # convblock7 (dilated)
]
IMG = 28            # 28x28 inputs (28->26->24->22 ->pool-> 11->11->9->7->5)
IMG_ROWS = 32       # input H padded to a multiple of 8 (zero rows)
BATCH_PACK = 8      # images packed along the lane axis per grid step
                    # (v5e: 4 keeps B*W <= 128; v6e/v7x: 8 fills the 256-wide MXU)
POOL_EXT = 3        # extra zero cols per image side emitted by the pool so the
                    # dilated convblocks 5-7 become plain lane slices


def _r8(n):
    return ((n + 7) // 8) * 8


# ------------------------------ Pallas kernel -------------------------------

def _net_kernel(x_ref,
                w1, s1, w2, s2, w3, s3,
                ps0, ps1, pr0, pr1,
                w4, s4, m4,
                w5, s5, m5,
                w6, s6, m6,
                w7, s7,
                gmat, bsum,
                o_ref):
    """Forward pass for BATCH_PACK packed images; all activations stay in VMEM
    in the interleaved (C*H, W*B) layout (lane index = w*B + b)."""
    B = x_ref.shape[-1] // IMG

    def mm(a, b):
        return jnp.dot(a, b, preferred_element_type=jnp.float32)

    def conv(X, w_ref, s_ref, k, d, mask_ref=None):
        # All k width-taps fused into ONE MXU matmul: the shifted lane slices
        # are stacked along sublanes (pieces are 8-row aligned by host-side
        # row padding) and contracted against the fused block-Toeplitz weight
        # (H padding + BatchNorm scale already folded in).
        owb = X.shape[1] - d * (k - 1) * B
        if k == 1:
            Xs = X
        else:
            Xs = jnp.concatenate(
                [X[:, j * d * B: j * d * B + owb] for j in range(k)], axis=0)
        Y = jnp.maximum(mm(w_ref[...], Xs) + s_ref[...], 0.0)
        if mask_ref is not None:
            Y = Y * mask_ref[...]      # re-zero the inter-image pad columns
        return Y

    X = x_ref[0]                       # (32, 28*B)
    X = conv(X, w1, s1, 3, 1)          # (264, 26*B)
    X = conv(X, w2, s2, 3, 1)          # (240, 24*B)
    X = conv(X, w3, s3, 3, 1)          # (330, 22*B)

    # MaxPool2d(2,2): pairwise maxes via 0/1 compaction matmuls; the W-side
    # matrices also insert POOL_EXT zero columns per image side (the zero
    # padding later consumed by the dilated convs).
    mw = jnp.maximum(mm(X, ps0[...]), mm(X, ps1[...]))     # (330, 17*B)
    X = jnp.maximum(mm(pr0[...], mw), mm(pr1[...], mw))    # (165, 17*B)

    X = conv(X, w4, s4, 1, 1, m4)      # 1x1 conv           -> (112, 17*B)
    X = conv(X, w5, s5, 3, 2, m5)      # dilated 3x3, pad 1 -> (96, 13*B)
    X = conv(X, w6, s6, 3, 2, m6)      #                    -> (72, 9*B)
    X = conv(X, w7, s7, 3, 2)          #                    -> (50, 5*B)

    # AdaptiveAvgPool2d(1) folded into two matmuls; log_softmax over the class
    # (sublane) axis of the (10, B) tile.
    g = mm(mm(gmat[...], X), bsum[...])                     # (10, B)
    m = jnp.max(g, axis=0, keepdims=True)
    z = g - m
    lse = jnp.log(jnp.sum(jnp.exp(z), axis=0, keepdims=True))
    o_ref[...] = (z - lse)[None]                            # (1, 10, B)


def net_forward(x_nchw, kparams, batch_pack=BATCH_PACK):
    """x_nchw: (N, 1, 28, 28) float32 (PyTorch layout) -> (N, 10) log-probs."""
    N = x_nchw.shape[0]
    B = batch_pack
    ng = (N + B - 1) // B
    if ng > 1 and ng % 2:
        ng += 1                        # even step count -> clean megacore split
    npad = ng * B

    x = x_nchw.astype(jnp.float32).reshape(N, IMG, IMG)
    x = jnp.pad(x, ((0, npad - N), (0, IMG_ROWS - IMG), (0, 0)))
    # interleaved lane layout: lane index = w*B + b (taps == static lane slices)
    xg = x.reshape(ng, B, IMG_ROWS, IMG).transpose(0, 2, 3, 1).reshape(
        ng, IMG_ROWS, IMG * B)

    in_specs = [pl.BlockSpec((1, IMG_ROWS, IMG * B), lambda n: (n, 0, 0))]
    for a in kparams:
        # Full-array blocks with constant index maps: parameters stay resident
        # in VMEM across the (parallel) grid steps (Pallas skips same-index
        # re-copies).
        in_specs.append(pl.BlockSpec(a.shape, lambda n: (0, 0)))

    out = pl.pallas_call(
        _net_kernel,
        out_shape=jax.ShapeDtypeStruct((ng, 10, B), jnp.float32),
        grid=(ng,),
        in_specs=in_specs,
        out_specs=pl.BlockSpec((1, 10, B), lambda n: (n, 0, 0)),
        compiler_params=pltpu.CompilerParams(
            dimension_semantics=("parallel",),
            vmem_limit_bytes=32 * 1024 * 1024,
        ),
    )(xg, *kparams)
    # (ng, 10, B) -> (ng, B, 10) -> (N, 10)
    return out.transpose(0, 2, 1).reshape(npad, 10)[:N]


# ---------------------- host-side parameter preparation ---------------------

def _fused_toeplitz(w, scale, H, k, d, p, rows_in, rows_out):
    """(rows_out, k*rows_in) fused-tap block-Toeplitz weight for the (C*H, W*B)
    layout.  Tap j's block sits at columns [j*rows_in, j*rows_in + cin*H);
    H-direction zero padding and the BatchNorm(eval) scale are folded in."""
    w = np.asarray(w, np.float32)
    cout, cin = w.shape[0], w.shape[1]
    OH = H + 2 * p - d * (k - 1)
    wt = np.zeros((rows_out, k * rows_in), np.float32)
    sw = w * np.asarray(scale, np.float32)[:, None, None, None]
    rows = np.arange(cout) * OH
    cols = np.arange(cin) * H
    for kj in range(k):
        for ki in range(k):
            for oh in range(OH):
                h = oh + ki * d - p
                if 0 <= h < H:
                    wt[np.ix_(rows + oh, kj * rows_in + cols + h)] += sw[:, :, ki, kj]
    return wt


def _shift_vec(shift, OH, rows_out):
    s = np.asarray(shift, np.float32)
    sv = np.zeros((rows_out, 1), np.float32)
    sv[:s.shape[0] * OH, 0] = np.repeat(s, OH)
    return sv


def _pool_mats(C, H, W, B, ext):
    """MaxPool2d(2,2) as 0/1 compaction matmuls in the interleaved layout; the
    W matrices also emit `ext` zero columns per image side."""
    OH, OW = H // 2, W // 2
    S0 = np.zeros((W * B, (OW + 2 * ext) * B), np.float32)
    S1 = np.zeros((W * B, (OW + 2 * ext) * B), np.float32)
    for ow in range(OW):
        for b in range(B):
            S0[(2 * ow) * B + b, (ow + ext) * B + b] = 1.0
            S1[(2 * ow + 1) * B + b, (ow + ext) * B + b] = 1.0
    R0 = np.zeros((C * OH, C * H), np.float32)
    R1 = np.zeros((C * OH, C * H), np.float32)
    for c in range(C):
        for oh in range(OH):
            R0[c * OH + oh, c * H + 2 * oh] = 1.0
            R1[c * OH + oh, c * H + 2 * oh + 1] = 1.0
    return S0, S1, R0, R1


def _col_mask(valid, ext, B):
    """(1, (valid+2*ext)*B) 0/1 lane mask keeping only the real columns."""
    m = np.zeros((1, (valid + 2 * ext) * B), np.float32)
    m[0, ext * B:(ext + valid) * B] = 1.0
    return m


def _gap_mats(C, OH, OW, B):
    """GAP folded into matmuls: (gmat @ X) @ bsum == per-image channel means."""
    G = np.zeros((C, C * OH), np.float32)
    for c in range(C):
        G[c, c * OH:(c + 1) * OH] = 1.0 / (OH * OW)
    Bs = np.zeros((OW * B, B), np.float32)
    for ow in range(OW):
        for b in range(B):
            Bs[ow * B + b, b] = 1.0
    return G, Bs


def init_params(key):
    """Random Conv/BN(eval) parameters in torch-like layouts."""
    eps = 1e-5
    raw = []
    for idx, (cin, cout, k, pad, dil) in enumerate(BLOCK_CFG):
        lk = jax.random.fold_in(key, idx)
        kw, kg, kb, km, kv = jax.random.split(lk, 5)
        fan_in = cin * k * k
        w = jax.random.normal(kw, (cout, cin, k, k), jnp.float32) * (2.0 / fan_in) ** 0.5
        gamma = 1.0 + 0.1 * jax.random.normal(kg, (cout,), jnp.float32)
        beta = 0.1 * jax.random.normal(kb, (cout,), jnp.float32)
        run_mean = 0.1 * jax.random.normal(km, (cout,), jnp.float32)
        run_var = jnp.abs(0.5 + 0.1 * jax.random.normal(kv, (cout,), jnp.float32))
        scale = gamma / jnp.sqrt(run_var + eps)     # fold BN (eval) into affine
        shift = beta - run_mean * scale
        raw.append(dict(w=w, scale=scale, shift=shift, k=k, pad=pad, dil=dil))
    return raw


def build_kernel_params(raw, B=BATCH_PACK):
    """Flatten all per-layer matrices into the kernel's argument order."""
    def conv_arrays(r, H, rows_in, pad_out):
        k, p, d = r['k'], r['pad'], r['dil']
        cout = np.asarray(r['w']).shape[0]
        OH = H + 2 * p - d * (k - 1)
        rows_out = _r8(cout * OH) if pad_out else cout * OH
        wf = _fused_toeplitz(r['w'], r['scale'], H, k, d, p, rows_in, rows_out)
        sv = _shift_vec(r['shift'], OH, rows_out)
        return wf, sv, OH, rows_out

    flat = []
    # convblock1..3 (valid 3x3); output rows padded to multiples of 8 so the
    # next layer's in-kernel tap stack is sublane-aligned.
    H, rows = IMG, IMG_ROWS
    for i in range(3):
        wf, sv, H, rows = conv_arrays(raw[i], H, rows, pad_out=(i < 2))
        flat += [wf, sv]

    C3 = np.asarray(raw[2]['w']).shape[0]
    flat += list(_pool_mats(C3, H, H, B, POOL_EXT))        # S0, S1, R0, R1
    H //= 2
    rows = C3 * H                                          # pool output rows

    ext = POOL_EXT
    for i in range(3, 7):                                  # convblock4..7
        wf, sv, H, rows = conv_arrays(raw[i], H, rows, pad_out=(i < 6))
        flat += [wf, sv]
        if raw[i]['k'] > 1:
            ext -= 1        # each padded dilated conv consumes one pad col/side
        if i < 6:
            flat.append(_col_mask(H, ext, B))

    cout = np.asarray(raw[6]['w']).shape[0]
    flat += list(_gap_mats(cout, H, H, B))                 # gmat, bsum
    return [jnp.asarray(a) for a in flat]


# --------------------------- plain-XLA reference ----------------------------

def reference_forward(x, raw):
    def block(x, r):
        p, d = r['pad'], r['dil']
        y = lax.conv_general_dilated(
            x, r['w'], (1, 1), [(p, p), (p, p)],
            rhs_dilation=(d, d),
            dimension_numbers=('NCHW', 'OIHW', 'NCHW'),
            precision=lax.Precision.HIGHEST)
        y = y * r['scale'][None, :, None, None] + r['shift'][None, :, None, None]
        return jnp.maximum(y, 0.0)

    x = block(x, raw[0])
    x = block(x, raw[1])
    x = block(x, raw[2])
    x = lax.reduce_window(x, -jnp.inf, lax.max, (1, 1, 2, 2), (1, 1, 2, 2), 'VALID')
    x = block(x, raw[3])
    x = block(x, raw[4])
    x = block(x, raw[5])
    x = block(x, raw[6])
    g = jnp.mean(x, axis=(2, 3))
    return jax.nn.log_softmax(g, axis=-1)


# ----------------------------------- main -----------------------------------

if __name__ == "__main__":
    key = jax.random.PRNGKey(0)
    pkey, xkey = jax.random.split(key)
    raw = init_params(pkey)
    kparams = build_kernel_params(raw, BATCH_PACK)

    x = jax.random.normal(xkey, (2, 1, IMG, IMG), jnp.float32)   # NCHW like torch

    fwd = jax.jit(net_forward, static_argnums=(2,))
    out = jax.block_until_ready(fwd(x, kparams, BATCH_PACK))
    assert out.shape == (2, 10)

    # rows of log_softmax must exp-sum to 1
    assert bool(jnp.allclose(jnp.exp(out).sum(-1), 1.0, atol=1e-4))

    # cross-check the fused Pallas kernel against a plain-XLA reference forward
    # (tightened vs v1: all-f32 pipeline, so only accumulation-order error).
    ref = jax.block_until_ready(jax.jit(lambda inp: reference_forward(inp, raw))(x))
    err = float(jnp.max(jnp.abs(out - ref)))
    assert err < 2e-3, f"mismatch vs reference: max|diff|={err}"

    print("KERNEL_OK")
</pallas_src>

<mosaic_0001>
module attributes {stable_mosaic.version = 11 : i64} {
  func.func @_net_kernel(%arg0: i32, %arg1: memref<1x32x224xf32, #tpu.memory_space<vmem>>, %arg2: memref<264x96xf32, #tpu.memory_space<vmem>>, %arg3: memref<264x1xf32, #tpu.memory_space<vmem>>, %arg4: memref<240x792xf32, #tpu.memory_space<vmem>>, %arg5: memref<240x1xf32, #tpu.memory_space<vmem>>, %arg6: memref<330x720xf32, #tpu.memory_space<vmem>>, %arg7: memref<330x1xf32, #tpu.memory_space<vmem>>, %arg8: memref<176x136xf32, #tpu.memory_space<vmem>>, %arg9: memref<176x136xf32, #tpu.memory_space<vmem>>, %arg10: memref<165x330xf32, #tpu.memory_space<vmem>>, %arg11: memref<165x330xf32, #tpu.memory_space<vmem>>, %arg12: memref<112x165xf32, #tpu.memory_space<vmem>>, %arg13: memref<112x1xf32, #tpu.memory_space<vmem>>, %arg14: memref<1x136xf32, #tpu.memory_space<vmem>>, %arg15: memref<96x336xf32, #tpu.memory_space<vmem>>, %arg16: memref<96x1xf32, #tpu.memory_space<vmem>>, %arg17: memref<1x104xf32, #tpu.memory_space<vmem>>, %arg18: memref<72x288xf32, #tpu.memory_space<vmem>>, %arg19: memref<72x1xf32, #tpu.memory_space<vmem>>, %arg20: memref<1x72xf32, #tpu.memory_space<vmem>>, %arg21: memref<50x216xf32, #tpu.memory_space<vmem>>, %arg22: memref<50x1xf32, #tpu.memory_space<vmem>>, %arg23: memref<10x50xf32, #tpu.memory_space<vmem>>, %arg24: memref<40x8xf32, #tpu.memory_space<vmem>>, %arg25: memref<1x10x8xf32, #tpu.memory_space<vmem>>) attributes {dimension_semantics = [#tpu.dimension_semantics<parallel>], iteration_bounds = array<i64: 1>, scalar_prefetch = 0 : i64, scratch_operands = 0 : i64, tpu.core_type = #tpu.core_type<tc>, window_params = [{transform_indices = @transform_0, window_bounds = array<i64: 1, 32, 224>}, {pipeline_mode = #tpu.pipeline_mode<synchronous>, transform_indices = @transform_1, window_bounds = array<i64: 264, 96>}, {pipeline_mode = #tpu.pipeline_mode<synchronous>, transform_indices = @transform_2, window_bounds = array<i64: 264, 1>}, {pipeline_mode = #tpu.pipeline_mode<synchronous>, transform_indices = @transform_3, window_bounds = array<i64: 240, 792>}, {pipeline_mode = #tpu.pipeline_mode<synchronous>, transform_indices = @transform_4, window_bounds = array<i64: 240, 1>}, {pipeline_mode = #tpu.pipeline_mode<synchronous>, transform_indices = @transform_5, window_bounds = array<i64: 330, 720>}, {pipeline_mode = #tpu.pipeline_mode<synchronous>, transform_indices = @transform_6, window_bounds = array<i64: 330, 1>}, {pipeline_mode = #tpu.pipeline_mode<synchronous>, transform_indices = @transform_7, window_bounds = array<i64: 176, 136>}, {pipeline_mode = #tpu.pipeline_mode<synchronous>, transform_indices = @transform_8, window_bounds = array<i64: 176, 136>}, {pipeline_mode = #tpu.pipeline_mode<synchronous>, transform_indices = @transform_9, window_bounds = array<i64: 165, 330>}, {pipeline_mode = #tpu.pipeline_mode<synchronous>, transform_indices = @transform_10, window_bounds = array<i64: 165, 330>}, {pipeline_mode = #tpu.pipeline_mode<synchronous>, transform_indices = @transform_11, window_bounds = array<i64: 112, 165>}, {pipeline_mode = #tpu.pipeline_mode<synchronous>, transform_indices = @transform_12, window_bounds = array<i64: 112, 1>}, {pipeline_mode = #tpu.pipeline_mode<synchronous>, transform_indices = @transform_13, window_bounds = array<i64: 1, 136>}, {pipeline_mode = #tpu.pipeline_mode<synchronous>, transform_indices = @transform_14, window_bounds = array<i64: 96, 336>}, {pipeline_mode = #tpu.pipeline_mode<synchronous>, transform_indices = @transform_15, window_bounds = array<i64: 96, 1>}, {pipeline_mode = #tpu.pipeline_mode<synchronous>, transform_indices = @transform_16, window_bounds = array<i64: 1, 104>}, {pipeline_mode = #tpu.pipeline_mode<synchronous>, transform_indices = @transform_17, window_bounds = array<i64: 72, 288>}, {pipeline_mode = #tpu.pipeline_mode<synchronous>, transform_indices = @transform_18, window_bounds = array<i64: 72, 1>}, {pipeline_mode = #tpu.pipeline_mode<synchronous>, transform_indices = @transform_19, window_bounds = array<i64: 1, 72>}, {pipeline_mode = #tpu.pipeline_mode<synchronous>, transform_indices = @transform_20, window_bounds = array<i64: 50, 216>}, {pipeline_mode = #tpu.pipeline_mode<synchronous>, transform_indices = @transform_21, window_bounds = array<i64: 50, 1>}, {pipeline_mode = #tpu.pipeline_mode<synchronous>, transform_indices = @transform_22, window_bounds = array<i64: 10, 50>}, {pipeline_mode = #tpu.pipeline_mode<synchronous>, transform_indices = @transform_23, window_bounds = array<i64: 40, 8>}, {transform_indices = @transform_24, window_bounds = array<i64: 1, 10, 8>}]} {
    %c0 = arith.constant 0 : index
    %c0_0 = arith.constant 0 : index
    %c0_1 = arith.constant 0 : index
    %0 = vector.load %arg1[%c0, %c0_0, %c0_1] : memref<1x32x224xf32, #tpu.memory_space<vmem>>, vector<1x32x224xf32>
    %1 = vector.shape_cast %0 : vector<1x32x224xf32> to vector<32x224xf32>
    %2 = vector.extract_strided_slice %1 {offsets = [0, 0], sizes = [32, 208], strides = [1, 1]} : vector<32x224xf32> to vector<32x208xf32>
    %3 = vector.extract_strided_slice %1 {offsets = [0, 8], sizes = [32, 208], strides = [1, 1]} : vector<32x224xf32> to vector<32x208xf32>
    %4 = vector.extract_strided_slice %1 {offsets = [0, 16], sizes = [32, 208], strides = [1, 1]} : vector<32x224xf32> to vector<32x208xf32>
    %5 = tpu.concatenate %2, %3, %4 in 0 : vector<32x208xf32>, vector<32x208xf32>, vector<32x208xf32> -> vector<96x208xf32>
    %c0_2 = arith.constant 0 : index
    %c0_3 = arith.constant 0 : index
    %6 = vector.load %arg2[%c0_2, %c0_3] : memref<264x96xf32, #tpu.memory_space<vmem>>, vector<264x96xf32>
    %cst = arith.constant dense<0.000000e+00> : vector<264x208xf32>
    %7 = tpu.matmul %6, %5, %cst {dimension_numbers = #tpu.dot_dimension_numbers<[1], [0], [0], [1], [0, 0, 1, 1], [], []>} : vector<264x96xf32>, vector<96x208xf32>, vector<264x208xf32> -> vector<264x208xf32>
    %c0_4 = arith.constant 0 : index
    %c0_5 = arith.constant 0 : index
    %8 = vector.load %arg3[%c0_4, %c0_5] : memref<264x1xf32, #tpu.memory_space<vmem>>, vector<264x1xf32>
    %9 = vector.broadcast %8 : vector<264x1xf32> to vector<264x208xf32>
    %10 = arith.addf %7, %9 : vector<264x208xf32>
    %cst_6 = arith.constant 0.000000e+00 : f32
    %11 = vector.broadcast %cst_6 : f32 to vector<264x208xf32>
    %12 = arith.maximumf %10, %11 : vector<264x208xf32>
    %13 = vector.extract_strided_slice %12 {offsets = [0, 0], sizes = [264, 192], strides = [1, 1]} : vector<264x208xf32> to vector<264x192xf32>
    %14 = vector.extract_strided_slice %12 {offsets = [0, 8], sizes = [264, 192], strides = [1, 1]} : vector<264x208xf32> to vector<264x192xf32>
    %15 = vector.extract_strided_slice %12 {offsets = [0, 16], sizes = [264, 192], strides = [1, 1]} : vector<264x208xf32> to vector<264x192xf32>
    %16 = tpu.concatenate %13, %14, %15 in 0 : vector<264x192xf32>, vector<264x192xf32>, vector<264x192xf32> -> vector<792x192xf32>
    %c0_7 = arith.constant 0 : index
    %c0_8 = arith.constant 0 : index
    %17 = vector.load %arg4[%c0_7, %c0_8] : memref<240x792xf32, #tpu.memory_space<vmem>>, vector<240x792xf32>
    %cst_9 = arith.constant dense<0.000000e+00> : vector<240x192xf32>
    %18 = tpu.matmul %17, %16, %cst_9 {dimension_numbers = #tpu.dot_dimension_numbers<[1], [0], [0], [1], [0, 0, 1, 1], [], []>} : vector<240x792xf32>, vector<792x192xf32>, vector<240x192xf32> -> vector<240x192xf32>
    %c0_10 = arith.constant 0 : index
    %c0_11 = arith.constant 0 : index
    %19 = vector.load %arg5[%c0_10, %c0_11] : memref<240x1xf32, #tpu.memory_space<vmem>>, vector<240x1xf32>
    %20 = vector.broadcast %19 : vector<240x1xf32> to vector<240x192xf32>
    %21 = arith.addf %18, %20 : vector<240x192xf32>
    %cst_12 = arith.constant 0.000000e+00 : f32
    %22 = vector.broadcast %cst_12 : f32 to vector<240x192xf32>
    %23 = arith.maximumf %21, %22 : vector<240x192xf32>
    %24 = vector.extract_strided_slice %23 {offsets = [0, 0], sizes = [240, 176], strides = [1, 1]} : vector<240x192xf32> to vector<240x176xf32>
    %25 = vector.extract_strided_slice %23 {offsets = [0, 8], sizes = [240, 176], strides = [1, 1]} : vector<240x192xf32> to vector<240x176xf32>
    %26 = vector.extract_strided_slice %23 {offsets = [0, 16], sizes = [240, 176], strides = [1, 1]} : vector<240x192xf32> to vector<240x176xf32>
    %27 = tpu.concatenate %24, %25, %26 in 0 : vector<240x176xf32>, vector<240x176xf32>, vector<240x176xf32> -> vector<720x176xf32>
    %c0_13 = arith.constant 0 : index
    %c0_14 = arith.constant 0 : index
    %28 = vector.load %arg6[%c0_13, %c0_14] : memref<330x720xf32, #tpu.memory_space<vmem>>, vector<330x720xf32>
    %cst_15 = arith.constant dense<0.000000e+00> : vector<330x176xf32>
    %29 = tpu.matmul %28, %27, %cst_15 {dimension_numbers = #tpu.dot_dimension_numbers<[1], [0], [0], [1], [0, 0, 1, 1], [], []>} : vector<330x720xf32>, vector<720x176xf32>, vector<330x176xf32> -> vector<330x176xf32>
    %c0_16 = arith.constant 0 : index
    %c0_17 = arith.constant 0 : index
    %30 = vector.load %arg7[%c0_16, %c0_17] : memref<330x1xf32, #tpu.memory_space<vmem>>, vector<330x1xf32>
    %31 = vector.broadcast %30 : vector<330x1xf32> to vector<330x176xf32>
    %32 = arith.addf %29, %31 : vector<330x176xf32>
    %cst_18 = arith.constant 0.000000e+00 : f32
    %33 = vector.broadcast %cst_18 : f32 to vector<330x176xf32>
    %34 = arith.maximumf %32, %33 : vector<330x176xf32>
    %c0_19 = arith.constant 0 : index
    %c0_20 = arith.constant 0 : index
    %35 = vector.load %arg8[%c0_19, %c0_20] : memref<176x136xf32, #tpu.memory_space<vmem>>, vector<176x136xf32>
    %cst_21 = arith.constant dense<0.000000e+00> : vector<330x136xf32>
    %36 = tpu.matmul %34, %35, %cst_21 {dimension_numbers = #tpu.dot_dimension_numbers<[1], [0], [0], [1], [0, 0, 1, 1], [], []>} : vector<330x176xf32>, vector<176x136xf32>, vector<330x136xf32> -> vector<330x136xf32>
    %c0_22 = arith.constant 0 : index
    %c0_23 = arith.constant 0 : index
    %37 = vector.load %arg9[%c0_22, %c0_23] : memref<176x136xf32, #tpu.memory_space<vmem>>, vector<176x136xf32>
    %cst_24 = arith.constant dense<0.000000e+00> : vector<330x136xf32>
    %38 = tpu.matmul %34, %37, %cst_24 {dimension_numbers = #tpu.dot_dimension_numbers<[1], [0], [0], [1], [0, 0, 1, 1], [], []>} : vector<330x176xf32>, vector<176x136xf32>, vector<330x136xf32> -> vector<330x136xf32>
    %39 = arith.maximumf %36, %38 : vector<330x136xf32>
    %c0_25 = arith.constant 0 : index
    %c0_26 = arith.constant 0 : index
    %40 = vector.load %arg10[%c0_25, %c0_26] : memref<165x330xf32, #tpu.memory_space<vmem>>, vector<165x330xf32>
    %cst_27 = arith.constant dense<0.000000e+00> : vector<165x136xf32>
    %41 = tpu.matmul %40, %39, %cst_27 {dimension_numbers = #tpu.dot_dimension_numbers<[1], [0], [0], [1], [0, 0, 1, 1], [], []>} : vector<165x330xf32>, vector<330x136xf32>, vector<165x136xf32> -> vector<165x136xf32>
    %c0_28 = arith.constant 0 : index
    %c0_29 = arith.constant 0 : index
    %42 = vector.load %arg11[%c0_28, %c0_29] : memref<165x330xf32, #tpu.memory_space<vmem>>, vector<165x330xf32>
    %cst_30 = arith.constant dense<0.000000e+00> : vector<165x136xf32>
    %43 = tpu.matmul %42, %39, %cst_30 {dimension_numbers = #tpu.dot_dimension_numbers<[1], [0], [0], [1], [0, 0, 1, 1], [], []>} : vector<165x330xf32>, vector<330x136xf32>, vector<165x136xf32> -> vector<165x136xf32>
    %44 = arith.maximumf %41, %43 : vector<165x136xf32>
    %c0_31 = arith.constant 0 : index
    %c0_32 = arith.constant 0 : index
    %45 = vector.load %arg12[%c0_31, %c0_32] : memref<112x165xf32, #tpu.memory_space<vmem>>, vector<112x165xf32>
    %cst_33 = arith.constant dense<0.000000e+00> : vector<112x136xf32>
    %46 = tpu.matmul %45, %44, %cst_33 {dimension_numbers = #tpu.dot_dimension_numbers<[1], [0], [0], [1], [0, 0, 1, 1], [], []>} : vector<112x165xf32>, vector<165x136xf32>, vector<112x136xf32> -> vector<112x136xf32>
    %c0_34 = arith.constant 0 : index
    %c0_35 = arith.constant 0 : index
    %47 = vector.load %arg13[%c0_34, %c0_35] : memref<112x1xf32, #tpu.memory_space<vmem>>, vector<112x1xf32>
    %48 = vector.broadcast %47 : vector<112x1xf32> to vector<112x136xf32>
    %49 = arith.addf %46, %48 : vector<112x136xf32>
    %cst_36 = arith.constant 0.000000e+00 : f32
    %50 = vector.broadcast %cst_36 : f32 to vector<112x136xf32>
    %51 = arith.maximumf %49, %50 : vector<112x136xf32>
    %c0_37 = arith.constant 0 : index
    %c0_38 = arith.constant 0 : index
    %52 = vector.load %arg14[%c0_37, %c0_38] : memref<1x136xf32, #tpu.memory_space<vmem>>, vector<1x136xf32>
    %53 = vector.broadcast %52 : vector<1x136xf32> to vector<112x136xf32>
    %54 = arith.mulf %51, %53 : vector<112x136xf32>
    %55 = vector.extract_strided_slice %54 {offsets = [0, 0], sizes = [112, 104], strides = [1, 1]} : vector<112x136xf32> to vector<112x104xf32>
    %56 = vector.extract_strided_slice %54 {offsets = [0, 16], sizes = [112, 104], strides = [1, 1]} : vector<112x136xf32> to vector<112x104xf32>
    %57 = vector.extract_strided_slice %54 {offsets = [0, 32], sizes = [112, 104], strides = [1, 1]} : vector<112x136xf32> to vector<112x104xf32>
    %58 = tpu.concatenate %55, %56, %57 in 0 : vector<112x104xf32>, vector<112x104xf32>, vector<112x104xf32> -> vector<336x104xf32>
    %c0_39 = arith.constant 0 : index
    %c0_40 = arith.constant 0 : index
    %59 = vector.load %arg15[%c0_39, %c0_40] : memref<96x336xf32, #tpu.memory_space<vmem>>, vector<96x336xf32>
    %cst_41 = arith.constant dense<0.000000e+00> : vector<96x104xf32>
    %60 = tpu.matmul %59, %58, %cst_41 {dimension_numbers = #tpu.dot_dimension_numbers<[1], [0], [0], [1], [0, 0, 1, 1], [], []>} : vector<96x336xf32>, vector<336x104xf32>, vector<96x104xf32> -> vector<96x104xf32>
    %c0_42 = arith.constant 0 : index
    %c0_43 = arith.constant 0 : index
    %61 = vector.load %arg16[%c0_42, %c0_43] : memref<96x1xf32, #tpu.memory_space<vmem>>, vector<96x1xf32>
    %62 = vector.broadcast %61 : vector<96x1xf32> to vector<96x104xf32>
    %63 = arith.addf %60, %62 : vector<96x104xf32>
    %cst_44 = arith.constant 0.000000e+00 : f32
    %64 = vector.broadcast %cst_44 : f32 to vector<96x104xf32>
    %65 = arith.maximumf %63, %64 : vector<96x104xf32>
    %c0_45 = arith.constant 0 : index
    %c0_46 = arith.constant 0 : index
    %66 = vector.load %arg17[%c0_45, %c0_46] : memref<1x104xf32, #tpu.memory_space<vmem>>, vector<1x104xf32>
    %67 = vector.broadcast %66 : vector<1x104xf32> to vector<96x104xf32>
    %68 = arith.mulf %65, %67 : vector<96x104xf32>
    %69 = vector.extract_strided_slice %68 {offsets = [0, 0], sizes = [96, 72], strides = [1, 1]} : vector<96x104xf32> to vector<96x72xf32>
    %70 = vector.extract_strided_slice %68 {offsets = [0, 16], sizes = [96, 72], strides = [1, 1]} : vector<96x104xf32> to vector<96x72xf32>
    %71 = vector.extract_strided_slice %68 {offsets = [0, 32], sizes = [96, 72], strides = [1, 1]} : vector<96x104xf32> to vector<96x72xf32>
    %72 = tpu.concatenate %69, %70, %71 in 0 : vector<96x72xf32>, vector<96x72xf32>, vector<96x72xf32> -> vector<288x72xf32>
    %c0_47 = arith.constant 0 : index
    %c0_48 = arith.constant 0 : index
    %73 = vector.load %arg18[%c0_47, %c0_48] : memref<72x288xf32, #tpu.memory_space<vmem>>, vector<72x288xf32>
    %cst_49 = arith.constant dense<0.000000e+00> : vector<72x72xf32>
    %74 = tpu.matmul %73, %72, %cst_49 {dimension_numbers = #tpu.dot_dimension_numbers<[1], [0], [0], [1], [0, 0, 1, 1], [], []>} : vector<72x288xf32>, vector<288x72xf32>, vector<72x72xf32> -> vector<72x72xf32>
    %c0_50 = arith.constant 0 : index
    %c0_51 = arith.constant 0 : index
    %75 = vector.load %arg19[%c0_50, %c0_51] : memref<72x1xf32, #tpu.memory_space<vmem>>, vector<72x1xf32>
    %76 = vector.broadcast %75 : vector<72x1xf32> to vector<72x72xf32>
    %77 = arith.addf %74, %76 : vector<72x72xf32>
    %cst_52 = arith.constant 0.000000e+00 : f32
    %78 = vector.broadcast %cst_52 : f32 to vector<72x72xf32>
    %79 = arith.maximumf %77, %78 : vector<72x72xf32>
    %c0_53 = arith.constant 0 : index
    %c0_54 = arith.constant 0 : index
    %80 = vector.load %arg20[%c0_53, %c0_54] : memref<1x72xf32, #tpu.memory_space<vmem>>, vector<1x72xf32>
    %81 = vector.broadcast %80 : vector<1x72xf32> to vector<72x72xf32>
    %82 = arith.mulf %79, %81 : vector<72x72xf32>
    %83 = vector.extract_strided_slice %82 {offsets = [0, 0], sizes = [72, 40], strides = [1, 1]} : vector<72x72xf32> to vector<72x40xf32>
    %84 = vector.extract_strided_slice %82 {offsets = [0, 16], sizes = [72, 40], strides = [1, 1]} : vector<72x72xf32> to vector<72x40xf32>
    %85 = vector.extract_strided_slice %82 {offsets = [0, 32], sizes = [72, 40], strides = [1, 1]} : vector<72x72xf32> to vector<72x40xf32>
    %86 = tpu.concatenate %83, %84, %85 in 0 : vector<72x40xf32>, vector<72x40xf32>, vector<72x40xf32> -> vector<216x40xf32>
    %c0_55 = arith.constant 0 : index
    %c0_56 = arith.constant 0 : index
    %87 = vector.load %arg21[%c0_55, %c0_56] : memref<50x216xf32, #tpu.memory_space<vmem>>, vector<50x216xf32>
    %cst_57 = arith.constant dense<0.000000e+00> : vector<50x40xf32>
    %88 = tpu.matmul %87, %86, %cst_57 {dimension_numbers = #tpu.dot_dimension_numbers<[1], [0], [0], [1], [0, 0, 1, 1], [], []>} : vector<50x216xf32>, vector<216x40xf32>, vector<50x40xf32> -> vector<50x40xf32>
    %c0_58 = arith.constant 0 : index
    %c0_59 = arith.constant 0 : index
    %89 = vector.load %arg22[%c0_58, %c0_59] : memref<50x1xf32, #tpu.memory_space<vmem>>, vector<50x1xf32>
    %90 = vector.broadcast %89 : vector<50x1xf32> to vector<50x40xf32>
    %91 = arith.addf %88, %90 : vector<50x40xf32>
    %cst_60 = arith.constant 0.000000e+00 : f32
    %92 = vector.broadcast %cst_60 : f32 to vector<50x40xf32>
    %93 = arith.maximumf %91, %92 : vector<50x40xf32>
    %c0_61 = arith.constant 0 : index
    %c0_62 = arith.constant 0 : index
    %94 = vector.load %arg23[%c0_61, %c0_62] : memref<10x50xf32, #tpu.memory_space<vmem>>, vector<10x50xf32>
    %cst_63 = arith.constant dense<0.000000e+00> : vector<10x40xf32>
    %95 = tpu.matmul %94, %93, %cst_63 {dimension_numbers = #tpu.dot_dimension_numbers<[1], [0], [0], [1], [0, 0, 1, 1], [], []>} : vector<10x50xf32>, vector<50x40xf32>, vector<10x40xf32> -> vector<10x40xf32>
    %c0_64 = arith.constant 0 : index
    %c0_65 = arith.constant 0 : index
    %96 = vector.load %arg24[%c0_64, %c0_65] : memref<40x8xf32, #tpu.memory_space<vmem>>, vector<40x8xf32>
    %cst_66 = arith.constant dense<0.000000e+00> : vector<10x8xf32>
    %97 = tpu.matmul %95, %96, %cst_66 {dimension_numbers = #tpu.dot_dimension_numbers<[1], [0], [0], [1], [0, 0, 1, 1], [], []>} : vector<10x40xf32>, vector<40x8xf32>, vector<10x8xf32> -> vector<10x8xf32>
    %cst_67 = arith.constant dense<0xFF800000> : vector<8xf32>
    %98 = vector.multi_reduction <maximumf>, %97, %cst_67 [0] : vector<10x8xf32> to vector<8xf32>
    %99 = vector.shape_cast %98 : vector<8xf32> to vector<1x8xf32>
    %100 = vector.broadcast %99 : vector<1x8xf32> to vector<10x8xf32>
    %101 = arith.subf %97, %100 : vector<10x8xf32>
    %102 = math.exp %101 : vector<10x8xf32>
    %cst_68 = arith.constant dense<0.000000e+00> : vector<8xf32>
    %103 = vector.multi_reduction <add>, %102, %cst_68 [0] : vector<10x8xf32> to vector<8xf32>
    %104 = vector.shape_cast %103 : vector<8xf32> to vector<1x8xf32>
    %105 = math.log %104 : vector<1x8xf32>
    %106 = vector.broadcast %105 : vector<1x8xf32> to vector<10x8xf32>
    %107 = arith.subf %101, %106 : vector<10x8xf32>
    %108 = vector.shape_cast %107 : vector<10x8xf32> to vector<1x10x8xf32>
    %c0_69 = arith.constant 0 : index
    %c0_70 = arith.constant 0 : index
    %c0_71 = arith.constant 0 : index
    %109 = vector.load %arg25[%c0_69, %c0_70, %c0_71] : memref<1x10x8xf32, #tpu.memory_space<vmem>>, vector<1x10x8xf32>
    tpu.vector_store %arg25[%c0_69, %c0_70, %c0_71], %108 {strides = array<i32>} : memref<1x10x8xf32, #tpu.memory_space<vmem>>, vector<1x10x8xf32>,
    return
  }
  func.func @transform_0(%arg0: i32) -> (i32, i32, i32) {
    %c0_i32 = arith.constant 0 : i32
    %c0_i32_0 = arith.constant 0 : i32
    %c0_i32_1 = arith.constant 0 : i32
    return %arg0, %c0_i32, %c0_i32_0 : i32, i32, i32
  }
  func.func @transform_1(%arg0: i32) -> (i32, i32) {
    %c0_i32 = arith.constant 0 : i32
    %c0_i32_0 = arith.constant 0 : i32
    %c0_i32_1 = arith.constant 0 : i32
    return %c0_i32, %c0_i32_0 : i32, i32
  }
  func.func @transform_2(%arg0: i32) -> (i32, i32) {
    %c0_i32 = arith.constant 0 : i32
    %c0_i32_0 = arith.constant 0 : i32
    %c0_i32_1 = arith.constant 0 : i32
    return %c0_i32, %c0_i32_0 : i32, i32
  }
  func.func @transform_3(%arg0: i32) -> (i32, i32) {
    %c0_i32 = arith.constant 0 : i32
    %c0_i32_0 = arith.constant 0 : i32
    %c0_i32_1 = arith.constant 0 : i32
    return %c0_i32, %c0_i32_0 : i32, i32
  }
  func.func @transform_4(%arg0: i32) -> (i32, i32) {
    %c0_i32 = arith.constant 0 : i32
    %c0_i32_0 = arith.constant 0 : i32
    %c0_i32_1 = arith.constant 0 : i32
    return %c0_i32, %c0_i32_0 : i32, i32
  }
  func.func @transform_5(%arg0: i32) -> (i32, i32) {
    %c0_i32 = arith.constant 0 : i32
    %c0_i32_0 = arith.constant 0 : i32
    %c0_i32_1 = arith.constant 0 : i32
    return %c0_i32, %c0_i32_0 : i32, i32
  }
  func.func @transform_6(%arg0: i32) -> (i32, i32) {
    %c0_i32 = arith.constant 0 : i32
    %c0_i32_0 = arith.constant 0 : i32
    %c0_i32_1 = arith.constant 0 : i32
    return %c0_i32, %c0_i32_0 : i32, i32
  }
  func.func @transform_7(%arg0: i32) -> (i32, i32) {
    %c0_i32 = arith.constant 0 : i32
    %c0_i32_0 = arith.constant 0 : i32
    %c0_i32_1 = arith.constant 0 : i32
    return %c0_i32, %c0_i32_0 : i32, i32
  }
  func.func @transform_8(%arg0: i32) -> (i32, i32) {
    %c0_i32 = arith.constant 0 : i32
    %c0_i32_0 = arith.constant 0 : i32
    %c0_i32_1 = arith.constant 0 : i32
    return %c0_i32, %c0_i32_0 : i32, i32
  }
  func.func @transform_9(%arg0: i32) -> (i32, i32) {
    %c0_i32 = arith.constant 0 : i32
    %c0_i32_0 = arith.constant 0 : i32
    %c0_i32_1 = arith.constant 0 : i32
    return %c0_i32, %c0_i32_0 : i32, i32
  }
  func.func @transform_10(%arg0: i32) -> (i32, i32) {
    %c0_i32 = arith.constant 0 : i32
    %c0_i32_0 = arith.constant 0 : i32
    %c0_i32_1 = arith.constant 0 : i32
    return %c0_i32, %c0_i32_0 : i32, i32
  }
  func.func @transform_11(%arg0: i32) -> (i32, i32) {
    %c0_i32 = arith.constant 0 : i32
    %c0_i32_0 = arith.constant 0 : i32
    %c0_i32_1 = arith.constant 0 : i32
    return %c0_i32, %c0_i32_0 : i32, i32
  }
  func.func @transform_12(%arg0: i32) -> (i32, i32) {
    %c0_i32 = arith.constant 0 : i32
    %c0_i32_0 = arith.constant 0 : i32
    %c0_i32_1 = arith.constant 0 : i32
    return %c0_i32, %c0_i32_0 : i32, i32
  }
  func.func @transform_13(%arg0: i32) -> (i32, i32) {
    %c0_i32 = arith.constant 0 : i32
    %c0_i32_0 = arith.constant 0 : i32
    %c0_i32_1 = arith.constant 0 : i32
    return %c0_i32, %c0_i32_0 : i32, i32
  }
  func.func @transform_14(%arg0: i32) -> (i32, i32) {
    %c0_i32 = arith.constant 0 : i32
    %c0_i32_0 = arith.constant 0 : i32
    %c0_i32_1 = arith.constant 0 : i32
    return %c0_i32, %c0_i32_0 : i32, i32
  }
  func.func @transform_15(%arg0: i32) -> (i32, i32) {
    %c0_i32 = arith.constant 0 : i32
    %c0_i32_0 = arith.constant 0 : i32
    %c0_i32_1 = arith.constant 0 : i32
    return %c0_i32, %c0_i32_0 : i32, i32
  }
  func.func @transform_16(%arg0: i32) -> (i32, i32) {
    %c0_i32 = arith.constant 0 : i32
    %c0_i32_0 = arith.constant 0 : i32
    %c0_i32_1 = arith.constant 0 : i32
    return %c0_i32, %c0_i32_0 : i32, i32
  }
  func.func @transform_17(%arg0: i32) -> (i32, i32) {
    %c0_i32 = arith.constant 0 : i32
    %c0_i32_0 = arith.constant 0 : i32
    %c0_i32_1 = arith.constant 0 : i32
    return %c0_i32, %c0_i32_0 : i32, i32
  }
  func.func @transform_18(%arg0: i32) -> (i32, i32) {
    %c0_i32 = arith.constant 0 : i32
    %c0_i32_0 = arith.constant 0 : i32
    %c0_i32_1 = arith.constant 0 : i32
    return %c0_i32, %c0_i32_0 : i32, i32
  }
  func.func @transform_19(%arg0: i32) -> (i32, i32) {
    %c0_i32 = arith.constant 0 : i32
    %c0_i32_0 = arith.constant 0 : i32
    %c0_i32_1 = arith.constant 0 : i32
    return %c0_i32, %c0_i32_0 : i32, i32
  }
  func.func @transform_20(%arg0: i32) -> (i32, i32) {
    %c0_i32 = arith.constant 0 : i32
    %c0_i32_0 = arith.constant 0 : i32
    %c0_i32_1 = arith.constant 0 : i32
    return %c0_i32, %c0_i32_0 : i32, i32
  }
  func.func @transform_21(%arg0: i32) -> (i32, i32) {
    %c0_i32 = arith.constant 0 : i32
    %c0_i32_0 = arith.constant 0 : i32
    %c0_i32_1 = arith.constant 0 : i32
    return %c0_i32, %c0_i32_0 : i32, i32
  }
  func.func @transform_22(%arg0: i32) -> (i32, i32) {
    %c0_i32 = arith.constant 0 : i32
    %c0_i32_0 = arith.constant 0 : i32
    %c0_i32_1 = arith.constant 0 : i32
    return %c0_i32, %c0_i32_0 : i32, i32
  }
  func.func @transform_23(%arg0: i32) -> (i32, i32) {
    %c0_i32 = arith.constant 0 : i32
    %c0_i32_0 = arith.constant 0 : i32
    %c0_i32_1 = arith.constant 0 : i32
    return %c0_i32, %c0_i32_0 : i32, i32
  }
  func.func @transform_24(%arg0: i32) -> (i32, i32, i32) {
    %c0_i32 = arith.constant 0 : i32
    %c0_i32_0 = arith.constant 0 : i32
    %c0_i32_1 = arith.constant 0 : i32
    return %arg0, %c0_i32, %c0_i32_0 : i32, i32, i32
  }
}

</mosaic_0001>

<llo_original>
// kernel: net_forward.1
$region0: #{net_forward.1}
  #allocation0 [shape = 'u32[]', space=smem, size = 0x4, offset = 0x4, fixed_abs, tag = 'smem constant byte address 0x4 - core index']
  #allocation1 [shape = 'u32[72,128]{1,0:T(1,128)}', space=vmem, size = 0x9000, scoped, tag = 'internal scratch']
  %s0 = inlined_call_operand.vmem [shape: f32[1,32,224], index: 0, kind: input, shape index: {}]
  %s1 = inlined_call_operand.vmem [shape: f32[264,96], index: 1, kind: input, shape index: {}]
  %s2 = inlined_call_operand.vmem [shape: f32[264,1], index: 2, kind: input, shape index: {}]
  %s3 = inlined_call_operand.vmem [shape: f32[240,792], index: 3, kind: input, shape index: {}]
  %s4 = inlined_call_operand.vmem [shape: f32[240,1], index: 4, kind: input, shape index: {}]
  %s5 = inlined_call_operand.vmem [shape: f32[330,720], index: 5, kind: input, shape index: {}]
  %s6 = inlined_call_operand.vmem [shape: f32[330,1], index: 6, kind: input, shape index: {}]
  %s7 = inlined_call_operand.vmem [shape: f32[176,136], index: 7, kind: input, shape index: {}]
  %s8 = inlined_call_operand.vmem [shape: f32[176,136], index: 8, kind: input, shape index: {}]
  %s9 = inlined_call_operand.vmem [shape: f32[165,330], index: 9, kind: input, shape index: {}]
  %s10 = inlined_call_operand.vmem [shape: f32[165,330], index: 10, kind: input, shape index: {}]
  %s11 = inlined_call_operand.vmem [shape: f32[112,165], index: 11, kind: input, shape index: {}]
  %s12 = inlined_call_operand.vmem [shape: f32[112,1], index: 12, kind: input, shape index: {}]
  %s13 = inlined_call_operand.vmem [shape: f32[1,136], index: 13, kind: input, shape index: {}]
  %s14 = inlined_call_operand.vmem [shape: f32[96,336], index: 14, kind: input, shape index: {}]
  %s15 = inlined_call_operand.vmem [shape: f32[96,1], index: 15, kind: input, shape index: {}]
  %s16 = inlined_call_operand.vmem [shape: f32[1,104], index: 16, kind: input, shape index: {}]
  %s17 = inlined_call_operand.vmem [shape: f32[72,288], index: 17, kind: input, shape index: {}]
  %s18 = inlined_call_operand.vmem [shape: f32[72,1], index: 18, kind: input, shape index: {}]
  %s19 = inlined_call_operand.vmem [shape: f32[1,72], index: 19, kind: input, shape index: {}]
  %s20 = inlined_call_operand.vmem [shape: f32[50,216], index: 20, kind: input, shape index: {}]
  %s21 = inlined_call_operand.vmem [shape: f32[50,1], index: 21, kind: input, shape index: {}]
  %s22 = inlined_call_operand.vmem [shape: f32[10,50], index: 22, kind: input, shape index: {}]
  %s23 = inlined_call_operand.vmem [shape: f32[40,8], index: 23, kind: input, shape index: {}]
  %s24 = inlined_call_operand.vmem [shape: f32[1,10,8], index: 24, kind: output, shape index: {}]
  %s25 = sld [smem:[#allocation0]]
  $region106: #{net_forward.1} parent=0
    _
  %s27 = ssub.s32 1, %s25
  %s28 = scalar_select 0, %s27, %s25
  // Predicated region
  $region2: #{net_forward.1} parent=0 // pred_check
    _
  $region3: #{net_forward.1} parent=0 // pred_check_branch
    %30 = sbr.rel (0) target = $region5
  $region4: #{net_forward.1} parent=0 // pred_region
    _
  $region5: #{net_forward.1} parent=0 // pred_fallthru
    _
  // Predicated region
  $region6: #{net_forward.1} parent=0 // pred_check
    _
  $region7: #{net_forward.1} parent=0 // pred_check_branch
    %32 = sbr.rel (0) target = $region9
  $region8: #{net_forward.1} parent=0 // pred_region
    _
  $region9: #{net_forward.1} parent=0 // pred_fallthru
    _
  // Predicated region
  $region10: #{net_forward.1} parent=0 // pred_check
    _
  $region11: #{net_forward.1} parent=0 // pred_check_branch
    %34 = sbr.rel (0) target = $region13
  $region12: #{net_forward.1} parent=0 // pred_region
    _
  $region13: #{net_forward.1} parent=0 // pred_fallthru
    _
  // Predicated region
  $region14: #{net_forward.1} parent=0 // pred_check
    _
  $region15: #{net_forward.1} parent=0 // pred_check_branch
    %36 = sbr.rel (0) target = $region17
  $region16: #{net_forward.1} parent=0 // pred_region
    _
  $region17: #{net_forward.1} parent=0 // pred_fallthru
    _
  // Predicated region
  $region18: #{net_forward.1} parent=0 // pred_check
    _
  $region19: #{net_forward.1} parent=0 // pred_check_branch
    %38 = sbr.rel (0) target = $region21
  $region20: #{net_forward.1} parent=0 // pred_region
    _
  $region21: #{net_forward.1} parent=0 // pred_fallthru
    _
  // Predicated region
  $region22: #{net_forward.1} parent=0 // pred_check
    _
  $region23: #{net_forward.1} parent=0 // pred_check_branch
    %40 = sbr.rel (0) target = $region25
  $region24: #{net_forward.1} parent=0 // pred_region
    _
  $region25: #{net_forward.1} parent=0 // pred_fallthru
    _
  // Predicated region
  $region26: #{net_forward.1} parent=0 // pred_check
    _
  $region27: #{net_forward.1} parent=0 // pred_check_branch
    %42 = sbr.rel (0) target = $region29
  $region28: #{net_forward.1} parent=0 // pred_region
    _
  $region29: #{net_forward.1} parent=0 // pred_fallthru
    _
  // Predicated region
  $region30: #{net_forward.1} parent=0 // pred_check
    _
  $region31: #{net_forward.1} parent=0 // pred_check_branch
    %44 = sbr.rel (0) target = $region33
  $region32: #{net_forward.1} parent=0 // pred_region
    _
  $region33: #{net_forward.1} parent=0 // pred_fallthru
    _
  // Predicated region
  $region34: #{net_forward.1} parent=0 // pred_check
    _
  $region35: #{net_forward.1} parent=0 // pred_check_branch
    %46 = sbr.rel (0) target = $region37
  $region36: #{net_forward.1} parent=0 // pred_region
    _
  $region37: #{net_forward.1} parent=0 // pred_fallthru
    _
  // Predicated region
  $region38: #{net_forward.1} parent=0 // pred_check
    _
  $region39: #{net_forward.1} parent=0 // pred_check_branch
    %48 = sbr.rel (0) target = $region41
  $region40: #{net_forward.1} parent=0 // pred_region
    _
  $region41: #{net_forward.1} parent=0 // pred_fallthru
    _
  // Predicated region
  $region42: #{net_forward.1} parent=0 // pred_check
    _
  $region43: #{net_forward.1} parent=0 // pred_check_branch
    %50 = sbr.rel (0) target = $region45
  $region44: #{net_forward.1} parent=0 // pred_region
    _
  $region45: #{net_forward.1} parent=0 // pred_fallthru
    _
  // Predicated region
  $region46: #{net_forward.1} parent=0 // pred_check
    _
  $region47: #{net_forward.1} parent=0 // pred_check_branch
    %52 = sbr.rel (0) target = $region49
  $region48: #{net_forward.1} parent=0 // pred_region
    _
  $region49: #{net_forward.1} parent=0 // pred_fallthru
    _
  // Predicated region
  $region50: #{net_forward.1} parent=0 // pred_check
    _
  $region51: #{net_forward.1} parent=0 // pred_check_branch
    %54 = sbr.rel (0) target = $region53
  $region52: #{net_forward.1} parent=0 // pred_region
    _
  $region53: #{net_forward.1} parent=0 // pred_fallthru
    _
  // Predicated region
  $region54: #{net_forward.1} parent=0 // pred_check
    _
  $region55: #{net_forward.1} parent=0 // pred_check_branch
    %56 = sbr.rel (0) target = $region57
  $region56: #{net_forward.1} parent=0 // pred_region
    _
  $region57: #{net_forward.1} parent=0 // pred_fallthru
    _
  // Predicated region
  $region58: #{net_forward.1} parent=0 // pred_check
    _
  $region59: #{net_forward.1} parent=0 // pred_check_branch
    %58 = sbr.rel (0) target = $region61
  $region60: #{net_forward.1} parent=0 // pred_region
    _
  $region61: #{net_forward.1} parent=0 // pred_fallthru
    _
  // Predicated region
  $region62: #{net_forward.1} parent=0 // pred_check
    _
  $region63: #{net_forward.1} parent=0 // pred_check_branch
    %60 = sbr.rel (0) target = $region65
  $region64: #{net_forward.1} parent=0 // pred_region
    _
  $region65: #{net_forward.1} parent=0 // pred_fallthru
    _
  // Predicated region
  $region66: #{net_forward.1} parent=0 // pred_check
    _
  $region67: #{net_forward.1} parent=0 // pred_check_branch
    %62 = sbr.rel (0) target = $region69
  $region68: #{net_forward.1} parent=0 // pred_region
    _
  $region69: #{net_forward.1} parent=0 // pred_fallthru
    _
  // Predicated region
  $region70: #{net_forward.1} parent=0 // pred_check
    _
  $region71: #{net_forward.1} parent=0 // pred_check_branch
    %64 = sbr.rel (0) target = $region73
  $region72: #{net_forward.1} parent=0 // pred_region
    _
  $region73: #{net_forward.1} parent=0 // pred_fallthru
    _
  // Predicated region
  $region74: #{net_forward.1} parent=0 // pred_check
    _
  $region75: #{net_forward.1} parent=0 // pred_check_branch
    %66 = sbr.rel (0) target = $region77
  $region76: #{net_forward.1} parent=0 // pred_region
    _
  $region77: #{net_forward.1} parent=0 // pred_fallthru
    _
  // Predicated region
  $region78: #{net_forward.1} parent=0 // pred_check
    _
  $region79: #{net_forward.1} parent=0 // pred_check_branch
    %68 = sbr.rel (0) target = $region81
  $region80: #{net_forward.1} parent=0 // pred_region
    _
  $region81: #{net_forward.1} parent=0 // pred_fallthru
    _
  // Predicated region
  $region82: #{net_forward.1} parent=0 // pred_check
    _
  $region83: #{net_forward.1} parent=0 // pred_check_branch
    %70 = sbr.rel (0) target = $region85
  $region84: #{net_forward.1} parent=0 // pred_region
    _
  $region85: #{net_forward.1} parent=0 // pred_fallthru
    _
  // Predicated region
  $region86: #{net_forward.1} parent=0 // pred_check
    _
  $region87: #{net_forward.1} parent=0 // pred_check_branch
    %72 = sbr.rel (0) target = $region89
  $region88: #{net_forward.1} parent=0 // pred_region
    _
  $region89: #{net_forward.1} parent=0 // pred_fallthru
    _
  // Predicated region
  $region90: #{net_forward.1} parent=0 // pred_check
    _
  $region91: #{net_forward.1} parent=0 // pred_check_branch
    %74 = sbr.rel (0) target = $region93
  $region92: #{net_forward.1} parent=0 // pred_region
    _
  $region93: #{net_forward.1} parent=0 // pred_fallthru
    _
  // Predicated region
  $region94: #{net_forward.1} parent=0 // pred_check
    _
  $region95: #{net_forward.1} parent=0 // pred_check_branch
    %76 = sbr.rel (0) target = $region97
  $region96: #{net_forward.1} parent=0 // pred_region
    _
  $region97: #{net_forward.1} parent=0 // pred_fallthru
    _
  %v77 = vld [vmem:[%s0] sm:$0xff]
  %v78 = vld [vmem:[%s0 + $0x8] sm:$0xff]
  %v79 = vld [vmem:[%s0 + $0x10] sm:$0xff]
  %v80 = vld [vmem:[%s0 + $0x18] sm:$0xff]
  %v81 = vld [vmem:[%s0 + $0x20] sm:$0xff]
  %v82 = vld [vmem:[%s0 + $0x28] sm:$0xff]
  %v83 = vld [vmem:[%s0 + $0x30] sm:$0xff]
  %v84 = vld [vmem:[%s0 + $0x38] sm:$0xff]
  %93 = vrot.lane.b32.xlu0 %v77, 120
  %v94 = vpop.permute.xlu0 %93
  %95 = vrot.lane.b32.xlu0 %v78, 120
  %v96 = vpop.permute.xlu0 %95
  %97 = vrot.lane.b32.xlu0 %v79, 120
  %v98 = vpop.permute.xlu0 %97
  %99 = vrot.lane.b32.xlu0 %v80, 120
  %v100 = vpop.permute.xlu0 %99
  %101 = vrot.lane.b32.xlu0 %v81, 120
  %v102 = vpop.permute.xlu0 %101
  %103 = vrot.lane.b32.xlu0 %v82, 120
  %v104 = vpop.permute.xlu0 %103
  %105 = vrot.lane.b32.xlu0 %v83, 120
  %v106 = vpop.permute.xlu0 %105
  %107 = vrot.lane.b32.xlu0 %v84, 120
  %v108 = vpop.permute.xlu0 %107
  %vm109 = vcmask 982016
  %v110 = vsel %vm109, %v94, %v96
  %v111 = vsel %vm109, %v98, %v100
  %v112 = vsel %vm109, %v102, %v104
  %v113 = vsel %vm109, %v106, %v108
  %122 = vrot.lane.b32.xlu0 %v77, 112
  %v123 = vpop.permute.xlu0 %122
  %124 = vrot.lane.b32.xlu0 %v78, 112
  %v125 = vpop.permute.xlu0 %124
  %126 = vrot.lane.b32.xlu0 %v79, 112
  %v127 = vpop.permute.xlu0 %126
  %128 = vrot.lane.b32.xlu0 %v80, 112
  %v129 = vpop.permute.xlu0 %128
  %130 = vrot.lane.b32.xlu0 %v81, 112
  %v131 = vpop.permute.xlu0 %130
  %132 = vrot.lane.b32.xlu0 %v82, 112
  %v133 = vpop.permute.xlu0 %132
  %134 = vrot.lane.b32.xlu0 %v83, 112
  %v135 = vpop.permute.xlu0 %134
  %136 = vrot.lane.b32.xlu0 %v84, 112
  %v137 = vpop.permute.xlu0 %136
  %vm138 = vcmask 916480
  %v139 = vsel %vm138, %v123, %v125
  %v140 = vsel %vm138, %v127, %v129
  %v141 = vsel %vm138, %v131, %v133
  %v142 = vsel %vm138, %v135, %v137
  %v151 = vld [vmem:[%s1] sm:$0xff]
  %v152 = vld [vmem:[%s1 + $0x8] sm:$0xff]
  %v153 = vld [vmem:[%s1 + $0x10] sm:$0xff]
  %v154 = vld [vmem:[%s1 + $0x18] sm:$0xff]
  %v155 = vld [vmem:[%s1 + $0x20] sm:$0xff]
  %v156 = vld [vmem:[%s1 + $0x28] sm:$0xff]
  %v157 = vld [vmem:[%s1 + $0x30] sm:$0xff]
  %v158 = vld [vmem:[%s1 + $0x38] sm:$0xff]
  %v159 = vld [vmem:[%s1 + $0x40] sm:$0xff]
  %v160 = vld [vmem:[%s1 + $0x48] sm:$0xff]
  %v161 = vld [vmem:[%s1 + $0x50] sm:$0xff]
  %v162 = vld [vmem:[%s1 + $0x58] sm:$0xff]
  %v163 = vld [vmem:[%s1 + $0x60] sm:$0xff]
  %v164 = vld [vmem:[%s1 + $0x68] sm:$0xff]
  %v165 = vld [vmem:[%s1 + $0x70] sm:$0xff]
  %v166 = vld [vmem:[%s1 + $0x78] sm:$0xff]
  %v167 = vld [vmem:[%s1 + $0x80] sm:$0xff]
  %v168 = vld [vmem:[%s1 + $0x88] sm:$0xff]
  %v169 = vld [vmem:[%s1 + $0x90] sm:$0xff]
  %v170 = vld [vmem:[%s1 + $0x98] sm:$0xff]
  %v171 = vld [vmem:[%s1 + $0xa0] sm:$0xff]
  %v172 = vld [vmem:[%s1 + $0xa8] sm:$0xff]
  %v173 = vld [vmem:[%s1 + $0xb0] sm:$0xff]
  %v174 = vld [vmem:[%s1 + $0xb8] sm:$0xff]
  %v175 = vld [vmem:[%s1 + $0xc0] sm:$0xff]
  %v176 = vld [vmem:[%s1 + $0xc8] sm:$0xff]
  %v177 = vld [vmem:[%s1 + $0xd0] sm:$0xff]
  %v178 = vld [vmem:[%s1 + $0xd8] sm:$0xff]
  %v179 = vld [vmem:[%s1 + $0xe0] sm:$0xff]
  %v180 = vld [vmem:[%s1 + $0xe8] sm:$0xff]
  %v181 = vld [vmem:[%s1 + $0xf0] sm:$0xff]
  %v182 = vld [vmem:[%s1 + $0xf8] sm:$0xff]
  %v183 = vld [vmem:[%s1 + $0x100] sm:$0xff]
  %v184 = vld [vmem:[%s2] sm:$0xff]
  %v185 = vld [vmem:[%s2 + $0x8] sm:$0xff]
  %v186 = vld [vmem:[%s2 + $0x10] sm:$0xff]
  %v187 = vld [vmem:[%s2 + $0x18] sm:$0xff]
  %v188 = vld [vmem:[%s2 + $0x20] sm:$0xff]
  %v189 = vld [vmem:[%s2 + $0x28] sm:$0xff]
  %v190 = vld [vmem:[%s2 + $0x30] sm:$0xff]
  %v191 = vld [vmem:[%s2 + $0x38] sm:$0xff]
  %v192 = vld [vmem:[%s2 + $0x40] sm:$0xff]
  %v193 = vld [vmem:[%s2 + $0x48] sm:$0xff]
  %v194 = vld [vmem:[%s2 + $0x50] sm:$0xff]
  %v195 = vld [vmem:[%s2 + $0x58] sm:$0xff]
  %v196 = vld [vmem:[%s2 + $0x60] sm:$0xff]
  %v197 = vld [vmem:[%s2 + $0x68] sm:$0xff]
  %v198 = vld [vmem:[%s2 + $0x70] sm:$0xff]
  %v199 = vld [vmem:[%s2 + $0x78] sm:$0xff]
  %v200 = vld [vmem:[%s2 + $0x80] sm:$0xff]
  %v201 = vld [vmem:[%s2 + $0x88] sm:$0xff]
  %v202 = vld [vmem:[%s2 + $0x90] sm:$0xff]
  %v203 = vld [vmem:[%s2 + $0x98] sm:$0xff]
  %v204 = vld [vmem:[%s2 + $0xa0] sm:$0xff]
  %v205 = vld [vmem:[%s2 + $0xa8] sm:$0xff]
  %v206 = vld [vmem:[%s2 + $0xb0] sm:$0xff]
  %v207 = vld [vmem:[%s2 + $0xb8] sm:$0xff]
  %v208 = vld [vmem:[%s2 + $0xc0] sm:$0xff]
  %v209 = vld [vmem:[%s2 + $0xc8] sm:$0xff]
  %v210 = vld [vmem:[%s2 + $0xd0] sm:$0xff]
  %v211 = vld [vmem:[%s2 + $0xd8] sm:$0xff]
  %v212 = vld [vmem:[%s2 + $0xe0] sm:$0xff]
  %v213 = vld [vmem:[%s2 + $0xe8] sm:$0xff]
  %v214 = vld [vmem:[%s2 + $0xf0] sm:$0xff]
  %v215 = vld [vmem:[%s2 + $0xf8] sm:$0xff]
  %v216 = vld [vmem:[%s2 + $0x100] sm:$0xff]
  %218 = vset.pattern.permute.xlu0 0
  %219 = vperm.xlu0 %218, %v184
  %v220 = vpop.permute.xlu0 %219
  %223 = vset.pattern.permute.xlu0 0
  %224 = vperm.xlu0 %223, %v185
  %v225 = vpop.permute.xlu0 %224
  %228 = vset.pattern.permute.xlu0 0
  %229 = vperm.xlu0 %228, %v186
  %v230 = vpop.permute.xlu0 %229
  %233 = vset.pattern.permute.xlu0 0
  %234 = vperm.xlu0 %233, %v187
  %v235 = vpop.permute.xlu0 %234
  %238 = vset.pattern.permute.xlu0 0
  %239 = vperm.xlu0 %238, %v188
  %v240 = vpop.permute.xlu0 %239
  %243 = vset.pattern.permute.xlu0 0
  %244 = vperm.xlu0 %243, %v189
  %v245 = vpop.permute.xlu0 %244
  %248 = vset.pattern.permute.xlu0 0
  %249 = vperm.xlu0 %248, %v190
  %v250 = vpop.permute.xlu0 %249
  %253 = vset.pattern.permute.xlu0 0
  %254 = vperm.xlu0 %253, %v191
  %v255 = vpop.permute.xlu0 %254
  %258 = vset.pattern.permute.xlu0 0
  %259 = vperm.xlu0 %258, %v192
  %v260 = vpop.permute.xlu0 %259
  %263 = vset.pattern.permute.xlu0 0
  %264 = vperm.xlu0 %263, %v193
  %v265 = vpop.permute.xlu0 %264
  %268 = vset.pattern.permute.xlu0 0
  %269 = vperm.xlu0 %268, %v194
  %v270 = vpop.permute.xlu0 %269
  %273 = vset.pattern.permute.xlu0 0
  %274 = vperm.xlu0 %273, %v195
  %v275 = vpop.permute.xlu0 %274
  %278 = vset.pattern.permute.xlu0 0
  %279 = vperm.xlu0 %278, %v196
  %v280 = vpop.permute.xlu0 %279
  %283 = vset.pattern.permute.xlu0 0
  %284 = vperm.xlu0 %283, %v197
  %v285 = vpop.permute.xlu0 %284
  %288 = vset.pattern.permute.xlu0 0
  %289 = vperm.xlu0 %288, %v198
  %v290 = vpop.permute.xlu0 %289
  %293 = vset.pattern.permute.xlu0 0
  %294 = vperm.xlu0 %293, %v199
  %v295 = vpop.permute.xlu0 %294
  %298 = vset.pattern.permute.xlu0 0
  %299 = vperm.xlu0 %298, %v200
  %v300 = vpop.permute.xlu0 %299
  %303 = vset.pattern.permute.xlu0 0
  %304 = vperm.xlu0 %303, %v201
  %v305 = vpop.permute.xlu0 %304
  %308 = vset.pattern.permute.xlu0 0
  %309 = vperm.xlu0 %308, %v202
  %v310 = vpop.permute.xlu0 %309
  %313 = vset.pattern.permute.xlu0 0
  %314 = vperm.xlu0 %313, %v203
  %v315 = vpop.permute.xlu0 %314
  %318 = vset.pattern.permute.xlu0 0
  %319 = vperm.xlu0 %318, %v204
  %v320 = vpop.permute.xlu0 %319
  %323 = vset.pattern.permute.xlu0 0
  %324 = vperm.xlu0 %323, %v205
  %v325 = vpop.permute.xlu0 %324
  %328 = vset.pattern.permute.xlu0 0
  %329 = vperm.xlu0 %328, %v206
  %v330 = vpop.permute.xlu0 %329
  %333 = vset.pattern.permute.xlu0 0
  %334 = vperm.xlu0 %333, %v207
  %v335 = vpop.permute.xlu0 %334
  %338 = vset.pattern.permute.xlu0 0
  %339 = vperm.xlu0 %338, %v208
  %v340 = vpop.permute.xlu0 %339
  %343 = vset.pattern.permute.xlu0 0
  %344 = vperm.xlu0 %343, %v209
  %v345 = vpop.permute.xlu0 %344
  %348 = vset.pattern.permute.xlu0 0
  %349 = vperm.xlu0 %348, %v210
  %v350 = vpop.permute.xlu0 %349
  %353 = vset.pattern.permute.xlu0 0
  %354 = vperm.xlu0 %353, %v211
  %v355 = vpop.permute.xlu0 %354
  %358 = vset.pattern.permute.xlu0 0
  %359 = vperm.xlu0 %358, %v212
  %v360 = vpop.permute.xlu0 %359
  %363 = vset.pattern.permute.xlu0 0
  %364 = vperm.xlu0 %363, %v213
  %v365 = vpop.permute.xlu0 %364
  %368 = vset.pattern.permute.xlu0 0
  %369 = vperm.xlu0 %368, %v214
  %v370 = vpop.permute.xlu0 %369
  %373 = vset.pattern.permute.xlu0 0
  %374 = vperm.xlu0 %373, %v215
  %v375 = vpop.permute.xlu0 %374
  %378 = vset.pattern.permute.xlu0 0
  %379 = vperm.xlu0 %378, %v216
  %v380 = vpop.permute.xlu0 %379
  %vm382 = vcmask 785408
  %v384 = vsel %vm382, %v151, 0
  %v387 = vsel %vm382, %v152, 0
  %v390 = vsel %vm382, %v153, 0
  %v393 = vsel %vm382, %v154, 0
  %v396 = vsel %vm382, %v155, 0
  %v399 = vsel %vm382, %v156, 0
  %v402 = vsel %vm382, %v157, 0
  %v405 = vsel %vm382, %v158, 0
  %v408 = vsel %vm382, %v159, 0
  %v411 = vsel %vm382, %v160, 0
  %v414 = vsel %vm382, %v161, 0
  %v417 = vsel %vm382, %v162, 0
  %v420 = vsel %vm382, %v163, 0
  %v423 = vsel %vm382, %v164, 0
  %v426 = vsel %vm382, %v165, 0
  %v429 = vsel %vm382, %v166, 0
  %v432 = vsel %vm382, %v167, 0
  %v435 = vsel %vm382, %v168, 0
  %v438 = vsel %vm382, %v169, 0
  %v441 = vsel %vm382, %v170, 0
  %v444 = vsel %vm382, %v171, 0
  %v447 = vsel %vm382, %v172, 0
  %v450 = vsel %vm382, %v173, 0
  %v453 = vsel %vm382, %v174, 0
  %v456 = vsel %vm382, %v175, 0
  %v459 = vsel %vm382, %v176, 0
  %v462 = vsel %vm382, %v177, 0
  %v465 = vsel %vm382, %v178, 0
  %v468 = vsel %vm382, %v179, 0
  %v471 = vsel %vm382, %v180, 0
  %v474 = vsel %vm382, %v181, 0
  %v477 = vsel %vm382, %v182, 0
  %v480 = vsel %vm382, %v183, 0
  %482 = vmatpush.msra.mxu0 0.0
  %483 = vmatpush.msra.mxu0 0.0
  %484 = vmatpush.msra.mxu0 0.0
  %485 = vmatpush.msra.mxu0 0.0
  %486 = vmatpush.msra.mxu0 %v142
  %487 = vmatpush.msra.mxu0 %v141
  %488 = vmatpush.msra.mxu0 %v140
  %489 = vmatpush.msra.mxu0 %v139
  %490 = vmatpush.msra.mxu0 %v113
  %491 = vmatpush.msra.mxu0 %v112
  %492 = vmatpush.msra.mxu0 %v111
  %493 = vmatpush.msra.mxu0 %v110
  %494 = vmatpush.msra.mxu0 %v83
  %495 = vmatpush.msra.mxu0 %v81
  %496 = vmatpush.msra.mxu0 %v79
  %497 = vmatpush.msra.mxu0 %v77
  %498 = vmatmul.f32.gmra.mxu0 %v384
  %v499 = vpop.f32.mrf.mxu0
  %v500 = vadd.f32 %v220, %v499
  %501 = vmatmul.f32.gmra.mxu0 %v387
  %v502 = vpop.f32.mrf.mxu0
  %v503 = vadd.f32 %v225, %v502
  %504 = vmatmul.f32.gmra.mxu0 %v390
  %v505 = vpop.f32.mrf.mxu0
  %v506 = vadd.f32 %v230, %v505
  %507 = vmatmul.f32.gmra.mxu0 %v393
  %v508 = vpop.f32.mrf.mxu0
  %v509 = vadd.f32 %v235, %v508
  %510 = vmatmul.f32.gmra.mxu0 %v396
  %v511 = vpop.f32.mrf.mxu0
  %v512 = vadd.f32 %v240, %v511
  %513 = vmatmul.f32.gmra.mxu0 %v399
  %v514 = vpop.f32.mrf.mxu0
  %v515 = vadd.f32 %v245, %v514
  %516 = vmatmul.f32.gmra.mxu0 %v402
  %v517 = vpop.f32.mrf.mxu0
  %v518 = vadd.f32 %v250, %v517
  %519 = vmatmul.f32.gmra.mxu0 %v405
  %v520 = vpop.f32.mrf.mxu0
  %v521 = vadd.f32 %v255, %v520
  %522 = vmatmul.f32.gmra.mxu0 %v408
  %v523 = vpop.f32.mrf.mxu0
  %v524 = vadd.f32 %v260, %v523
  %525 = vmatmul.f32.gmra.mxu0 %v411
  %v526 = vpop.f32.mrf.mxu0
  %v527 = vadd.f32 %v265, %v526
  %528 = vmatmul.f32.gmra.mxu0 %v414
  %v529 = vpop.f32.mrf.mxu0
  %v530 = vadd.f32 %v270, %v529
  %531 = vmatmul.f32.gmra.mxu0 %v417
  %v532 = vpop.f32.mrf.mxu0
  %v533 = vadd.f32 %v275, %v532
  %534 = vmatmul.f32.gmra.mxu0 %v420
  %v535 = vpop.f32.mrf.mxu0
  %v536 = vadd.f32 %v280, %v535
  %537 = vmatmul.f32.gmra.mxu0 %v423
  %v538 = vpop.f32.mrf.mxu0
  %v539 = vadd.f32 %v285, %v538
  %540 = vmatmul.f32.gmra.mxu0 %v426
  %v541 = vpop.f32.mrf.mxu0
  %v542 = vadd.f32 %v290, %v541
  %543 = vmatmul.f32.gmra.mxu0 %v429
  %v544 = vpop.f32.mrf.mxu0
  %v545 = vadd.f32 %v295, %v544
  %546 = vmatmul.f32.gmra.mxu0 %v432
  %v547 = vpop.f32.mrf.mxu0
  %v548 = vadd.f32 %v300, %v547
  %549 = vmatmul.f32.gmra.mxu0 %v435
  %v550 = vpop.f32.mrf.mxu0
  %v551 = vadd.f32 %v305, %v550
  %552 = vmatmul.f32.gmra.mxu0 %v438
  %v553 = vpop.f32.mrf.mxu0
  %v554 = vadd.f32 %v310, %v553
  %555 = vmatmul.f32.gmra.mxu0 %v441
  %v556 = vpop.f32.mrf.mxu0
  %v557 = vadd.f32 %v315, %v556
  %558 = vmatmul.f32.gmra.mxu0 %v444
  %v559 = vpop.f32.mrf.mxu0
  %v560 = vadd.f32 %v320, %v559
  %561 = vmatmul.f32.gmra.mxu0 %v447
  %v562 = vpop.f32.mrf.mxu0
  %v563 = vadd.f32 %v325, %v562
  %564 = vmatmul.f32.gmra.mxu0 %v450
  %v565 = vpop.f32.mrf.mxu0
  %v566 = vadd.f32 %v330, %v565
  %567 = vmatmul.f32.gmra.mxu0 %v453
  %v568 = vpop.f32.mrf.mxu0
  %v569 = vadd.f32 %v335, %v568
  %570 = vmatmul.f32.gmra.mxu0 %v456
  %v571 = vpop.f32.mrf.mxu0
  %v572 = vadd.f32 %v340, %v571
  %573 = vmatmul.f32.gmra.mxu0 %v459
  %v574 = vpop.f32.mrf.mxu0
  %v575 = vadd.f32 %v345, %v574
  %576 = vmatmul.f32.gmra.mxu0 %v462
  %v577 = vpop.f32.mrf.mxu0
  %v578 = vadd.f32 %v350, %v577
  %579 = vmatmul.f32.gmra.mxu0 %v465
  %v580 = vpop.f32.mrf.mxu0
  %v581 = vadd.f32 %v355, %v580
  %582 = vmatmul.f32.gmra.mxu0 %v468
  %v583 = vpop.f32.mrf.mxu0
  %v584 = vadd.f32 %v360, %v583
  %585 = vmatmul.f32.gmra.mxu0 %v471
  %v586 = vpop.f32.mrf.mxu0
  %v587 = vadd.f32 %v365, %v586
  %588 = vmatmul.f32.gmra.mxu0 %v474
  %v589 = vpop.f32.mrf.mxu0
  %v590 = vadd.f32 %v370, %v589
  %591 = vmatmul.f32.gmra.mxu0 %v477
  %v592 = vpop.f32.mrf.mxu0
  %v593 = vadd.f32 %v375, %v592
  %594 = vmatmul.f32.gmra.mxu0 %v480
  %v595 = vpop.f32.mrf.mxu0
  %v596 = vadd.f32 %v380, %v595
  %597 = vdwg.mxu0
  %598 = vmatpush.msra.mxu0 0.0
  %599 = vmatpush.msra.mxu0 0.0
  %600 = vmatpush.msra.mxu0 0.0
  %601 = vmatpush.msra.mxu0 0.0
  %602 = vmatpush.msra.mxu0 %v137
  %603 = vmatpush.msra.mxu0 %v133
  %604 = vmatpush.msra.mxu0 %v129
  %605 = vmatpush.msra.mxu0 %v125
  %606 = vmatpush.msra.mxu0 %v108
  %607 = vmatpush.msra.mxu0 %v104
  %608 = vmatpush.msra.mxu0 %v100
  %609 = vmatpush.msra.mxu0 %v96
  %610 = vmatpush.msra.mxu0 %v84
  %611 = vmatpush.msra.mxu0 %v82
  %612 = vmatpush.msra.mxu0 %v80
  %613 = vmatpush.msra.mxu0 %v78
  %614 = vmatmul.f32.gmra.mxu0 %v384
  %v615 = vpop.f32.mrf.mxu0
  %v616 = vadd.f32 %v220, %v615
  %617 = vmatmul.f32.gmra.mxu0 %v387
  %v618 = vpop.f32.mrf.mxu0
  %v619 = vadd.f32 %v225, %v618
  %620 = vmatmul.f32.gmra.mxu0 %v390
  %v621 = vpop.f32.mrf.mxu0
  %v622 = vadd.f32 %v230, %v621
  %623 = vmatmul.f32.gmra.mxu0 %v393
  %v624 = vpop.f32.mrf.mxu0
  %v625 = vadd.f32 %v235, %v624
  %626 = vmatmul.f32.gmra.mxu0 %v396
  %v627 = vpop.f32.mrf.mxu0
  %v628 = vadd.f32 %v240, %v627
  %629 = vmatmul.f32.gmra.mxu0 %v399
  %v630 = vpop.f32.mrf.mxu0
  %v631 = vadd.f32 %v245, %v630
  %632 = vmatmul.f32.gmra.mxu0 %v402
  %v633 = vpop.f32.mrf.mxu0
  %v634 = vadd.f32 %v250, %v633
  %635 = vmatmul.f32.gmra.mxu0 %v405
  %v636 = vpop.f32.mrf.mxu0
  %v637 = vadd.f32 %v255, %v636
  %638 = vmatmul.f32.gmra.mxu0 %v408
  %v639 = vpop.f32.mrf.mxu0
  %v640 = vadd.f32 %v260, %v639
  %641 = vmatmul.f32.gmra.mxu0 %v411
  %v642 = vpop.f32.mrf.mxu0
  %v643 = vadd.f32 %v265, %v642
  %644 = vmatmul.f32.gmra.mxu0 %v414
  %v645 = vpop.f32.mrf.mxu0
  %v646 = vadd.f32 %v270, %v645
  %647 = vmatmul.f32.gmra.mxu0 %v417
  %v648 = vpop.f32.mrf.mxu0
  %v649 = vadd.f32 %v275, %v648
  %650 = vmatmul.f32.gmra.mxu0 %v420
  %v651 = vpop.f32.mrf.mxu0
  %v652 = vadd.f32 %v280, %v651
  %653 = vmatmul.f32.gmra.mxu0 %v423
  %v654 = vpop.f32.mrf.mxu0
  %v655 = vadd.f32 %v285, %v654
  %656 = vmatmul.f32.gmra.mxu0 %v426
  %v657 = vpop.f32.mrf.mxu0
  %v658 = vadd.f32 %v290, %v657
  %659 = vmatmul.f32.gmra.mxu0 %v429
  %v660 = vpop.f32.mrf.mxu0
  %v661 = vadd.f32 %v295, %v660
  %662 = vmatmul.f32.gmra.mxu0 %v432
  %v663 = vpop.f32.mrf.mxu0
  %v664 = vadd.f32 %v300, %v663
  %665 = vmatmul.f32.gmra.mxu0 %v435
  %v666 = vpop.f32.mrf.mxu0
  %v667 = vadd.f32 %v305, %v666
  %668 = vmatmul.f32.gmra.mxu0 %v438
  %v669 = vpop.f32.mrf.mxu0
  %v670 = vadd.f32 %v310, %v669
  %671 = vmatmul.f32.gmra.mxu0 %v441
  %v672 = vpop.f32.mrf.mxu0
  %v673 = vadd.f32 %v315, %v672
  %674 = vmatmul.f32.gmra.mxu0 %v444
  %v675 = vpop.f32.mrf.mxu0
  %v676 = vadd.f32 %v320, %v675
  %677 = vmatmul.f32.gmra.mxu0 %v447
  %v678 = vpop.f32.mrf.mxu0
  %v679 = vadd.f32 %v325, %v678
  %680 = vmatmul.f32.gmra.mxu0 %v450
  %v681 = vpop.f32.mrf.mxu0
  %v682 = vadd.f32 %v330, %v681
  %683 = vmatmul.f32.gmra.mxu0 %v453
  %v684 = vpop.f32.mrf.mxu0
  %v685 = vadd.f32 %v335, %v684
  %686 = vmatmul.f32.gmra.mxu0 %v456
  %v687 = vpop.f32.mrf.mxu0
  %v688 = vadd.f32 %v340, %v687
  %689 = vmatmul.f32.gmra.mxu0 %v459
  %v690 = vpop.f32.mrf.mxu0
  %v691 = vadd.f32 %v345, %v690
  %692 = vmatmul.f32.gmra.mxu0 %v462
  %v693 = vpop.f32.mrf.mxu0
  %v694 = vadd.f32 %v350, %v693
  %695 = vmatmul.f32.gmra.mxu0 %v465
  %v696 = vpop.f32.mrf.mxu0
  %v697 = vadd.f32 %v355, %v696
  %698 = vmatmul.f32.gmra.mxu0 %v468
  %v699 = vpop.f32.mrf.mxu0
  %v700 = vadd.f32 %v360, %v699
  %701 = vmatmul.f32.gmra.mxu0 %v471
  %v702 = vpop.f32.mrf.mxu0
  %v703 = vadd.f32 %v365, %v702
  %704 = vmatmul.f32.gmra.mxu0 %v474
  %v705 = vpop.f32.mrf.mxu0
  %v706 = vadd.f32 %v370, %v705
  %707 = vmatmul.f32.gmra.mxu0 %v477
  %v708 = vpop.f32.mrf.mxu0
  %v709 = vadd.f32 %v375, %v708
  %710 = vmatmul.f32.gmra.mxu0 %v480
  %v711 = vpop.f32.mrf.mxu0
  %v712 = vadd.f32 %v380, %v711
  %713 = vdwg.mxu0
  %v714 = vmax.f32 %v500, 0.0
  %v715 = vmax.f32 %v616, 0.0
  %v716 = vmax.f32 %v503, 0.0
  %v717 = vmax.f32 %v619, 0.0
  %v718 = vmax.f32 %v506, 0.0
  %v719 = vmax.f32 %v622, 0.0
  %v720 = vmax.f32 %v509, 0.0
  %v721 = vmax.f32 %v625, 0.0
  %v722 = vmax.f32 %v512, 0.0
  %v723 = vmax.f32 %v628, 0.0
  %v724 = vmax.f32 %v515, 0.0
  %v725 = vmax.f32 %v631, 0.0
  %v726 = vmax.f32 %v518, 0.0
  %v727 = vmax.f32 %v634, 0.0
  %v728 = vmax.f32 %v521, 0.0
  %v729 = vmax.f32 %v637, 0.0
  %v730 = vmax.f32 %v524, 0.0
  %v731 = vmax.f32 %v640, 0.0
  %v732 = vmax.f32 %v527, 0.0
  %v733 = vmax.f32 %v643, 0.0
  %v734 = vmax.f32 %v530, 0.0
  %v735 = vmax.f32 %v646, 0.0
  %v736 = vmax.f32 %v533, 0.0
  %v737 = vmax.f32 %v649, 0.0
  %v738 = vmax.f32 %v536, 0.0
  %v739 = vmax.f32 %v652, 0.0
  %v740 = vmax.f32 %v539, 0.0
  %v741 = vmax.f32 %v655, 0.0
  %v742 = vmax.f32 %v542, 0.0
  %v743 = vmax.f32 %v658, 0.0
  %v744 = vmax.f32 %v545, 0.0
  %v745 = vmax.f32 %v661, 0.0
  %v746 = vmax.f32 %v548, 0.0
  %v747 = vmax.f32 %v664, 0.0
  %v748 = vmax.f32 %v551, 0.0
  %v749 = vmax.f32 %v667, 0.0
  %v750 = vmax.f32 %v554, 0.0
  %v751 = vmax.f32 %v670, 0.0
  %v752 = vmax.f32 %v557, 0.0
  %v753 = vmax.f32 %v673, 0.0
  %v754 = vmax.f32 %v560, 0.0
  %v755 = vmax.f32 %v676, 0.0
  %v756 = vmax.f32 %v563, 0.0
  %v757 = vmax.f32 %v679, 0.0
  %v758 = vmax.f32 %v566, 0.0
  %v759 = vmax.f32 %v682, 0.0
  %v760 = vmax.f32 %v569, 0.0
  %v761 = vmax.f32 %v685, 0.0
  %v762 = vmax.f32 %v572, 0.0
  %v763 = vmax.f32 %v688, 0.0
  %v764 = vmax.f32 %v575, 0.0
  %v765 = vmax.f32 %v691, 0.0
  %v766 = vmax.f32 %v578, 0.0
  %v767 = vmax.f32 %v694, 0.0
  %v768 = vmax.f32 %v581, 0.0
  %v769 = vmax.f32 %v697, 0.0
  %v770 = vmax.f32 %v584, 0.0
  %v771 = vmax.f32 %v700, 0.0
  %v772 = vmax.f32 %v587, 0.0
  %v773 = vmax.f32 %v703, 0.0
  %v774 = vmax.f32 %v590, 0.0
  %v775 = vmax.f32 %v706, 0.0
  %v776 = vmax.f32 %v593, 0.0
  %v777 = vmax.f32 %v709, 0.0
  %v778 = vmax.f32 %v596, 0.0
  %v779 = vmax.f32 %v712, 0.0
  %846 = vrot.lane.b32.xlu0 %v714, 120
  %v847 = vpop.permute.xlu0 %846
  %848 = vrot.lane.b32.xlu0 %v715, 120
  %v849 = vpop.permute.xlu0 %848
  %850 = vrot.lane.b32.xlu0 %v716, 120
  %v851 = vpop.permute.xlu0 %850
  %852 = vrot.lane.b32.xlu0 %v717, 120
  %v853 = vpop.permute.xlu0 %852
  %854 = vrot.lane.b32.xlu0 %v718, 120
  %v855 = vpop.permute.xlu0 %854
  %856 = vrot.lane.b32.xlu0 %v719, 120
  %v857 = vpop.permute.xlu0 %856
  %858 = vrot.lane.b32.xlu0 %v720, 120
  %v859 = vpop.permute.xlu0 %858
  %860 = vrot.lane.b32.xlu0 %v721, 120
  %v861 = vpop.permute.xlu0 %860
  %862 = vrot.lane.b32.xlu0 %v722, 120
  %v863 = vpop.permute.xlu0 %862
  %864 = vrot.lane.b32.xlu0 %v723, 120
  %v865 = vpop.permute.xlu0 %864
  %866 = vrot.lane.b32.xlu0 %v724, 120
  %v867 = vpop.permute.xlu0 %866
  %868 = vrot.lane.b32.xlu0 %v725, 120
  %v869 = vpop.permute.xlu0 %868
  %870 = vrot.lane.b32.xlu0 %v726, 120
  %v871 = vpop.permute.xlu0 %870
  %872 = vrot.lane.b32.xlu0 %v727, 120
  %v873 = vpop.permute.xlu0 %872
  %874 = vrot.lane.b32.xlu0 %v728, 120
  %v875 = vpop.permute.xlu0 %874
  %876 = vrot.lane.b32.xlu0 %v729, 120
  %v877 = vpop.permute.xlu0 %876
  %878 = vrot.lane.b32.xlu0 %v730, 120
  %v879 = vpop.permute.xlu0 %878
  %880 = vrot.lane.b32.xlu0 %v731, 120
  %v881 = vpop.permute.xlu0 %880
  %882 = vrot.lane.b32.xlu0 %v732, 120
  %v883 = vpop.permute.xlu0 %882
  %884 = vrot.lane.b32.xlu0 %v733, 120
  %v885 = vpop.permute.xlu0 %884
  %886 = vrot.lane.b32.xlu0 %v734, 120
  %v887 = vpop.permute.xlu0 %886
  %888 = vrot.lane.b32.xlu0 %v735, 120
  %v889 = vpop.permute.xlu0 %888
  %890 = vrot.lane.b32.xlu0 %v736, 120
  %v891 = vpop.permute.xlu0 %890
  %892 = vrot.lane.b32.xlu0 %v737, 120
  %v893 = vpop.permute.xlu0 %892
  %894 = vrot.lane.b32.xlu0 %v738, 120
  %v895 = vpop.permute.xlu0 %894
  %896 = vrot.lane.b32.xlu0 %v739, 120
  %v897 = vpop.permute.xlu0 %896
  %898 = vrot.lane.b32.xlu0 %v740, 120
  %v899 = vpop.permute.xlu0 %898
  %900 = vrot.lane.b32.xlu0 %v741, 120
  %v901 = vpop.permute.xlu0 %900
  %902 = vrot.lane.b32.xlu0 %v742, 120
  %v903 = vpop.permute.xlu0 %902
  %904 = vrot.lane.b32.xlu0 %v743, 120
  %v905 = vpop.permute.xlu0 %904
  %906 = vrot.lane.b32.xlu0 %v744, 120
  %v907 = vpop.permute.xlu0 %906
  %908 = vrot.lane.b32.xlu0 %v745, 120
  %v909 = vpop.permute.xlu0 %908
  %910 = vrot.lane.b32.xlu0 %v746, 120
  %v911 = vpop.permute.xlu0 %910
  %912 = vrot.lane.b32.xlu0 %v747, 120
  %v913 = vpop.permute.xlu0 %912
  %914 = vrot.lane.b32.xlu0 %v748, 120
  %v915 = vpop.permute.xlu0 %914
  %916 = vrot.lane.b32.xlu0 %v749, 120
  %v917 = vpop.permute.xlu0 %916
  %918 = vrot.lane.b32.xlu0 %v750, 120
  %v919 = vpop.permute.xlu0 %918
  %920 = vrot.lane.b32.xlu0 %v751, 120
  %v921 = vpop.permute.xlu0 %920
  %922 = vrot.lane.b32.xlu0 %v752, 120
  %v923 = vpop.permute.xlu0 %922
  %924 = vrot.lane.b32.xlu0 %v753, 120
  %v925 = vpop.permute.xlu0 %924
  %926 = vrot.lane.b32.xlu0 %v754, 120
  %v927 = vpop.permute.xlu0 %926
  %928 = vrot.lane.b32.xlu0 %v755, 120
  %v929 = vpop.permute.xlu0 %928
  %930 = vrot.lane.b32.xlu0 %v756, 120
  %v931 = vpop.permute.xlu0 %930
  %932 = vrot.lane.b32.xlu0 %v757, 120
  %v933 = vpop.permute.xlu0 %932
  %934 = vrot.lane.b32.xlu0 %v758, 120
  %v935 = vpop.permute.xlu0 %934
  %936 = vrot.lane.b32.xlu0 %v759, 120
  %v937 = vpop.permute.xlu0 %936
  %938 = vrot.lane.b32.xlu0 %v760, 120
  %v939 = vpop.permute.xlu0 %938
  %940 = vrot.lane.b32.xlu0 %v761, 120
  %v941 = vpop.permute.xlu0 %940
  %942 = vrot.lane.b32.xlu0 %v762, 120
  %v943 = vpop.permute.xlu0 %942
  %944 = vrot.lane.b32.xlu0 %v763, 120
  %v945 = vpop.permute.xlu0 %944
  %946 = vrot.lane.b32.xlu0 %v764, 120
  %v947 = vpop.permute.xlu0 %946
  %948 = vrot.lane.b32.xlu0 %v765, 120
  %v949 = vpop.permute.xlu0 %948
  %950 = vrot.lane.b32.xlu0 %v766, 120
  %v951 = vpop.permute.xlu0 %950
  %952 = vrot.lane.b32.xlu0 %v767, 120
  %v953 = vpop.permute.xlu0 %952
  %954 = vrot.lane.b32.xlu0 %v768, 120
  %v955 = vpop.permute.xlu0 %954
  %956 = vrot.lane.b32.xlu0 %v769, 120
  %v957 = vpop.permute.xlu0 %956
  %958 = vrot.lane.b32.xlu0 %v770, 120
  %v959 = vpop.permute.xlu0 %958
  %960 = vrot.lane.b32.xlu0 %v771, 120
  %v961 = vpop.permute.xlu0 %960
  %962 = vrot.lane.b32.xlu0 %v772, 120
  %v963 = vpop.permute.xlu0 %962
  %964 = vrot.lane.b32.xlu0 %v773, 120
  %v965 = vpop.permute.xlu0 %964
  %966 = vrot.lane.b32.xlu0 %v774, 120
  %v967 = vpop.permute.xlu0 %966
  %968 = vrot.lane.b32.xlu0 %v775, 120
  %v969 = vpop.permute.xlu0 %968
  %970 = vrot.lane.b32.xlu0 %v776, 120
  %v971 = vpop.permute.xlu0 %970
  %972 = vrot.lane.b32.xlu0 %v777, 120
  %v973 = vpop.permute.xlu0 %972
  %974 = vrot.lane.b32.xlu0 %v778, 120
  %v975 = vpop.permute.xlu0 %974
  %976 = vrot.lane.b32.xlu0 %v779, 120
  %v977 = vpop.permute.xlu0 %976
  %v978 = vsel %vm109, %v847, %v849
  %v979 = vsel %vm109, %v851, %v853
  %v980 = vsel %vm109, %v855, %v857
  %v981 = vsel %vm109, %v859, %v861
  %v982 = vsel %vm109, %v863, %v865
  %v983 = vsel %vm109, %v867, %v869
  %v984 = vsel %vm109, %v871, %v873
  %v985 = vsel %vm109, %v875, %v877
  %v986 = vsel %vm109, %v879, %v881
  %v987 = vsel %vm109, %v883, %v885
  %v988 = vsel %vm109, %v887, %v889
  %v989 = vsel %vm109, %v891, %v893
  %v990 = vsel %vm109, %v895, %v897
  %v991 = vsel %vm109, %v899, %v901
  %v992 = vsel %vm109, %v903, %v905
  %v993 = vsel %vm109, %v907, %v909
  %v994 = vsel %vm109, %v911, %v913
  %v995 = vsel %vm109, %v915, %v917
  %v996 = vsel %vm109, %v919, %v921
  %v997 = vsel %vm109, %v923, %v925
  %v998 = vsel %vm109, %v927, %v929
  %v999 = vsel %vm109, %v931, %v933
  %v1000 = vsel %vm109, %v935, %v937
  %v1001 = vsel %vm109, %v939, %v941
  %v1002 = vsel %vm109, %v943, %v945
  %v1003 = vsel %vm109, %v947, %v949
  %v1004 = vsel %vm109, %v951, %v953
  %v1005 = vsel %vm109, %v955, %v957
  %v1006 = vsel %vm109, %v959, %v961
  %v1007 = vsel %vm109, %v963, %v965
  %v1008 = vsel %vm109, %v967, %v969
  %v1009 = vsel %vm109, %v971, %v973
  %v1010 = vsel %vm109, %v975, %v977
  %1077 = vrot.lane.b32.xlu0 %v714, 112
  %v1078 = vpop.permute.xlu0 %1077
  %1079 = vrot.lane.b32.xlu0 %v715, 112
  %v1080 = vpop.permute.xlu0 %1079
  %1081 = vrot.lane.b32.xlu0 %v716, 112
  %v1082 = vpop.permute.xlu0 %1081
  %1083 = vrot.lane.b32.xlu0 %v717, 112
  %v1084 = vpop.permute.xlu0 %1083
  %1085 = vrot.lane.b32.xlu0 %v718, 112
  %v1086 = vpop.permute.xlu0 %1085
  %1087 = vrot.lane.b32.xlu0 %v719, 112
  %v1088 = vpop.permute.xlu0 %1087
  %1089 = vrot.lane.b32.xlu0 %v720, 112
  %v1090 = vpop.permute.xlu0 %1089
  %1091 = vrot.lane.b32.xlu0 %v721, 112
  %v1092 = vpop.permute.xlu0 %1091
  %1093 = vrot.lane.b32.xlu0 %v722, 112
  %v1094 = vpop.permute.xlu0 %1093
  %1095 = vrot.lane.b32.xlu0 %v723, 112
  %v1096 = vpop.permute.xlu0 %1095
  %1097 = vrot.lane.b32.xlu0 %v724, 112
  %v1098 = vpop.permute.xlu0 %1097
  %1099 = vrot.lane.b32.xlu0 %v725, 112
  %v1100 = vpop.permute.xlu0 %1099
  %1101 = vrot.lane.b32.xlu0 %v726, 112
  %v1102 = vpop.permute.xlu0 %1101
  %1103 = vrot.lane.b32.xlu0 %v727, 112
  %v1104 = vpop.permute.xlu0 %1103
  %1105 = vrot.lane.b32.xlu0 %v728, 112
  %v1106 = vpop.permute.xlu0 %1105
  %1107 = vrot.lane.b32.xlu0 %v729, 112
  %v1108 = vpop.permute.xlu0 %1107
  %1109 = vrot.lane.b32.xlu0 %v730, 112
  %v1110 = vpop.permute.xlu0 %1109
  %1111 = vrot.lane.b32.xlu0 %v731, 112
  %v1112 = vpop.permute.xlu0 %1111
  %1113 = vrot.lane.b32.xlu0 %v732, 112
  %v1114 = vpop.permute.xlu0 %1113
  %1115 = vrot.lane.b32.xlu0 %v733, 112
  %v1116 = vpop.permute.xlu0 %1115
  %1117 = vrot.lane.b32.xlu0 %v734, 112
  %v1118 = vpop.permute.xlu0 %1117
  %1119 = vrot.lane.b32.xlu0 %v735, 112
  %v1120 = vpop.permute.xlu0 %1119
  %1121 = vrot.lane.b32.xlu0 %v736, 112
  %v1122 = vpop.permute.xlu0 %1121
  %1123 = vrot.lane.b32.xlu0 %v737, 112
  %v1124 = vpop.permute.xlu0 %1123
  %1125 = vrot.lane.b32.xlu0 %v738, 112
  %v1126 = vpop.permute.xlu0 %1125
  %1127 = vrot.lane.b32.xlu0 %v739, 112
  %v1128 = vpop.permute.xlu0 %1127
  %1129 = vrot.lane.b32.xlu0 %v740, 112
  %v1130 = vpop.permute.xlu0 %1129
  %1131 = vrot.lane.b32.xlu0 %v741, 112
  %v1132 = vpop.permute.xlu0 %1131
  %1133 = vrot.lane.b32.xlu0 %v742, 112
  %v1134 = vpop.permute.xlu0 %1133
  %1135 = vrot.lane.b32.xlu0 %v743, 112
  %v1136 = vpop.permute.xlu0 %1135
  %1137 = vrot.lane.b32.xlu0 %v744, 112
  %v1138 = vpop.permute.xlu0 %1137
  %1139 = vrot.lane.b32.xlu0 %v745, 112
  %v1140 = vpop.permute.xlu0 %1139
  %1141 = vrot.lane.b32.xlu0 %v746, 112
  %v1142 = vpop.permute.xlu0 %1141
  %1143 = vrot.lane.b32.xlu0 %v747, 112
  %v1144 = vpop.permute.xlu0 %1143
  %1145 = vrot.lane.b32.xlu0 %v748, 112
  %v1146 = vpop.permute.xlu0 %1145
  %1147 = vrot.lane.b32.xlu0 %v749, 112
  %v1148 = vpop.permute.xlu0 %1147
  %1149 = vrot.lane.b32.xlu0 %v750, 112
  %v1150 = vpop.permute.xlu0 %1149
  %1151 = vrot.lane.b32.xlu0 %v751, 112
  %v1152 = vpop.permute.xlu0 %1151
  %1153 = vrot.lane.b32.xlu0 %v752, 112
  %v1154 = vpop.permute.xlu0 %1153
  %1155 = vrot.lane.b32.xlu0 %v753, 112
  %v1156 = vpop.permute.xlu0 %1155
  %1157 = vrot.lane.b32.xlu0 %v754, 112
  %v1158 = vpop.permute.xlu0 %1157
  %1159 = vrot.lane.b32.xlu0 %v755, 112
  %v1160 = vpop.permute.xlu0 %1159
  %1161 = vrot.lane.b32.xlu0 %v756, 112
  %v1162 = vpop.permute.xlu0 %1161
  %1163 = vrot.lane.b32.xlu0 %v757, 112
  %v1164 = vpop.permute.xlu0 %1163
  %1165 = vrot.lane.b32.xlu0 %v758, 112
  %v1166 = vpop.permute.xlu0 %1165
  %1167 = vrot.lane.b32.xlu0 %v759, 112
  %v1168 = vpop.permute.xlu0 %1167
  %1169 = vrot.lane.b32.xlu0 %v760, 112
  %v1170 = vpop.permute.xlu0 %1169
  %1171 = vrot.lane.b32.xlu0 %v761, 112
  %v1172 = vpop.permute.xlu0 %1171
  %1173 = vrot.lane.b32.xlu0 %v762, 112
  %v1174 = vpop.permute.xlu0 %1173
  %1175 = vrot.lane.b32.xlu0 %v763, 112
  %v1176 = vpop.permute.xlu0 %1175
  %1177 = vrot.lane.b32.xlu0 %v764, 112
  %v1178 = vpop.permute.xlu0 %1177
  %1179 = vrot.lane.b32.xlu0 %v765, 112
  %v1180 = vpop.permute.xlu0 %1179
  %1181 = vrot.lane.b32.xlu0 %v766, 112
  %v1182 = vpop.permute.xlu0 %1181
  %1183 = vrot.lane.b32.xlu0 %v767, 112
  %v1184 = vpop.permute.xlu0 %1183
  %1185 = vrot.lane.b32.xlu0 %v768, 112
  %v1186 = vpop.permute.xlu0 %1185
  %1187 = vrot.lane.b32.xlu0 %v769, 112
  %v1188 = vpop.permute.xlu0 %1187
  %1189 = vrot.lane.b32.xlu0 %v770, 112
  %v1190 = vpop.permute.xlu0 %1189
  %1191 = vrot.lane.b32.xlu0 %v771, 112
  %v1192 = vpop.permute.xlu0 %1191
  %1193 = vrot.lane.b32.xlu0 %v772, 112
  %v1194 = vpop.permute.xlu0 %1193
  %1195 = vrot.lane.b32.xlu0 %v773, 112
  %v1196 = vpop.permute.xlu0 %1195
  %1197 = vrot.lane.b32.xlu0 %v774, 112
  %v1198 = vpop.permute.xlu0 %1197
  %1199 = vrot.lane.b32.xlu0 %v775, 112
  %v1200 = vpop.permute.xlu0 %1199
  %1201 = vrot.lane.b32.xlu0 %v776, 112
  %v1202 = vpop.permute.xlu0 %1201
  %1203 = vrot.lane.b32.xlu0 %v777, 112
  %v1204 = vpop.permute.xlu0 %1203
  %1205 = vrot.lane.b32.xlu0 %v778, 112
  %v1206 = vpop.permute.xlu0 %1205
  %1207 = vrot.lane.b32.xlu0 %v779, 112
  %v1208 = vpop.permute.xlu0 %1207
  %v1209 = vsel %vm138, %v1078, %v1080
  %v1210 = vsel %vm138, %v1082, %v1084
  %v1211 = vsel %vm138, %v1086, %v1088
  %v1212 = vsel %vm138, %v1090, %v1092
  %v1213 = vsel %vm138, %v1094, %v1096
  %v1214 = vsel %vm138, %v1098, %v1100
  %v1215 = vsel %vm138, %v1102, %v1104
  %v1216 = vsel %vm138, %v1106, %v1108
  %v1217 = vsel %vm138, %v1110, %v1112
  %v1218 = vsel %vm138, %v1114, %v1116
  %v1219 = vsel %vm138, %v1118, %v1120
  %v1220 = vsel %vm138, %v1122, %v1124
  %v1221 = vsel %vm138, %v1126, %v1128
  %v1222 = vsel %vm138, %v1130, %v1132
  %v1223 = vsel %vm138, %v1134, %v1136
  %v1224 = vsel %vm138, %v1138, %v1140
  %v1225 = vsel %vm138, %v1142, %v1144
  %v1226 = vsel %vm138, %v1146, %v1148
  %v1227 = vsel %vm138, %v1150, %v1152
  %v1228 = vsel %vm138, %v1154, %v1156
  %v1229 = vsel %vm138, %v1158, %v1160
  %v1230 = vsel %vm138, %v1162, %v1164
  %v1231 = vsel %vm138, %v1166, %v1168
  %v1232 = vsel %vm138, %v1170, %v1172
  %v1233 = vsel %vm138, %v1174, %v1176
  %v1234 = vsel %vm138, %v1178, %v1180
  %v1235 = vsel %vm138, %v1182, %v1184
  %v1236 = vsel %vm138, %v1186, %v1188
  %v1237 = vsel %vm138, %v1190, %v1192
  %v1238 = vsel %vm138, %v1194, %v1196
  %v1239 = vsel %vm138, %v1198, %v1200
  %v1240 = vsel %vm138, %v1202, %v1204
  %v1241 = vsel %vm138, %v1206, %v1208
  %v1308 = vld [vmem:[%s3] sm:$0xff]
  %v1309 = vld [vmem:[%s3 + $0x8] sm:$0xff]
  %v1310 = vld [vmem:[%s3 + $0x10] sm:$0xff]
  %v1311 = vld [vmem:[%s3 + $0x18] sm:$0xff]
  %v1312 = vld [vmem:[%s3 + $0x20] sm:$0xff]
  %v1313 = vld [vmem:[%s3 + $0x28] sm:$0xff]
  %v1314 = vld [vmem:[%s3 + $0x30] sm:$0xff]
  %v1315 = vld [vmem:[%s3 + $0x38] sm:$0xff]
  %v1316 = vld [vmem:[%s3 + $0x40] sm:$0xff]
  %v1317 = vld [vmem:[%s3 + $0x48] sm:$0xff]
  %v1318 = vld [vmem:[%s3 + $0x50] sm:$0xff]
  %v1319 = vld [vmem:[%s3 + $0x58] sm:$0xff]
  %v1320 = vld [vmem:[%s3 + $0x60] sm:$0xff]
  %v1321 = vld [vmem:[%s3 + $0x68] sm:$0xff]
  %v1322 = vld [vmem:[%s3 + $0x70] sm:$0xff]
  %v1323 = vld [vmem:[%s3 + $0x78] sm:$0xff]
  %v1324 = vld [vmem:[%s3 + $0x80] sm:$0xff]
  %v1325 = vld [vmem:[%s3 + $0x88] sm:$0xff]
  %v1326 = vld [vmem:[%s3 + $0x90] sm:$0xff]
  %v1327 = vld [vmem:[%s3 + $0x98] sm:$0xff]
  %v1328 = vld [vmem:[%s3 + $0xa0] sm:$0xff]
  %v1329 = vld [vmem:[%s3 + $0xa8] sm:$0xff]
  %v1330 = vld [vmem:[%s3 + $0xb0] sm:$0xff]
  %v1331 = vld [vmem:[%s3 + $0xb8] sm:$0xff]
  %v1332 = vld [vmem:[%s3 + $0xc0] sm:$0xff]
  %v1333 = vld [vmem:[%s3 + $0xc8] sm:$0xff]
  %v1334 = vld [vmem:[%s3 + $0xd0] sm:$0xff]
  %v1335 = vld [vmem:[%s3 + $0xd8] sm:$0xff]
  %v1336 = vld [vmem:[%s3 + $0xe0] sm:$0xff]
  %v1337 = vld [vmem:[%s3 + $0xe8] sm:$0xff]
  %v1338 = vld [vmem:[%s3 + $0xf0] sm:$0xff]
  %v1339 = vld [vmem:[%s3 + $0xf8] sm:$0xff]
  %v1340 = vld [vmem:[%s3 + $0x100] sm:$0xff]
  %v1341 = vld [vmem:[%s3 + $0x108] sm:$0xff]
  %v1342 = vld [vmem:[%s3 + $0x110] sm:$0xff]
  %v1343 = vld [vmem:[%s3 + $0x118] sm:$0xff]
  %v1344 = vld [vmem:[%s3 + $0x120] sm:$0xff]
  %v1345 = vld [vmem:[%s3 + $0x128] sm:$0xff]
  %v1346 = vld [vmem:[%s3 + $0x130] sm:$0xff]
  %v1347 = vld [vmem:[%s3 + $0x138] sm:$0xff]
  %v1348 = vld [vmem:[%s3 + $0x140] sm:$0xff]
  %v1349 = vld [vmem:[%s3 + $0x148] sm:$0xff]
  %v1350 = vld [vmem:[%s3 + $0x150] sm:$0xff]
  %v1351 = vld [vmem:[%s3 + $0x158] sm:$0xff]
  %v1352 = vld [vmem:[%s3 + $0x160] sm:$0xff]
  %v1353 = vld [vmem:[%s3 + $0x168] sm:$0xff]
  %v1354 = vld [vmem:[%s3 + $0x170] sm:$0xff]
  %v1355 = vld [vmem:[%s3 + $0x178] sm:$0xff]
  %v1356 = vld [vmem:[%s3 + $0x180] sm:$0xff]
  %v1357 = vld [vmem:[%s3 + $0x188] sm:$0xff]
  %v1358 = vld [vmem:[%s3 + $0x190] sm:$0xff]
  %v1359 = vld [vmem:[%s3 + $0x198] sm:$0xff]
  %v1360 = vld [vmem:[%s3 + $0x1a0] sm:$0xff]
  %v1361 = vld [vmem:[%s3 + $0x1a8] sm:$0xff]
  %v1362 = vld [vmem:[%s3 + $0x1b0] sm:$0xff]
  %v1363 = vld [vmem:[%s3 + $0x1b8] sm:$0xff]
  %v1364 = vld [vmem:[%s3 + $0x1c0] sm:$0xff]
  %v1365 = vld [vmem:[%s3 + $0x1c8] sm:$0xff]
  %v1366 = vld [vmem:[%s3 + $0x1d0] sm:$0xff]
  %v1367 = vld [vmem:[%s3 + $0x1d8] sm:$0xff]
  %v1368 = vld [vmem:[%s3 + $0x1e0] sm:$0xff]
  %v1369 = vld [vmem:[%s3 + $0x1e8] sm:$0xff]
  %v1370 = vld [vmem:[%s3 + $0x1f0] sm:$0xff]
  %v1371 = vld [vmem:[%s3 + $0x1f8] sm:$0xff]
  %v1372 = vld [vmem:[%s3 + $0x200] sm:$0xff]
  %v1373 = vld [vmem:[%s3 + $0x208] sm:$0xff]
  %v1374 = vld [vmem:[%s3 + $0x210] sm:$0xff]
  %v1375 = vld [vmem:[%s3 + $0x218] sm:$0xff]
  %v1376 = vld [vmem:[%s3 + $0x220] sm:$0xff]
  %v1377 = vld [vmem:[%s3 + $0x228] sm:$0xff]
  %v1378 = vld [vmem:[%s3 + $0x230] sm:$0xff]
  %v1379 = vld [vmem:[%s3 + $0x238] sm:$0xff]
  %v1380 = vld [vmem:[%s3 + $0x240] sm:$0xff]
  %v1381 = vld [vmem:[%s3 + $0x248] sm:$0xff]
  %v1382 = vld [vmem:[%s3 + $0x250] sm:$0xff]
  %v1383 = vld [vmem:[%s3 + $0x258] sm:$0xff]
  %v1384 = vld [vmem:[%s3 + $0x260] sm:$0xff]
  %v1385 = vld [vmem:[%s3 + $0x268] sm:$0xff]
  %v1386 = vld [vmem:[%s3 + $0x270] sm:$0xff]
  %v1387 = vld [vmem:[%s3 + $0x278] sm:$0xff]
  %v1388 = vld [vmem:[%s3 + $0x280] sm:$0xff]
  %v1389 = vld [vmem:[%s3 + $0x288] sm:$0xff]
  %v1390 = vld [vmem:[%s3 + $0x290] sm:$0xff]
  %v1391 = vld [vmem:[%s3 + $0x298] sm:$0xff]
  %v1392 = vld [vmem:[%s3 + $0x2a0] sm:$0xff]
  %v1393 = vld [vmem:[%s3 + $0x2a8] sm:$0xff]
  %v1394 = vld [vmem:[%s3 + $0x2b0] sm:$0xff]
  %v1395 = vld [vmem:[%s3 + $0x2b8] sm:$0xff]
  %v1396 = vld [vmem:[%s3 + $0x2c0] sm:$0xff]
  %v1397 = vld [vmem:[%s3 + $0x2c8] sm:$0xff]
  %v1398 = vld [vmem:[%s3 + $0x2d0] sm:$0xff]
  %v1399 = vld [vmem:[%s3 + $0x2d8] sm:$0xff]
  %v1400 = vld [vmem:[%s3 + $0x2e0] sm:$0xff]
  %v1401 = vld [vmem:[%s3 + $0x2e8] sm:$0xff]
  %v1402 = vld [vmem:[%s3 + $0x2f0] sm:$0xff]
  %v1403 = vld [vmem:[%s3 + $0x2f8] sm:$0xff]
  %v1404 = vld [vmem:[%s3 + $0x300] sm:$0xff]
  %v1405 = vld [vmem:[%s3 + $0x308] sm:$0xff]
  %v1406 = vld [vmem:[%s3 + $0x310] sm:$0xff]
  %v1407 = vld [vmem:[%s3 + $0x318] sm:$0xff]
  %v1408 = vld [vmem:[%s3 + $0x320] sm:$0xff]
  %v1409 = vld [vmem:[%s3 + $0x328] sm:$0xff]
  %v1410 = vld [vmem:[%s3 + $0x330] sm:$0xff]
  %v1411 = vld [vmem:[%s3 + $0x338] sm:$0xff]
  %v1412 = vld [vmem:[%s3 + $0x340] sm:$0xff]
  %v1413 = vld [vmem:[%s3 + $0x348] sm:$0xff]
  %v1414 = vld [vmem:[%s3 + $0x350] sm:$0xff]
  %v1415 = vld [vmem:[%s3 + $0x358] sm:$0xff]
  %v1416 = vld [vmem:[%s3 + $0x360] sm:$0xff]
  %v1417 = vld [vmem:[%s3 + $0x368] sm:$0xff]
  %v1418 = vld [vmem:[%s3 + $0x370] sm:$0xff]
  %v1419 = vld [vmem:[%s3 + $0x378] sm:$0xff]
  %v1420 = vld [vmem:[%s3 + $0x380] sm:$0xff]
  %v1421 = vld [vmem:[%s3 + $0x388] sm:$0xff]
  %v1422 = vld [vmem:[%s3 + $0x390] sm:$0xff]
  %v1423 = vld [vmem:[%s3 + $0x398] sm:$0xff]
  %v1424 = vld [vmem:[%s3 + $0x3a0] sm:$0xff]
  %v1425 = vld [vmem:[%s3 + $0x3a8] sm:$0xff]
  %v1426 = vld [vmem:[%s3 + $0x3b0] sm:$0xff]
  %v1427 = vld [vmem:[%s3 + $0x3b8] sm:$0xff]
  %v1428 = vld [vmem:[%s3 + $0x3c0] sm:$0xff]
  %v1429 = vld [vmem:[%s3 + $0x3c8] sm:$0xff]
  %v1430 = vld [vmem:[%s3 + $0x3d0] sm:$0xff]
  %v1431 = vld [vmem:[%s3 + $0x3d8] sm:$0xff]
  %v1432 = vld [vmem:[%s3 + $0x3e0] sm:$0xff]
  %v1433 = vld [vmem:[%s3 + $0x3e8] sm:$0xff]
  %v1434 = vld [vmem:[%s3 + $0x3f0] sm:$0xff]
  %v1435 = vld [vmem:[%s3 + $0x3f8] sm:$0xff]
  %v1436 = vld [vmem:[%s3 + $0x400] sm:$0xff]
  %v1437 = vld [vmem:[%s3 + $0x408] sm:$0xff]
  %v1438 = vld [vmem:[%s3 + $0x410] sm:$0xff]
  %v1439 = vld [vmem:[%s3 + $0x418] sm:$0xff]
  %v1440 = vld [vmem:[%s3 + $0x420] sm:$0xff]
  %v1441 = vld [vmem:[%s3 + $0x428] sm:$0xff]
  %v1442 = vld [vmem:[%s3 + $0x430] sm:$0xff]
  %v1443 = vld [vmem:[%s3 + $0x438] sm:$0xff]
  %v1444 = vld [vmem:[%s3 + $0x440] sm:$0xff]
  %v1445 = vld [vmem:[%s3 + $0x448] sm:$0xff]
  %v1446 = vld [vmem:[%s3 + $0x450] sm:$0xff]
  %v1447 = vld [vmem:[%s3 + $0x458] sm:$0xff]
  %v1448 = vld [vmem:[%s3 + $0x460] sm:$0xff]
  %v1449 = vld [vmem:[%s3 + $0x468] sm:$0xff]
  %v1450 = vld [vmem:[%s3 + $0x470] sm:$0xff]
  %v1451 = vld [vmem:[%s3 + $0x478] sm:$0xff]
  %v1452 = vld [vmem:[%s3 + $0x480] sm:$0xff]
  %v1453 = vld [vmem:[%s3 + $0x488] sm:$0xff]
  %v1454 = vld [vmem:[%s3 + $0x490] sm:$0xff]
  %v1455 = vld [vmem:[%s3 + $0x498] sm:$0xff]
  %v1456 = vld [vmem:[%s3 + $0x4a0] sm:$0xff]
  %v1457 = vld [vmem:[%s3 + $0x4a8] sm:$0xff]
  %v1458 = vld [vmem:[%s3 + $0x4b0] sm:$0xff]
  %v1459 = vld [vmem:[%s3 + $0x4b8] sm:$0xff]
  %v1460 = vld [vmem:[%s3 + $0x4c0] sm:$0xff]
  %v1461 = vld [vmem:[%s3 + $0x4c8] sm:$0xff]
  %v1462 = vld [vmem:[%s3 + $0x4d0] sm:$0xff]
  %v1463 = vld [vmem:[%s3 + $0x4d8] sm:$0xff]
  %v1464 = vld [vmem:[%s3 + $0x4e0] sm:$0xff]
  %v1465 = vld [vmem:[%s3 + $0x4e8] sm:$0xff]
  %v1466 = vld [vmem:[%s3 + $0x4f0] sm:$0xff]
  %v1467 = vld [vmem:[%s3 + $0x4f8] sm:$0xff]
  %v1468 = vld [vmem:[%s3 + $0x500] sm:$0xff]
  %v1469 = vld [vmem:[%s3 + $0x508] sm:$0xff]
  %v1470 = vld [vmem:[%s3 + $0x510] sm:$0xff]
  %v1471 = vld [vmem:[%s3 + $0x518] sm:$0xff]
  %v1472 = vld [vmem:[%s3 + $0x520] sm:$0xff]
  %v1473 = vld [vmem:[%s3 + $0x528] sm:$0xff]
  %v1474 = vld [vmem:[%s3 + $0x530] sm:$0xff]
  %v1475 = vld [vmem:[%s3 + $0x538] sm:$0xff]
  %v1476 = vld [vmem:[%s3 + $0x540] sm:$0xff]
  %v1477 = vld [vmem:[%s3 + $0x548] sm:$0xff]
  %v1478 = vld [vmem:[%s3 + $0x550] sm:$0xff]
  %v1479 = vld [vmem:[%s3 + $0x558] sm:$0xff]
  %v1480 = vld [vmem:[%s3 + $0x560] sm:$0xff]
  %v1481 = vld [vmem:[%s3 + $0x568] sm:$0xff]
  %v1482 = vld [vmem:[%s3 + $0x570] sm:$0xff]
  %v1483 = vld [vmem:[%s3 + $0x578] sm:$0xff]
  %v1484 = vld [vmem:[%s3 + $0x580] sm:$0xff]
  %v1485 = vld [vmem:[%s3 + $0x588] sm:$0xff]
  %v1486 = vld [vmem:[%s3 + $0x590] sm:$0xff]
  %v1487 = vld [vmem:[%s3 + $0x598] sm:$0xff]
  %v1488 = vld [vmem:[%s3 + $0x5a0] sm:$0xff]
  %v1489 = vld [vmem:[%s3 + $0x5a8] sm:$0xff]
  %v1490 = vld [vmem:[%s3 + $0x5b0] sm:$0xff]
  %v1491 = vld [vmem:[%s3 + $0x5b8] sm:$0xff]
  %v1492 = vld [vmem:[%s3 + $0x5c0] sm:$0xff]
  %v1493 = vld [vmem:[%s3 + $0x5c8] sm:$0xff]
  %v1494 = vld [vmem:[%s3 + $0x5d0] sm:$0xff]
  %v1495 = vld [vmem:[%s3 + $0x5d8] sm:$0xff]
  %v1496 = vld [vmem:[%s3 + $0x5e0] sm:$0xff]
  %v1497 = vld [vmem:[%s3 + $0x5e8] sm:$0xff]
  %v1498 = vld [vmem:[%s3 + $0x5f0] sm:$0xff]
  %v1499 = vld [vmem:[%s3 + $0x5f8] sm:$0xff]
  %v1500 = vld [vmem:[%s3 + $0x600] sm:$0xff]
  %v1501 = vld [vmem:[%s3 + $0x608] sm:$0xff]
  %v1502 = vld [vmem:[%s3 + $0x610] sm:$0xff]
  %v1503 = vld [vmem:[%s3 + $0x618] sm:$0xff]
  %v1504 = vld [vmem:[%s3 + $0x620] sm:$0xff]
  %v1505 = vld [vmem:[%s3 + $0x628] sm:$0xff]
  %v1506 = vld [vmem:[%s3 + $0x630] sm:$0xff]
  %v1507 = vld [vmem:[%s3 + $0x638] sm:$0xff]
  %v1508 = vld [vmem:[%s3 + $0x640] sm:$0xff]
  %v1509 = vld [vmem:[%s3 + $0x648] sm:$0xff]
  %v1510 = vld [vmem:[%s3 + $0x650] sm:$0xff]
  %v1511 = vld [vmem:[%s3 + $0x658] sm:$0xff]
  %v1512 = vld [vmem:[%s3 + $0x660] sm:$0xff]
  %v1513 = vld [vmem:[%s3 + $0x668] sm:$0xff]
  %v1514 = vld [vmem:[%s3 + $0x670] sm:$0xff]
  %v1515 = vld [vmem:[%s3 + $0x678] sm:$0xff]
  %v1516 = vld [vmem:[%s3 + $0x680] sm:$0xff]
  %v1517 = vld [vmem:[%s3 + $0x688] sm:$0xff]
  %v1518 = vld [vmem:[%s4] sm:$0xff]
  %v1519 = vld [vmem:[%s4 + $0x8] sm:$0xff]
  %v1520 = vld [vmem:[%s4 + $0x10] sm:$0xff]
  %v1521 = vld [vmem:[%s4 + $0x18] sm:$0xff]
  %v1522 = vld [vmem:[%s4 + $0x20] sm:$0xff]
  %v1523 = vld [vmem:[%s4 + $0x28] sm:$0xff]
  %v1524 = vld [vmem:[%s4 + $0x30] sm:$0xff]
  %v1525 = vld [vmem:[%s4 + $0x38] sm:$0xff]
  %v1526 = vld [vmem:[%s4 + $0x40] sm:$0xff]
  %v1527 = vld [vmem:[%s4 + $0x48] sm:$0xff]
  %v1528 = vld [vmem:[%s4 + $0x50] sm:$0xff]
  %v1529 = vld [vmem:[%s4 + $0x58] sm:$0xff]
  %v1530 = vld [vmem:[%s4 + $0x60] sm:$0xff]
  %v1531 = vld [vmem:[%s4 + $0x68] sm:$0xff]
  %v1532 = vld [vmem:[%s4 + $0x70] sm:$0xff]
  %v1533 = vld [vmem:[%s4 + $0x78] sm:$0xff]
  %v1534 = vld [vmem:[%s4 + $0x80] sm:$0xff]
  %v1535 = vld [vmem:[%s4 + $0x88] sm:$0xff]
  %v1536 = vld [vmem:[%s4 + $0x90] sm:$0xff]
  %v1537 = vld [vmem:[%s4 + $0x98] sm:$0xff]
  %v1538 = vld [vmem:[%s4 + $0xa0] sm:$0xff]
  %v1539 = vld [vmem:[%s4 + $0xa8] sm:$0xff]
  %v1540 = vld [vmem:[%s4 + $0xb0] sm:$0xff]
  %v1541 = vld [vmem:[%s4 + $0xb8] sm:$0xff]
  %v1542 = vld [vmem:[%s4 + $0xc0] sm:$0xff]
  %v1543 = vld [vmem:[%s4 + $0xc8] sm:$0xff]
  %v1544 = vld [vmem:[%s4 + $0xd0] sm:$0xff]
  %v1545 = vld [vmem:[%s4 + $0xd8] sm:$0xff]
  %v1546 = vld [vmem:[%s4 + $0xe0] sm:$0xff]
  %v1547 = vld [vmem:[%s4 + $0xe8] sm:$0xff]
  %1549 = vset.pattern.permute.xlu0 0
  %1550 = vperm.xlu0 %1549, %v1518
  %v1551 = vpop.permute.xlu0 %1550
  %1554 = vset.pattern.permute.xlu0 0
  %1555 = vperm.xlu0 %1554, %v1519
  %v1556 = vpop.permute.xlu0 %1555
  %1559 = vset.pattern.permute.xlu0 0
  %1560 = vperm.xlu0 %1559, %v1520
  %v1561 = vpop.permute.xlu0 %1560
  %1564 = vset.pattern.permute.xlu0 0
  %1565 = vperm.xlu0 %1564, %v1521
  %v1566 = vpop.permute.xlu0 %1565
  %1569 = vset.pattern.permute.xlu0 0
  %1570 = vperm.xlu0 %1569, %v1522
  %v1571 = vpop.permute.xlu0 %1570
  %1574 = vset.pattern.permute.xlu0 0
  %1575 = vperm.xlu0 %1574, %v1523
  %v1576 = vpop.permute.xlu0 %1575
  %1579 = vset.pattern.permute.xlu0 0
  %1580 = vperm.xlu0 %1579, %v1524
  %v1581 = vpop.permute.xlu0 %1580
  %1584 = vset.pattern.permute.xlu0 0
  %1585 = vperm.xlu0 %1584, %v1525
  %v1586 = vpop.permute.xlu0 %1585
  %1589 = vset.pattern.permute.xlu0 0
  %1590 = vperm.xlu0 %1589, %v1526
  %v1591 = vpop.permute.xlu0 %1590
  %1594 = vset.pattern.permute.xlu0 0
  %1595 = vperm.xlu0 %1594, %v1527
  %v1596 = vpop.permute.xlu0 %1595
  %1599 = vset.pattern.permute.xlu0 0
  %1600 = vperm.xlu0 %1599, %v1528
  %v1601 = vpop.permute.xlu0 %1600
  %1604 = vset.pattern.permute.xlu0 0
  %1605 = vperm.xlu0 %1604, %v1529
  %v1606 = vpop.permute.xlu0 %1605
  %1609 = vset.pattern.permute.xlu0 0
  %1610 = vperm.xlu0 %1609, %v1530
  %v1611 = vpop.permute.xlu0 %1610
  %1614 = vset.pattern.permute.xlu0 0
  %1615 = vperm.xlu0 %1614, %v1531
  %v1616 = vpop.permute.xlu0 %1615
  %1619 = vset.pattern.permute.xlu0 0
  %1620 = vperm.xlu0 %1619, %v1532
  %v1621 = vpop.permute.xlu0 %1620
  %1624 = vset.pattern.permute.xlu0 0
  %1625 = vperm.xlu0 %1624, %v1533
  %v1626 = vpop.permute.xlu0 %1625
  %1629 = vset.pattern.permute.xlu0 0
  %1630 = vperm.xlu0 %1629, %v1534
  %v1631 = vpop.permute.xlu0 %1630
  %1634 = vset.pattern.permute.xlu0 0
  %1635 = vperm.xlu0 %1634, %v1535
  %v1636 = vpop.permute.xlu0 %1635
  %1639 = vset.pattern.permute.xlu0 0
  %1640 = vperm.xlu0 %1639, %v1536
  %v1641 = vpop.permute.xlu0 %1640
  %1644 = vset.pattern.permute.xlu0 0
  %1645 = vperm.xlu0 %1644, %v1537
  %v1646 = vpop.permute.xlu0 %1645
  %1649 = vset.pattern.permute.xlu0 0
  %1650 = vperm.xlu0 %1649, %v1538
  %v1651 = vpop.permute.xlu0 %1650
  %1654 = vset.pattern.permute.xlu0 0
  %1655 = vperm.xlu0 %1654, %v1539
  %v1656 = vpop.permute.xlu0 %1655
  %1659 = vset.pattern.permute.xlu0 0
  %1660 = vperm.xlu0 %1659, %v1540
  %v1661 = vpop.permute.xlu0 %1660
  %1664 = vset.pattern.permute.xlu0 0
  %1665 = vperm.xlu0 %1664, %v1541
  %v1666 = vpop.permute.xlu0 %1665
  %1669 = vset.pattern.permute.xlu0 0
  %1670 = vperm.xlu0 %1669, %v1542
  %v1671 = vpop.permute.xlu0 %1670
  %1674 = vset.pattern.permute.xlu0 0
  %1675 = vperm.xlu0 %1674, %v1543
  %v1676 = vpop.permute.xlu0 %1675
  %1679 = vset.pattern.permute.xlu0 0
  %1680 = vperm.xlu0 %1679, %v1544
  %v1681 = vpop.permute.xlu0 %1680
  %1684 = vset.pattern.permute.xlu0 0
  %1685 = vperm.xlu0 %1684, %v1545
  %v1686 = vpop.permute.xlu0 %1685
  %1689 = vset.pattern.permute.xlu0 0
  %1690 = vperm.xlu0 %1689, %v1546
  %v1691 = vpop.permute.xlu0 %1690
  %1694 = vset.pattern.permute.xlu0 0
  %1695 = vperm.xlu0 %1694, %v1547
  %v1696 = vpop.permute.xlu0 %1695
  %vm1698 = vcmask 195584
  %v1700 = vsel %vm1698, %v1314, 0
  %v1703 = vsel %vm1698, %v1321, 0
  %v1706 = vsel %vm1698, %v1328, 0
  %v1709 = vsel %vm1698, %v1335, 0
  %v1712 = vsel %vm1698, %v1342, 0
  %v1715 = vsel %vm1698, %v1349, 0
  %v1718 = vsel %vm1698, %v1356, 0
  %v1721 = vsel %vm1698, %v1363, 0
  %v1724 = vsel %vm1698, %v1370, 0
  %v1727 = vsel %vm1698, %v1377, 0
  %v1730 = vsel %vm1698, %v1384, 0
  %v1733 = vsel %vm1698, %v1391, 0
  %v1736 = vsel %vm1698, %v1398, 0
  %v1739 = vsel %vm1698, %v1405, 0
  %v1742 = vsel %vm1698, %v1412, 0
  %v1745 = vsel %vm1698, %v1419, 0
  %v1748 = vsel %vm1698, %v1426, 0
  %v1751 = vsel %vm1698, %v1433, 0
  %v1754 = vsel %vm1698, %v1440, 0
  %v1757 = vsel %vm1698, %v1447, 0
  %v1760 = vsel %vm1698, %v1454, 0
  %v1763 = vsel %vm1698, %v1461, 0
  %v1766 = vsel %vm1698, %v1468, 0
  %v1769 = vsel %vm1698, %v1475, 0
  %v1772 = vsel %vm1698, %v1482, 0
  %v1775 = vsel %vm1698, %v1489, 0
  %v1778 = vsel %vm1698, %v1496, 0
  %v1781 = vsel %vm1698, %v1503, 0
  %v1784 = vsel %vm1698, %v1510, 0
  %v1787 = vsel %vm1698, %v1517, 0
  %1789 = vmatpush.msra.mxu0 %v744
  %1790 = vmatpush.msra.mxu0 %v742
  %1791 = vmatpush.msra.mxu0 %v740
  %1792 = vmatpush.msra.mxu0 %v738
  %1793 = vmatpush.msra.mxu0 %v736
  %1794 = vmatpush.msra.mxu0 %v734
  %1795 = vmatpush.msra.mxu0 %v732
  %1796 = vmatpush.msra.mxu0 %v730
  %1797 = vmatpush.msra.mxu0 %v728
  %1798 = vmatpush.msra.mxu0 %v726
  %1799 = vmatpush.msra.mxu0 %v724
  %1800 = vmatpush.msra.mxu0 %v722
  %1801 = vmatpush.msra.mxu0 %v720
  %1802 = vmatpush.msra.mxu0 %v718
  %1803 = vmatpush.msra.mxu0 %v716
  %1804 = vmatpush.msra.mxu0 %v714
  %1805 = vmatmul.f32.gmra.mxu0 %v1308
  %v1806 = vpop.f32.mrf.mxu0
  %v1807 = vadd.f32 %v1551, %v1806
  %1808 = vmatmul.f32.gmra.mxu0 %v1315
  %v1809 = vpop.f32.mrf.mxu0
  %v1810 = vadd.f32 %v1556, %v1809
  %1811 = vmatmul.f32.gmra.mxu0 %v1322
  %v1812 = vpop.f32.mrf.mxu0
  %v1813 = vadd.f32 %v1561, %v1812
  %1814 = vmatmul.f32.gmra.mxu0 %v1329
  %v1815 = vpop.f32.mrf.mxu0
  %v1816 = vadd.f32 %v1566, %v1815
  %1817 = vmatmul.f32.gmra.mxu0 %v1336
  %v1818 = vpop.f32.mrf.mxu0
  %v1819 = vadd.f32 %v1571, %v1818
  %1820 = vmatmul.f32.gmra.mxu0 %v1343
  %v1821 = vpop.f32.mrf.mxu0
  %v1822 = vadd.f32 %v1576, %v1821
  %1823 = vmatmul.f32.gmra.mxu0 %v1350
  %v1824 = vpop.f32.mrf.mxu0
  %v1825 = vadd.f32 %v1581, %v1824
  %1826 = vmatmul.f32.gmra.mxu0 %v1357
  %v1827 = vpop.f32.mrf.mxu0
  %v1828 = vadd.f32 %v1586, %v1827
  %1829 = vmatmul.f32.gmra.mxu0 %v1364
  %v1830 = vpop.f32.mrf.mxu0
  %v1831 = vadd.f32 %v1591, %v1830
  %1832 = vmatmul.f32.gmra.mxu0 %v1371
  %v1833 = vpop.f32.mrf.mxu0
  %v1834 = vadd.f32 %v1596, %v1833
  %1835 = vmatmul.f32.gmra.mxu0 %v1378
  %v1836 = vpop.f32.mrf.mxu0
  %v1837 = vadd.f32 %v1601, %v1836
  %1838 = vmatmul.f32.gmra.mxu0 %v1385
  %v1839 = vpop.f32.mrf.mxu0
  %v1840 = vadd.f32 %v1606, %v1839
  %1841 = vmatmul.f32.gmra.mxu0 %v1392
  %v1842 = vpop.f32.mrf.mxu0
  %v1843 = vadd.f32 %v1611, %v1842
  %1844 = vmatmul.f32.gmra.mxu0 %v1399
  %v1845 = vpop.f32.mrf.mxu0
  %v1846 = vadd.f32 %v1616, %v1845
  %1847 = vmatmul.f32.gmra.mxu0 %v1406
  %v1848 = vpop.f32.mrf.mxu0
  %v1849 = vadd.f32 %v1621, %v1848
  %1850 = vmatmul.f32.gmra.mxu0 %v1413
  %v1851 = vpop.f32.mrf.mxu0
  %v1852 = vadd.f32 %v1626, %v1851
  %1853 = vmatmul.f32.gmra.mxu0 %v1420
  %v1854 = vpop.f32.mrf.mxu0
  %v1855 = vadd.f32 %v1631, %v1854
  %1856 = vmatmul.f32.gmra.mxu0 %v1427
  %v1857 = vpop.f32.mrf.mxu0
  %v1858 = vadd.f32 %v1636, %v1857
  %1859 = vmatmul.f32.gmra.mxu0 %v1434
  %v1860 = vpop.f32.mrf.mxu0
  %v1861 = vadd.f32 %v1641, %v1860
  %1862 = vmatmul.f32.gmra.mxu0 %v1441
  %v1863 = vpop.f32.mrf.mxu0
  %v1864 = vadd.f32 %v1646, %v1863
  %1865 = vmatmul.f32.gmra.mxu0 %v1448
  %v1866 = vpop.f32.mrf.mxu0
  %v1867 = vadd.f32 %v1651, %v1866
  %1868 = vmatmul.f32.gmra.mxu0 %v1455
  %v1869 = vpop.f32.mrf.mxu0
  %v1870 = vadd.f32 %v1656, %v1869
  %1871 = vmatmul.f32.gmra.mxu0 %v1462
  %v1872 = vpop.f32.mrf.mxu0
  %v1873 = vadd.f32 %v1661, %v1872
  %1874 = vmatmul.f32.gmra.mxu0 %v1469
  %v1875 = vpop.f32.mrf.mxu0
  %v1876 = vadd.f32 %v1666, %v1875
  %1877 = vmatmul.f32.gmra.mxu0 %v1476
  %v1878 = vpop.f32.mrf.mxu0
  %v1879 = vadd.f32 %v1671, %v1878
  %1880 = vmatmul.f32.gmra.mxu0 %v1483
  %v1881 = vpop.f32.mrf.mxu0
  %v1882 = vadd.f32 %v1676, %v1881
  %1883 = vmatmul.f32.gmra.mxu0 %v1490
  %v1884 = vpop.f32.mrf.mxu0
  %v1885 = vadd.f32 %v1681, %v1884
  %1886 = vmatmul.f32.gmra.mxu0 %v1497
  %v1887 = vpop.f32.mrf.mxu0
  %v1888 = vadd.f32 %v1686, %v1887
  %1889 = vmatmul.f32.gmra.mxu0 %v1504
  %v1890 = vpop.f32.mrf.mxu0
  %v1891 = vadd.f32 %v1691, %v1890
  %1892 = vmatmul.f32.gmra.mxu0 %v1511
  %v1893 = vpop.f32.mrf.mxu0
  %v1894 = vadd.f32 %v1696, %v1893
  %1895 = vdwg.mxu0
  %1896 = vmatpush.msra.mxu0 %v776
  %1897 = vmatpush.msra.mxu0 %v774
  %1898 = vmatpush.msra.mxu0 %v772
  %1899 = vmatpush.msra.mxu0 %v770
  %1900 = vmatpush.msra.mxu0 %v768
  %1901 = vmatpush.msra.mxu0 %v766
  %1902 = vmatpush.msra.mxu0 %v764
  %1903 = vmatpush.msra.mxu0 %v762
  %1904 = vmatpush.msra.mxu0 %v760
  %1905 = vmatpush.msra.mxu0 %v758
  %1906 = vmatpush.msra.mxu0 %v756
  %1907 = vmatpush.msra.mxu0 %v754
  %1908 = vmatpush.msra.mxu0 %v752
  %1909 = vmatpush.msra.mxu0 %v750
  %1910 = vmatpush.msra.mxu0 %v748
  %1911 = vmatpush.msra.mxu0 %v746
  %1912 = vmatmul.f32.gmra.mxu0 %v1309
  %v1913 = vpop.f32.mrf.mxu0
  %v1914 = vadd.f32 %v1807, %v1913
  %1915 = vmatmul.f32.gmra.mxu0 %v1316
  %v1916 = vpop.f32.mrf.mxu0
  %v1917 = vadd.f32 %v1810, %v1916
  %1918 = vmatmul.f32.gmra.mxu0 %v1323
  %v1919 = vpop.f32.mrf.mxu0
  %v1920 = vadd.f32 %v1813, %v1919
  %1921 = vmatmul.f32.gmra.mxu0 %v1330
  %v1922 = vpop.f32.mrf.mxu0
  %v1923 = vadd.f32 %v1816, %v1922
  %1924 = vmatmul.f32.gmra.mxu0 %v1337
  %v1925 = vpop.f32.mrf.mxu0
  %v1926 = vadd.f32 %v1819, %v1925
  %1927 = vmatmul.f32.gmra.mxu0 %v1344
  %v1928 = vpop.f32.mrf.mxu0
  %v1929 = vadd.f32 %v1822, %v1928
  %1930 = vmatmul.f32.gmra.mxu0 %v1351
  %v1931 = vpop.f32.mrf.mxu0
  %v1932 = vadd.f32 %v1825, %v1931
  %1933 = vmatmul.f32.gmra.mxu0 %v1358
  %v1934 = vpop.f32.mrf.mxu0
  %v1935 = vadd.f32 %v1828, %v1934
  %1936 = vmatmul.f32.gmra.mxu0 %v1365
  %v1937 = vpop.f32.mrf.mxu0
  %v1938 = vadd.f32 %v1831, %v1937
  %1939 = vmatmul.f32.gmra.mxu0 %v1372
  %v1940 = vpop.f32.mrf.mxu0
  %v1941 = vadd.f32 %v1834, %v1940
  %1942 = vmatmul.f32.gmra.mxu0 %v1379
  %v1943 = vpop.f32.mrf.mxu0
  %v1944 = vadd.f32 %v1837, %v1943
  %1945 = vmatmul.f32.gmra.mxu0 %v1386
  %v1946 = vpop.f32.mrf.mxu0
  %v1947 = vadd.f32 %v1840, %v1946
  %1948 = vmatmul.f32.gmra.mxu0 %v1393
  %v1949 = vpop.f32.mrf.mxu0
  %v1950 = vadd.f32 %v1843, %v1949
  %1951 = vmatmul.f32.gmra.mxu0 %v1400
  %v1952 = vpop.f32.mrf.mxu0
  %v1953 = vadd.f32 %v1846, %v1952
  %1954 = vmatmul.f32.gmra.mxu0 %v1407
  %v1955 = vpop.f32.mrf.mxu0
  %v1956 = vadd.f32 %v1849, %v1955
  %1957 = vmatmul.f32.gmra.mxu0 %v1414
  %v1958 = vpop.f32.mrf.mxu0
  %v1959 = vadd.f32 %v1852, %v1958
  %1960 = vmatmul.f32.gmra.mxu0 %v1421
  %v1961 = vpop.f32.mrf.mxu0
  %v1962 = vadd.f32 %v1855, %v1961
  %1963 = vmatmul.f32.gmra.mxu0 %v1428
  %v1964 = vpop.f32.mrf.mxu0
  %v1965 = vadd.f32 %v1858, %v1964
  %1966 = vmatmul.f32.gmra.mxu0 %v1435
  %v1967 = vpop.f32.mrf.mxu0
  %v1968 = vadd.f32 %v1861, %v1967
  %1969 = vmatmul.f32.gmra.mxu0 %v1442
  %v1970 = vpop.f32.mrf.mxu0
  %v1971 = vadd.f32 %v1864, %v1970
  %1972 = vmatmul.f32.gmra.mxu0 %v1449
  %v1973 = vpop.f32.mrf.mxu0
  %v1974 = vadd.f32 %v1867, %v1973
  %1975 = vmatmul.f32.gmra.mxu0 %v1456
  %v1976 = vpop.f32.mrf.mxu0
  %v1977 = vadd.f32 %v1870, %v1976
  %1978 = vmatmul.f32.gmra.mxu0 %v1463
  %v1979 = vpop.f32.mrf.mxu0
  %v1980 = vadd.f32 %v1873, %v1979
  %1981 = vmatmul.f32.gmra.mxu0 %v1470
  %v1982 = vpop.f32.mrf.mxu0
  %v1983 = vadd.f32 %v1876, %v1982
  %1984 = vmatmul.f32.gmra.mxu0 %v1477
  %v1985 = vpop.f32.mrf.mxu0
  %v1986 = vadd.f32 %v1879, %v1985
  %1987 = vmatmul.f32.gmra.mxu0 %v1484
  %v1988 = vpop.f32.mrf.mxu0
  %v1989 = vadd.f32 %v1882, %v1988
  %1990 = vmatmul.f32.gmra.mxu0 %v1491
  %v1991 = vpop.f32.mrf.mxu0
  %v1992 = vadd.f32 %v1885, %v1991
  %1993 = vmatmul.f32.gmra.mxu0 %v1498
  %v1994 = vpop.f32.mrf.mxu0
  %v1995 = vadd.f32 %v1888, %v1994
  %1996 = vmatmul.f32.gmra.mxu0 %v1505
  %v1997 = vpop.f32.mrf.mxu0
  %v1998 = vadd.f32 %v1891, %v1997
  %1999 = vmatmul.f32.gmra.mxu0 %v1512
  %v2000 = vpop.f32.mrf.mxu0
  %v2001 = vadd.f32 %v1894, %v2000
  %2002 = vdwg.mxu0
  %2003 = vmatpush.msra.mxu0 %v992
  %2004 = vmatpush.msra.mxu0 %v991
  %2005 = vmatpush.msra.mxu0 %v990
  %2006 = vmatpush.msra.mxu0 %v989
  %2007 = vmatpush.msra.mxu0 %v988
  %2008 = vmatpush.msra.mxu0 %v987
  %2009 = vmatpush.msra.mxu0 %v986
  %2010 = vmatpush.msra.mxu0 %v985
  %2011 = vmatpush.msra.mxu0 %v984
  %2012 = vmatpush.msra.mxu0 %v983
  %2013 = vmatpush.msra.mxu0 %v982
  %2014 = vmatpush.msra.mxu0 %v981
  %2015 = vmatpush.msra.mxu0 %v980
  %2016 = vmatpush.msra.mxu0 %v979
  %2017 = vmatpush.msra.mxu0 %v978
  %2018 = vmatpush.msra.mxu0 %v778
  %2019 = vmatmul.f32.gmra.mxu0 %v1310
  %v2020 = vpop.f32.mrf.mxu0
  %v2021 = vadd.f32 %v1914, %v2020
  %2022 = vmatmul.f32.gmra.mxu0 %v1317
  %v2023 = vpop.f32.mrf.mxu0
  %v2024 = vadd.f32 %v1917, %v2023
  %2025 = vmatmul.f32.gmra.mxu0 %v1324
  %v2026 = vpop.f32.mrf.mxu0
  %v2027 = vadd.f32 %v1920, %v2026
  %2028 = vmatmul.f32.gmra.mxu0 %v1331
  %v2029 = vpop.f32.mrf.mxu0
  %v2030 = vadd.f32 %v1923, %v2029
  %2031 = vmatmul.f32.gmra.mxu0 %v1338
  %v2032 = vpop.f32.mrf.mxu0
  %v2033 = vadd.f32 %v1926, %v2032
  %2034 = vmatmul.f32.gmra.mxu0 %v1345
  %v2035 = vpop.f32.mrf.mxu0
  %v2036 = vadd.f32 %v1929, %v2035
  %2037 = vmatmul.f32.gmra.mxu0 %v1352
  %v2038 = vpop.f32.mrf.mxu0
  %v2039 = vadd.f32 %v1932, %v2038
  %2040 = vmatmul.f32.gmra.mxu0 %v1359
  %v2041 = vpop.f32.mrf.mxu0
  %v2042 = vadd.f32 %v1935, %v2041
  %2043 = vmatmul.f32.gmra.mxu0 %v1366
  %v2044 = vpop.f32.mrf.mxu0
  %v2045 = vadd.f32 %v1938, %v2044
  %2046 = vmatmul.f32.gmra.mxu0 %v1373
  %v2047 = vpop.f32.mrf.mxu0
  %v2048 = vadd.f32 %v1941, %v2047
  %2049 = vmatmul.f32.gmra.mxu0 %v1380
  %v2050 = vpop.f32.mrf.mxu0
  %v2051 = vadd.f32 %v1944, %v2050
  %2052 = vmatmul.f32.gmra.mxu0 %v1387
  %v2053 = vpop.f32.mrf.mxu0
  %v2054 = vadd.f32 %v1947, %v2053
  %2055 = vmatmul.f32.gmra.mxu0 %v1394
  %v2056 = vpop.f32.mrf.mxu0
  %v2057 = vadd.f32 %v1950, %v2056
  %2058 = vmatmul.f32.gmra.mxu0 %v1401
  %v2059 = vpop.f32.mrf.mxu0
  %v2060 = vadd.f32 %v1953, %v2059
  %2061 = vmatmul.f32.gmra.mxu0 %v1408
  %v2062 = vpop.f32.mrf.mxu0
  %v2063 = vadd.f32 %v1956, %v2062
  %2064 = vmatmul.f32.gmra.mxu0 %v1415
  %v2065 = vpop.f32.mrf.mxu0
  %v2066 = vadd.f32 %v1959, %v2065
  %2067 = vmatmul.f32.gmra.mxu0 %v1422
  %v2068 = vpop.f32.mrf.mxu0
  %v2069 = vadd.f32 %v1962, %v2068
  %2070 = vmatmul.f32.gmra.mxu0 %v1429
  %v2071 = vpop.f32.mrf.mxu0
  %v2072 = vadd.f32 %v1965, %v2071
  %2073 = vmatmul.f32.gmra.mxu0 %v1436
  %v2074 = vpop.f32.mrf.mxu0
  %v2075 = vadd.f32 %v1968, %v2074
  %2076 = vmatmul.f32.gmra.mxu0 %v1443
  %v2077 = vpop.f32.mrf.mxu0
  %v2078 = vadd.f32 %v1971, %v2077
  %2079 = vmatmul.f32.gmra.mxu0 %v1450
  %v2080 = vpop.f32.mrf.mxu0
  %v2081 = vadd.f32 %v1974, %v2080
  %2082 = vmatmul.f32.gmra.mxu0 %v1457
  %v2083 = vpop.f32.mrf.mxu0
  %v2084 = vadd.f32 %v1977, %v2083
  %2085 = vmatmul.f32.gmra.mxu0 %v1464
  %v2086 = vpop.f32.mrf.mxu0
  %v2087 = vadd.f32 %v1980, %v2086
  %2088 = vmatmul.f32.gmra.mxu0 %v1471
  %v2089 = vpop.f32.mrf.mxu0
  %v2090 = vadd.f32 %v1983, %v2089
  %2091 = vmatmul.f32.gmra.mxu0 %v1478
  %v2092 = vpop.f32.mrf.mxu0
  %v2093 = vadd.f32 %v1986, %v2092
  %2094 = vmatmul.f32.gmra.mxu0 %v1485
  %v2095 = vpop.f32.mrf.mxu0
  %v2096 = vadd.f32 %v1989, %v2095
  %2097 = vmatmul.f32.gmra.mxu0 %v1492
  %v2098 = vpop.f32.mrf.mxu0
  %v2099 = vadd.f32 %v1992, %v2098
  %2100 = vmatmul.f32.gmra.mxu0 %v1499
  %v2101 = vpop.f32.mrf.mxu0
  %v2102 = vadd.f32 %v1995, %v2101
  %2103 = vmatmul.f32.gmra.mxu0 %v1506
  %v2104 = vpop.f32.mrf.mxu0
  %v2105 = vadd.f32 %v1998, %v2104
  %2106 = vmatmul.f32.gmra.mxu0 %v1513
  %v2107 = vpop.f32.mrf.mxu0
  %v2108 = vadd.f32 %v2001, %v2107
  %2109 = vdwg.mxu0
  %2110 = vmatpush.msra.mxu0 %v1008
  %2111 = vmatpush.msra.mxu0 %v1007
  %2112 = vmatpush.msra.mxu0 %v1006
  %2113 = vmatpush.msra.mxu0 %v1005
  %2114 = vmatpush.msra.mxu0 %v1004
  %2115 = vmatpush.msra.mxu0 %v1003
  %2116 = vmatpush.msra.mxu0 %v1002
  %2117 = vmatpush.msra.mxu0 %v1001
  %2118 = vmatpush.msra.mxu0 %v1000
  %2119 = vmatpush.msra.mxu0 %v999
  %2120 = vmatpush.msra.mxu0 %v998
  %2121 = vmatpush.msra.mxu0 %v997
  %2122 = vmatpush.msra.mxu0 %v996
  %2123 = vmatpush.msra.mxu0 %v995
  %2124 = vmatpush.msra.mxu0 %v994
  %2125 = vmatpush.msra.mxu0 %v993
  %2126 = vmatmul.f32.gmra.mxu0 %v1311
  %v2127 = vpop.f32.mrf.mxu0
  %v2128 = vadd.f32 %v2021, %v2127
  %2129 = vmatmul.f32.gmra.mxu0 %v1318
  %v2130 = vpop.f32.mrf.mxu0
  %v2131 = vadd.f32 %v2024, %v2130
  %2132 = vmatmul.f32.gmra.mxu0 %v1325
  %v2133 = vpop.f32.mrf.mxu0
  %v2134 = vadd.f32 %v2027, %v2133
  %2135 = vmatmul.f32.gmra.mxu0 %v1332
  %v2136 = vpop.f32.mrf.mxu0
  %v2137 = vadd.f32 %v2030, %v2136
  %2138 = vmatmul.f32.gmra.mxu0 %v1339
  %v2139 = vpop.f32.mrf.mxu0
  %v2140 = vadd.f32 %v2033, %v2139
  %2141 = vmatmul.f32.gmra.mxu0 %v1346
  %v2142 = vpop.f32.mrf.mxu0
  %v2143 = vadd.f32 %v2036, %v2142
  %2144 = vmatmul.f32.gmra.mxu0 %v1353
  %v2145 = vpop.f32.mrf.mxu0
  %v2146 = vadd.f32 %v2039, %v2145
  %2147 = vmatmul.f32.gmra.mxu0 %v1360
  %v2148 = vpop.f32.mrf.mxu0
  %v2149 = vadd.f32 %v2042, %v2148
  %2150 = vmatmul.f32.gmra.mxu0 %v1367
  %v2151 = vpop.f32.mrf.mxu0
  %v2152 = vadd.f32 %v2045, %v2151
  %2153 = vmatmul.f32.gmra.mxu0 %v1374
  %v2154 = vpop.f32.mrf.mxu0
  %v2155 = vadd.f32 %v2048, %v2154
  %2156 = vmatmul.f32.gmra.mxu0 %v1381
  %v2157 = vpop.f32.mrf.mxu0
  %v2158 = vadd.f32 %v2051, %v2157
  %2159 = vmatmul.f32.gmra.mxu0 %v1388
  %v2160 = vpop.f32.mrf.mxu0
  %v2161 = vadd.f32 %v2054, %v2160
  %2162 = vmatmul.f32.gmra.mxu0 %v1395
  %v2163 = vpop.f32.mrf.mxu0
  %v2164 = vadd.f32 %v2057, %v2163
  %2165 = vmatmul.f32.gmra.mxu0 %v1402
  %v2166 = vpop.f32.mrf.mxu0
  %v2167 = vadd.f32 %v2060, %v2166
  %2168 = vmatmul.f32.gmra.mxu0 %v1409
  %v2169 = vpop.f32.mrf.mxu0
  %v2170 = vadd.f32 %v2063, %v2169
  %2171 = vmatmul.f32.gmra.mxu0 %v1416
  %v2172 = vpop.f32.mrf.mxu0
  %v2173 = vadd.f32 %v2066, %v2172
  %2174 = vmatmul.f32.gmra.mxu0 %v1423
  %v2175 = vpop.f32.mrf.mxu0
  %v2176 = vadd.f32 %v2069, %v2175
  %2177 = vmatmul.f32.gmra.mxu0 %v1430
  %v2178 = vpop.f32.mrf.mxu0
  %v2179 = vadd.f32 %v2072, %v2178
  %2180 = vmatmul.f32.gmra.mxu0 %v1437
  %v2181 = vpop.f32.mrf.mxu0
  %v2182 = vadd.f32 %v2075, %v2181
  %2183 = vmatmul.f32.gmra.mxu0 %v1444
  %v2184 = vpop.f32.mrf.mxu0
  %v2185 = vadd.f32 %v2078, %v2184
  %2186 = vmatmul.f32.gmra.mxu0 %v1451
  %v2187 = vpop.f32.mrf.mxu0
  %v2188 = vadd.f32 %v2081, %v2187
  %2189 = vmatmul.f32.gmra.mxu0 %v1458
  %v2190 = vpop.f32.mrf.mxu0
  %v2191 = vadd.f32 %v2084, %v2190
  %2192 = vmatmul.f32.gmra.mxu0 %v1465
  %v2193 = vpop.f32.mrf.mxu0
  %v2194 = vadd.f32 %v2087, %v2193
  %2195 = vmatmul.f32.gmra.mxu0 %v1472
  %v2196 = vpop.f32.mrf.mxu0
  %v2197 = vadd.f32 %v2090, %v2196
  %2198 = vmatmul.f32.gmra.mxu0 %v1479
  %v2199 = vpop.f32.mrf.mxu0
  %v2200 = vadd.f32 %v2093, %v2199
  %2201 = vmatmul.f32.gmra.mxu0 %v1486
  %v2202 = vpop.f32.mrf.mxu0
  %v2203 = vadd.f32 %v2096, %v2202
  %2204 = vmatmul.f32.gmra.mxu0 %v1493
  %v2205 = vpop.f32.mrf.mxu0
  %v2206 = vadd.f32 %v2099, %v2205
  %2207 = vmatmul.f32.gmra.mxu0 %v1500
  %v2208 = vpop.f32.mrf.mxu0
  %v2209 = vadd.f32 %v2102, %v2208
  %2210 = vmatmul.f32.gmra.mxu0 %v1507
  %v2211 = vpop.f32.mrf.mxu0
  %v2212 = vadd.f32 %v2105, %v2211
  %2213 = vmatmul.f32.gmra.mxu0 %v1514
  %v2214 = vpop.f32.mrf.mxu0
  %v2215 = vadd.f32 %v2108, %v2214
  %2216 = vdwg.mxu0
  %2217 = vmatpush.msra.mxu0 %v1222
  %2218 = vmatpush.msra.mxu0 %v1221
  %2219 = vmatpush.msra.mxu0 %v1220
  %2220 = vmatpush.msra.mxu0 %v1219
  %2221 = vmatpush.msra.mxu0 %v1218
  %2222 = vmatpush.msra.mxu0 %v1217
  %2223 = vmatpush.msra.mxu0 %v1216
  %2224 = vmatpush.msra.mxu0 %v1215
  %2225 = vmatpush.msra.mxu0 %v1214
  %2226 = vmatpush.msra.mxu0 %v1213
  %2227 = vmatpush.msra.mxu0 %v1212
  %2228 = vmatpush.msra.mxu0 %v1211
  %2229 = vmatpush.msra.mxu0 %v1210
  %2230 = vmatpush.msra.mxu0 %v1209
  %2231 = vmatpush.msra.mxu0 %v1010
  %2232 = vmatpush.msra.mxu0 %v1009
  %2233 = vmatmul.f32.gmra.mxu0 %v1312
  %v2234 = vpop.f32.mrf.mxu0
  %v2235 = vadd.f32 %v2128, %v2234
  %2236 = vmatmul.f32.gmra.mxu0 %v1319
  %v2237 = vpop.f32.mrf.mxu0
  %v2238 = vadd.f32 %v2131, %v2237
  %2239 = vmatmul.f32.gmra.mxu0 %v1326
  %v2240 = vpop.f32.mrf.mxu0
  %v2241 = vadd.f32 %v2134, %v2240
  %2242 = vmatmul.f32.gmra.mxu0 %v1333
  %v2243 = vpop.f32.mrf.mxu0
  %v2244 = vadd.f32 %v2137, %v2243
  %2245 = vmatmul.f32.gmra.mxu0 %v1340
  %v2246 = vpop.f32.mrf.mxu0
  %v2247 = vadd.f32 %v2140, %v2246
  %2248 = vmatmul.f32.gmra.mxu0 %v1347
  %v2249 = vpop.f32.mrf.mxu0
  %v2250 = vadd.f32 %v2143, %v2249
  %2251 = vmatmul.f32.gmra.mxu0 %v1354
  %v2252 = vpop.f32.mrf.mxu0
  %v2253 = vadd.f32 %v2146, %v2252
  %2254 = vmatmul.f32.gmra.mxu0 %v1361
  %v2255 = vpop.f32.mrf.mxu0
  %v2256 = vadd.f32 %v2149, %v2255
  %2257 = vmatmul.f32.gmra.mxu0 %v1368
  %v2258 = vpop.f32.mrf.mxu0
  %v2259 = vadd.f32 %v2152, %v2258
  %2260 = vmatmul.f32.gmra.mxu0 %v1375
  %v2261 = vpop.f32.mrf.mxu0
  %v2262 = vadd.f32 %v2155, %v2261
  %2263 = vmatmul.f32.gmra.mxu0 %v1382
  %v2264 = vpop.f32.mrf.mxu0
  %v2265 = vadd.f32 %v2158, %v2264
  %2266 = vmatmul.f32.gmra.mxu0 %v1389
  %v2267 = vpop.f32.mrf.mxu0
  %v2268 = vadd.f32 %v2161, %v2267
  %2269 = vmatmul.f32.gmra.mxu0 %v1396
  %v2270 = vpop.f32.mrf.mxu0
  %v2271 = vadd.f32 %v2164, %v2270
  %2272 = vmatmul.f32.gmra.mxu0 %v1403
  %v2273 = vpop.f32.mrf.mxu0
  %v2274 = vadd.f32 %v2167, %v2273
  %2275 = vmatmul.f32.gmra.mxu0 %v1410
  %v2276 = vpop.f32.mrf.mxu0
  %v2277 = vadd.f32 %v2170, %v2276
  %2278 = vmatmul.f32.gmra.mxu0 %v1417
  %v2279 = vpop.f32.mrf.mxu0
  %v2280 = vadd.f32 %v2173, %v2279
  %2281 = vmatmul.f32.gmra.mxu0 %v1424
  %v2282 = vpop.f32.mrf.mxu0
  %v2283 = vadd.f32 %v2176, %v2282
  %2284 = vmatmul.f32.gmra.mxu0 %v1431
  %v2285 = vpop.f32.mrf.mxu0
  %v2286 = vadd.f32 %v2179, %v2285
  %2287 = vmatmul.f32.gmra.mxu0 %v1438
  %v2288 = vpop.f32.mrf.mxu0
  %v2289 = vadd.f32 %v2182, %v2288
  %2290 = vmatmul.f32.gmra.mxu0 %v1445
  %v2291 = vpop.f32.mrf.mxu0
  %v2292 = vadd.f32 %v2185, %v2291
  %2293 = vmatmul.f32.gmra.mxu0 %v1452
  %v2294 = vpop.f32.mrf.mxu0
  %v2295 = vadd.f32 %v2188, %v2294
  %2296 = vmatmul.f32.gmra.mxu0 %v1459
  %v2297 = vpop.f32.mrf.mxu0
  %v2298 = vadd.f32 %v2191, %v2297
  %2299 = vmatmul.f32.gmra.mxu0 %v1466
  %v2300 = vpop.f32.mrf.mxu0
  %v2301 = vadd.f32 %v2194, %v2300
  %2302 = vmatmul.f32.gmra.mxu0 %v1473
  %v2303 = vpop.f32.mrf.mxu0
  %v2304 = vadd.f32 %v2197, %v2303
  %2305 = vmatmul.f32.gmra.mxu0 %v1480
  %v2306 = vpop.f32.mrf.mxu0
  %v2307 = vadd.f32 %v2200, %v2306
  %2308 = vmatmul.f32.gmra.mxu0 %v1487
  %v2309 = vpop.f32.mrf.mxu0
  %v2310 = vadd.f32 %v2203, %v2309
  %2311 = vmatmul.f32.gmra.mxu0 %v1494
  %v2312 = vpop.f32.mrf.mxu0
  %v2313 = vadd.f32 %v2206, %v2312
  %2314 = vmatmul.f32.gmra.mxu0 %v1501
  %v2315 = vpop.f32.mrf.mxu0
  %v2316 = vadd.f32 %v2209, %v2315
  %2317 = vmatmul.f32.gmra.mxu0 %v1508
  %v2318 = vpop.f32.mrf.mxu0
  %v2319 = vadd.f32 %v2212, %v2318
  %2320 = vmatmul.f32.gmra.mxu0 %v1515
  %v2321 = vpop.f32.mrf.mxu0
  %v2322 = vadd.f32 %v2215, %v2321
  %2323 = vdwg.mxu0
  %2324 = vmatpush.msra.mxu0 %v1238
  %2325 = vmatpush.msra.mxu0 %v1237
  %2326 = vmatpush.msra.mxu0 %v1236
  %2327 = vmatpush.msra.mxu0 %v1235
  %2328 = vmatpush.msra.mxu0 %v1234
  %2329 = vmatpush.msra.mxu0 %v1233
  %2330 = vmatpush.msra.mxu0 %v1232
  %2331 = vmatpush.msra.mxu0 %v1231
  %2332 = vmatpush.msra.mxu0 %v1230
  %2333 = vmatpush.msra.mxu0 %v1229
  %2334 = vmatpush.msra.mxu0 %v1228
  %2335 = vmatpush.msra.mxu0 %v1227
  %2336 = vmatpush.msra.mxu0 %v1226
  %2337 = vmatpush.msra.mxu0 %v1225
  %2338 = vmatpush.msra.mxu0 %v1224
  %2339 = vmatpush.msra.mxu0 %v1223
  %2340 = vmatmul.f32.gmra.mxu0 %v1313
  %v2341 = vpop.f32.mrf.mxu0
  %v2342 = vadd.f32 %v2235, %v2341
  %2343 = vmatmul.f32.gmra.mxu0 %v1320
  %v2344 = vpop.f32.mrf.mxu0
  %v2345 = vadd.f32 %v2238, %v2344
  %2346 = vmatmul.f32.gmra.mxu0 %v1327
  %v2347 = vpop.f32.mrf.mxu0
  %v2348 = vadd.f32 %v2241, %v2347
  %2349 = vmatmul.f32.gmra.mxu0 %v1334
  %v2350 = vpop.f32.mrf.mxu0
  %v2351 = vadd.f32 %v2244, %v2350
  %2352 = vmatmul.f32.gmra.mxu0 %v1341
  %v2353 = vpop.f32.mrf.mxu0
  %v2354 = vadd.f32 %v2247, %v2353
  %2355 = vmatmul.f32.gmra.mxu0 %v1348
  %v2356 = vpop.f32.mrf.mxu0
  %v2357 = vadd.f32 %v2250, %v2356
  %2358 = vmatmul.f32.gmra.mxu0 %v1355
  %v2359 = vpop.f32.mrf.mxu0
  %v2360 = vadd.f32 %v2253, %v2359
  %2361 = vmatmul.f32.gmra.mxu0 %v1362
  %v2362 = vpop.f32.mrf.mxu0
  %v2363 = vadd.f32 %v2256, %v2362
  %2364 = vmatmul.f32.gmra.mxu0 %v1369
  %v2365 = vpop.f32.mrf.mxu0
  %v2366 = vadd.f32 %v2259, %v2365
  %2367 = vmatmul.f32.gmra.mxu0 %v1376
  %v2368 = vpop.f32.mrf.mxu0
  %v2369 = vadd.f32 %v2262, %v2368
  %2370 = vmatmul.f32.gmra.mxu0 %v1383
  %v2371 = vpop.f32.mrf.mxu0
  %v2372 = vadd.f32 %v2265, %v2371
  %2373 = vmatmul.f32.gmra.mxu0 %v1390
  %v2374 = vpop.f32.mrf.mxu0
  %v2375 = vadd.f32 %v2268, %v2374
  %2376 = vmatmul.f32.gmra.mxu0 %v1397
  %v2377 = vpop.f32.mrf.mxu0
  %v2378 = vadd.f32 %v2271, %v2377
  %2379 = vmatmul.f32.gmra.mxu0 %v1404
  %v2380 = vpop.f32.mrf.mxu0
  %v2381 = vadd.f32 %v2274, %v2380
  %2382 = vmatmul.f32.gmra.mxu0 %v1411
  %v2383 = vpop.f32.mrf.mxu0
  %v2384 = vadd.f32 %v2277, %v2383
  %2385 = vmatmul.f32.gmra.mxu0 %v1418
  %v2386 = vpop.f32.mrf.mxu0
  %v2387 = vadd.f32 %v2280, %v2386
  %2388 = vmatmul.f32.gmra.mxu0 %v1425
  %v2389 = vpop.f32.mrf.mxu0
  %v2390 = vadd.f32 %v2283, %v2389
  %2391 = vmatmul.f32.gmra.mxu0 %v1432
  %v2392 = vpop.f32.mrf.mxu0
  %v2393 = vadd.f32 %v2286, %v2392
  %2394 = vmatmul.f32.gmra.mxu0 %v1439
  %v2395 = vpop.f32.mrf.mxu0
  %v2396 = vadd.f32 %v2289, %v2395
  %2397 = vmatmul.f32.gmra.mxu0 %v1446
  %v2398 = vpop.f32.mrf.mxu0
  %v2399 = vadd.f32 %v2292, %v2398
  %2400 = vmatmul.f32.gmra.mxu0 %v1453
  %v2401 = vpop.f32.mrf.mxu0
  %v2402 = vadd.f32 %v2295, %v2401
  %2403 = vmatmul.f32.gmra.mxu0 %v1460
  %v2404 = vpop.f32.mrf.mxu0
  %v2405 = vadd.f32 %v2298, %v2404
  %2406 = vmatmul.f32.gmra.mxu0 %v1467
  %v2407 = vpop.f32.mrf.mxu0
  %v2408 = vadd.f32 %v2301, %v2407
  %2409 = vmatmul.f32.gmra.mxu0 %v1474
  %v2410 = vpop.f32.mrf.mxu0
  %v2411 = vadd.f32 %v2304, %v2410
  %2412 = vmatmul.f32.gmra.mxu0 %v1481
  %v2413 = vpop.f32.mrf.mxu0
  %v2414 = vadd.f32 %v2307, %v2413
  %2415 = vmatmul.f32.gmra.mxu0 %v1488
  %v2416 = vpop.f32.mrf.mxu0
  %v2417 = vadd.f32 %v2310, %v2416
  %2418 = vmatmul.f32.gmra.mxu0 %v1495
  %v2419 = vpop.f32.mrf.mxu0
  %v2420 = vadd.f32 %v2313, %v2419
  %2421 = vmatmul.f32.gmra.mxu0 %v1502
  %v2422 = vpop.f32.mrf.mxu0
  %v2423 = vadd.f32 %v2316, %v2422
  %2424 = vmatmul.f32.gmra.mxu0 %v1509
  %v2425 = vpop.f32.mrf.mxu0
  %v2426 = vadd.f32 %v2319, %v2425
  %2427 = vmatmul.f32.gmra.mxu0 %v1516
  %v2428 = vpop.f32.mrf.mxu0
  %v2429 = vadd.f32 %v2322, %v2428
  %2430 = vdwg.mxu0
  %2431 = vmatpush.msra.mxu0 0.0
  %2432 = vmatpush.msra.mxu0 0.0
  %2433 = vmatpush.msra.mxu0 0.0
  %2434 = vmatpush.msra.mxu0 0.0
  %2435 = vmatpush.msra.mxu0 0.0
  %2436 = vmatpush.msra.mxu0 0.0
  %2437 = vmatpush.msra.mxu0 0.0
  %2438 = vmatpush.msra.mxu0 0.0
  %2439 = vmatpush.msra.mxu0 0.0
  %2440 = vmatpush.msra.mxu0 0.0
  %2441 = vmatpush.msra.mxu0 0.0
  %2442 = vmatpush.msra.mxu0 0.0
  %2443 = vmatpush.msra.mxu0 0.0
  %2444 = vmatpush.msra.mxu0 %v1241
  %2445 = vmatpush.msra.mxu0 %v1240
  %2446 = vmatpush.msra.mxu0 %v1239
  %2447 = vmatmul.f32.gmra.mxu0 %v1700
  %v2448 = vpop.f32.mrf.mxu0
  %v2449 = vadd.f32 %v2342, %v2448
  %2450 = vmatmul.f32.gmra.mxu0 %v1703
  %v2451 = vpop.f32.mrf.mxu0
  %v2452 = vadd.f32 %v2345, %v2451
  %2453 = vmatmul.f32.gmra.mxu0 %v1706
  %v2454 = vpop.f32.mrf.mxu0
  %v2455 = vadd.f32 %v2348, %v2454
  %2456 = vmatmul.f32.gmra.mxu0 %v1709
  %v2457 = vpop.f32.mrf.mxu0
  %v2458 = vadd.f32 %v2351, %v2457
  %2459 = vmatmul.f32.gmra.mxu0 %v1712
  %v2460 = vpop.f32.mrf.mxu0
  %v2461 = vadd.f32 %v2354, %v2460
  %2462 = vmatmul.f32.gmra.mxu0 %v1715
  %v2463 = vpop.f32.mrf.mxu0
  %v2464 = vadd.f32 %v2357, %v2463
  %2465 = vmatmul.f32.gmra.mxu0 %v1718
  %v2466 = vpop.f32.mrf.mxu0
  %v2467 = vadd.f32 %v2360, %v2466
  %2468 = vmatmul.f32.gmra.mxu0 %v1721
  %v2469 = vpop.f32.mrf.mxu0
  %v2470 = vadd.f32 %v2363, %v2469
  %2471 = vmatmul.f32.gmra.mxu0 %v1724
  %v2472 = vpop.f32.mrf.mxu0
  %v2473 = vadd.f32 %v2366, %v2472
  %2474 = vmatmul.f32.gmra.mxu0 %v1727
  %v2475 = vpop.f32.mrf.mxu0
  %v2476 = vadd.f32 %v2369, %v2475
  %2477 = vmatmul.f32.gmra.mxu0 %v1730
  %v2478 = vpop.f32.mrf.mxu0
  %v2479 = vadd.f32 %v2372, %v2478
  %2480 = vmatmul.f32.gmra.mxu0 %v1733
  %v2481 = vpop.f32.mrf.mxu0
  %v2482 = vadd.f32 %v2375, %v2481
  %2483 = vmatmul.f32.gmra.mxu0 %v1736
  %v2484 = vpop.f32.mrf.mxu0
  %v2485 = vadd.f32 %v2378, %v2484
  %2486 = vmatmul.f32.gmra.mxu0 %v1739
  %v2487 = vpop.f32.mrf.mxu0
  %v2488 = vadd.f32 %v2381, %v2487
  %2489 = vmatmul.f32.gmra.mxu0 %v1742
  %v2490 = vpop.f32.mrf.mxu0
  %v2491 = vadd.f32 %v2384, %v2490
  %2492 = vmatmul.f32.gmra.mxu0 %v1745
  %v2493 = vpop.f32.mrf.mxu0
  %v2494 = vadd.f32 %v2387, %v2493
  %2495 = vmatmul.f32.gmra.mxu0 %v1748
  %v2496 = vpop.f32.mrf.mxu0
  %v2497 = vadd.f32 %v2390, %v2496
  %2498 = vmatmul.f32.gmra.mxu0 %v1751
  %v2499 = vpop.f32.mrf.mxu0
  %v2500 = vadd.f32 %v2393, %v2499
  %2501 = vmatmul.f32.gmra.mxu0 %v1754
  %v2502 = vpop.f32.mrf.mxu0
  %v2503 = vadd.f32 %v2396, %v2502
  %2504 = vmatmul.f32.gmra.mxu0 %v1757
  %v2505 = vpop.f32.mrf.mxu0
  %v2506 = vadd.f32 %v2399, %v2505
  %2507 = vmatmul.f32.gmra.mxu0 %v1760
  %v2508 = vpop.f32.mrf.mxu0
  %v2509 = vadd.f32 %v2402, %v2508
  %2510 = vmatmul.f32.gmra.mxu0 %v1763
  %v2511 = vpop.f32.mrf.mxu0
  %v2512 = vadd.f32 %v2405, %v2511
  %2513 = vmatmul.f32.gmra.mxu0 %v1766
  %v2514 = vpop.f32.mrf.mxu0
  %v2515 = vadd.f32 %v2408, %v2514
  %2516 = vmatmul.f32.gmra.mxu0 %v1769
  %v2517 = vpop.f32.mrf.mxu0
  %v2518 = vadd.f32 %v2411, %v2517
  %2519 = vmatmul.f32.gmra.mxu0 %v1772
  %v2520 = vpop.f32.mrf.mxu0
  %v2521 = vadd.f32 %v2414, %v2520
  %2522 = vmatmul.f32.gmra.mxu0 %v1775
  %v2523 = vpop.f32.mrf.mxu0
  %v2524 = vadd.f32 %v2417, %v2523
  %2525 = vmatmul.f32.gmra.mxu0 %v1778
  %v2526 = vpop.f32.mrf.mxu0
  %v2527 = vadd.f32 %v2420, %v2526
  %2528 = vmatmul.f32.gmra.mxu0 %v1781
  %v2529 = vpop.f32.mrf.mxu0
  %v2530 = vadd.f32 %v2423, %v2529
  %2531 = vmatmul.f32.gmra.mxu0 %v1784
  %v2532 = vpop.f32.mrf.mxu0
  %v2533 = vadd.f32 %v2426, %v2532
  %2534 = vmatmul.f32.gmra.mxu0 %v1787
  %v2535 = vpop.f32.mrf.mxu0
  %v2536 = vadd.f32 %v2429, %v2535
  %2537 = vdwg.mxu0
  %2538 = vmatpush.msra.mxu0 %v745
  %2539 = vmatpush.msra.mxu0 %v743
  %2540 = vmatpush.msra.mxu0 %v741
  %2541 = vmatpush.msra.mxu0 %v739
  %2542 = vmatpush.msra.mxu0 %v737
  %2543 = vmatpush.msra.mxu0 %v735
  %2544 = vmatpush.msra.mxu0 %v733
  %2545 = vmatpush.msra.mxu0 %v731
  %2546 = vmatpush.msra.mxu0 %v729
  %2547 = vmatpush.msra.mxu0 %v727
  %2548 = vmatpush.msra.mxu0 %v725
  %2549 = vmatpush.msra.mxu0 %v723
  %2550 = vmatpush.msra.mxu0 %v721
  %2551 = vmatpush.msra.mxu0 %v719
  %2552 = vmatpush.msra.mxu0 %v717
  %2553 = vmatpush.msra.mxu0 %v715
  %2554 = vmatmul.f32.gmra.mxu0 %v1308
  %v2555 = vpop.f32.mrf.mxu0
  %v2556 = vadd.f32 %v1551, %v2555
  %2557 = vmatmul.f32.gmra.mxu0 %v1315
  %v2558 = vpop.f32.mrf.mxu0
  %v2559 = vadd.f32 %v1556, %v2558
  %2560 = vmatmul.f32.gmra.mxu0 %v1322
  %v2561 = vpop.f32.mrf.mxu0
  %v2562 = vadd.f32 %v1561, %v2561
  %2563 = vmatmul.f32.gmra.mxu0 %v1329
  %v2564 = vpop.f32.mrf.mxu0
  %v2565 = vadd.f32 %v1566, %v2564
  %2566 = vmatmul.f32.gmra.mxu0 %v1336
  %v2567 = vpop.f32.mrf.mxu0
  %v2568 = vadd.f32 %v1571, %v2567
  %2569 = vmatmul.f32.gmra.mxu0 %v1343
  %v2570 = vpop.f32.mrf.mxu0
  %v2571 = vadd.f32 %v1576, %v2570
  %2572 = vmatmul.f32.gmra.mxu0 %v1350
  %v2573 = vpop.f32.mrf.mxu0
  %v2574 = vadd.f32 %v1581, %v2573
  %2575 = vmatmul.f32.gmra.mxu0 %v1357
  %v2576 = vpop.f32.mrf.mxu0
  %v2577 = vadd.f32 %v1586, %v2576
  %2578 = vmatmul.f32.gmra.mxu0 %v1364
  %v2579 = vpop.f32.mrf.mxu0
  %v2580 = vadd.f32 %v1591, %v2579
  %2581 = vmatmul.f32.gmra.mxu0 %v1371
  %v2582 = vpop.f32.mrf.mxu0
  %v2583 = vadd.f32 %v1596, %v2582
  %2584 = vmatmul.f32.gmra.mxu0 %v1378
  %v2585 = vpop.f32.mrf.mxu0
  %v2586 = vadd.f32 %v1601, %v2585
  %2587 = vmatmul.f32.gmra.mxu0 %v1385
  %v2588 = vpop.f32.mrf.mxu0
  %v2589 = vadd.f32 %v1606, %v2588
  %2590 = vmatmul.f32.gmra.mxu0 %v1392
  %v2591 = vpop.f32.mrf.mxu0
  %v2592 = vadd.f32 %v1611, %v2591
  %2593 = vmatmul.f32.gmra.mxu0 %v1399
  %v2594 = vpop.f32.mrf.mxu0
  %v2595 = vadd.f32 %v1616, %v2594
  %2596 = vmatmul.f32.gmra.mxu0 %v1406
  %v2597 = vpop.f32.mrf.mxu0
  %v2598 = vadd.f32 %v1621, %v2597
  %2599 = vmatmul.f32.gmra.mxu0 %v1413
  %v2600 = vpop.f32.mrf.mxu0
  %v2601 = vadd.f32 %v1626, %v2600
  %2602 = vmatmul.f32.gmra.mxu0 %v1420
  %v2603 = vpop.f32.mrf.mxu0
  %v2604 = vadd.f32 %v1631, %v2603
  %2605 = vmatmul.f32.gmra.mxu0 %v1427
  %v2606 = vpop.f32.mrf.mxu0
  %v2607 = vadd.f32 %v1636, %v2606
  %2608 = vmatmul.f32.gmra.mxu0 %v1434
  %v2609 = vpop.f32.mrf.mxu0
  %v2610 = vadd.f32 %v1641, %v2609
  %2611 = vmatmul.f32.gmra.mxu0 %v1441
  %v2612 = vpop.f32.mrf.mxu0
  %v2613 = vadd.f32 %v1646, %v2612
  %2614 = vmatmul.f32.gmra.mxu0 %v1448
  %v2615 = vpop.f32.mrf.mxu0
  %v2616 = vadd.f32 %v1651, %v2615
  %2617 = vmatmul.f32.gmra.mxu0 %v1455
  %v2618 = vpop.f32.mrf.mxu0
  %v2619 = vadd.f32 %v1656, %v2618
  %2620 = vmatmul.f32.gmra.mxu0 %v1462
  %v2621 = vpop.f32.mrf.mxu0
  %v2622 = vadd.f32 %v1661, %v2621
  %2623 = vmatmul.f32.gmra.mxu0 %v1469
  %v2624 = vpop.f32.mrf.mxu0
  %v2625 = vadd.f32 %v1666, %v2624
  %2626 = vmatmul.f32.gmra.mxu0 %v1476
  %v2627 = vpop.f32.mrf.mxu0
  %v2628 = vadd.f32 %v1671, %v2627
  %2629 = vmatmul.f32.gmra.mxu0 %v1483
  %v2630 = vpop.f32.mrf.mxu0
  %v2631 = vadd.f32 %v1676, %v2630
  %2632 = vmatmul.f32.gmra.mxu0 %v1490
  %v2633 = vpop.f32.mrf.mxu0
  %v2634 = vadd.f32 %v1681, %v2633
  %2635 = vmatmul.f32.gmra.mxu0 %v1497
  %v2636 = vpop.f32.mrf.mxu0
  %v2637 = vadd.f32 %v1686, %v2636
  %2638 = vmatmul.f32.gmra.mxu0 %v1504
  %v2639 = vpop.f32.mrf.mxu0
  %v2640 = vadd.f32 %v1691, %v2639
  %2641 = vmatmul.f32.gmra.mxu0 %v1511
  %v2642 = vpop.f32.mrf.mxu0
  %v2643 = vadd.f32 %v1696, %v2642
  %2644 = vdwg.mxu0
  %2645 = vmatpush.msra.mxu0 %v777
  %2646 = vmatpush.msra.mxu0 %v775
  %2647 = vmatpush.msra.mxu0 %v773
  %2648 = vmatpush.msra.mxu0 %v771
  %2649 = vmatpush.msra.mxu0 %v769
  %2650 = vmatpush.msra.mxu0 %v767
  %2651 = vmatpush.msra.mxu0 %v765
  %2652 = vmatpush.msra.mxu0 %v763
  %2653 = vmatpush.msra.mxu0 %v761
  %2654 = vmatpush.msra.mxu0 %v759
  %2655 = vmatpush.msra.mxu0 %v757
  %2656 = vmatpush.msra.mxu0 %v755
  %2657 = vmatpush.msra.mxu0 %v753
  %2658 = vmatpush.msra.mxu0 %v751
  %2659 = vmatpush.msra.mxu0 %v749
  %2660 = vmatpush.msra.mxu0 %v747
  %2661 = vmatmul.f32.gmra.mxu0 %v1309
  %v2662 = vpop.f32.mrf.mxu0
  %v2663 = vadd.f32 %v2556, %v2662
  %2664 = vmatmul.f32.gmra.mxu0 %v1316
  %v2665 = vpop.f32.mrf.mxu0
  %v2666 = vadd.f32 %v2559, %v2665
  %2667 = vmatmul.f32.gmra.mxu0 %v1323
  %v2668 = vpop.f32.mrf.mxu0
  %v2669 = vadd.f32 %v2562, %v2668
  %2670 = vmatmul.f32.gmra.mxu0 %v1330
  %v2671 = vpop.f32.mrf.mxu0
  %v2672 = vadd.f32 %v2565, %v2671
  %2673 = vmatmul.f32.gmra.mxu0 %v1337
  %v2674 = vpop.f32.mrf.mxu0
  %v2675 = vadd.f32 %v2568, %v2674
  %2676 = vmatmul.f32.gmra.mxu0 %v1344
  %v2677 = vpop.f32.mrf.mxu0
  %v2678 = vadd.f32 %v2571, %v2677
  %2679 = vmatmul.f32.gmra.mxu0 %v1351
  %v2680 = vpop.f32.mrf.mxu0
  %v2681 = vadd.f32 %v2574, %v2680
  %2682 = vmatmul.f32.gmra.mxu0 %v1358
  %v2683 = vpop.f32.mrf.mxu0
  %v2684 = vadd.f32 %v2577, %v2683
  %2685 = vmatmul.f32.gmra.mxu0 %v1365
  %v2686 = vpop.f32.mrf.mxu0
  %v2687 = vadd.f32 %v2580, %v2686
  %2688 = vmatmul.f32.gmra.mxu0 %v1372
  %v2689 = vpop.f32.mrf.mxu0
  %v2690 = vadd.f32 %v2583, %v2689
  %2691 = vmatmul.f32.gmra.mxu0 %v1379
  %v2692 = vpop.f32.mrf.mxu0
  %v2693 = vadd.f32 %v2586, %v2692
  %2694 = vmatmul.f32.gmra.mxu0 %v1386
  %v2695 = vpop.f32.mrf.mxu0
  %v2696 = vadd.f32 %v2589, %v2695
  %2697 = vmatmul.f32.gmra.mxu0 %v1393
  %v2698 = vpop.f32.mrf.mxu0
  %v2699 = vadd.f32 %v2592, %v2698
  %2700 = vmatmul.f32.gmra.mxu0 %v1400
  %v2701 = vpop.f32.mrf.mxu0
  %v2702 = vadd.f32 %v2595, %v2701
  %2703 = vmatmul.f32.gmra.mxu0 %v1407
  %v2704 = vpop.f32.mrf.mxu0
  %v2705 = vadd.f32 %v2598, %v2704
  %2706 = vmatmul.f32.gmra.mxu0 %v1414
  %v2707 = vpop.f32.mrf.mxu0
  %v2708 = vadd.f32 %v2601, %v2707
  %2709 = vmatmul.f32.gmra.mxu0 %v1421
  %v2710 = vpop.f32.mrf.mxu0
  %v2711 = vadd.f32 %v2604, %v2710
  %2712 = vmatmul.f32.gmra.mxu0 %v1428
  %v2713 = vpop.f32.mrf.mxu0
  %v2714 = vadd.f32 %v2607, %v2713
  %2715 = vmatmul.f32.gmra.mxu0 %v1435
  %v2716 = vpop.f32.mrf.mxu0
  %v2717 = vadd.f32 %v2610, %v2716
  %2718 = vmatmul.f32.gmra.mxu0 %v1442
  %v2719 = vpop.f32.mrf.mxu0
  %v2720 = vadd.f32 %v2613, %v2719
  %2721 = vmatmul.f32.gmra.mxu0 %v1449
  %v2722 = vpop.f32.mrf.mxu0
  %v2723 = vadd.f32 %v2616, %v2722
  %2724 = vmatmul.f32.gmra.mxu0 %v1456
  %v2725 = vpop.f32.mrf.mxu0
  %v2726 = vadd.f32 %v2619, %v2725
  %2727 = vmatmul.f32.gmra.mxu0 %v1463
  %v2728 = vpop.f32.mrf.mxu0
  %v2729 = vadd.f32 %v2622, %v2728
  %2730 = vmatmul.f32.gmra.mxu0 %v1470
  %v2731 = vpop.f32.mrf.mxu0
  %v2732 = vadd.f32 %v2625, %v2731
  %2733 = vmatmul.f32.gmra.mxu0 %v1477
  %v2734 = vpop.f32.mrf.mxu0
  %v2735 = vadd.f32 %v2628, %v2734
  %2736 = vmatmul.f32.gmra.mxu0 %v1484
  %v2737 = vpop.f32.mrf.mxu0
  %v2738 = vadd.f32 %v2631, %v2737
  %2739 = vmatmul.f32.gmra.mxu0 %v1491
  %v2740 = vpop.f32.mrf.mxu0
  %v2741 = vadd.f32 %v2634, %v2740
  %2742 = vmatmul.f32.gmra.mxu0 %v1498
  %v2743 = vpop.f32.mrf.mxu0
  %v2744 = vadd.f32 %v2637, %v2743
  %2745 = vmatmul.f32.gmra.mxu0 %v1505
  %v2746 = vpop.f32.mrf.mxu0
  %v2747 = vadd.f32 %v2640, %v2746
  %2748 = vmatmul.f32.gmra.mxu0 %v1512
  %v2749 = vpop.f32.mrf.mxu0
  %v2750 = vadd.f32 %v2643, %v2749
  %2751 = vdwg.mxu0
  %2752 = vmatpush.msra.mxu0 %v905
  %2753 = vmatpush.msra.mxu0 %v901
  %2754 = vmatpush.msra.mxu0 %v897
  %2755 = vmatpush.msra.mxu0 %v893
  %2756 = vmatpush.msra.mxu0 %v889
  %2757 = vmatpush.msra.mxu0 %v885
  %2758 = vmatpush.msra.mxu0 %v881
  %2759 = vmatpush.msra.mxu0 %v877
  %2760 = vmatpush.msra.mxu0 %v873
  %2761 = vmatpush.msra.mxu0 %v869
  %2762 = vmatpush.msra.mxu0 %v865
  %2763 = vmatpush.msra.mxu0 %v861
  %2764 = vmatpush.msra.mxu0 %v857
  %2765 = vmatpush.msra.mxu0 %v853
  %2766 = vmatpush.msra.mxu0 %v849
  %2767 = vmatpush.msra.mxu0 %v779
  %2768 = vmatmul.f32.gmra.mxu0 %v1310
  %v2769 = vpop.f32.mrf.mxu0
  %v2770 = vadd.f32 %v2663, %v2769
  %2771 = vmatmul.f32.gmra.mxu0 %v1317
  %v2772 = vpop.f32.mrf.mxu0
  %v2773 = vadd.f32 %v2666, %v2772
  %2774 = vmatmul.f32.gmra.mxu0 %v1324
  %v2775 = vpop.f32.mrf.mxu0
  %v2776 = vadd.f32 %v2669, %v2775
  %2777 = vmatmul.f32.gmra.mxu0 %v1331
  %v2778 = vpop.f32.mrf.mxu0
  %v2779 = vadd.f32 %v2672, %v2778
  %2780 = vmatmul.f32.gmra.mxu0 %v1338
  %v2781 = vpop.f32.mrf.mxu0
  %v2782 = vadd.f32 %v2675, %v2781
  %2783 = vmatmul.f32.gmra.mxu0 %v1345
  %v2784 = vpop.f32.mrf.mxu0
  %v2785 = vadd.f32 %v2678, %v2784
  %2786 = vmatmul.f32.gmra.mxu0 %v1352
  %v2787 = vpop.f32.mrf.mxu0
  %v2788 = vadd.f32 %v2681, %v2787
  %2789 = vmatmul.f32.gmra.mxu0 %v1359
  %v2790 = vpop.f32.mrf.mxu0
  %v2791 = vadd.f32 %v2684, %v2790
  %2792 = vmatmul.f32.gmra.mxu0 %v1366
  %v2793 = vpop.f32.mrf.mxu0
  %v2794 = vadd.f32 %v2687, %v2793
  %2795 = vmatmul.f32.gmra.mxu0 %v1373
  %v2796 = vpop.f32.mrf.mxu0
  %v2797 = vadd.f32 %v2690, %v2796
  %2798 = vmatmul.f32.gmra.mxu0 %v1380
  %v2799 = vpop.f32.mrf.mxu0
  %v2800 = vadd.f32 %v2693, %v2799
  %2801 = vmatmul.f32.gmra.mxu0 %v1387
  %v2802 = vpop.f32.mrf.mxu0
  %v2803 = vadd.f32 %v2696, %v2802
  %2804 = vmatmul.f32.gmra.mxu0 %v1394
  %v2805 = vpop.f32.mrf.mxu0
  %v2806 = vadd.f32 %v2699, %v2805
  %2807 = vmatmul.f32.gmra.mxu0 %v1401
  %v2808 = vpop.f32.mrf.mxu0
  %v2809 = vadd.f32 %v2702, %v2808
  %2810 = vmatmul.f32.gmra.mxu0 %v1408
  %v2811 = vpop.f32.mrf.mxu0
  %v2812 = vadd.f32 %v2705, %v2811
  %2813 = vmatmul.f32.gmra.mxu0 %v1415
  %v2814 = vpop.f32.mrf.mxu0
  %v2815 = vadd.f32 %v2708, %v2814
  %2816 = vmatmul.f32.gmra.mxu0 %v1422
  %v2817 = vpop.f32.mrf.mxu0
  %v2818 = vadd.f32 %v2711, %v2817
  %2819 = vmatmul.f32.gmra.mxu0 %v1429
  %v2820 = vpop.f32.mrf.mxu0
  %v2821 = vadd.f32 %v2714, %v2820
  %2822 = vmatmul.f32.gmra.mxu0 %v1436
  %v2823 = vpop.f32.mrf.mxu0
  %v2824 = vadd.f32 %v2717, %v2823
  %2825 = vmatmul.f32.gmra.mxu0 %v1443
  %v2826 = vpop.f32.mrf.mxu0
  %v2827 = vadd.f32 %v2720, %v2826
  %2828 = vmatmul.f32.gmra.mxu0 %v1450
  %v2829 = vpop.f32.mrf.mxu0
  %v2830 = vadd.f32 %v2723, %v2829
  %2831 = vmatmul.f32.gmra.mxu0 %v1457
  %v2832 = vpop.f32.mrf.mxu0
  %v2833 = vadd.f32 %v2726, %v2832
  %2834 = vmatmul.f32.gmra.mxu0 %v1464
  %v2835 = vpop.f32.mrf.mxu0
  %v2836 = vadd.f32 %v2729, %v2835
  %2837 = vmatmul.f32.gmra.mxu0 %v1471
  %v2838 = vpop.f32.mrf.mxu0
  %v2839 = vadd.f32 %v2732, %v2838
  %2840 = vmatmul.f32.gmra.mxu0 %v1478
  %v2841 = vpop.f32.mrf.mxu0
  %v2842 = vadd.f32 %v2735, %v2841
  %2843 = vmatmul.f32.gmra.mxu0 %v1485
  %v2844 = vpop.f32.mrf.mxu0
  %v2845 = vadd.f32 %v2738, %v2844
  %2846 = vmatmul.f32.gmra.mxu0 %v1492
  %v2847 = vpop.f32.mrf.mxu0
  %v2848 = vadd.f32 %v2741, %v2847
  %2849 = vmatmul.f32.gmra.mxu0 %v1499
  %v2850 = vpop.f32.mrf.mxu0
  %v2851 = vadd.f32 %v2744, %v2850
  %2852 = vmatmul.f32.gmra.mxu0 %v1506
  %v2853 = vpop.f32.mrf.mxu0
  %v2854 = vadd.f32 %v2747, %v2853
  %2855 = vmatmul.f32.gmra.mxu0 %v1513
  %v2856 = vpop.f32.mrf.mxu0
  %v2857 = vadd.f32 %v2750, %v2856
  %2858 = vdwg.mxu0
  %2859 = vmatpush.msra.mxu0 %v969
  %2860 = vmatpush.msra.mxu0 %v965
  %2861 = vmatpush.msra.mxu0 %v961
  %2862 = vmatpush.msra.mxu0 %v957
  %2863 = vmatpush.msra.mxu0 %v953
  %2864 = vmatpush.msra.mxu0 %v949
  %2865 = vmatpush.msra.mxu0 %v945
  %2866 = vmatpush.msra.mxu0 %v941
  %2867 = vmatpush.msra.mxu0 %v937
  %2868 = vmatpush.msra.mxu0 %v933
  %2869 = vmatpush.msra.mxu0 %v929
  %2870 = vmatpush.msra.mxu0 %v925
  %2871 = vmatpush.msra.mxu0 %v921
  %2872 = vmatpush.msra.mxu0 %v917
  %2873 = vmatpush.msra.mxu0 %v913
  %2874 = vmatpush.msra.mxu0 %v909
  %2875 = vmatmul.f32.gmra.mxu0 %v1311
  %v2876 = vpop.f32.mrf.mxu0
  %v2877 = vadd.f32 %v2770, %v2876
  %2878 = vmatmul.f32.gmra.mxu0 %v1318
  %v2879 = vpop.f32.mrf.mxu0
  %v2880 = vadd.f32 %v2773, %v2879
  %2881 = vmatmul.f32.gmra.mxu0 %v1325
  %v2882 = vpop.f32.mrf.mxu0
  %v2883 = vadd.f32 %v2776, %v2882
  %2884 = vmatmul.f32.gmra.mxu0 %v1332
  %v2885 = vpop.f32.mrf.mxu0
  %v2886 = vadd.f32 %v2779, %v2885
  %2887 = vmatmul.f32.gmra.mxu0 %v1339
  %v2888 = vpop.f32.mrf.mxu0
  %v2889 = vadd.f32 %v2782, %v2888
  %2890 = vmatmul.f32.gmra.mxu0 %v1346
  %v2891 = vpop.f32.mrf.mxu0
  %v2892 = vadd.f32 %v2785, %v2891
  %2893 = vmatmul.f32.gmra.mxu0 %v1353
  %v2894 = vpop.f32.mrf.mxu0
  %v2895 = vadd.f32 %v2788, %v2894
  %2896 = vmatmul.f32.gmra.mxu0 %v1360
  %v2897 = vpop.f32.mrf.mxu0
  %v2898 = vadd.f32 %v2791, %v2897
  %2899 = vmatmul.f32.gmra.mxu0 %v1367
  %v2900 = vpop.f32.mrf.mxu0
  %v2901 = vadd.f32 %v2794, %v2900
  %2902 = vmatmul.f32.gmra.mxu0 %v1374
  %v2903 = vpop.f32.mrf.mxu0
  %v2904 = vadd.f32 %v2797, %v2903
  %2905 = vmatmul.f32.gmra.mxu0 %v1381
  %v2906 = vpop.f32.mrf.mxu0
  %v2907 = vadd.f32 %v2800, %v2906
  %2908 = vmatmul.f32.gmra.mxu0 %v1388
  %v2909 = vpop.f32.mrf.mxu0
  %v2910 = vadd.f32 %v2803, %v2909
  %2911 = vmatmul.f32.gmra.mxu0 %v1395
  %v2912 = vpop.f32.mrf.mxu0
  %v2913 = vadd.f32 %v2806, %v2912
  %2914 = vmatmul.f32.gmra.mxu0 %v1402
  %v2915 = vpop.f32.mrf.mxu0
  %v2916 = vadd.f32 %v2809, %v2915
  %2917 = vmatmul.f32.gmra.mxu0 %v1409
  %v2918 = vpop.f32.mrf.mxu0
  %v2919 = vadd.f32 %v2812, %v2918
  %2920 = vmatmul.f32.gmra.mxu0 %v1416
  %v2921 = vpop.f32.mrf.mxu0
  %v2922 = vadd.f32 %v2815, %v2921
  %2923 = vmatmul.f32.gmra.mxu0 %v1423
  %v2924 = vpop.f32.mrf.mxu0
  %v2925 = vadd.f32 %v2818, %v2924
  %2926 = vmatmul.f32.gmra.mxu0 %v1430
  %v2927 = vpop.f32.mrf.mxu0
  %v2928 = vadd.f32 %v2821, %v2927
  %2929 = vmatmul.f32.gmra.mxu0 %v1437
  %v2930 = vpop.f32.mrf.mxu0
  %v2931 = vadd.f32 %v2824, %v2930
  %2932 = vmatmul.f32.gmra.mxu0 %v1444
  %v2933 = vpop.f32.mrf.mxu0
  %v2934 = vadd.f32 %v2827, %v2933
  %2935 = vmatmul.f32.gmra.mxu0 %v1451
  %v2936 = vpop.f32.mrf.mxu0
  %v2937 = vadd.f32 %v2830, %v2936
  %2938 = vmatmul.f32.gmra.mxu0 %v1458
  %v2939 = vpop.f32.mrf.mxu0
  %v2940 = vadd.f32 %v2833, %v2939
  %2941 = vmatmul.f32.gmra.mxu0 %v1465
  %v2942 = vpop.f32.mrf.mxu0
  %v2943 = vadd.f32 %v2836, %v2942
  %2944 = vmatmul.f32.gmra.mxu0 %v1472
  %v2945 = vpop.f32.mrf.mxu0
  %v2946 = vadd.f32 %v2839, %v2945
  %2947 = vmatmul.f32.gmra.mxu0 %v1479
  %v2948 = vpop.f32.mrf.mxu0
  %v2949 = vadd.f32 %v2842, %v2948
  %2950 = vmatmul.f32.gmra.mxu0 %v1486
  %v2951 = vpop.f32.mrf.mxu0
  %v2952 = vadd.f32 %v2845, %v2951
  %2953 = vmatmul.f32.gmra.mxu0 %v1493
  %v2954 = vpop.f32.mrf.mxu0
  %v2955 = vadd.f32 %v2848, %v2954
  %2956 = vmatmul.f32.gmra.mxu0 %v1500
  %v2957 = vpop.f32.mrf.mxu0
  %v2958 = vadd.f32 %v2851, %v2957
  %2959 = vmatmul.f32.gmra.mxu0 %v1507
  %v2960 = vpop.f32.mrf.mxu0
  %v2961 = vadd.f32 %v2854, %v2960
  %2962 = vmatmul.f32.gmra.mxu0 %v1514
  %v2963 = vpop.f32.mrf.mxu0
  %v2964 = vadd.f32 %v2857, %v2963
  %2965 = vdwg.mxu0
  %2966 = vmatpush.msra.mxu0 %v1132
  %2967 = vmatpush.msra.mxu0 %v1128
  %2968 = vmatpush.msra.mxu0 %v1124
  %2969 = vmatpush.msra.mxu0 %v1120
  %2970 = vmatpush.msra.mxu0 %v1116
  %2971 = vmatpush.msra.mxu0 %v1112
  %2972 = vmatpush.msra.mxu0 %v1108
  %2973 = vmatpush.msra.mxu0 %v1104
  %2974 = vmatpush.msra.mxu0 %v1100
  %2975 = vmatpush.msra.mxu0 %v1096
  %2976 = vmatpush.msra.mxu0 %v1092
  %2977 = vmatpush.msra.mxu0 %v1088
  %2978 = vmatpush.msra.mxu0 %v1084
  %2979 = vmatpush.msra.mxu0 %v1080
  %2980 = vmatpush.msra.mxu0 %v977
  %2981 = vmatpush.msra.mxu0 %v973
  %2982 = vmatmul.f32.gmra.mxu0 %v1312
  %v2983 = vpop.f32.mrf.mxu0
  %v2984 = vadd.f32 %v2877, %v2983
  %2985 = vmatmul.f32.gmra.mxu0 %v1319
  %v2986 = vpop.f32.mrf.mxu0
  %v2987 = vadd.f32 %v2880, %v2986
  %2988 = vmatmul.f32.gmra.mxu0 %v1326
  %v2989 = vpop.f32.mrf.mxu0
  %v2990 = vadd.f32 %v2883, %v2989
  %2991 = vmatmul.f32.gmra.mxu0 %v1333
  %v2992 = vpop.f32.mrf.mxu0
  %v2993 = vadd.f32 %v2886, %v2992
  %2994 = vmatmul.f32.gmra.mxu0 %v1340
  %v2995 = vpop.f32.mrf.mxu0
  %v2996 = vadd.f32 %v2889, %v2995
  %2997 = vmatmul.f32.gmra.mxu0 %v1347
  %v2998 = vpop.f32.mrf.mxu0
  %v2999 = vadd.f32 %v2892, %v2998
  %3000 = vmatmul.f32.gmra.mxu0 %v1354
  %v3001 = vpop.f32.mrf.mxu0
  %v3002 = vadd.f32 %v2895, %v3001
  %3003 = vmatmul.f32.gmra.mxu0 %v1361
  %v3004 = vpop.f32.mrf.mxu0
  %v3005 = vadd.f32 %v2898, %v3004
  %3006 = vmatmul.f32.gmra.mxu0 %v1368
  %v3007 = vpop.f32.mrf.mxu0
  %v3008 = vadd.f32 %v2901, %v3007
  %3009 = vmatmul.f32.gmra.mxu0 %v1375
  %v3010 = vpop.f32.mrf.mxu0
  %v3011 = vadd.f32 %v2904, %v3010
  %3012 = vmatmul.f32.gmra.mxu0 %v1382
  %v3013 = vpop.f32.mrf.mxu0
  %v3014 = vadd.f32 %v2907, %v3013
  %3015 = vmatmul.f32.gmra.mxu0 %v1389
  %v3016 = vpop.f32.mrf.mxu0
  %v3017 = vadd.f32 %v2910, %v3016
  %3018 = vmatmul.f32.gmra.mxu0 %v1396
  %v3019 = vpop.f32.mrf.mxu0
  %v3020 = vadd.f32 %v2913, %v3019
  %3021 = vmatmul.f32.gmra.mxu0 %v1403
  %v3022 = vpop.f32.mrf.mxu0
  %v3023 = vadd.f32 %v2916, %v3022
  %3024 = vmatmul.f32.gmra.mxu0 %v1410
  %v3025 = vpop.f32.mrf.mxu0
  %v3026 = vadd.f32 %v2919, %v3025
  %3027 = vmatmul.f32.gmra.mxu0 %v1417
  %v3028 = vpop.f32.mrf.mxu0
  %v3029 = vadd.f32 %v2922, %v3028
  %3030 = vmatmul.f32.gmra.mxu0 %v1424
  %v3031 = vpop.f32.mrf.mxu0
  %v3032 = vadd.f32 %v2925, %v3031
  %3033 = vmatmul.f32.gmra.mxu0 %v1431
  %v3034 = vpop.f32.mrf.mxu0
  %v3035 = vadd.f32 %v2928, %v3034
  %3036 = vmatmul.f32.gmra.mxu0 %v1438
  %v3037 = vpop.f32.mrf.mxu0
  %v3038 = vadd.f32 %v2931, %v3037
  %3039 = vmatmul.f32.gmra.mxu0 %v1445
  %v3040 = vpop.f32.mrf.mxu0
  %v3041 = vadd.f32 %v2934, %v3040
  %3042 = vmatmul.f32.gmra.mxu0 %v1452
  %v3043 = vpop.f32.mrf.mxu0
  %v3044 = vadd.f32 %v2937, %v3043
  %3045 = vmatmul.f32.gmra.mxu0 %v1459
  %v3046 = vpop.f32.mrf.mxu0
  %v3047 = vadd.f32 %v2940, %v3046
  %3048 = vmatmul.f32.gmra.mxu0 %v1466
  %v3049 = vpop.f32.mrf.mxu0
  %v3050 = vadd.f32 %v2943, %v3049
  %3051 = vmatmul.f32.gmra.mxu0 %v1473
  %v3052 = vpop.f32.mrf.mxu0
  %v3053 = vadd.f32 %v2946, %v3052
  %3054 = vmatmul.f32.gmra.mxu0 %v1480
  %v3055 = vpop.f32.mrf.mxu0
  %v3056 = vadd.f32 %v2949, %v3055
  %3057 = vmatmul.f32.gmra.mxu0 %v1487
  %v3058 = vpop.f32.mrf.mxu0
  %v3059 = vadd.f32 %v2952, %v3058
  %3060 = vmatmul.f32.gmra.mxu0 %v1494
  %v3061 = vpop.f32.mrf.mxu0
  %v3062 = vadd.f32 %v2955, %v3061
  %3063 = vmatmul.f32.gmra.mxu0 %v1501
  %v3064 = vpop.f32.mrf.mxu0
  %v3065 = vadd.f32 %v2958, %v3064
  %3066 = vmatmul.f32.gmra.mxu0 %v1508
  %v3067 = vpop.f32.mrf.mxu0
  %v3068 = vadd.f32 %v2961, %v3067
  %3069 = vmatmul.f32.gmra.mxu0 %v1515
  %v3070 = vpop.f32.mrf.mxu0
  %v3071 = vadd.f32 %v2964, %v3070
  %3072 = vdwg.mxu0
  %3073 = vmatpush.msra.mxu0 %v1196
  %3074 = vmatpush.msra.mxu0 %v1192
  %3075 = vmatpush.msra.mxu0 %v1188
  %3076 = vmatpush.msra.mxu0 %v1184
  %3077 = vmatpush.msra.mxu0 %v1180
  %3078 = vmatpush.msra.mxu0 %v1176
  %3079 = vmatpush.msra.mxu0 %v1172
  %3080 = vmatpush.msra.mxu0 %v1168
  %3081 = vmatpush.msra.mxu0 %v1164
  %3082 = vmatpush.msra.mxu0 %v1160
  %3083 = vmatpush.msra.mxu0 %v1156
  %3084 = vmatpush.msra.mxu0 %v1152
  %3085 = vmatpush.msra.mxu0 %v1148
  %3086 = vmatpush.msra.mxu0 %v1144
  %3087 = vmatpush.msra.mxu0 %v1140
  %3088 = vmatpush.msra.mxu0 %v1136
  %3089 = vmatmul.f32.gmra.mxu0 %v1313
  %v3090 = vpop.f32.mrf.mxu0
  %v3091 = vadd.f32 %v2984, %v3090
  %3092 = vmatmul.f32.gmra.mxu0 %v1320
  %v3093 = vpop.f32.mrf.mxu0
  %v3094 = vadd.f32 %v2987, %v3093
  %3095 = vmatmul.f32.gmra.mxu0 %v1327
  %v3096 = vpop.f32.mrf.mxu0
  %v3097 = vadd.f32 %v2990, %v3096
  %3098 = vmatmul.f32.gmra.mxu0 %v1334
  %v3099 = vpop.f32.mrf.mxu0
  %v3100 = vadd.f32 %v2993, %v3099
  %3101 = vmatmul.f32.gmra.mxu0 %v1341
  %v3102 = vpop.f32.mrf.mxu0
  %v3103 = vadd.f32 %v2996, %v3102
  %3104 = vmatmul.f32.gmra.mxu0 %v1348
  %v3105 = vpop.f32.mrf.mxu0
  %v3106 = vadd.f32 %v2999, %v3105
  %3107 = vmatmul.f32.gmra.mxu0 %v1355
  %v3108 = vpop.f32.mrf.mxu0
  %v3109 = vadd.f32 %v3002, %v3108
  %3110 = vmatmul.f32.gmra.mxu0 %v1362
  %v3111 = vpop.f32.mrf.mxu0
  %v3112 = vadd.f32 %v3005, %v3111
  %3113 = vmatmul.f32.gmra.mxu0 %v1369
  %v3114 = vpop.f32.mrf.mxu0
  %v3115 = vadd.f32 %v3008, %v3114
  %3116 = vmatmul.f32.gmra.mxu0 %v1376
  %v3117 = vpop.f32.mrf.mxu0
  %v3118 = vadd.f32 %v3011, %v3117
  %3119 = vmatmul.f32.gmra.mxu0 %v1383
  %v3120 = vpop.f32.mrf.mxu0
  %v3121 = vadd.f32 %v3014, %v3120
  %3122 = vmatmul.f32.gmra.mxu0 %v1390
  %v3123 = vpop.f32.mrf.mxu0
  %v3124 = vadd.f32 %v3017, %v3123
  %3125 = vmatmul.f32.gmra.mxu0 %v1397
  %v3126 = vpop.f32.mrf.mxu0
  %v3127 = vadd.f32 %v3020, %v3126
  %3128 = vmatmul.f32.gmra.mxu0 %v1404
  %v3129 = vpop.f32.mrf.mxu0
  %v3130 = vadd.f32 %v3023, %v3129
  %3131 = vmatmul.f32.gmra.mxu0 %v1411
  %v3132 = vpop.f32.mrf.mxu0
  %v3133 = vadd.f32 %v3026, %v3132
  %3134 = vmatmul.f32.gmra.mxu0 %v1418
  %v3135 = vpop.f32.mrf.mxu0
  %v3136 = vadd.f32 %v3029, %v3135
  %3137 = vmatmul.f32.gmra.mxu0 %v1425
  %v3138 = vpop.f32.mrf.mxu0
  %v3139 = vadd.f32 %v3032, %v3138
  %3140 = vmatmul.f32.gmra.mxu0 %v1432
  %v3141 = vpop.f32.mrf.mxu0
  %v3142 = vadd.f32 %v3035, %v3141
  %3143 = vmatmul.f32.gmra.mxu0 %v1439
  %v3144 = vpop.f32.mrf.mxu0
  %v3145 = vadd.f32 %v3038, %v3144
  %3146 = vmatmul.f32.gmra.mxu0 %v1446
  %v3147 = vpop.f32.mrf.mxu0
  %v3148 = vadd.f32 %v3041, %v3147
  %3149 = vmatmul.f32.gmra.mxu0 %v1453
  %v3150 = vpop.f32.mrf.mxu0
  %v3151 = vadd.f32 %v3044, %v3150
  %3152 = vmatmul.f32.gmra.mxu0 %v1460
  %v3153 = vpop.f32.mrf.mxu0
  %v3154 = vadd.f32 %v3047, %v3153
  %3155 = vmatmul.f32.gmra.mxu0 %v1467
  %v3156 = vpop.f32.mrf.mxu0
  %v3157 = vadd.f32 %v3050, %v3156
  %3158 = vmatmul.f32.gmra.mxu0 %v1474
  %v3159 = vpop.f32.mrf.mxu0
  %v3160 = vadd.f32 %v3053, %v3159
  %3161 = vmatmul.f32.gmra.mxu0 %v1481
  %v3162 = vpop.f32.mrf.mxu0
  %v3163 = vadd.f32 %v3056, %v3162
  %3164 = vmatmul.f32.gmra.mxu0 %v1488
  %v3165 = vpop.f32.mrf.mxu0
  %v3166 = vadd.f32 %v3059, %v3165
  %3167 = vmatmul.f32.gmra.mxu0 %v1495
  %v3168 = vpop.f32.mrf.mxu0
  %v3169 = vadd.f32 %v3062, %v3168
  %3170 = vmatmul.f32.gmra.mxu0 %v1502
  %v3171 = vpop.f32.mrf.mxu0
  %v3172 = vadd.f32 %v3065, %v3171
  %3173 = vmatmul.f32.gmra.mxu0 %v1509
  %v3174 = vpop.f32.mrf.mxu0
  %v3175 = vadd.f32 %v3068, %v3174
  %3176 = vmatmul.f32.gmra.mxu0 %v1516
  %v3177 = vpop.f32.mrf.mxu0
  %v3178 = vadd.f32 %v3071, %v3177
  %3179 = vdwg.mxu0
  %3180 = vmatpush.msra.mxu0 0.0
  %3181 = vmatpush.msra.mxu0 0.0
  %3182 = vmatpush.msra.mxu0 0.0
  %3183 = vmatpush.msra.mxu0 0.0
  %3184 = vmatpush.msra.mxu0 0.0
  %3185 = vmatpush.msra.mxu0 0.0
  %3186 = vmatpush.msra.mxu0 0.0
  %3187 = vmatpush.msra.mxu0 0.0
  %3188 = vmatpush.msra.mxu0 0.0
  %3189 = vmatpush.msra.mxu0 0.0
  %3190 = vmatpush.msra.mxu0 0.0
  %3191 = vmatpush.msra.mxu0 0.0
  %3192 = vmatpush.msra.mxu0 0.0
  %3193 = vmatpush.msra.mxu0 %v1208
  %3194 = vmatpush.msra.mxu0 %v1204
  %3195 = vmatpush.msra.mxu0 %v1200
  %3196 = vmatmul.f32.gmra.mxu0 %v1700
  %v3197 = vpop.f32.mrf.mxu0
  %v3198 = vadd.f32 %v3091, %v3197
  %3199 = vmatmul.f32.gmra.mxu0 %v1703
  %v3200 = vpop.f32.mrf.mxu0
  %v3201 = vadd.f32 %v3094, %v3200
  %3202 = vmatmul.f32.gmra.mxu0 %v1706
  %v3203 = vpop.f32.mrf.mxu0
  %v3204 = vadd.f32 %v3097, %v3203
  %3205 = vmatmul.f32.gmra.mxu0 %v1709
  %v3206 = vpop.f32.mrf.mxu0
  %v3207 = vadd.f32 %v3100, %v3206
  %3208 = vmatmul.f32.gmra.mxu0 %v1712
  %v3209 = vpop.f32.mrf.mxu0
  %v3210 = vadd.f32 %v3103, %v3209
  %3211 = vmatmul.f32.gmra.mxu0 %v1715
  %v3212 = vpop.f32.mrf.mxu0
  %v3213 = vadd.f32 %v3106, %v3212
  %3214 = vmatmul.f32.gmra.mxu0 %v1718
  %v3215 = vpop.f32.mrf.mxu0
  %v3216 = vadd.f32 %v3109, %v3215
  %3217 = vmatmul.f32.gmra.mxu0 %v1721
  %v3218 = vpop.f32.mrf.mxu0
  %v3219 = vadd.f32 %v3112, %v3218
  %3220 = vmatmul.f32.gmra.mxu0 %v1724
  %v3221 = vpop.f32.mrf.mxu0
  %v3222 = vadd.f32 %v3115, %v3221
  %3223 = vmatmul.f32.gmra.mxu0 %v1727
  %v3224 = vpop.f32.mrf.mxu0
  %v3225 = vadd.f32 %v3118, %v3224
  %3226 = vmatmul.f32.gmra.mxu0 %v1730
  %v3227 = vpop.f32.mrf.mxu0
  %v3228 = vadd.f32 %v3121, %v3227
  %3229 = vmatmul.f32.gmra.mxu0 %v1733
  %v3230 = vpop.f32.mrf.mxu0
  %v3231 = vadd.f32 %v3124, %v3230
  %3232 = vmatmul.f32.gmra.mxu0 %v1736
  %v3233 = vpop.f32.mrf.mxu0
  %v3234 = vadd.f32 %v3127, %v3233
  %3235 = vmatmul.f32.gmra.mxu0 %v1739
  %v3236 = vpop.f32.mrf.mxu0
  %v3237 = vadd.f32 %v3130, %v3236
  %3238 = vmatmul.f32.gmra.mxu0 %v1742
  %v3239 = vpop.f32.mrf.mxu0
  %v3240 = vadd.f32 %v3133, %v3239
  %3241 = vmatmul.f32.gmra.mxu0 %v1745
  %v3242 = vpop.f32.mrf.mxu0
  %v3243 = vadd.f32 %v3136, %v3242
  %3244 = vmatmul.f32.gmra.mxu0 %v1748
  %v3245 = vpop.f32.mrf.mxu0
  %v3246 = vadd.f32 %v3139, %v3245
  %3247 = vmatmul.f32.gmra.mxu0 %v1751
  %v3248 = vpop.f32.mrf.mxu0
  %v3249 = vadd.f32 %v3142, %v3248
  %3250 = vmatmul.f32.gmra.mxu0 %v1754
  %v3251 = vpop.f32.mrf.mxu0
  %v3252 = vadd.f32 %v3145, %v3251
  %3253 = vmatmul.f32.gmra.mxu0 %v1757
  %v3254 = vpop.f32.mrf.mxu0
  %v3255 = vadd.f32 %v3148, %v3254
  %3256 = vmatmul.f32.gmra.mxu0 %v1760
  %v3257 = vpop.f32.mrf.mxu0
  %v3258 = vadd.f32 %v3151, %v3257
  %3259 = vmatmul.f32.gmra.mxu0 %v1763
  %v3260 = vpop.f32.mrf.mxu0
  %v3261 = vadd.f32 %v3154, %v3260
  %3262 = vmatmul.f32.gmra.mxu0 %v1766
  %v3263 = vpop.f32.mrf.mxu0
  %v3264 = vadd.f32 %v3157, %v3263
  %3265 = vmatmul.f32.gmra.mxu0 %v1769
  %v3266 = vpop.f32.mrf.mxu0
  %v3267 = vadd.f32 %v3160, %v3266
  %3268 = vmatmul.f32.gmra.mxu0 %v1772
  %v3269 = vpop.f32.mrf.mxu0
  %v3270 = vadd.f32 %v3163, %v3269
  %3271 = vmatmul.f32.gmra.mxu0 %v1775
  %v3272 = vpop.f32.mrf.mxu0
  %v3273 = vadd.f32 %v3166, %v3272
  %3274 = vmatmul.f32.gmra.mxu0 %v1778
  %v3275 = vpop.f32.mrf.mxu0
  %v3276 = vadd.f32 %v3169, %v3275
  %3277 = vmatmul.f32.gmra.mxu0 %v1781
  %v3278 = vpop.f32.mrf.mxu0
  %v3279 = vadd.f32 %v3172, %v3278
  %3280 = vmatmul.f32.gmra.mxu0 %v1784
  %v3281 = vpop.f32.mrf.mxu0
  %v3282 = vadd.f32 %v3175, %v3281
  %3283 = vmatmul.f32.gmra.mxu0 %v1787
  %v3284 = vpop.f32.mrf.mxu0
  %v3285 = vadd.f32 %v3178, %v3284
  %3286 = vdwg.mxu0
  %v3287 = vmax.f32 %v2449, 0.0
  %v3288 = vmax.f32 %v3198, 0.0
  %v3289 = vmax.f32 %v2452, 0.0
  %v3290 = vmax.f32 %v3201, 0.0
  %v3291 = vmax.f32 %v2455, 0.0
  %v3292 = vmax.f32 %v3204, 0.0
  %v3293 = vmax.f32 %v2458, 0.0
  %v3294 = vmax.f32 %v3207, 0.0
  %v3295 = vmax.f32 %v2461, 0.0
  %v3296 = vmax.f32 %v3210, 0.0
  %v3297 = vmax.f32 %v2464, 0.0
  %v3298 = vmax.f32 %v3213, 0.0
  %v3299 = vmax.f32 %v2467, 0.0
  %v3300 = vmax.f32 %v3216, 0.0
  %v3301 = vmax.f32 %v2470, 0.0
  %v3302 = vmax.f32 %v3219, 0.0
  %v3303 = vmax.f32 %v2473, 0.0
  %v3304 = vmax.f32 %v3222, 0.0
  %v3305 = vmax.f32 %v2476, 0.0
  %v3306 = vmax.f32 %v3225, 0.0
  %v3307 = vmax.f32 %v2479, 0.0
  %v3308 = vmax.f32 %v3228, 0.0
  %v3309 = vmax.f32 %v2482, 0.0
  %v3310 = vmax.f32 %v3231, 0.0
  %v3311 = vmax.f32 %v2485, 0.0
  %v3312 = vmax.f32 %v3234, 0.0
  %v3313 = vmax.f32 %v2488, 0.0
  %v3314 = vmax.f32 %v3237, 0.0
  %v3315 = vmax.f32 %v2491, 0.0
  %v3316 = vmax.f32 %v3240, 0.0
  %v3317 = vmax.f32 %v2494, 0.0
  %v3318 = vmax.f32 %v3243, 0.0
  %v3319 = vmax.f32 %v2497, 0.0
  %v3320 = vmax.f32 %v3246, 0.0
  %v3321 = vmax.f32 %v2500, 0.0
  %v3322 = vmax.f32 %v3249, 0.0
  %v3323 = vmax.f32 %v2503, 0.0
  %v3324 = vmax.f32 %v3252, 0.0
  %v3325 = vmax.f32 %v2506, 0.0
  %v3326 = vmax.f32 %v3255, 0.0
  %v3327 = vmax.f32 %v2509, 0.0
  %v3328 = vmax.f32 %v3258, 0.0
  %v3329 = vmax.f32 %v2512, 0.0
  %v3330 = vmax.f32 %v3261, 0.0
  %v3331 = vmax.f32 %v2515, 0.0
  %v3332 = vmax.f32 %v3264, 0.0
  %v3333 = vmax.f32 %v2518, 0.0
  %v3334 = vmax.f32 %v3267, 0.0
  %v3335 = vmax.f32 %v2521, 0.0
  %v3336 = vmax.f32 %v3270, 0.0
  %v3337 = vmax.f32 %v2524, 0.0
  %v3338 = vmax.f32 %v3273, 0.0
  %v3339 = vmax.f32 %v2527, 0.0
  %v3340 = vmax.f32 %v3276, 0.0
  %v3341 = vmax.f32 %v2530, 0.0
  %v3342 = vmax.f32 %v3279, 0.0
  %v3343 = vmax.f32 %v2533, 0.0
  %v3344 = vmax.f32 %v3282, 0.0
  %v3345 = vmax.f32 %v2536, 0.0
  %v3346 = vmax.f32 %v3285, 0.0
  %3407 = vrot.lane.b32.xlu0 %v3287, 120
  %v3408 = vpop.permute.xlu0 %3407
  %3409 = vrot.lane.b32.xlu0 %v3288, 120
  %v3410 = vpop.permute.xlu0 %3409
  %3411 = vrot.lane.b32.xlu0 %v3289, 120
  %v3412 = vpop.permute.xlu0 %3411
  %3413 = vrot.lane.b32.xlu0 %v3290, 120
  %v3414 = vpop.permute.xlu0 %3413
  %3415 = vrot.lane.b32.xlu0 %v3291, 120
  %v3416 = vpop.permute.xlu0 %3415
  %3417 = vrot.lane.b32.xlu0 %v3292, 120
  %v3418 = vpop.permute.xlu0 %3417
  %3419 = vrot.lane.b32.xlu0 %v3293, 120
  %v3420 = vpop.permute.xlu0 %3419
  %3421 = vrot.lane.b32.xlu0 %v3294, 120
  %v3422 = vpop.permute.xlu0 %3421
  %3423 = vrot.lane.b32.xlu0 %v3295, 120
  %v3424 = vpop.permute.xlu0 %3423
  %3425 = vrot.lane.b32.xlu0 %v3296, 120
  %v3426 = vpop.permute.xlu0 %3425
  %3427 = vrot.lane.b32.xlu0 %v3297, 120
  %v3428 = vpop.permute.xlu0 %3427
  %3429 = vrot.lane.b32.xlu0 %v3298, 120
  %v3430 = vpop.permute.xlu0 %3429
  %3431 = vrot.lane.b32.xlu0 %v3299, 120
  %v3432 = vpop.permute.xlu0 %3431
  %3433 = vrot.lane.b32.xlu0 %v3300, 120
  %v3434 = vpop.permute.xlu0 %3433
  %3435 = vrot.lane.b32.xlu0 %v3301, 120
  %v3436 = vpop.permute.xlu0 %3435
  %3437 = vrot.lane.b32.xlu0 %v3302, 120
  %v3438 = vpop.permute.xlu0 %3437
  %3439 = vrot.lane.b32.xlu0 %v3303, 120
  %v3440 = vpop.permute.xlu0 %3439
  %3441 = vrot.lane.b32.xlu0 %v3304, 120
  %v3442 = vpop.permute.xlu0 %3441
  %3443 = vrot.lane.b32.xlu0 %v3305, 120
  %v3444 = vpop.permute.xlu0 %3443
  %3445 = vrot.lane.b32.xlu0 %v3306, 120
  %v3446 = vpop.permute.xlu0 %3445
  %3447 = vrot.lane.b32.xlu0 %v3307, 120
  %v3448 = vpop.permute.xlu0 %3447
  %3449 = vrot.lane.b32.xlu0 %v3308, 120
  %v3450 = vpop.permute.xlu0 %3449
  %3451 = vrot.lane.b32.xlu0 %v3309, 120
  %v3452 = vpop.permute.xlu0 %3451
  %3453 = vrot.lane.b32.xlu0 %v3310, 120
  %v3454 = vpop.permute.xlu0 %3453
  %3455 = vrot.lane.b32.xlu0 %v3311, 120
  %v3456 = vpop.permute.xlu0 %3455
  %3457 = vrot.lane.b32.xlu0 %v3312, 120
  %v3458 = vpop.permute.xlu0 %3457
  %3459 = vrot.lane.b32.xlu0 %v3313, 120
  %v3460 = vpop.permute.xlu0 %3459
  %3461 = vrot.lane.b32.xlu0 %v3314, 120
  %v3462 = vpop.permute.xlu0 %3461
  %3463 = vrot.lane.b32.xlu0 %v3315, 120
  %v3464 = vpop.permute.xlu0 %3463
  %3465 = vrot.lane.b32.xlu0 %v3316, 120
  %v3466 = vpop.permute.xlu0 %3465
  %3467 = vrot.lane.b32.xlu0 %v3317, 120
  %v3468 = vpop.permute.xlu0 %3467
  %3469 = vrot.lane.b32.xlu0 %v3318, 120
  %v3470 = vpop.permute.xlu0 %3469
  %3471 = vrot.lane.b32.xlu0 %v3319, 120
  %v3472 = vpop.permute.xlu0 %3471
  %3473 = vrot.lane.b32.xlu0 %v3320, 120
  %v3474 = vpop.permute.xlu0 %3473
  %3475 = vrot.lane.b32.xlu0 %v3321, 120
  %v3476 = vpop.permute.xlu0 %3475
  %3477 = vrot.lane.b32.xlu0 %v3322, 120
  %v3478 = vpop.permute.xlu0 %3477
  %3479 = vrot.lane.b32.xlu0 %v3323, 120
  %v3480 = vpop.permute.xlu0 %3479
  %3481 = vrot.lane.b32.xlu0 %v3324, 120
  %v3482 = vpop.permute.xlu0 %3481
  %3483 = vrot.lane.b32.xlu0 %v3325, 120
  %v3484 = vpop.permute.xlu0 %3483
  %3485 = vrot.lane.b32.xlu0 %v3326, 120
  %v3486 = vpop.permute.xlu0 %3485
  %3487 = vrot.lane.b32.xlu0 %v3327, 120
  %v3488 = vpop.permute.xlu0 %3487
  %3489 = vrot.lane.b32.xlu0 %v3328, 120
  %v3490 = vpop.permute.xlu0 %3489
  %3491 = vrot.lane.b32.xlu0 %v3329, 120
  %v3492 = vpop.permute.xlu0 %3491
  %3493 = vrot.lane.b32.xlu0 %v3330, 120
  %v3494 = vpop.permute.xlu0 %3493
  %3495 = vrot.lane.b32.xlu0 %v3331, 120
  %v3496 = vpop.permute.xlu0 %3495
  %3497 = vrot.lane.b32.xlu0 %v3332, 120
  %v3498 = vpop.permute.xlu0 %3497
  %3499 = vrot.lane.b32.xlu0 %v3333, 120
  %v3500 = vpop.permute.xlu0 %3499
  %3501 = vrot.lane.b32.xlu0 %v3334, 120
  %v3502 = vpop.permute.xlu0 %3501
  %3503 = vrot.lane.b32.xlu0 %v3335, 120
  %v3504 = vpop.permute.xlu0 %3503
  %3505 = vrot.lane.b32.xlu0 %v3336, 120
  %v3506 = vpop.permute.xlu0 %3505
  %3507 = vrot.lane.b32.xlu0 %v3337, 120
  %v3508 = vpop.permute.xlu0 %3507
  %3509 = vrot.lane.b32.xlu0 %v3338, 120
  %v3510 = vpop.permute.xlu0 %3509
  %3511 = vrot.lane.b32.xlu0 %v3339, 120
  %v3512 = vpop.permute.xlu0 %3511
  %3513 = vrot.lane.b32.xlu0 %v3340, 120
  %v3514 = vpop.permute.xlu0 %3513
  %3515 = vrot.lane.b32.xlu0 %v3341, 120
  %v3516 = vpop.permute.xlu0 %3515
  %3517 = vrot.lane.b32.xlu0 %v3342, 120
  %v3518 = vpop.permute.xlu0 %3517
  %3519 = vrot.lane.b32.xlu0 %v3343, 120
  %v3520 = vpop.permute.xlu0 %3519
  %3521 = vrot.lane.b32.xlu0 %v3344, 120
  %v3522 = vpop.permute.xlu0 %3521
  %3523 = vrot.lane.b32.xlu0 %v3345, 120
  %v3524 = vpop.permute.xlu0 %3523
  %3525 = vrot.lane.b32.xlu0 %v3346, 120
  %v3526 = vpop.permute.xlu0 %3525
  %v3527 = vsel %vm109, %v3408, %v3410
  %v3528 = vsel %vm109, %v3412, %v3414
  %v3529 = vsel %vm109, %v3416, %v3418
  %v3530 = vsel %vm109, %v3420, %v3422
  %v3531 = vsel %vm109, %v3424, %v3426
  %v3532 = vsel %vm109, %v3428, %v3430
  %v3533 = vsel %vm109, %v3432, %v3434
  %v3534 = vsel %vm109, %v3436, %v3438
  %v3535 = vsel %vm109, %v3440, %v3442
  %v3536 = vsel %vm109, %v3444, %v3446
  %v3537 = vsel %vm109, %v3448, %v3450
  %v3538 = vsel %vm109, %v3452, %v3454
  %v3539 = vsel %vm109, %v3456, %v3458
  %v3540 = vsel %vm109, %v3460, %v3462
  %v3541 = vsel %vm109, %v3464, %v3466
  %v3542 = vsel %vm109, %v3468, %v3470
  %v3543 = vsel %vm109, %v3472, %v3474
  %v3544 = vsel %vm109, %v3476, %v3478
  %v3545 = vsel %vm109, %v3480, %v3482
  %v3546 = vsel %vm109, %v3484, %v3486
  %v3547 = vsel %vm109, %v3488, %v3490
  %v3548 = vsel %vm109, %v3492, %v3494
  %v3549 = vsel %vm109, %v3496, %v3498
  %v3550 = vsel %vm109, %v3500, %v3502
  %v3551 = vsel %vm109, %v3504, %v3506
  %v3552 = vsel %vm109, %v3508, %v3510
  %v3553 = vsel %vm109, %v3512, %v3514
  %v3554 = vsel %vm109, %v3516, %v3518
  %v3555 = vsel %vm109, %v3520, %v3522
  %v3556 = vsel %vm109, %v3524, %v3526
  %3617 = vrot.lane.b32.xlu0 %v3287, 112
  %v3618 = vpop.permute.xlu0 %3617
  %3619 = vrot.lane.b32.xlu0 %v3288, 112
  %v3620 = vpop.permute.xlu0 %3619
  %3621 = vrot.lane.b32.xlu0 %v3289, 112
  %v3622 = vpop.permute.xlu0 %3621
  %3623 = vrot.lane.b32.xlu0 %v3290, 112
  %v3624 = vpop.permute.xlu0 %3623
  %3625 = vrot.lane.b32.xlu0 %v3291, 112
  %v3626 = vpop.permute.xlu0 %3625
  %3627 = vrot.lane.b32.xlu0 %v3292, 112
  %v3628 = vpop.permute.xlu0 %3627
  %3629 = vrot.lane.b32.xlu0 %v3293, 112
  %v3630 = vpop.permute.xlu0 %3629
  %3631 = vrot.lane.b32.xlu0 %v3294, 112
  %v3632 = vpop.permute.xlu0 %3631
  %3633 = vrot.lane.b32.xlu0 %v3295, 112
  %v3634 = vpop.permute.xlu0 %3633
  %3635 = vrot.lane.b32.xlu0 %v3296, 112
  %v3636 = vpop.permute.xlu0 %3635
  %3637 = vrot.lane.b32.xlu0 %v3297, 112
  %v3638 = vpop.permute.xlu0 %3637
  %3639 = vrot.lane.b32.xlu0 %v3298, 112
  %v3640 = vpop.permute.xlu0 %3639
  %3641 = vrot.lane.b32.xlu0 %v3299, 112
  %v3642 = vpop.permute.xlu0 %3641
  %3643 = vrot.lane.b32.xlu0 %v3300, 112
  %v3644 = vpop.permute.xlu0 %3643
  %3645 = vrot.lane.b32.xlu0 %v3301, 112
  %v3646 = vpop.permute.xlu0 %3645
  %3647 = vrot.lane.b32.xlu0 %v3302, 112
  %v3648 = vpop.permute.xlu0 %3647
  %3649 = vrot.lane.b32.xlu0 %v3303, 112
  %v3650 = vpop.permute.xlu0 %3649
  %3651 = vrot.lane.b32.xlu0 %v3304, 112
  %v3652 = vpop.permute.xlu0 %3651
  %3653 = vrot.lane.b32.xlu0 %v3305, 112
  %v3654 = vpop.permute.xlu0 %3653
  %3655 = vrot.lane.b32.xlu0 %v3306, 112
  %v3656 = vpop.permute.xlu0 %3655
  %3657 = vrot.lane.b32.xlu0 %v3307, 112
  %v3658 = vpop.permute.xlu0 %3657
  %3659 = vrot.lane.b32.xlu0 %v3308, 112
  %v3660 = vpop.permute.xlu0 %3659
  %3661 = vrot.lane.b32.xlu0 %v3309, 112
  %v3662 = vpop.permute.xlu0 %3661
  %3663 = vrot.lane.b32.xlu0 %v3310, 112
  %v3664 = vpop.permute.xlu0 %3663
  %3665 = vrot.lane.b32.xlu0 %v3311, 112
  %v3666 = vpop.permute.xlu0 %3665
  %3667 = vrot.lane.b32.xlu0 %v3312, 112
  %v3668 = vpop.permute.xlu0 %3667
  %3669 = vrot.lane.b32.xlu0 %v3313, 112
  %v3670 = vpop.permute.xlu0 %3669
  %3671 = vrot.lane.b32.xlu0 %v3314, 112
  %v3672 = vpop.permute.xlu0 %3671
  %3673 = vrot.lane.b32.xlu0 %v3315, 112
  %v3674 = vpop.permute.xlu0 %3673
  %3675 = vrot.lane.b32.xlu0 %v3316, 112
  %v3676 = vpop.permute.xlu0 %3675
  %3677 = vrot.lane.b32.xlu0 %v3317, 112
  %v3678 = vpop.permute.xlu0 %3677
  %3679 = vrot.lane.b32.xlu0 %v3318, 112
  %v3680 = vpop.permute.xlu0 %3679
  %3681 = vrot.lane.b32.xlu0 %v3319, 112
  %v3682 = vpop.permute.xlu0 %3681
  %3683 = vrot.lane.b32.xlu0 %v3320, 112
  %v3684 = vpop.permute.xlu0 %3683
  %3685 = vrot.lane.b32.xlu0 %v3321, 112
  %v3686 = vpop.permute.xlu0 %3685
  %3687 = vrot.lane.b32.xlu0 %v3322, 112
  %v3688 = vpop.permute.xlu0 %3687
  %3689 = vrot.lane.b32.xlu0 %v3323, 112
  %v3690 = vpop.permute.xlu0 %3689
  %3691 = vrot.lane.b32.xlu0 %v3324, 112
  %v3692 = vpop.permute.xlu0 %3691
  %3693 = vrot.lane.b32.xlu0 %v3325, 112
  %v3694 = vpop.permute.xlu0 %3693
  %3695 = vrot.lane.b32.xlu0 %v3326, 112
  %v3696 = vpop.permute.xlu0 %3695
  %3697 = vrot.lane.b32.xlu0 %v3327, 112
  %v3698 = vpop.permute.xlu0 %3697
  %3699 = vrot.lane.b32.xlu0 %v3328, 112
  %v3700 = vpop.permute.xlu0 %3699
  %3701 = vrot.lane.b32.xlu0 %v3329, 112
  %v3702 = vpop.permute.xlu0 %3701
  %3703 = vrot.lane.b32.xlu0 %v3330, 112
  %v3704 = vpop.permute.xlu0 %3703
  %3705 = vrot.lane.b32.xlu0 %v3331, 112
  %v3706 = vpop.permute.xlu0 %3705
  %3707 = vrot.lane.b32.xlu0 %v3332, 112
  %v3708 = vpop.permute.xlu0 %3707
  %3709 = vrot.lane.b32.xlu0 %v3333, 112
  %v3710 = vpop.permute.xlu0 %3709
  %3711 = vrot.lane.b32.xlu0 %v3334, 112
  %v3712 = vpop.permute.xlu0 %3711
  %3713 = vrot.lane.b32.xlu0 %v3335, 112
  %v3714 = vpop.permute.xlu0 %3713
  %3715 = vrot.lane.b32.xlu0 %v3336, 112
  %v3716 = vpop.permute.xlu0 %3715
  %3717 = vrot.lane.b32.xlu0 %v3337, 112
  %v3718 = vpop.permute.xlu0 %3717
  %3719 = vrot.lane.b32.xlu0 %v3338, 112
  %v3720 = vpop.permute.xlu0 %3719
  %3721 = vrot.lane.b32.xlu0 %v3339, 112
  %v3722 = vpop.permute.xlu0 %3721
  %3723 = vrot.lane.b32.xlu0 %v3340, 112
  %v3724 = vpop.permute.xlu0 %3723
  %3725 = vrot.lane.b32.xlu0 %v3341, 112
  %v3726 = vpop.permute.xlu0 %3725
  %3727 = vrot.lane.b32.xlu0 %v3342, 112
  %v3728 = vpop.permute.xlu0 %3727
  %3729 = vrot.lane.b32.xlu0 %v3343, 112
  %v3730 = vpop.permute.xlu0 %3729
  %3731 = vrot.lane.b32.xlu0 %v3344, 112
  %v3732 = vpop.permute.xlu0 %3731
  %3733 = vrot.lane.b32.xlu0 %v3345, 112
  %v3734 = vpop.permute.xlu0 %3733
  %3735 = vrot.lane.b32.xlu0 %v3346, 112
  %v3736 = vpop.permute.xlu0 %3735
  %v3737 = vsel %vm138, %v3618, %v3620
  %v3738 = vsel %vm138, %v3622, %v3624
  %v3739 = vsel %vm138, %v3626, %v3628
  %v3740 = vsel %vm138, %v3630, %v3632
  %v3741 = vsel %vm138, %v3634, %v3636
  %v3742 = vsel %vm138, %v3638, %v3640
  %v3743 = vsel %vm138, %v3642, %v3644
  %v3744 = vsel %vm138, %v3646, %v3648
  %v3745 = vsel %vm138, %v3650, %v3652
  %v3746 = vsel %vm138, %v3654, %v3656
  %v3747 = vsel %vm138, %v3658, %v3660
  %v3748 = vsel %vm138, %v3662, %v3664
  %v3749 = vsel %vm138, %v3666, %v3668
  %v3750 = vsel %vm138, %v3670, %v3672
  %v3751 = vsel %vm138, %v3674, %v3676
  %v3752 = vsel %vm138, %v3678, %v3680
  %v3753 = vsel %vm138, %v3682, %v3684
  %v3754 = vsel %vm138, %v3686, %v3688
  %v3755 = vsel %vm138, %v3690, %v3692
  %v3756 = vsel %vm138, %v3694, %v3696
  %v3757 = vsel %vm138, %v3698, %v3700
  %v3758 = vsel %vm138, %v3702, %v3704
  %v3759 = vsel %vm138, %v3706, %v3708
  %v3760 = vsel %vm138, %v3710, %v3712
  %v3761 = vsel %vm138, %v3714, %v3716
  %v3762 = vsel %vm138, %v3718, %v3720
  %v3763 = vsel %vm138, %v3722, %v3724
  %v3764 = vsel %vm138, %v3726, %v3728
  %v3765 = vsel %vm138, %v3730, %v3732
  %v3766 = vsel %vm138, %v3734, %v3736
  %v3827 = vld [vmem:[%s5] sm:$0xff]
  %v3828 = vld [vmem:[%s5 + $0x8] sm:$0xff]
  %v3829 = vld [vmem:[%s5 + $0x10] sm:$0xff]
  %v3830 = vld [vmem:[%s5 + $0x18] sm:$0xff]
  %v3831 = vld [vmem:[%s5 + $0x20] sm:$0xff]
  %v3832 = vld [vmem:[%s5 + $0x28] sm:$0xff]
  %v3833 = vld [vmem:[%s5 + $0x30] sm:$0xff]
  %v3834 = vld [vmem:[%s5 + $0x38] sm:$0xff]
  %v3835 = vld [vmem:[%s5 + $0x40] sm:$0xff]
  %v3836 = vld [vmem:[%s5 + $0x48] sm:$0xff]
  %v3837 = vld [vmem:[%s5 + $0x50] sm:$0xff]
  %v3838 = vld [vmem:[%s5 + $0x58] sm:$0xff]
  %v3839 = vld [vmem:[%s5 + $0x60] sm:$0xff]
  %v3840 = vld [vmem:[%s5 + $0x68] sm:$0xff]
  %v3841 = vld [vmem:[%s5 + $0x70] sm:$0xff]
  %v3842 = vld [vmem:[%s5 + $0x78] sm:$0xff]
  %v3843 = vld [vmem:[%s5 + $0x80] sm:$0xff]
  %v3844 = vld [vmem:[%s5 + $0x88] sm:$0xff]
  %v3845 = vld [vmem:[%s5 + $0x90] sm:$0xff]
  %v3846 = vld [vmem:[%s5 + $0x98] sm:$0xff]
  %v3847 = vld [vmem:[%s5 + $0xa0] sm:$0xff]
  %v3848 = vld [vmem:[%s5 + $0xa8] sm:$0xff]
  %v3849 = vld [vmem:[%s5 + $0xb0] sm:$0xff]
  %v3850 = vld [vmem:[%s5 + $0xb8] sm:$0xff]
  %v3851 = vld [vmem:[%s5 + $0xc0] sm:$0xff]
  %v3852 = vld [vmem:[%s5 + $0xc8] sm:$0xff]
  %v3853 = vld [vmem:[%s5 + $0xd0] sm:$0xff]
  %v3854 = vld [vmem:[%s5 + $0xd8] sm:$0xff]
  %v3855 = vld [vmem:[%s5 + $0xe0] sm:$0xff]
  %v3856 = vld [vmem:[%s5 + $0xe8] sm:$0xff]
  %v3857 = vld [vmem:[%s5 + $0xf0] sm:$0xff]
  %v3858 = vld [vmem:[%s5 + $0xf8] sm:$0xff]
  %v3859 = vld [vmem:[%s5 + $0x100] sm:$0xff]
  %v3860 = vld [vmem:[%s5 + $0x108] sm:$0xff]
  %v3861 = vld [vmem:[%s5 + $0x110] sm:$0xff]
  %v3862 = vld [vmem:[%s5 + $0x118] sm:$0xff]
  %v3863 = vld [vmem:[%s5 + $0x120] sm:$0xff]
  %v3864 = vld [vmem:[%s5 + $0x128] sm:$0xff]
  %v3865 = vld [vmem:[%s5 + $0x130] sm:$0xff]
  %v3866 = vld [vmem:[%s5 + $0x138] sm:$0xff]
  %v3867 = vld [vmem:[%s5 + $0x140] sm:$0xff]
  %v3868 = vld [vmem:[%s5 + $0x148] sm:$0xff]
  %v3869 = vld [vmem:[%s5 + $0x150] sm:$0xff]
  %v3870 = vld [vmem:[%s5 + $0x158] sm:$0xff]
  %v3871 = vld [vmem:[%s5 + $0x160] sm:$0xff]
  %v3872 = vld [vmem:[%s5 + $0x168] sm:$0xff]
  %v3873 = vld [vmem:[%s5 + $0x170] sm:$0xff]
  %v3874 = vld [vmem:[%s5 + $0x178] sm:$0xff]
  %v3875 = vld [vmem:[%s5 + $0x180] sm:$0xff]
  %v3876 = vld [vmem:[%s5 + $0x188] sm:$0xff]
  %v3877 = vld [vmem:[%s5 + $0x190] sm:$0xff]
  %v3878 = vld [vmem:[%s5 + $0x198] sm:$0xff]
  %v3879 = vld [vmem:[%s5 + $0x1a0] sm:$0xff]
  %v3880 = vld [vmem:[%s5 + $0x1a8] sm:$0xff]
  %v3881 = vld [vmem:[%s5 + $0x1b0] sm:$0xff]
  %v3882 = vld [vmem:[%s5 + $0x1b8] sm:$0xff]
  %v3883 = vld [vmem:[%s5 + $0x1c0] sm:$0xff]
  %v3884 = vld [vmem:[%s5 + $0x1c8] sm:$0xff]
  %v3885 = vld [vmem:[%s5 + $0x1d0] sm:$0xff]
  %v3886 = vld [vmem:[%s5 + $0x1d8] sm:$0xff]
  %v3887 = vld [vmem:[%s5 + $0x1e0] sm:$0xff]
  %v3888 = vld [vmem:[%s5 + $0x1e8] sm:$0xff]
  %v3889 = vld [vmem:[%s5 + $0x1f0] sm:$0xff]
  %v3890 = vld [vmem:[%s5 + $0x1f8] sm:$0xff]
  %v3891 = vld [vmem:[%s5 + $0x200] sm:$0xff]
  %v3892 = vld [vmem:[%s5 + $0x208] sm:$0xff]
  %v3893 = vld [vmem:[%s5 + $0x210] sm:$0xff]
  %v3894 = vld [vmem:[%s5 + $0x218] sm:$0xff]
  %v3895 = vld [vmem:[%s5 + $0x220] sm:$0xff]
  %v3896 = vld [vmem:[%s5 + $0x228] sm:$0xff]
  %v3897 = vld [vmem:[%s5 + $0x230] sm:$0xff]
  %v3898 = vld [vmem:[%s5 + $0x238] sm:$0xff]
  %v3899 = vld [vmem:[%s5 + $0x240] sm:$0xff]
  %v3900 = vld [vmem:[%s5 + $0x248] sm:$0xff]
  %v3901 = vld [vmem:[%s5 + $0x250] sm:$0xff]
  %v3902 = vld [vmem:[%s5 + $0x258] sm:$0xff]
  %v3903 = vld [vmem:[%s5 + $0x260] sm:$0xff]
  %v3904 = vld [vmem:[%s5 + $0x268] sm:$0xff]
  %v3905 = vld [vmem:[%s5 + $0x270] sm:$0xff]
  %v3906 = vld [vmem:[%s5 + $0x278] sm:$0xff]
  %v3907 = vld [vmem:[%s5 + $0x280] sm:$0xff]
  %v3908 = vld [vmem:[%s5 + $0x288] sm:$0xff]
  %v3909 = vld [vmem:[%s5 + $0x290] sm:$0xff]
  %v3910 = vld [vmem:[%s5 + $0x298] sm:$0xff]
  %v3911 = vld [vmem:[%s5 + $0x2a0] sm:$0xff]
  %v3912 = vld [vmem:[%s5 + $0x2a8] sm:$0xff]
  %v3913 = vld [vmem:[%s5 + $0x2b0] sm:$0xff]
  %v3914 = vld [vmem:[%s5 + $0x2b8] sm:$0xff]
  %v3915 = vld [vmem:[%s5 + $0x2c0] sm:$0xff]
  %v3916 = vld [vmem:[%s5 + $0x2c8] sm:$0xff]
  %v3917 = vld [vmem:[%s5 + $0x2d0] sm:$0xff]
  %v3918 = vld [vmem:[%s5 + $0x2d8] sm:$0xff]
  %v3919 = vld [vmem:[%s5 + $0x2e0] sm:$0xff]
  %v3920 = vld [vmem:[%s5 + $0x2e8] sm:$0xff]
  %v3921 = vld [vmem:[%s5 + $0x2f0] sm:$0xff]
  %v3922 = vld [vmem:[%s5 + $0x2f8] sm:$0xff]
  %v3923 = vld [vmem:[%s5 + $0x300] sm:$0xff]
  %v3924 = vld [vmem:[%s5 + $0x308] sm:$0xff]
  %v3925 = vld [vmem:[%s5 + $0x310] sm:$0xff]
  %v3926 = vld [vmem:[%s5 + $0x318] sm:$0xff]
  %v3927 = vld [vmem:[%s5 + $0x320] sm:$0xff]
  %v3928 = vld [vmem:[%s5 + $0x328] sm:$0xff]
  %v3929 = vld [vmem:[%s5 + $0x330] sm:$0xff]
  %v3930 = vld [vmem:[%s5 + $0x338] sm:$0xff]
  %v3931 = vld [vmem:[%s5 + $0x340] sm:$0xff]
  %v3932 = vld [vmem:[%s5 + $0x348] sm:$0xff]
  %v3933 = vld [vmem:[%s5 + $0x350] sm:$0xff]
  %v3934 = vld [vmem:[%s5 + $0x358] sm:$0xff]
  %v3935 = vld [vmem:[%s5 + $0x360] sm:$0xff]
  %v3936 = vld [vmem:[%s5 + $0x368] sm:$0xff]
  %v3937 = vld [vmem:[%s5 + $0x370] sm:$0xff]
  %v3938 = vld [vmem:[%s5 + $0x378] sm:$0xff]
  %v3939 = vld [vmem:[%s5 + $0x380] sm:$0xff]
  %v3940 = vld [vmem:[%s5 + $0x388] sm:$0xff]
  %v3941 = vld [vmem:[%s5 + $0x390] sm:$0xff]
  %v3942 = vld [vmem:[%s5 + $0x398] sm:$0xff]
  %v3943 = vld [vmem:[%s5 + $0x3a0] sm:$0xff]
  %v3944 = vld [vmem:[%s5 + $0x3a8] sm:$0xff]
  %v3945 = vld [vmem:[%s5 + $0x3b0] sm:$0xff]
  %v3946 = vld [vmem:[%s5 + $0x3b8] sm:$0xff]
  %v3947 = vld [vmem:[%s5 + $0x3c0] sm:$0xff]
  %v3948 = vld [vmem:[%s5 + $0x3c8] sm:$0xff]
  %v3949 = vld [vmem:[%s5 + $0x3d0] sm:$0xff]
  %v3950 = vld [vmem:[%s5 + $0x3d8] sm:$0xff]
  %v3951 = vld [vmem:[%s5 + $0x3e0] sm:$0xff]
  %v3952 = vld [vmem:[%s5 + $0x3e8] sm:$0xff]
  %v3953 = vld [vmem:[%s5 + $0x3f0] sm:$0xff]
  %v3954 = vld [vmem:[%s5 + $0x3f8] sm:$0xff]
  %v3955 = vld [vmem:[%s5 + $0x400] sm:$0xff]
  %v3956 = vld [vmem:[%s5 + $0x408] sm:$0xff]
  %v3957 = vld [vmem:[%s5 + $0x410] sm:$0xff]
  %v3958 = vld [vmem:[%s5 + $0x418] sm:$0xff]
  %v3959 = vld [vmem:[%s5 + $0x420] sm:$0xff]
  %v3960 = vld [vmem:[%s5 + $0x428] sm:$0xff]
  %v3961 = vld [vmem:[%s5 + $0x430] sm:$0xff]
  %v3962 = vld [vmem:[%s5 + $0x438] sm:$0xff]
  %v3963 = vld [vmem:[%s5 + $0x440] sm:$0xff]
  %v3964 = vld [vmem:[%s5 + $0x448] sm:$0xff]
  %v3965 = vld [vmem:[%s5 + $0x450] sm:$0xff]
  %v3966 = vld [vmem:[%s5 + $0x458] sm:$0xff]
  %v3967 = vld [vmem:[%s5 + $0x460] sm:$0xff]
  %v3968 = vld [vmem:[%s5 + $0x468] sm:$0xff]
  %v3969 = vld [vmem:[%s5 + $0x470] sm:$0xff]
  %v3970 = vld [vmem:[%s5 + $0x478] sm:$0xff]
  %v3971 = vld [vmem:[%s5 + $0x480] sm:$0xff]
  %v3972 = vld [vmem:[%s5 + $0x488] sm:$0xff]
  %v3973 = vld [vmem:[%s5 + $0x490] sm:$0xff]
  %v3974 = vld [vmem:[%s5 + $0x498] sm:$0xff]
  %v3975 = vld [vmem:[%s5 + $0x4a0] sm:$0xff]
  %v3976 = vld [vmem:[%s5 + $0x4a8] sm:$0xff]
  %v3977 = vld [vmem:[%s5 + $0x4b0] sm:$0xff]
  %v3978 = vld [vmem:[%s5 + $0x4b8] sm:$0xff]
  %v3979 = vld [vmem:[%s5 + $0x4c0] sm:$0xff]
  %v3980 = vld [vmem:[%s5 + $0x4c8] sm:$0xff]
  %v3981 = vld [vmem:[%s5 + $0x4d0] sm:$0xff]
  %v3982 = vld [vmem:[%s5 + $0x4d8] sm:$0xff]
  %v3983 = vld [vmem:[%s5 + $0x4e0] sm:$0xff]
  %v3984 = vld [vmem:[%s5 + $0x4e8] sm:$0xff]
  %v3985 = vld [vmem:[%s5 + $0x4f0] sm:$0xff]
  %v3986 = vld [vmem:[%s5 + $0x4f8] sm:$0xff]
  %v3987 = vld [vmem:[%s5 + $0x500] sm:$0xff]
  %v3988 = vld [vmem:[%s5 + $0x508] sm:$0xff]
  %v3989 = vld [vmem:[%s5 + $0x510] sm:$0xff]
  %v3990 = vld [vmem:[%s5 + $0x518] sm:$0xff]
  %v3991 = vld [vmem:[%s5 + $0x520] sm:$0xff]
  %v3992 = vld [vmem:[%s5 + $0x528] sm:$0xff]
  %v3993 = vld [vmem:[%s5 + $0x530] sm:$0xff]
  %v3994 = vld [vmem:[%s5 + $0x538] sm:$0xff]
  %v3995 = vld [vmem:[%s5 + $0x540] sm:$0xff]
  %v3996 = vld [vmem:[%s5 + $0x548] sm:$0xff]
  %v3997 = vld [vmem:[%s5 + $0x550] sm:$0xff]
  %v3998 = vld [vmem:[%s5 + $0x558] sm:$0xff]
  %v3999 = vld [vmem:[%s5 + $0x560] sm:$0xff]
  %v4000 = vld [vmem:[%s5 + $0x568] sm:$0xff]
  %v4001 = vld [vmem:[%s5 + $0x570] sm:$0xff]
  %v4002 = vld [vmem:[%s5 + $0x578] sm:$0xff]
  %v4003 = vld [vmem:[%s5 + $0x580] sm:$0xff]
  %v4004 = vld [vmem:[%s5 + $0x588] sm:$0xff]
  %v4005 = vld [vmem:[%s5 + $0x590] sm:$0xff]
  %v4006 = vld [vmem:[%s5 + $0x598] sm:$0xff]
  %v4007 = vld [vmem:[%s5 + $0x5a0] sm:$0xff]
  %v4008 = vld [vmem:[%s5 + $0x5a8] sm:$0xff]
  %v4009 = vld [vmem:[%s5 + $0x5b0] sm:$0xff]
  %v4010 = vld [vmem:[%s5 + $0x5b8] sm:$0xff]
  %v4011 = vld [vmem:[%s5 + $0x5c0] sm:$0xff]
  %v4012 = vld [vmem:[%s5 + $0x5c8] sm:$0xff]
  %v4013 = vld [vmem:[%s5 + $0x5d0] sm:$0xff]
  %v4014 = vld [vmem:[%s5 + $0x5d8] sm:$0xff]
  %v4015 = vld [vmem:[%s5 + $0x5e0] sm:$0xff]
  %v4016 = vld [vmem:[%s5 + $0x5e8] sm:$0xff]
  %v4017 = vld [vmem:[%s5 + $0x5f0] sm:$0xff]
  %v4018 = vld [vmem:[%s5 + $0x5f8] sm:$0xff]
  %v4019 = vld [vmem:[%s5 + $0x600] sm:$0xff]
  %v4020 = vld [vmem:[%s5 + $0x608] sm:$0xff]
  %v4021 = vld [vmem:[%s5 + $0x610] sm:$0xff]
  %v4022 = vld [vmem:[%s5 + $0x618] sm:$0xff]
  %v4023 = vld [vmem:[%s5 + $0x620] sm:$0xff]
  %v4024 = vld [vmem:[%s5 + $0x628] sm:$0xff]
  %v4025 = vld [vmem:[%s5 + $0x630] sm:$0xff]
  %v4026 = vld [vmem:[%s5 + $0x638] sm:$0xff]
  %v4027 = vld [vmem:[%s5 + $0x640] sm:$0xff]
  %v4028 = vld [vmem:[%s5 + $0x648] sm:$0xff]
  %v4029 = vld [vmem:[%s5 + $0x650] sm:$0xff]
  %v4030 = vld [vmem:[%s5 + $0x658] sm:$0xff]
  %v4031 = vld [vmem:[%s5 + $0x660] sm:$0xff]
  %v4032 = vld [vmem:[%s5 + $0x668] sm:$0xff]
  %v4033 = vld [vmem:[%s5 + $0x670] sm:$0xff]
  %v4034 = vld [vmem:[%s5 + $0x678] sm:$0xff]
  %v4035 = vld [vmem:[%s5 + $0x680] sm:$0xff]
  %v4036 = vld [vmem:[%s5 + $0x688] sm:$0xff]
  %v4037 = vld [vmem:[%s5 + $0x690] sm:$0xff]
  %v4038 = vld [vmem:[%s5 + $0x698] sm:$0xff]
  %v4039 = vld [vmem:[%s5 + $0x6a0] sm:$0xff]
  %v4040 = vld [vmem:[%s5 + $0x6a8] sm:$0xff]
  %v4041 = vld [vmem:[%s5 + $0x6b0] sm:$0xff]
  %v4042 = vld [vmem:[%s5 + $0x6b8] sm:$0xff]
  %v4043 = vld [vmem:[%s5 + $0x6c0] sm:$0xff]
  %v4044 = vld [vmem:[%s5 + $0x6c8] sm:$0xff]
  %v4045 = vld [vmem:[%s5 + $0x6d0] sm:$0xff]
  %v4046 = vld [vmem:[%s5 + $0x6d8] sm:$0xff]
  %v4047 = vld [vmem:[%s5 + $0x6e0] sm:$0xff]
  %v4048 = vld [vmem:[%s5 + $0x6e8] sm:$0xff]
  %v4049 = vld [vmem:[%s5 + $0x6f0] sm:$0xff]
  %v4050 = vld [vmem:[%s5 + $0x6f8] sm:$0xff]
  %v4051 = vld [vmem:[%s5 + $0x700] sm:$0xff]
  %v4052 = vld [vmem:[%s5 + $0x708] sm:$0xff]
  %v4053 = vld [vmem:[%s5 + $0x710] sm:$0xff]
  %v4054 = vld [vmem:[%s5 + $0x718] sm:$0xff]
  %v4055 = vld [vmem:[%s5 + $0x720] sm:$0xff]
  %v4056 = vld [vmem:[%s5 + $0x728] sm:$0xff]
  %v4057 = vld [vmem:[%s5 + $0x730] sm:$0xff]
  %v4058 = vld [vmem:[%s5 + $0x738] sm:$0xff]
  %v4059 = vld [vmem:[%s5 + $0x740] sm:$0xff]
  %v4060 = vld [vmem:[%s5 + $0x748] sm:$0xff]
  %v4061 = vld [vmem:[%s5 + $0x750] sm:$0xff]
  %v4062 = vld [vmem:[%s5 + $0x758] sm:$0xff]
  %v4063 = vld [vmem:[%s5 + $0x760] sm:$0xff]
  %v4064 = vld [vmem:[%s5 + $0x768] sm:$0xff]
  %v4065 = vld [vmem:[%s5 + $0x770] sm:$0xff]
  %v4066 = vld [vmem:[%s5 + $0x778] sm:$0xff]
  %v4067 = vld [vmem:[%s5 + $0x780] sm:$0xff]
  %v4068 = vld [vmem:[%s5 + $0x788] sm:$0xff]
  %v4069 = vld [vmem:[%s5 + $0x790] sm:$0xff]
  %v4070 = vld [vmem:[%s5 + $0x798] sm:$0xff]
  %v4071 = vld [vmem:[%s5 + $0x7a0] sm:$0xff]
  %v4072 = vld [vmem:[%s5 + $0x7a8] sm:$0xff]
  %v4073 = vld [vmem:[%s5 + $0x7b0] sm:$0x3]
  %v4074 = vld [vmem:[%s5 + $0x7b8] sm:$0x3]
  %v4075 = vld [vmem:[%s5 + $0x7c0] sm:$0x3]
  %v4076 = vld [vmem:[%s5 + $0x7c8] sm:$0x3]
  %v4077 = vld [vmem:[%s5 + $0x7d0] sm:$0x3]
  %v4078 = vld [vmem:[%s5 + $0x7d8] sm:$0x3]
  %v4079 = vld [vmem:[%s6] sm:$0xff]
  %v4080 = vld [vmem:[%s6 + $0x8] sm:$0xff]
  %v4081 = vld [vmem:[%s6 + $0x10] sm:$0xff]
  %v4082 = vld [vmem:[%s6 + $0x18] sm:$0xff]
  %v4083 = vld [vmem:[%s6 + $0x20] sm:$0xff]
  %v4084 = vld [vmem:[%s6 + $0x28] sm:$0xff]
  %v4085 = vld [vmem:[%s6 + $0x30] sm:$0xff]
  %v4086 = vld [vmem:[%s6 + $0x38] sm:$0xff]
  %v4087 = vld [vmem:[%s6 + $0x40] sm:$0xff]
  %v4088 = vld [vmem:[%s6 + $0x48] sm:$0xff]
  %v4089 = vld [vmem:[%s6 + $0x50] sm:$0xff]
  %v4090 = vld [vmem:[%s6 + $0x58] sm:$0xff]
  %v4091 = vld [vmem:[%s6 + $0x60] sm:$0xff]
  %v4092 = vld [vmem:[%s6 + $0x68] sm:$0xff]
  %v4093 = vld [vmem:[%s6 + $0x70] sm:$0xff]
  %v4094 = vld [vmem:[%s6 + $0x78] sm:$0xff]
  %v4095 = vld [vmem:[%s6 + $0x80] sm:$0xff]
  %v4096 = vld [vmem:[%s6 + $0x88] sm:$0xff]
  %v4097 = vld [vmem:[%s6 + $0x90] sm:$0xff]
  %v4098 = vld [vmem:[%s6 + $0x98] sm:$0xff]
  %v4099 = vld [vmem:[%s6 + $0xa0] sm:$0xff]
  %v4100 = vld [vmem:[%s6 + $0xa8] sm:$0xff]
  %v4101 = vld [vmem:[%s6 + $0xb0] sm:$0xff]
  %v4102 = vld [vmem:[%s6 + $0xb8] sm:$0xff]
  %v4103 = vld [vmem:[%s6 + $0xc0] sm:$0xff]
  %v4104 = vld [vmem:[%s6 + $0xc8] sm:$0xff]
  %v4105 = vld [vmem:[%s6 + $0xd0] sm:$0xff]
  %v4106 = vld [vmem:[%s6 + $0xd8] sm:$0xff]
  %v4107 = vld [vmem:[%s6 + $0xe0] sm:$0xff]
  %v4108 = vld [vmem:[%s6 + $0xe8] sm:$0xff]
  %v4109 = vld [vmem:[%s6 + $0xf0] sm:$0xff]
  %v4110 = vld [vmem:[%s6 + $0xf8] sm:$0xff]
  %v4111 = vld [vmem:[%s6 + $0x100] sm:$0xff]
  %v4112 = vld [vmem:[%s6 + $0x108] sm:$0xff]
  %v4113 = vld [vmem:[%s6 + $0x110] sm:$0xff]
  %v4114 = vld [vmem:[%s6 + $0x118] sm:$0xff]
  %v4115 = vld [vmem:[%s6 + $0x120] sm:$0xff]
  %v4116 = vld [vmem:[%s6 + $0x128] sm:$0xff]
  %v4117 = vld [vmem:[%s6 + $0x130] sm:$0xff]
  %v4118 = vld [vmem:[%s6 + $0x138] sm:$0xff]
  %v4119 = vld [vmem:[%s6 + $0x140] sm:$0xff]
  %v4120 = vld [vmem:[%s6 + $0x148] sm:$0x3]
  %4122 = vset.pattern.permute.xlu0 0
  %4123 = vperm.xlu0 %4122, %v4079
  %v4124 = vpop.permute.xlu0 %4123
  %4127 = vset.pattern.permute.xlu0 0
  %4128 = vperm.xlu0 %4127, %v4080
  %v4129 = vpop.permute.xlu0 %4128
  %4132 = vset.pattern.permute.xlu0 0
  %4133 = vperm.xlu0 %4132, %v4081
  %v4134 = vpop.permute.xlu0 %4133
  %4137 = vset.pattern.permute.xlu0 0
  %4138 = vperm.xlu0 %4137, %v4082
  %v4139 = vpop.permute.xlu0 %4138
  %4142 = vset.pattern.permute.xlu0 0
  %4143 = vperm.xlu0 %4142, %v4083
  %v4144 = vpop.permute.xlu0 %4143
  %4147 = vset.pattern.permute.xlu0 0
  %4148 = vperm.xlu0 %4147, %v4084
  %v4149 = vpop.permute.xlu0 %4148
  %4152 = vset.pattern.permute.xlu0 0
  %4153 = vperm.xlu0 %4152, %v4085
  %v4154 = vpop.permute.xlu0 %4153
  %4157 = vset.pattern.permute.xlu0 0
  %4158 = vperm.xlu0 %4157, %v4086
  %v4159 = vpop.permute.xlu0 %4158
  %4162 = vset.pattern.permute.xlu0 0
  %4163 = vperm.xlu0 %4162, %v4087
  %v4164 = vpop.permute.xlu0 %4163
  %4167 = vset.pattern.permute.xlu0 0
  %4168 = vperm.xlu0 %4167, %v4088
  %v4169 = vpop.permute.xlu0 %4168
  %4172 = vset.pattern.permute.xlu0 0
  %4173 = vperm.xlu0 %4172, %v4089
  %v4174 = vpop.permute.xlu0 %4173
  %4177 = vset.pattern.permute.xlu0 0
  %4178 = vperm.xlu0 %4177, %v4090
  %v4179 = vpop.permute.xlu0 %4178
  %4182 = vset.pattern.permute.xlu0 0
  %4183 = vperm.xlu0 %4182, %v4091
  %v4184 = vpop.permute.xlu0 %4183
  %4187 = vset.pattern.permute.xlu0 0
  %4188 = vperm.xlu0 %4187, %v4092
  %v4189 = vpop.permute.xlu0 %4188
  %4192 = vset.pattern.permute.xlu0 0
  %4193 = vperm.xlu0 %4192, %v4093
  %v4194 = vpop.permute.xlu0 %4193
  %4197 = vset.pattern.permute.xlu0 0
  %4198 = vperm.xlu0 %4197, %v4094
  %v4199 = vpop.permute.xlu0 %4198
  %4202 = vset.pattern.permute.xlu0 0
  %4203 = vperm.xlu0 %4202, %v4095
  %v4204 = vpop.permute.xlu0 %4203
  %4207 = vset.pattern.permute.xlu0 0
  %4208 = vperm.xlu0 %4207, %v4096
  %v4209 = vpop.permute.xlu0 %4208
  %4212 = vset.pattern.permute.xlu0 0
  %4213 = vperm.xlu0 %4212, %v4097
  %v4214 = vpop.permute.xlu0 %4213
  %4217 = vset.pattern.permute.xlu0 0
  %4218 = vperm.xlu0 %4217, %v4098
  %v4219 = vpop.permute.xlu0 %4218
  %4222 = vset.pattern.permute.xlu0 0
  %4223 = vperm.xlu0 %4222, %v4099
  %v4224 = vpop.permute.xlu0 %4223
  %4227 = vset.pattern.permute.xlu0 0
  %4228 = vperm.xlu0 %4227, %v4100
  %v4229 = vpop.permute.xlu0 %4228
  %4232 = vset.pattern.permute.xlu0 0
  %4233 = vperm.xlu0 %4232, %v4101
  %v4234 = vpop.permute.xlu0 %4233
  %4237 = vset.pattern.permute.xlu0 0
  %4238 = vperm.xlu0 %4237, %v4102
  %v4239 = vpop.permute.xlu0 %4238
  %4242 = vset.pattern.permute.xlu0 0
  %4243 = vperm.xlu0 %4242, %v4103
  %v4244 = vpop.permute.xlu0 %4243
  %4247 = vset.pattern.permute.xlu0 0
  %4248 = vperm.xlu0 %4247, %v4104
  %v4249 = vpop.permute.xlu0 %4248
  %4252 = vset.pattern.permute.xlu0 0
  %4253 = vperm.xlu0 %4252, %v4105
  %v4254 = vpop.permute.xlu0 %4253
  %4257 = vset.pattern.permute.xlu0 0
  %4258 = vperm.xlu0 %4257, %v4106
  %v4259 = vpop.permute.xlu0 %4258
  %4262 = vset.pattern.permute.xlu0 0
  %4263 = vperm.xlu0 %4262, %v4107
  %v4264 = vpop.permute.xlu0 %4263
  %4267 = vset.pattern.permute.xlu0 0
  %4268 = vperm.xlu0 %4267, %v4108
  %v4269 = vpop.permute.xlu0 %4268
  %4272 = vset.pattern.permute.xlu0 0
  %4273 = vperm.xlu0 %4272, %v4109
  %v4274 = vpop.permute.xlu0 %4273
  %4277 = vset.pattern.permute.xlu0 0
  %4278 = vperm.xlu0 %4277, %v4110
  %v4279 = vpop.permute.xlu0 %4278
  %4282 = vset.pattern.permute.xlu0 0
  %4283 = vperm.xlu0 %4282, %v4111
  %v4284 = vpop.permute.xlu0 %4283
  %4287 = vset.pattern.permute.xlu0 0
  %4288 = vperm.xlu0 %4287, %v4112
  %v4289 = vpop.permute.xlu0 %4288
  %4292 = vset.pattern.permute.xlu0 0
  %4293 = vperm.xlu0 %4292, %v4113
  %v4294 = vpop.permute.xlu0 %4293
  %4297 = vset.pattern.permute.xlu0 0
  %4298 = vperm.xlu0 %4297, %v4114
  %v4299 = vpop.permute.xlu0 %4298
  %4302 = vset.pattern.permute.xlu0 0
  %4303 = vperm.xlu0 %4302, %v4115
  %v4304 = vpop.permute.xlu0 %4303
  %4307 = vset.pattern.permute.xlu0 0
  %4308 = vperm.xlu0 %4307, %v4116
  %v4309 = vpop.permute.xlu0 %4308
  %4312 = vset.pattern.permute.xlu0 0
  %4313 = vperm.xlu0 %4312, %v4117
  %v4314 = vpop.permute.xlu0 %4313
  %4317 = vset.pattern.permute.xlu0 0
  %4318 = vperm.xlu0 %4317, %v4118
  %v4319 = vpop.permute.xlu0 %4318
  %4322 = vset.pattern.permute.xlu0 0
  %4323 = vperm.xlu0 %4322, %v4119
  %v4324 = vpop.permute.xlu0 %4323
  %4327 = vset.pattern.permute.xlu0 0
  %4328 = vperm.xlu0 %4327, %v4120
  %v4329 = vpop.permute.xlu0 %4328
  %vm4331 = vcmask 654336
  %v4333 = vsel %vm4331, %v3832, 0
  %v4336 = vsel %vm4331, %v3838, 0
  %v4339 = vsel %vm4331, %v3844, 0
  %v4342 = vsel %vm4331, %v3850, 0
  %v4345 = vsel %vm4331, %v3856, 0
  %v4348 = vsel %vm4331, %v3862, 0
  %v4351 = vsel %vm4331, %v3868, 0
  %v4354 = vsel %vm4331, %v3874, 0
  %v4357 = vsel %vm4331, %v3880, 0
  %v4360 = vsel %vm4331, %v3886, 0
  %v4363 = vsel %vm4331, %v3892, 0
  %v4366 = vsel %vm4331, %v3898, 0
  %v4369 = vsel %vm4331, %v3904, 0
  %v4372 = vsel %vm4331, %v3910, 0
  %v4375 = vsel %vm4331, %v3916, 0
  %v4378 = vsel %vm4331, %v3922, 0
  %v4381 = vsel %vm4331, %v3928, 0
  %v4384 = vsel %vm4331, %v3934, 0
  %v4387 = vsel %vm4331, %v3940, 0
  %v4390 = vsel %vm4331, %v3946, 0
  %v4393 = vsel %vm4331, %v3952, 0
  %v4396 = vsel %vm4331, %v3958, 0
  %v4399 = vsel %vm4331, %v3964, 0
  %v4402 = vsel %vm4331, %v3970, 0
  %v4405 = vsel %vm4331, %v3976, 0
  %v4408 = vsel %vm4331, %v3982, 0
  %v4411 = vsel %vm4331, %v3988, 0
  %v4414 = vsel %vm4331, %v3994, 0
  %v4417 = vsel %vm4331, %v4000, 0
  %v4420 = vsel %vm4331, %v4006, 0
  %v4423 = vsel %vm4331, %v4012, 0
  %v4426 = vsel %vm4331, %v4018, 0
  %v4429 = vsel %vm4331, %v4024, 0
  %v4432 = vsel %vm4331, %v4030, 0
  %v4435 = vsel %vm4331, %v4036, 0
  %v4438 = vsel %vm4331, %v4042, 0
  %v4441 = vsel %vm4331, %v4048, 0
  %v4444 = vsel %vm4331, %v4054, 0
  %v4447 = vsel %vm4331, %v4060, 0
  %v4450 = vsel %vm4331, %v4066, 0
  %v4453 = vsel %vm4331, %v4072, 0
  %v4456 = vsel %vm4331, %v4078, 0
  %4458 = vmatpush.msra.mxu0 %v3317
  %4459 = vmatpush.msra.mxu0 %v3315
  %4460 = vmatpush.msra.mxu0 %v3313
  %4461 = vmatpush.msra.mxu0 %v3311
  %4462 = vmatpush.msra.mxu0 %v3309
  %4463 = vmatpush.msra.mxu0 %v3307
  %4464 = vmatpush.msra.mxu0 %v3305
  %4465 = vmatpush.msra.mxu0 %v3303
  %4466 = vmatpush.msra.mxu0 %v3301
  %4467 = vmatpush.msra.mxu0 %v3299
  %4468 = vmatpush.msra.mxu0 %v3297
  %4469 = vmatpush.msra.mxu0 %v3295
  %4470 = vmatpush.msra.mxu0 %v3293
  %4471 = vmatpush.msra.mxu0 %v3291
  %4472 = vmatpush.msra.mxu0 %v3289
  %4473 = vmatpush.msra.mxu0 %v3287
  %4474 = vmatmul.f32.gmra.mxu0 %v3827
  %v4475 = vpop.f32.mrf.mxu0
  %v4476 = vadd.f32 %v4124, %v4475
  %4477 = vmatmul.f32.gmra.mxu0 %v3833
  %v4478 = vpop.f32.mrf.mxu0
  %v4479 = vadd.f32 %v4129, %v4478
  %4480 = vmatmul.f32.gmra.mxu0 %v3839
  %v4481 = vpop.f32.mrf.mxu0
  %v4482 = vadd.f32 %v4134, %v4481
  %4483 = vmatmul.f32.gmra.mxu0 %v3845
  %v4484 = vpop.f32.mrf.mxu0
  %v4485 = vadd.f32 %v4139, %v4484
  %4486 = vmatmul.f32.gmra.mxu0 %v3851
  %v4487 = vpop.f32.mrf.mxu0
  %v4488 = vadd.f32 %v4144, %v4487
  %4489 = vmatmul.f32.gmra.mxu0 %v3857
  %v4490 = vpop.f32.mrf.mxu0
  %v4491 = vadd.f32 %v4149, %v4490
  %4492 = vmatmul.f32.gmra.mxu0 %v3863
  %v4493 = vpop.f32.mrf.mxu0
  %v4494 = vadd.f32 %v4154, %v4493
  %4495 = vmatmul.f32.gmra.mxu0 %v3869
  %v4496 = vpop.f32.mrf.mxu0
  %v4497 = vadd.f32 %v4159, %v4496
  %4498 = vmatmul.f32.gmra.mxu0 %v3875
  %v4499 = vpop.f32.mrf.mxu0
  %v4500 = vadd.f32 %v4164, %v4499
  %4501 = vmatmul.f32.gmra.mxu0 %v3881
  %v4502 = vpop.f32.mrf.mxu0
  %v4503 = vadd.f32 %v4169, %v4502
  %4504 = vmatmul.f32.gmra.mxu0 %v3887
  %v4505 = vpop.f32.mrf.mxu0
  %v4506 = vadd.f32 %v4174, %v4505
  %4507 = vmatmul.f32.gmra.mxu0 %v3893
  %v4508 = vpop.f32.mrf.mxu0
  %v4509 = vadd.f32 %v4179, %v4508
  %4510 = vmatmul.f32.gmra.mxu0 %v3899
  %v4511 = vpop.f32.mrf.mxu0
  %v4512 = vadd.f32 %v4184, %v4511
  %4513 = vmatmul.f32.gmra.mxu0 %v3905
  %v4514 = vpop.f32.mrf.mxu0
  %v4515 = vadd.f32 %v4189, %v4514
  %4516 = vmatmul.f32.gmra.mxu0 %v3911
  %v4517 = vpop.f32.mrf.mxu0
  %v4518 = vadd.f32 %v4194, %v4517
  %4519 = vmatmul.f32.gmra.mxu0 %v3917
  %v4520 = vpop.f32.mrf.mxu0
  %v4521 = vadd.f32 %v4199, %v4520
  %4522 = vmatmul.f32.gmra.mxu0 %v3923
  %v4523 = vpop.f32.mrf.mxu0
  %v4524 = vadd.f32 %v4204, %v4523
  %4525 = vmatmul.f32.gmra.mxu0 %v3929
  %v4526 = vpop.f32.mrf.mxu0
  %v4527 = vadd.f32 %v4209, %v4526
  %4528 = vmatmul.f32.gmra.mxu0 %v3935
  %v4529 = vpop.f32.mrf.mxu0
  %v4530 = vadd.f32 %v4214, %v4529
  %4531 = vmatmul.f32.gmra.mxu0 %v3941
  %v4532 = vpop.f32.mrf.mxu0
  %v4533 = vadd.f32 %v4219, %v4532
  %4534 = vmatmul.f32.gmra.mxu0 %v3947
  %v4535 = vpop.f32.mrf.mxu0
  %v4536 = vadd.f32 %v4224, %v4535
  %4537 = vmatmul.f32.gmra.mxu0 %v3953
  %v4538 = vpop.f32.mrf.mxu0
  %v4539 = vadd.f32 %v4229, %v4538
  %4540 = vmatmul.f32.gmra.mxu0 %v3959
  %v4541 = vpop.f32.mrf.mxu0
  %v4542 = vadd.f32 %v4234, %v4541
  %4543 = vmatmul.f32.gmra.mxu0 %v3965
  %v4544 = vpop.f32.mrf.mxu0
  %v4545 = vadd.f32 %v4239, %v4544
  %4546 = vmatmul.f32.gmra.mxu0 %v3971
  %v4547 = vpop.f32.mrf.mxu0
  %v4548 = vadd.f32 %v4244, %v4547
  %4549 = vmatmul.f32.gmra.mxu0 %v3977
  %v4550 = vpop.f32.mrf.mxu0
  %v4551 = vadd.f32 %v4249, %v4550
  %4552 = vmatmul.f32.gmra.mxu0 %v3983
  %v4553 = vpop.f32.mrf.mxu0
  %v4554 = vadd.f32 %v4254, %v4553
  %4555 = vmatmul.f32.gmra.mxu0 %v3989
  %v4556 = vpop.f32.mrf.mxu0
  %v4557 = vadd.f32 %v4259, %v4556
  %4558 = vmatmul.f32.gmra.mxu0 %v3995
  %v4559 = vpop.f32.mrf.mxu0
  %v4560 = vadd.f32 %v4264, %v4559
  %4561 = vmatmul.f32.gmra.mxu0 %v4001
  %v4562 = vpop.f32.mrf.mxu0
  %v4563 = vadd.f32 %v4269, %v4562
  %4564 = vmatmul.f32.gmra.mxu0 %v4007
  %v4565 = vpop.f32.mrf.mxu0
  %v4566 = vadd.f32 %v4274, %v4565
  %4567 = vmatmul.f32.gmra.mxu0 %v4013
  %v4568 = vpop.f32.mrf.mxu0
  %v4569 = vadd.f32 %v4279, %v4568
  %4570 = vmatmul.f32.gmra.mxu0 %v4019
  %v4571 = vpop.f32.mrf.mxu0
  %v4572 = vadd.f32 %v4284, %v4571
  %4573 = vmatmul.f32.gmra.mxu0 %v4025
  %v4574 = vpop.f32.mrf.mxu0
  %v4575 = vadd.f32 %v4289, %v4574
  %4576 = vmatmul.f32.gmra.mxu0 %v4031
  %v4577 = vpop.f32.mrf.mxu0
  %v4578 = vadd.f32 %v4294, %v4577
  %4579 = vmatmul.f32.gmra.mxu0 %v4037
  %v4580 = vpop.f32.mrf.mxu0
  %v4581 = vadd.f32 %v4299, %v4580
  %4582 = vmatmul.f32.gmra.mxu0 %v4043
  %v4583 = vpop.f32.mrf.mxu0
  %v4584 = vadd.f32 %v4304, %v4583
  %4585 = vmatmul.f32.gmra.mxu0 %v4049
  %v4586 = vpop.f32.mrf.mxu0
  %v4587 = vadd.f32 %v4309, %v4586
  %4588 = vmatmul.f32.gmra.mxu0 %v4055
  %v4589 = vpop.f32.mrf.mxu0
  %v4590 = vadd.f32 %v4314, %v4589
  %4591 = vmatmul.f32.gmra.mxu0 %v4061
  %v4592 = vpop.f32.mrf.mxu0
  %v4593 = vadd.f32 %v4319, %v4592
  %4594 = vmatmul.f32.gmra.mxu0 %v4067
  %v4595 = vpop.f32.mrf.mxu0
  %v4596 = vadd.f32 %v4324, %v4595
  %4597 = vmatmul.f32.gmra.mxu0 %v4073
  %v4598 = vpop.f32.mrf.mxu0
  %v4599 = vadd.f32 %v4329, %v4598
  %4600 = vdwg.mxu0
  %4601 = vmatpush.msra.mxu0 %v3528
  %4602 = vmatpush.msra.mxu0 %v3527
  %4603 = vmatpush.msra.mxu0 %v3345
  %4604 = vmatpush.msra.mxu0 %v3343
  %4605 = vmatpush.msra.mxu0 %v3341
  %4606 = vmatpush.msra.mxu0 %v3339
  %4607 = vmatpush.msra.mxu0 %v3337
  %4608 = vmatpush.msra.mxu0 %v3335
  %4609 = vmatpush.msra.mxu0 %v3333
  %4610 = vmatpush.msra.mxu0 %v3331
  %4611 = vmatpush.msra.mxu0 %v3329
  %4612 = vmatpush.msra.mxu0 %v3327
  %4613 = vmatpush.msra.mxu0 %v3325
  %4614 = vmatpush.msra.mxu0 %v3323
  %4615 = vmatpush.msra.mxu0 %v3321
  %4616 = vmatpush.msra.mxu0 %v3319
  %4617 = vmatmul.f32.gmra.mxu0 %v3828
  %v4618 = vpop.f32.mrf.mxu0
  %v4619 = vadd.f32 %v4476, %v4618
  %4620 = vmatmul.f32.gmra.mxu0 %v3834
  %v4621 = vpop.f32.mrf.mxu0
  %v4622 = vadd.f32 %v4479, %v4621
  %4623 = vmatmul.f32.gmra.mxu0 %v3840
  %v4624 = vpop.f32.mrf.mxu0
  %v4625 = vadd.f32 %v4482, %v4624
  %4626 = vmatmul.f32.gmra.mxu0 %v3846
  %v4627 = vpop.f32.mrf.mxu0
  %v4628 = vadd.f32 %v4485, %v4627
  %4629 = vmatmul.f32.gmra.mxu0 %v3852
  %v4630 = vpop.f32.mrf.mxu0
  %v4631 = vadd.f32 %v4488, %v4630
  %4632 = vmatmul.f32.gmra.mxu0 %v3858
  %v4633 = vpop.f32.mrf.mxu0
  %v4634 = vadd.f32 %v4491, %v4633
  %4635 = vmatmul.f32.gmra.mxu0 %v3864
  %v4636 = vpop.f32.mrf.mxu0
  %v4637 = vadd.f32 %v4494, %v4636
  %4638 = vmatmul.f32.gmra.mxu0 %v3870
  %v4639 = vpop.f32.mrf.mxu0
  %v4640 = vadd.f32 %v4497, %v4639
  %4641 = vmatmul.f32.gmra.mxu0 %v3876
  %v4642 = vpop.f32.mrf.mxu0
  %v4643 = vadd.f32 %v4500, %v4642
  %4644 = vmatmul.f32.gmra.mxu0 %v3882
  %v4645 = vpop.f32.mrf.mxu0
  %v4646 = vadd.f32 %v4503, %v4645
  %4647 = vmatmul.f32.gmra.mxu0 %v3888
  %v4648 = vpop.f32.mrf.mxu0
  %v4649 = vadd.f32 %v4506, %v4648
  %4650 = vmatmul.f32.gmra.mxu0 %v3894
  %v4651 = vpop.f32.mrf.mxu0
  %v4652 = vadd.f32 %v4509, %v4651
  %4653 = vmatmul.f32.gmra.mxu0 %v3900
  %v4654 = vpop.f32.mrf.mxu0
  %v4655 = vadd.f32 %v4512, %v4654
  %4656 = vmatmul.f32.gmra.mxu0 %v3906
  %v4657 = vpop.f32.mrf.mxu0
  %v4658 = vadd.f32 %v4515, %v4657
  %4659 = vmatmul.f32.gmra.mxu0 %v3912
  %v4660 = vpop.f32.mrf.mxu0
  %v4661 = vadd.f32 %v4518, %v4660
  %4662 = vmatmul.f32.gmra.mxu0 %v3918
  %v4663 = vpop.f32.mrf.mxu0
  %v4664 = vadd.f32 %v4521, %v4663
  %4665 = vmatmul.f32.gmra.mxu0 %v3924
  %v4666 = vpop.f32.mrf.mxu0
  %v4667 = vadd.f32 %v4524, %v4666
  %4668 = vmatmul.f32.gmra.mxu0 %v3930
  %v4669 = vpop.f32.mrf.mxu0
  %v4670 = vadd.f32 %v4527, %v4669
  %4671 = vmatmul.f32.gmra.mxu0 %v3936
  %v4672 = vpop.f32.mrf.mxu0
  %v4673 = vadd.f32 %v4530, %v4672
  %4674 = vmatmul.f32.gmra.mxu0 %v3942
  %v4675 = vpop.f32.mrf.mxu0
  %v4676 = vadd.f32 %v4533, %v4675
  %4677 = vmatmul.f32.gmra.mxu0 %v3948
  %v4678 = vpop.f32.mrf.mxu0
  %v4679 = vadd.f32 %v4536, %v4678
  %4680 = vmatmul.f32.gmra.mxu0 %v3954
  %v4681 = vpop.f32.mrf.mxu0
  %v4682 = vadd.f32 %v4539, %v4681
  %4683 = vmatmul.f32.gmra.mxu0 %v3960
  %v4684 = vpop.f32.mrf.mxu0
  %v4685 = vadd.f32 %v4542, %v4684
  %4686 = vmatmul.f32.gmra.mxu0 %v3966
  %v4687 = vpop.f32.mrf.mxu0
  %v4688 = vadd.f32 %v4545, %v4687
  %4689 = vmatmul.f32.gmra.mxu0 %v3972
  %v4690 = vpop.f32.mrf.mxu0
  %v4691 = vadd.f32 %v4548, %v4690
  %4692 = vmatmul.f32.gmra.mxu0 %v3978
  %v4693 = vpop.f32.mrf.mxu0
  %v4694 = vadd.f32 %v4551, %v4693
  %4695 = vmatmul.f32.gmra.mxu0 %v3984
  %v4696 = vpop.f32.mrf.mxu0
  %v4697 = vadd.f32 %v4554, %v4696
  %4698 = vmatmul.f32.gmra.mxu0 %v3990
  %v4699 = vpop.f32.mrf.mxu0
  %v4700 = vadd.f32 %v4557, %v4699
  %4701 = vmatmul.f32.gmra.mxu0 %v3996
  %v4702 = vpop.f32.mrf.mxu0
  %v4703 = vadd.f32 %v4560, %v4702
  %4704 = vmatmul.f32.gmra.mxu0 %v4002
  %v4705 = vpop.f32.mrf.mxu0
  %v4706 = vadd.f32 %v4563, %v4705
  %4707 = vmatmul.f32.gmra.mxu0 %v4008
  %v4708 = vpop.f32.mrf.mxu0
  %v4709 = vadd.f32 %v4566, %v4708
  %4710 = vmatmul.f32.gmra.mxu0 %v4014
  %v4711 = vpop.f32.mrf.mxu0
  %v4712 = vadd.f32 %v4569, %v4711
  %4713 = vmatmul.f32.gmra.mxu0 %v4020
  %v4714 = vpop.f32.mrf.mxu0
  %v4715 = vadd.f32 %v4572, %v4714
  %4716 = vmatmul.f32.gmra.mxu0 %v4026
  %v4717 = vpop.f32.mrf.mxu0
  %v4718 = vadd.f32 %v4575, %v4717
  %4719 = vmatmul.f32.gmra.mxu0 %v4032
  %v4720 = vpop.f32.mrf.mxu0
  %v4721 = vadd.f32 %v4578, %v4720
  %4722 = vmatmul.f32.gmra.mxu0 %v4038
  %v4723 = vpop.f32.mrf.mxu0
  %v4724 = vadd.f32 %v4581, %v4723
  %4725 = vmatmul.f32.gmra.mxu0 %v4044
  %v4726 = vpop.f32.mrf.mxu0
  %v4727 = vadd.f32 %v4584, %v4726
  %4728 = vmatmul.f32.gmra.mxu0 %v4050
  %v4729 = vpop.f32.mrf.mxu0
  %v4730 = vadd.f32 %v4587, %v4729
  %4731 = vmatmul.f32.gmra.mxu0 %v4056
  %v4732 = vpop.f32.mrf.mxu0
  %v4733 = vadd.f32 %v4590, %v4732
  %4734 = vmatmul.f32.gmra.mxu0 %v4062
  %v4735 = vpop.f32.mrf.mxu0
  %v4736 = vadd.f32 %v4593, %v4735
  %4737 = vmatmul.f32.gmra.mxu0 %v4068
  %v4738 = vpop.f32.mrf.mxu0
  %v4739 = vadd.f32 %v4596, %v4738
  %4740 = vmatmul.f32.gmra.mxu0 %v4074
  %v4741 = vpop.f32.mrf.mxu0
  %v4742 = vadd.f32 %v4599, %v4741
  %4743 = vdwg.mxu0
  %4744 = vmatpush.msra.mxu0 %v3544
  %4745 = vmatpush.msra.mxu0 %v3543
  %4746 = vmatpush.msra.mxu0 %v3542
  %4747 = vmatpush.msra.mxu0 %v3541
  %4748 = vmatpush.msra.mxu0 %v3540
  %4749 = vmatpush.msra.mxu0 %v3539
  %4750 = vmatpush.msra.mxu0 %v3538
  %4751 = vmatpush.msra.mxu0 %v3537
  %4752 = vmatpush.msra.mxu0 %v3536
  %4753 = vmatpush.msra.mxu0 %v3535
  %4754 = vmatpush.msra.mxu0 %v3534
  %4755 = vmatpush.msra.mxu0 %v3533
  %4756 = vmatpush.msra.mxu0 %v3532
  %4757 = vmatpush.msra.mxu0 %v3531
  %4758 = vmatpush.msra.mxu0 %v3530
  %4759 = vmatpush.msra.mxu0 %v3529
  %4760 = vmatmul.f32.gmra.mxu0 %v3829
  %v4761 = vpop.f32.mrf.mxu0
  %v4762 = vadd.f32 %v4619, %v4761
  %4763 = vmatmul.f32.gmra.mxu0 %v3835
  %v4764 = vpop.f32.mrf.mxu0
  %v4765 = vadd.f32 %v4622, %v4764
  %4766 = vmatmul.f32.gmra.mxu0 %v3841
  %v4767 = vpop.f32.mrf.mxu0
  %v4768 = vadd.f32 %v4625, %v4767
  %4769 = vmatmul.f32.gmra.mxu0 %v3847
  %v4770 = vpop.f32.mrf.mxu0
  %v4771 = vadd.f32 %v4628, %v4770
  %4772 = vmatmul.f32.gmra.mxu0 %v3853
  %v4773 = vpop.f32.mrf.mxu0
  %v4774 = vadd.f32 %v4631, %v4773
  %4775 = vmatmul.f32.gmra.mxu0 %v3859
  %v4776 = vpop.f32.mrf.mxu0
  %v4777 = vadd.f32 %v4634, %v4776
  %4778 = vmatmul.f32.gmra.mxu0 %v3865
  %v4779 = vpop.f32.mrf.mxu0
  %v4780 = vadd.f32 %v4637, %v4779
  %4781 = vmatmul.f32.gmra.mxu0 %v3871
  %v4782 = vpop.f32.mrf.mxu0
  %v4783 = vadd.f32 %v4640, %v4782
  %4784 = vmatmul.f32.gmra.mxu0 %v3877
  %v4785 = vpop.f32.mrf.mxu0
  %v4786 = vadd.f32 %v4643, %v4785
  %4787 = vmatmul.f32.gmra.mxu0 %v3883
  %v4788 = vpop.f32.mrf.mxu0
  %v4789 = vadd.f32 %v4646, %v4788
  %4790 = vmatmul.f32.gmra.mxu0 %v3889
  %v4791 = vpop.f32.mrf.mxu0
  %v4792 = vadd.f32 %v4649, %v4791
  %4793 = vmatmul.f32.gmra.mxu0 %v3895
  %v4794 = vpop.f32.mrf.mxu0
  %v4795 = vadd.f32 %v4652, %v4794
  %4796 = vmatmul.f32.gmra.mxu0 %v3901
  %v4797 = vpop.f32.mrf.mxu0
  %v4798 = vadd.f32 %v4655, %v4797
  %4799 = vmatmul.f32.gmra.mxu0 %v3907
  %v4800 = vpop.f32.mrf.mxu0
  %v4801 = vadd.f32 %v4658, %v4800
  %4802 = vmatmul.f32.gmra.mxu0 %v3913
  %v4803 = vpop.f32.mrf.mxu0
  %v4804 = vadd.f32 %v4661, %v4803
  %4805 = vmatmul.f32.gmra.mxu0 %v3919
  %v4806 = vpop.f32.mrf.mxu0
  %v4807 = vadd.f32 %v4664, %v4806
  %4808 = vmatmul.f32.gmra.mxu0 %v3925
  %v4809 = vpop.f32.mrf.mxu0
  %v4810 = vadd.f32 %v4667, %v4809
  %4811 = vmatmul.f32.gmra.mxu0 %v3931
  %v4812 = vpop.f32.mrf.mxu0
  %v4813 = vadd.f32 %v4670, %v4812
  %4814 = vmatmul.f32.gmra.mxu0 %v3937
  %v4815 = vpop.f32.mrf.mxu0
  %v4816 = vadd.f32 %v4673, %v4815
  %4817 = vmatmul.f32.gmra.mxu0 %v3943
  %v4818 = vpop.f32.mrf.mxu0
  %v4819 = vadd.f32 %v4676, %v4818
  %4820 = vmatmul.f32.gmra.mxu0 %v3949
  %v4821 = vpop.f32.mrf.mxu0
  %v4822 = vadd.f32 %v4679, %v4821
  %4823 = vmatmul.f32.gmra.mxu0 %v3955
  %v4824 = vpop.f32.mrf.mxu0
  %v4825 = vadd.f32 %v4682, %v4824
  %4826 = vmatmul.f32.gmra.mxu0 %v3961
  %v4827 = vpop.f32.mrf.mxu0
  %v4828 = vadd.f32 %v4685, %v4827
  %4829 = vmatmul.f32.gmra.mxu0 %v3967
  %v4830 = vpop.f32.mrf.mxu0
  %v4831 = vadd.f32 %v4688, %v4830
  %4832 = vmatmul.f32.gmra.mxu0 %v3973
  %v4833 = vpop.f32.mrf.mxu0
  %v4834 = vadd.f32 %v4691, %v4833
  %4835 = vmatmul.f32.gmra.mxu0 %v3979
  %v4836 = vpop.f32.mrf.mxu0
  %v4837 = vadd.f32 %v4694, %v4836
  %4838 = vmatmul.f32.gmra.mxu0 %v3985
  %v4839 = vpop.f32.mrf.mxu0
  %v4840 = vadd.f32 %v4697, %v4839
  %4841 = vmatmul.f32.gmra.mxu0 %v3991
  %v4842 = vpop.f32.mrf.mxu0
  %v4843 = vadd.f32 %v4700, %v4842
  %4844 = vmatmul.f32.gmra.mxu0 %v3997
  %v4845 = vpop.f32.mrf.mxu0
  %v4846 = vadd.f32 %v4703, %v4845
  %4847 = vmatmul.f32.gmra.mxu0 %v4003
  %v4848 = vpop.f32.mrf.mxu0
  %v4849 = vadd.f32 %v4706, %v4848
  %4850 = vmatmul.f32.gmra.mxu0 %v4009
  %v4851 = vpop.f32.mrf.mxu0
  %v4852 = vadd.f32 %v4709, %v4851
  %4853 = vmatmul.f32.gmra.mxu0 %v4015
  %v4854 = vpop.f32.mrf.mxu0
  %v4855 = vadd.f32 %v4712, %v4854
  %4856 = vmatmul.f32.gmra.mxu0 %v4021
  %v4857 = vpop.f32.mrf.mxu0
  %v4858 = vadd.f32 %v4715, %v4857
  %4859 = vmatmul.f32.gmra.mxu0 %v4027
  %v4860 = vpop.f32.mrf.mxu0
  %v4861 = vadd.f32 %v4718, %v4860
  %4862 = vmatmul.f32.gmra.mxu0 %v4033
  %v4863 = vpop.f32.mrf.mxu0
  %v4864 = vadd.f32 %v4721, %v4863
  %4865 = vmatmul.f32.gmra.mxu0 %v4039
  %v4866 = vpop.f32.mrf.mxu0
  %v4867 = vadd.f32 %v4724, %v4866
  %4868 = vmatmul.f32.gmra.mxu0 %v4045
  %v4869 = vpop.f32.mrf.mxu0
  %v4870 = vadd.f32 %v4727, %v4869
  %4871 = vmatmul.f32.gmra.mxu0 %v4051
  %v4872 = vpop.f32.mrf.mxu0
  %v4873 = vadd.f32 %v4730, %v4872
  %4874 = vmatmul.f32.gmra.mxu0 %v4057
  %v4875 = vpop.f32.mrf.mxu0
  %v4876 = vadd.f32 %v4733, %v4875
  %4877 = vmatmul.f32.gmra.mxu0 %v4063
  %v4878 = vpop.f32.mrf.mxu0
  %v4879 = vadd.f32 %v4736, %v4878
  %4880 = vmatmul.f32.gmra.mxu0 %v4069
  %v4881 = vpop.f32.mrf.mxu0
  %v4882 = vadd.f32 %v4739, %v4881
  %4883 = vmatmul.f32.gmra.mxu0 %v4075
  %v4884 = vpop.f32.mrf.mxu0
  %v4885 = vadd.f32 %v4742, %v4884
  %4886 = vdwg.mxu0
  %4887 = vmatpush.msra.mxu0 %v3740
  %4888 = vmatpush.msra.mxu0 %v3739
  %4889 = vmatpush.msra.mxu0 %v3738
  %4890 = vmatpush.msra.mxu0 %v3737
  %4891 = vmatpush.msra.mxu0 %v3556
  %4892 = vmatpush.msra.mxu0 %v3555
  %4893 = vmatpush.msra.mxu0 %v3554
  %4894 = vmatpush.msra.mxu0 %v3553
  %4895 = vmatpush.msra.mxu0 %v3552
  %4896 = vmatpush.msra.mxu0 %v3551
  %4897 = vmatpush.msra.mxu0 %v3550
  %4898 = vmatpush.msra.mxu0 %v3549
  %4899 = vmatpush.msra.mxu0 %v3548
  %4900 = vmatpush.msra.mxu0 %v3547
  %4901 = vmatpush.msra.mxu0 %v3546
  %4902 = vmatpush.msra.mxu0 %v3545
  %4903 = vmatmul.f32.gmra.mxu0 %v3830
  %v4904 = vpop.f32.mrf.mxu0
  %v4905 = vadd.f32 %v4762, %v4904
  %4906 = vmatmul.f32.gmra.mxu0 %v3836
  %v4907 = vpop.f32.mrf.mxu0
  %v4908 = vadd.f32 %v4765, %v4907
  %4909 = vmatmul.f32.gmra.mxu0 %v3842
  %v4910 = vpop.f32.mrf.mxu0
  %v4911 = vadd.f32 %v4768, %v4910
  %4912 = vmatmul.f32.gmra.mxu0 %v3848
  %v4913 = vpop.f32.mrf.mxu0
  %v4914 = vadd.f32 %v4771, %v4913
  %4915 = vmatmul.f32.gmra.mxu0 %v3854
  %v4916 = vpop.f32.mrf.mxu0
  %v4917 = vadd.f32 %v4774, %v4916
  %4918 = vmatmul.f32.gmra.mxu0 %v3860
  %v4919 = vpop.f32.mrf.mxu0
  %v4920 = vadd.f32 %v4777, %v4919
  %4921 = vmatmul.f32.gmra.mxu0 %v3866
  %v4922 = vpop.f32.mrf.mxu0
  %v4923 = vadd.f32 %v4780, %v4922
  %4924 = vmatmul.f32.gmra.mxu0 %v3872
  %v4925 = vpop.f32.mrf.mxu0
  %v4926 = vadd.f32 %v4783, %v4925
  %4927 = vmatmul.f32.gmra.mxu0 %v3878
  %v4928 = vpop.f32.mrf.mxu0
  %v4929 = vadd.f32 %v4786, %v4928
  %4930 = vmatmul.f32.gmra.mxu0 %v3884
  %v4931 = vpop.f32.mrf.mxu0
  %v4932 = vadd.f32 %v4789, %v4931
  %4933 = vmatmul.f32.gmra.mxu0 %v3890
  %v4934 = vpop.f32.mrf.mxu0
  %v4935 = vadd.f32 %v4792, %v4934
  %4936 = vmatmul.f32.gmra.mxu0 %v3896
  %v4937 = vpop.f32.mrf.mxu0
  %v4938 = vadd.f32 %v4795, %v4937
  %4939 = vmatmul.f32.gmra.mxu0 %v3902
  %v4940 = vpop.f32.mrf.mxu0
  %v4941 = vadd.f32 %v4798, %v4940
  %4942 = vmatmul.f32.gmra.mxu0 %v3908
  %v4943 = vpop.f32.mrf.mxu0
  %v4944 = vadd.f32 %v4801, %v4943
  %4945 = vmatmul.f32.gmra.mxu0 %v3914
  %v4946 = vpop.f32.mrf.mxu0
  %v4947 = vadd.f32 %v4804, %v4946
  %4948 = vmatmul.f32.gmra.mxu0 %v3920
  %v4949 = vpop.f32.mrf.mxu0
  %v4950 = vadd.f32 %v4807, %v4949
  %4951 = vmatmul.f32.gmra.mxu0 %v3926
  %v4952 = vpop.f32.mrf.mxu0
  %v4953 = vadd.f32 %v4810, %v4952
  %4954 = vmatmul.f32.gmra.mxu0 %v3932
  %v4955 = vpop.f32.mrf.mxu0
  %v4956 = vadd.f32 %v4813, %v4955
  %4957 = vmatmul.f32.gmra.mxu0 %v3938
  %v4958 = vpop.f32.mrf.mxu0
  %v4959 = vadd.f32 %v4816, %v4958
  %4960 = vmatmul.f32.gmra.mxu0 %v3944
  %v4961 = vpop.f32.mrf.mxu0
  %v4962 = vadd.f32 %v4819, %v4961
  %4963 = vmatmul.f32.gmra.mxu0 %v3950
  %v4964 = vpop.f32.mrf.mxu0
  %v4965 = vadd.f32 %v4822, %v4964
  %4966 = vmatmul.f32.gmra.mxu0 %v3956
  %v4967 = vpop.f32.mrf.mxu0
  %v4968 = vadd.f32 %v4825, %v4967
  %4969 = vmatmul.f32.gmra.mxu0 %v3962
  %v4970 = vpop.f32.mrf.mxu0
  %v4971 = vadd.f32 %v4828, %v4970
  %4972 = vmatmul.f32.gmra.mxu0 %v3968
  %v4973 = vpop.f32.mrf.mxu0
  %v4974 = vadd.f32 %v4831, %v4973
  %4975 = vmatmul.f32.gmra.mxu0 %v3974
  %v4976 = vpop.f32.mrf.mxu0
  %v4977 = vadd.f32 %v4834, %v4976
  %4978 = vmatmul.f32.gmra.mxu0 %v3980
  %v4979 = vpop.f32.mrf.mxu0
  %v4980 = vadd.f32 %v4837, %v4979
  %4981 = vmatmul.f32.gmra.mxu0 %v3986
  %v4982 = vpop.f32.mrf.mxu0
  %v4983 = vadd.f32 %v4840, %v4982
  %4984 = vmatmul.f32.gmra.mxu0 %v3992
  %v4985 = vpop.f32.mrf.mxu0
  %v4986 = vadd.f32 %v4843, %v4985
  %4987 = vmatmul.f32.gmra.mxu0 %v3998
  %v4988 = vpop.f32.mrf.mxu0
  %v4989 = vadd.f32 %v4846, %v4988
  %4990 = vmatmul.f32.gmra.mxu0 %v4004
  %v4991 = vpop.f32.mrf.mxu0
  %v4992 = vadd.f32 %v4849, %v4991
  %4993 = vmatmul.f32.gmra.mxu0 %v4010
  %v4994 = vpop.f32.mrf.mxu0
  %v4995 = vadd.f32 %v4852, %v4994
  %4996 = vmatmul.f32.gmra.mxu0 %v4016
  %v4997 = vpop.f32.mrf.mxu0
  %v4998 = vadd.f32 %v4855, %v4997
  %4999 = vmatmul.f32.gmra.mxu0 %v4022
  %v5000 = vpop.f32.mrf.mxu0
  %v5001 = vadd.f32 %v4858, %v5000
  %5002 = vmatmul.f32.gmra.mxu0 %v4028
  %v5003 = vpop.f32.mrf.mxu0
  %v5004 = vadd.f32 %v4861, %v5003
  %5005 = vmatmul.f32.gmra.mxu0 %v4034
  %v5006 = vpop.f32.mrf.mxu0
  %v5007 = vadd.f32 %v4864, %v5006
  %5008 = vmatmul.f32.gmra.mxu0 %v4040
  %v5009 = vpop.f32.mrf.mxu0
  %v5010 = vadd.f32 %v4867, %v5009
  %5011 = vmatmul.f32.gmra.mxu0 %v4046
  %v5012 = vpop.f32.mrf.mxu0
  %v5013 = vadd.f32 %v4870, %v5012
  %5014 = vmatmul.f32.gmra.mxu0 %v4052
  %v5015 = vpop.f32.mrf.mxu0
  %v5016 = vadd.f32 %v4873, %v5015
  %5017 = vmatmul.f32.gmra.mxu0 %v4058
  %v5018 = vpop.f32.mrf.mxu0
  %v5019 = vadd.f32 %v4876, %v5018
  %5020 = vmatmul.f32.gmra.mxu0 %v4064
  %v5021 = vpop.f32.mrf.mxu0
  %v5022 = vadd.f32 %v4879, %v5021
  %5023 = vmatmul.f32.gmra.mxu0 %v4070
  %v5024 = vpop.f32.mrf.mxu0
  %v5025 = vadd.f32 %v4882, %v5024
  %5026 = vmatmul.f32.gmra.mxu0 %v4076
  %v5027 = vpop.f32.mrf.mxu0
  %v5028 = vadd.f32 %v4885, %v5027
  %5029 = vdwg.mxu0
  %5030 = vmatpush.msra.mxu0 %v3756
  %5031 = vmatpush.msra.mxu0 %v3755
  %5032 = vmatpush.msra.mxu0 %v3754
  %5033 = vmatpush.msra.mxu0 %v3753
  %5034 = vmatpush.msra.mxu0 %v3752
  %5035 = vmatpush.msra.mxu0 %v3751
  %5036 = vmatpush.msra.mxu0 %v3750
  %5037 = vmatpush.msra.mxu0 %v3749
  %5038 = vmatpush.msra.mxu0 %v3748
  %5039 = vmatpush.msra.mxu0 %v3747
  %5040 = vmatpush.msra.mxu0 %v3746
  %5041 = vmatpush.msra.mxu0 %v3745
  %5042 = vmatpush.msra.mxu0 %v3744
  %5043 = vmatpush.msra.mxu0 %v3743
  %5044 = vmatpush.msra.mxu0 %v3742
  %5045 = vmatpush.msra.mxu0 %v3741
  %5046 = vmatmul.f32.gmra.mxu0 %v3831
  %v5047 = vpop.f32.mrf.mxu0
  %v5048 = vadd.f32 %v4905, %v5047
  %5049 = vmatmul.f32.gmra.mxu0 %v3837
  %v5050 = vpop.f32.mrf.mxu0
  %v5051 = vadd.f32 %v4908, %v5050
  %5052 = vmatmul.f32.gmra.mxu0 %v3843
  %v5053 = vpop.f32.mrf.mxu0
  %v5054 = vadd.f32 %v4911, %v5053
  %5055 = vmatmul.f32.gmra.mxu0 %v3849
  %v5056 = vpop.f32.mrf.mxu0
  %v5057 = vadd.f32 %v4914, %v5056
  %5058 = vmatmul.f32.gmra.mxu0 %v3855
  %v5059 = vpop.f32.mrf.mxu0
  %v5060 = vadd.f32 %v4917, %v5059
  %5061 = vmatmul.f32.gmra.mxu0 %v3861
  %v5062 = vpop.f32.mrf.mxu0
  %v5063 = vadd.f32 %v4920, %v5062
  %5064 = vmatmul.f32.gmra.mxu0 %v3867
  %v5065 = vpop.f32.mrf.mxu0
  %v5066 = vadd.f32 %v4923, %v5065
  %5067 = vmatmul.f32.gmra.mxu0 %v3873
  %v5068 = vpop.f32.mrf.mxu0
  %v5069 = vadd.f32 %v4926, %v5068
  %5070 = vmatmul.f32.gmra.mxu0 %v3879
  %v5071 = vpop.f32.mrf.mxu0
  %v5072 = vadd.f32 %v4929, %v5071
  %5073 = vmatmul.f32.gmra.mxu0 %v3885
  %v5074 = vpop.f32.mrf.mxu0
  %v5075 = vadd.f32 %v4932, %v5074
  %5076 = vmatmul.f32.gmra.mxu0 %v3891
  %v5077 = vpop.f32.mrf.mxu0
  %v5078 = vadd.f32 %v4935, %v5077
  %5079 = vmatmul.f32.gmra.mxu0 %v3897
  %v5080 = vpop.f32.mrf.mxu0
  %v5081 = vadd.f32 %v4938, %v5080
  %5082 = vmatmul.f32.gmra.mxu0 %v3903
  %v5083 = vpop.f32.mrf.mxu0
  %v5084 = vadd.f32 %v4941, %v5083
  %5085 = vmatmul.f32.gmra.mxu0 %v3909
  %v5086 = vpop.f32.mrf.mxu0
  %v5087 = vadd.f32 %v4944, %v5086
  %5088 = vmatmul.f32.gmra.mxu0 %v3915
  %v5089 = vpop.f32.mrf.mxu0
  %v5090 = vadd.f32 %v4947, %v5089
  %5091 = vmatmul.f32.gmra.mxu0 %v3921
  %v5092 = vpop.f32.mrf.mxu0
  %v5093 = vadd.f32 %v4950, %v5092
  %5094 = vmatmul.f32.gmra.mxu0 %v3927
  %v5095 = vpop.f32.mrf.mxu0
  %v5096 = vadd.f32 %v4953, %v5095
  %5097 = vmatmul.f32.gmra.mxu0 %v3933
  %v5098 = vpop.f32.mrf.mxu0
  %v5099 = vadd.f32 %v4956, %v5098
  %5100 = vmatmul.f32.gmra.mxu0 %v3939
  %v5101 = vpop.f32.mrf.mxu0
  %v5102 = vadd.f32 %v4959, %v5101
  %5103 = vmatmul.f32.gmra.mxu0 %v3945
  %v5104 = vpop.f32.mrf.mxu0
  %v5105 = vadd.f32 %v4962, %v5104
  %5106 = vmatmul.f32.gmra.mxu0 %v3951
  %v5107 = vpop.f32.mrf.mxu0
  %v5108 = vadd.f32 %v4965, %v5107
  %5109 = vmatmul.f32.gmra.mxu0 %v3957
  %v5110 = vpop.f32.mrf.mxu0
  %v5111 = vadd.f32 %v4968, %v5110
  %5112 = vmatmul.f32.gmra.mxu0 %v3963
  %v5113 = vpop.f32.mrf.mxu0
  %v5114 = vadd.f32 %v4971, %v5113
  %5115 = vmatmul.f32.gmra.mxu0 %v3969
  %v5116 = vpop.f32.mrf.mxu0
  %v5117 = vadd.f32 %v4974, %v5116
  %5118 = vmatmul.f32.gmra.mxu0 %v3975
  %v5119 = vpop.f32.mrf.mxu0
  %v5120 = vadd.f32 %v4977, %v5119
  %5121 = vmatmul.f32.gmra.mxu0 %v3981
  %v5122 = vpop.f32.mrf.mxu0
  %v5123 = vadd.f32 %v4980, %v5122
  %5124 = vmatmul.f32.gmra.mxu0 %v3987
  %v5125 = vpop.f32.mrf.mxu0
  %v5126 = vadd.f32 %v4983, %v5125
  %5127 = vmatmul.f32.gmra.mxu0 %v3993
  %v5128 = vpop.f32.mrf.mxu0
  %v5129 = vadd.f32 %v4986, %v5128
  %5130 = vmatmul.f32.gmra.mxu0 %v3999
  %v5131 = vpop.f32.mrf.mxu0
  %v5132 = vadd.f32 %v4989, %v5131
  %5133 = vmatmul.f32.gmra.mxu0 %v4005
  %v5134 = vpop.f32.mrf.mxu0
  %v5135 = vadd.f32 %v4992, %v5134
  %5136 = vmatmul.f32.gmra.mxu0 %v4011
  %v5137 = vpop.f32.mrf.mxu0
  %v5138 = vadd.f32 %v4995, %v5137
  %5139 = vmatmul.f32.gmra.mxu0 %v4017
  %v5140 = vpop.f32.mrf.mxu0
  %v5141 = vadd.f32 %v4998, %v5140
  %5142 = vmatmul.f32.gmra.mxu0 %v4023
  %v5143 = vpop.f32.mrf.mxu0
  %v5144 = vadd.f32 %v5001, %v5143
  %5145 = vmatmul.f32.gmra.mxu0 %v4029
  %v5146 = vpop.f32.mrf.mxu0
  %v5147 = vadd.f32 %v5004, %v5146
  %5148 = vmatmul.f32.gmra.mxu0 %v4035
  %v5149 = vpop.f32.mrf.mxu0
  %v5150 = vadd.f32 %v5007, %v5149
  %5151 = vmatmul.f32.gmra.mxu0 %v4041
  %v5152 = vpop.f32.mrf.mxu0
  %v5153 = vadd.f32 %v5010, %v5152
  %5154 = vmatmul.f32.gmra.mxu0 %v4047
  %v5155 = vpop.f32.mrf.mxu0
  %v5156 = vadd.f32 %v5013, %v5155
  %5157 = vmatmul.f32.gmra.mxu0 %v4053
  %v5158 = vpop.f32.mrf.mxu0
  %v5159 = vadd.f32 %v5016, %v5158
  %5160 = vmatmul.f32.gmra.mxu0 %v4059
  %v5161 = vpop.f32.mrf.mxu0
  %v5162 = vadd.f32 %v5019, %v5161
  %5163 = vmatmul.f32.gmra.mxu0 %v4065
  %v5164 = vpop.f32.mrf.mxu0
  %v5165 = vadd.f32 %v5022, %v5164
  %5166 = vmatmul.f32.gmra.mxu0 %v4071
  %v5167 = vpop.f32.mrf.mxu0
  %v5168 = vadd.f32 %v5025, %v5167
  %5169 = vmatmul.f32.gmra.mxu0 %v4077
  %v5170 = vpop.f32.mrf.mxu0
  %v5171 = vadd.f32 %v5028, %v5170
  %5172 = vdwg.mxu0
  %5173 = vmatpush.msra.mxu0 0.0
  %5174 = vmatpush.msra.mxu0 0.0
  %5175 = vmatpush.msra.mxu0 0.0
  %5176 = vmatpush.msra.mxu0 0.0
  %5177 = vmatpush.msra.mxu0 0.0
  %5178 = vmatpush.msra.mxu0 0.0
  %5179 = vmatpush.msra.mxu0 %v3766
  %5180 = vmatpush.msra.mxu0 %v3765
  %5181 = vmatpush.msra.mxu0 %v3764
  %5182 = vmatpush.msra.mxu0 %v3763
  %5183 = vmatpush.msra.mxu0 %v3762
  %5184 = vmatpush.msra.mxu0 %v3761
  %5185 = vmatpush.msra.mxu0 %v3760
  %5186 = vmatpush.msra.mxu0 %v3759
  %5187 = vmatpush.msra.mxu0 %v3758
  %5188 = vmatpush.msra.mxu0 %v3757
  %5189 = vmatmul.f32.gmra.mxu0 %v4333
  %v5190 = vpop.f32.mrf.mxu0
  %v5191 = vadd.f32 %v5048, %v5190
  %5192 = vmatmul.f32.gmra.mxu0 %v4336
  %v5193 = vpop.f32.mrf.mxu0
  %v5194 = vadd.f32 %v5051, %v5193
  %5195 = vmatmul.f32.gmra.mxu0 %v4339
  %v5196 = vpop.f32.mrf.mxu0
  %v5197 = vadd.f32 %v5054, %v5196
  %5198 = vmatmul.f32.gmra.mxu0 %v4342
  %v5199 = vpop.f32.mrf.mxu0
  %v5200 = vadd.f32 %v5057, %v5199
  %5201 = vmatmul.f32.gmra.mxu0 %v4345
  %v5202 = vpop.f32.mrf.mxu0
  %v5203 = vadd.f32 %v5060, %v5202
  %5204 = vmatmul.f32.gmra.mxu0 %v4348
  %v5205 = vpop.f32.mrf.mxu0
  %v5206 = vadd.f32 %v5063, %v5205
  %5207 = vmatmul.f32.gmra.mxu0 %v4351
  %v5208 = vpop.f32.mrf.mxu0
  %v5209 = vadd.f32 %v5066, %v5208
  %5210 = vmatmul.f32.gmra.mxu0 %v4354
  %v5211 = vpop.f32.mrf.mxu0
  %v5212 = vadd.f32 %v5069, %v5211
  %5213 = vmatmul.f32.gmra.mxu0 %v4357
  %v5214 = vpop.f32.mrf.mxu0
  %v5215 = vadd.f32 %v5072, %v5214
  %5216 = vmatmul.f32.gmra.mxu0 %v4360
  %v5217 = vpop.f32.mrf.mxu0
  %v5218 = vadd.f32 %v5075, %v5217
  %5219 = vmatmul.f32.gmra.mxu0 %v4363
  %v5220 = vpop.f32.mrf.mxu0
  %v5221 = vadd.f32 %v5078, %v5220
  %5222 = vmatmul.f32.gmra.mxu0 %v4366
  %v5223 = vpop.f32.mrf.mxu0
  %v5224 = vadd.f32 %v5081, %v5223
  %5225 = vmatmul.f32.gmra.mxu0 %v4369
  %v5226 = vpop.f32.mrf.mxu0
  %v5227 = vadd.f32 %v5084, %v5226
  %5228 = vmatmul.f32.gmra.mxu0 %v4372
  %v5229 = vpop.f32.mrf.mxu0
  %v5230 = vadd.f32 %v5087, %v5229
  %5231 = vmatmul.f32.gmra.mxu0 %v4375
  %v5232 = vpop.f32.mrf.mxu0
  %v5233 = vadd.f32 %v5090, %v5232
  %5234 = vmatmul.f32.gmra.mxu0 %v4378
  %v5235 = vpop.f32.mrf.mxu0
  %v5236 = vadd.f32 %v5093, %v5235
  %5237 = vmatmul.f32.gmra.mxu0 %v4381
  %v5238 = vpop.f32.mrf.mxu0
  %v5239 = vadd.f32 %v5096, %v5238
  %5240 = vmatmul.f32.gmra.mxu0 %v4384
  %v5241 = vpop.f32.mrf.mxu0
  %v5242 = vadd.f32 %v5099, %v5241
  %5243 = vmatmul.f32.gmra.mxu0 %v4387
  %v5244 = vpop.f32.mrf.mxu0
  %v5245 = vadd.f32 %v5102, %v5244
  %5246 = vmatmul.f32.gmra.mxu0 %v4390
  %v5247 = vpop.f32.mrf.mxu0
  %v5248 = vadd.f32 %v5105, %v5247
  %5249 = vmatmul.f32.gmra.mxu0 %v4393
  %v5250 = vpop.f32.mrf.mxu0
  %v5251 = vadd.f32 %v5108, %v5250
  %5252 = vmatmul.f32.gmra.mxu0 %v4396
  %v5253 = vpop.f32.mrf.mxu0
  %v5254 = vadd.f32 %v5111, %v5253
  %5255 = vmatmul.f32.gmra.mxu0 %v4399
  %v5256 = vpop.f32.mrf.mxu0
  %v5257 = vadd.f32 %v5114, %v5256
  %5258 = vmatmul.f32.gmra.mxu0 %v4402
  %v5259 = vpop.f32.mrf.mxu0
  %v5260 = vadd.f32 %v5117, %v5259
  %5261 = vmatmul.f32.gmra.mxu0 %v4405
  %v5262 = vpop.f32.mrf.mxu0
  %v5263 = vadd.f32 %v5120, %v5262
  %5264 = vmatmul.f32.gmra.mxu0 %v4408
  %v5265 = vpop.f32.mrf.mxu0
  %v5266 = vadd.f32 %v5123, %v5265
  %5267 = vmatmul.f32.gmra.mxu0 %v4411
  %v5268 = vpop.f32.mrf.mxu0
  %v5269 = vadd.f32 %v5126, %v5268
  %5270 = vmatmul.f32.gmra.mxu0 %v4414
  %v5271 = vpop.f32.mrf.mxu0
  %v5272 = vadd.f32 %v5129, %v5271
  %5273 = vmatmul.f32.gmra.mxu0 %v4417
  %v5274 = vpop.f32.mrf.mxu0
  %v5275 = vadd.f32 %v5132, %v5274
  %5276 = vmatmul.f32.gmra.mxu0 %v4420
  %v5277 = vpop.f32.mrf.mxu0
  %v5278 = vadd.f32 %v5135, %v5277
  %5279 = vmatmul.f32.gmra.mxu0 %v4423
  %v5280 = vpop.f32.mrf.mxu0
  %v5281 = vadd.f32 %v5138, %v5280
  %5282 = vmatmul.f32.gmra.mxu0 %v4426
  %v5283 = vpop.f32.mrf.mxu0
  %v5284 = vadd.f32 %v5141, %v5283
  %5285 = vmatmul.f32.gmra.mxu0 %v4429
  %v5286 = vpop.f32.mrf.mxu0
  %v5287 = vadd.f32 %v5144, %v5286
  %5288 = vmatmul.f32.gmra.mxu0 %v4432
  %v5289 = vpop.f32.mrf.mxu0
  %v5290 = vadd.f32 %v5147, %v5289
  %5291 = vmatmul.f32.gmra.mxu0 %v4435
  %v5292 = vpop.f32.mrf.mxu0
  %v5293 = vadd.f32 %v5150, %v5292
  %5294 = vmatmul.f32.gmra.mxu0 %v4438
  %v5295 = vpop.f32.mrf.mxu0
  %v5296 = vadd.f32 %v5153, %v5295
  %5297 = vmatmul.f32.gmra.mxu0 %v4441
  %v5298 = vpop.f32.mrf.mxu0
  %v5299 = vadd.f32 %v5156, %v5298
  %5300 = vmatmul.f32.gmra.mxu0 %v4444
  %v5301 = vpop.f32.mrf.mxu0
  %v5302 = vadd.f32 %v5159, %v5301
  %5303 = vmatmul.f32.gmra.mxu0 %v4447
  %v5304 = vpop.f32.mrf.mxu0
  %v5305 = vadd.f32 %v5162, %v5304
  %5306 = vmatmul.f32.gmra.mxu0 %v4450
  %v5307 = vpop.f32.mrf.mxu0
  %v5308 = vadd.f32 %v5165, %v5307
  %5309 = vmatmul.f32.gmra.mxu0 %v4453
  %v5310 = vpop.f32.mrf.mxu0
  %v5311 = vadd.f32 %v5168, %v5310
  %5312 = vmatmul.f32.gmra.mxu0 %v4456
  %v5313 = vpop.f32.mrf.mxu0
  %v5314 = vadd.f32 %v5171, %v5313
  %5315 = vdwg.mxu0
  %5316 = vmatpush.msra.mxu0 %v3318
  %5317 = vmatpush.msra.mxu0 %v3316
  %5318 = vmatpush.msra.mxu0 %v3314
  %5319 = vmatpush.msra.mxu0 %v3312
  %5320 = vmatpush.msra.mxu0 %v3310
  %5321 = vmatpush.msra.mxu0 %v3308
  %5322 = vmatpush.msra.mxu0 %v3306
  %5323 = vmatpush.msra.mxu0 %v3304
  %5324 = vmatpush.msra.mxu0 %v3302
  %5325 = vmatpush.msra.mxu0 %v3300
  %5326 = vmatpush.msra.mxu0 %v3298
  %5327 = vmatpush.msra.mxu0 %v3296
  %5328 = vmatpush.msra.mxu0 %v3294
  %5329 = vmatpush.msra.mxu0 %v3292
  %5330 = vmatpush.msra.mxu0 %v3290
  %5331 = vmatpush.msra.mxu0 %v3288
  %5332 = vmatmul.f32.gmra.mxu0 %v3827
  %v5333 = vpop.f32.mrf.mxu0
  %v5334 = vadd.f32 %v4124, %v5333
  %5335 = vmatmul.f32.gmra.mxu0 %v3833
  %v5336 = vpop.f32.mrf.mxu0
  %v5337 = vadd.f32 %v4129, %v5336
  %5338 = vmatmul.f32.gmra.mxu0 %v3839
  %v5339 = vpop.f32.mrf.mxu0
  %v5340 = vadd.f32 %v4134, %v5339
  %5341 = vmatmul.f32.gmra.mxu0 %v3845
  %v5342 = vpop.f32.mrf.mxu0
  %v5343 = vadd.f32 %v4139, %v5342
  %5344 = vmatmul.f32.gmra.mxu0 %v3851
  %v5345 = vpop.f32.mrf.mxu0
  %v5346 = vadd.f32 %v4144, %v5345
  %5347 = vmatmul.f32.gmra.mxu0 %v3857
  %v5348 = vpop.f32.mrf.mxu0
  %v5349 = vadd.f32 %v4149, %v5348
  %5350 = vmatmul.f32.gmra.mxu0 %v3863
  %v5351 = vpop.f32.mrf.mxu0
  %v5352 = vadd.f32 %v4154, %v5351
  %5353 = vmatmul.f32.gmra.mxu0 %v3869
  %v5354 = vpop.f32.mrf.mxu0
  %v5355 = vadd.f32 %v4159, %v5354
  %5356 = vmatmul.f32.gmra.mxu0 %v3875
  %v5357 = vpop.f32.mrf.mxu0
  %v5358 = vadd.f32 %v4164, %v5357
  %5359 = vmatmul.f32.gmra.mxu0 %v3881
  %v5360 = vpop.f32.mrf.mxu0
  %v5361 = vadd.f32 %v4169, %v5360
  %5362 = vmatmul.f32.gmra.mxu0 %v3887
  %v5363 = vpop.f32.mrf.mxu0
  %v5364 = vadd.f32 %v4174, %v5363
  %5365 = vmatmul.f32.gmra.mxu0 %v3893
  %v5366 = vpop.f32.mrf.mxu0
  %v5367 = vadd.f32 %v4179, %v5366
  %5368 = vmatmul.f32.gmra.mxu0 %v3899
  %v5369 = vpop.f32.mrf.mxu0
  %v5370 = vadd.f32 %v4184, %v5369
  %5371 = vmatmul.f32.gmra.mxu0 %v3905
  %v5372 = vpop.f32.mrf.mxu0
  %v5373 = vadd.f32 %v4189, %v5372
  %5374 = vmatmul.f32.gmra.mxu0 %v3911
  %v5375 = vpop.f32.mrf.mxu0
  %v5376 = vadd.f32 %v4194, %v5375
  %5377 = vmatmul.f32.gmra.mxu0 %v3917
  %v5378 = vpop.f32.mrf.mxu0
  %v5379 = vadd.f32 %v4199, %v5378
  %5380 = vmatmul.f32.gmra.mxu0 %v3923
  %v5381 = vpop.f32.mrf.mxu0
  %v5382 = vadd.f32 %v4204, %v5381
  %5383 = vmatmul.f32.gmra.mxu0 %v3929
  %v5384 = vpop.f32.mrf.mxu0
  %v5385 = vadd.f32 %v4209, %v5384
  %5386 = vmatmul.f32.gmra.mxu0 %v3935
  %v5387 = vpop.f32.mrf.mxu0
  %v5388 = vadd.f32 %v4214, %v5387
  %5389 = vmatmul.f32.gmra.mxu0 %v3941
  %v5390 = vpop.f32.mrf.mxu0
  %v5391 = vadd.f32 %v4219, %v5390
  %5392 = vmatmul.f32.gmra.mxu0 %v3947
  %v5393 = vpop.f32.mrf.mxu0
  %v5394 = vadd.f32 %v4224, %v5393
  %5395 = vmatmul.f32.gmra.mxu0 %v3953
  %v5396 = vpop.f32.mrf.mxu0
  %v5397 = vadd.f32 %v4229, %v5396
  %5398 = vmatmul.f32.gmra.mxu0 %v3959
  %v5399 = vpop.f32.mrf.mxu0
  %v5400 = vadd.f32 %v4234, %v5399
  %5401 = vmatmul.f32.gmra.mxu0 %v3965
  %v5402 = vpop.f32.mrf.mxu0
  %v5403 = vadd.f32 %v4239, %v5402
  %5404 = vmatmul.f32.gmra.mxu0 %v3971
  %v5405 = vpop.f32.mrf.mxu0
  %v5406 = vadd.f32 %v4244, %v5405
  %5407 = vmatmul.f32.gmra.mxu0 %v3977
  %v5408 = vpop.f32.mrf.mxu0
  %v5409 = vadd.f32 %v4249, %v5408
  %5410 = vmatmul.f32.gmra.mxu0 %v3983
  %v5411 = vpop.f32.mrf.mxu0
  %v5412 = vadd.f32 %v4254, %v5411
  %5413 = vmatmul.f32.gmra.mxu0 %v3989
  %v5414 = vpop.f32.mrf.mxu0
  %v5415 = vadd.f32 %v4259, %v5414
  %5416 = vmatmul.f32.gmra.mxu0 %v3995
  %v5417 = vpop.f32.mrf.mxu0
  %v5418 = vadd.f32 %v4264, %v5417
  %5419 = vmatmul.f32.gmra.mxu0 %v4001
  %v5420 = vpop.f32.mrf.mxu0
  %v5421 = vadd.f32 %v4269, %v5420
  %5422 = vmatmul.f32.gmra.mxu0 %v4007
  %v5423 = vpop.f32.mrf.mxu0
  %v5424 = vadd.f32 %v4274, %v5423
  %5425 = vmatmul.f32.gmra.mxu0 %v4013
  %v5426 = vpop.f32.mrf.mxu0
  %v5427 = vadd.f32 %v4279, %v5426
  %5428 = vmatmul.f32.gmra.mxu0 %v4019
  %v5429 = vpop.f32.mrf.mxu0
  %v5430 = vadd.f32 %v4284, %v5429
  %5431 = vmatmul.f32.gmra.mxu0 %v4025
  %v5432 = vpop.f32.mrf.mxu0
  %v5433 = vadd.f32 %v4289, %v5432
  %5434 = vmatmul.f32.gmra.mxu0 %v4031
  %v5435 = vpop.f32.mrf.mxu0
  %v5436 = vadd.f32 %v4294, %v5435
  %5437 = vmatmul.f32.gmra.mxu0 %v4037
  %v5438 = vpop.f32.mrf.mxu0
  %v5439 = vadd.f32 %v4299, %v5438
  %5440 = vmatmul.f32.gmra.mxu0 %v4043
  %v5441 = vpop.f32.mrf.mxu0
  %v5442 = vadd.f32 %v4304, %v5441
  %5443 = vmatmul.f32.gmra.mxu0 %v4049
  %v5444 = vpop.f32.mrf.mxu0
  %v5445 = vadd.f32 %v4309, %v5444
  %5446 = vmatmul.f32.gmra.mxu0 %v4055
  %v5447 = vpop.f32.mrf.mxu0
  %v5448 = vadd.f32 %v4314, %v5447
  %5449 = vmatmul.f32.gmra.mxu0 %v4061
  %v5450 = vpop.f32.mrf.mxu0
  %v5451 = vadd.f32 %v4319, %v5450
  %5452 = vmatmul.f32.gmra.mxu0 %v4067
  %v5453 = vpop.f32.mrf.mxu0
  %v5454 = vadd.f32 %v4324, %v5453
  %5455 = vmatmul.f32.gmra.mxu0 %v4073
  %v5456 = vpop.f32.mrf.mxu0
  %v5457 = vadd.f32 %v4329, %v5456
  %5458 = vdwg.mxu0
  %5459 = vmatpush.msra.mxu0 %v3414
  %5460 = vmatpush.msra.mxu0 %v3410
  %5461 = vmatpush.msra.mxu0 %v3346
  %5462 = vmatpush.msra.mxu0 %v3344
  %5463 = vmatpush.msra.mxu0 %v3342
  %5464 = vmatpush.msra.mxu0 %v3340
  %5465 = vmatpush.msra.mxu0 %v3338
  %5466 = vmatpush.msra.mxu0 %v3336
  %5467 = vmatpush.msra.mxu0 %v3334
  %5468 = vmatpush.msra.mxu0 %v3332
  %5469 = vmatpush.msra.mxu0 %v3330
  %5470 = vmatpush.msra.mxu0 %v3328
  %5471 = vmatpush.msra.mxu0 %v3326
  %5472 = vmatpush.msra.mxu0 %v3324
  %5473 = vmatpush.msra.mxu0 %v3322
  %5474 = vmatpush.msra.mxu0 %v3320
  %5475 = vmatmul.f32.gmra.mxu0 %v3828
  %v5476 = vpop.f32.mrf.mxu0
  %v5477 = vadd.f32 %v5334, %v5476
  %5478 = vmatmul.f32.gmra.mxu0 %v3834
  %v5479 = vpop.f32.mrf.mxu0
  %v5480 = vadd.f32 %v5337, %v5479
  %5481 = vmatmul.f32.gmra.mxu0 %v3840
  %v5482 = vpop.f32.mrf.mxu0
  %v5483 = vadd.f32 %v5340, %v5482
  %5484 = vmatmul.f32.gmra.mxu0 %v3846
  %v5485 = vpop.f32.mrf.mxu0
  %v5486 = vadd.f32 %v5343, %v5485
  %5487 = vmatmul.f32.gmra.mxu0 %v3852
  %v5488 = vpop.f32.mrf.mxu0
  %v5489 = vadd.f32 %v5346, %v5488
  %5490 = vmatmul.f32.gmra.mxu0 %v3858
  %v5491 = vpop.f32.mrf.mxu0
  %v5492 = vadd.f32 %v5349, %v5491
  %5493 = vmatmul.f32.gmra.mxu0 %v3864
  %v5494 = vpop.f32.mrf.mxu0
  %v5495 = vadd.f32 %v5352, %v5494
  %5496 = vmatmul.f32.gmra.mxu0 %v3870
  %v5497 = vpop.f32.mrf.mxu0
  %v5498 = vadd.f32 %v5355, %v5497
  %5499 = vmatmul.f32.gmra.mxu0 %v3876
  %v5500 = vpop.f32.mrf.mxu0
  %v5501 = vadd.f32 %v5358, %v5500
  %5502 = vmatmul.f32.gmra.mxu0 %v3882
  %v5503 = vpop.f32.mrf.mxu0
  %v5504 = vadd.f32 %v5361, %v5503
  %5505 = vmatmul.f32.gmra.mxu0 %v3888
  %v5506 = vpop.f32.mrf.mxu0
  %v5507 = vadd.f32 %v5364, %v5506
  %5508 = vmatmul.f32.gmra.mxu0 %v3894
  %v5509 = vpop.f32.mrf.mxu0
  %v5510 = vadd.f32 %v5367, %v5509
  %5511 = vmatmul.f32.gmra.mxu0 %v3900
  %v5512 = vpop.f32.mrf.mxu0
  %v5513 = vadd.f32 %v5370, %v5512
  %5514 = vmatmul.f32.gmra.mxu0 %v3906
  %v5515 = vpop.f32.mrf.mxu0
  %v5516 = vadd.f32 %v5373, %v5515
  %5517 = vmatmul.f32.gmra.mxu0 %v3912
  %v5518 = vpop.f32.mrf.mxu0
  %v5519 = vadd.f32 %v5376, %v5518
  %5520 = vmatmul.f32.gmra.mxu0 %v3918
  %v5521 = vpop.f32.mrf.mxu0
  %v5522 = vadd.f32 %v5379, %v5521
  %5523 = vmatmul.f32.gmra.mxu0 %v3924
  %v5524 = vpop.f32.mrf.mxu0
  %v5525 = vadd.f32 %v5382, %v5524
  %5526 = vmatmul.f32.gmra.mxu0 %v3930
  %v5527 = vpop.f32.mrf.mxu0
  %v5528 = vadd.f32 %v5385, %v5527
  %5529 = vmatmul.f32.gmra.mxu0 %v3936
  %v5530 = vpop.f32.mrf.mxu0
  %v5531 = vadd.f32 %v5388, %v5530
  %5532 = vmatmul.f32.gmra.mxu0 %v3942
  %v5533 = vpop.f32.mrf.mxu0
  %v5534 = vadd.f32 %v5391, %v5533
  %5535 = vmatmul.f32.gmra.mxu0 %v3948
  %v5536 = vpop.f32.mrf.mxu0
  %v5537 = vadd.f32 %v5394, %v5536
  %5538 = vmatmul.f32.gmra.mxu0 %v3954
  %v5539 = vpop.f32.mrf.mxu0
  %v5540 = vadd.f32 %v5397, %v5539
  %5541 = vmatmul.f32.gmra.mxu0 %v3960
  %v5542 = vpop.f32.mrf.mxu0
  %v5543 = vadd.f32 %v5400, %v5542
  %5544 = vmatmul.f32.gmra.mxu0 %v3966
  %v5545 = vpop.f32.mrf.mxu0
  %v5546 = vadd.f32 %v5403, %v5545
  %5547 = vmatmul.f32.gmra.mxu0 %v3972
  %v5548 = vpop.f32.mrf.mxu0
  %v5549 = vadd.f32 %v5406, %v5548
  %5550 = vmatmul.f32.gmra.mxu0 %v3978
  %v5551 = vpop.f32.mrf.mxu0
  %v5552 = vadd.f32 %v5409, %v5551
  %5553 = vmatmul.f32.gmra.mxu0 %v3984
  %v5554 = vpop.f32.mrf.mxu0
  %v5555 = vadd.f32 %v5412, %v5554
  %5556 = vmatmul.f32.gmra.mxu0 %v3990
  %v5557 = vpop.f32.mrf.mxu0
  %v5558 = vadd.f32 %v5415, %v5557
  %5559 = vmatmul.f32.gmra.mxu0 %v3996
  %v5560 = vpop.f32.mrf.mxu0
  %v5561 = vadd.f32 %v5418, %v5560
  %5562 = vmatmul.f32.gmra.mxu0 %v4002
  %v5563 = vpop.f32.mrf.mxu0
  %v5564 = vadd.f32 %v5421, %v5563
  %5565 = vmatmul.f32.gmra.mxu0 %v4008
  %v5566 = vpop.f32.mrf.mxu0
  %v5567 = vadd.f32 %v5424, %v5566
  %5568 = vmatmul.f32.gmra.mxu0 %v4014
  %v5569 = vpop.f32.mrf.mxu0
  %v5570 = vadd.f32 %v5427, %v5569
  %5571 = vmatmul.f32.gmra.mxu0 %v4020
  %v5572 = vpop.f32.mrf.mxu0
  %v5573 = vadd.f32 %v5430, %v5572
  %5574 = vmatmul.f32.gmra.mxu0 %v4026
  %v5575 = vpop.f32.mrf.mxu0
  %v5576 = vadd.f32 %v5433, %v5575
  %5577 = vmatmul.f32.gmra.mxu0 %v4032
  %v5578 = vpop.f32.mrf.mxu0
  %v5579 = vadd.f32 %v5436, %v5578
  %5580 = vmatmul.f32.gmra.mxu0 %v4038
  %v5581 = vpop.f32.mrf.mxu0
  %v5582 = vadd.f32 %v5439, %v5581
  %5583 = vmatmul.f32.gmra.mxu0 %v4044
  %v5584 = vpop.f32.mrf.mxu0
  %v5585 = vadd.f32 %v5442, %v5584
  %5586 = vmatmul.f32.gmra.mxu0 %v4050
  %v5587 = vpop.f32.mrf.mxu0
  %v5588 = vadd.f32 %v5445, %v5587
  %5589 = vmatmul.f32.gmra.mxu0 %v4056
  %v5590 = vpop.f32.mrf.mxu0
  %v5591 = vadd.f32 %v5448, %v5590
  %5592 = vmatmul.f32.gmra.mxu0 %v4062
  %v5593 = vpop.f32.mrf.mxu0
  %v5594 = vadd.f32 %v5451, %v5593
  %5595 = vmatmul.f32.gmra.mxu0 %v4068
  %v5596 = vpop.f32.mrf.mxu0
  %v5597 = vadd.f32 %v5454, %v5596
  %5598 = vmatmul.f32.gmra.mxu0 %v4074
  %v5599 = vpop.f32.mrf.mxu0
  %v5600 = vadd.f32 %v5457, %v5599
  %5601 = vdwg.mxu0
  %5602 = vmatpush.msra.mxu0 %v3478
  %5603 = vmatpush.msra.mxu0 %v3474
  %5604 = vmatpush.msra.mxu0 %v3470
  %5605 = vmatpush.msra.mxu0 %v3466
  %5606 = vmatpush.msra.mxu0 %v3462
  %5607 = vmatpush.msra.mxu0 %v3458
  %5608 = vmatpush.msra.mxu0 %v3454
  %5609 = vmatpush.msra.mxu0 %v3450
  %5610 = vmatpush.msra.mxu0 %v3446
  %5611 = vmatpush.msra.mxu0 %v3442
  %5612 = vmatpush.msra.mxu0 %v3438
  %5613 = vmatpush.msra.mxu0 %v3434
  %5614 = vmatpush.msra.mxu0 %v3430
  %5615 = vmatpush.msra.mxu0 %v3426
  %5616 = vmatpush.msra.mxu0 %v3422
  %5617 = vmatpush.msra.mxu0 %v3418
  %5618 = vmatmul.f32.gmra.mxu0 %v3829
  %v5619 = vpop.f32.mrf.mxu0
  %v5620 = vadd.f32 %v5477, %v5619
  %5621 = vmatmul.f32.gmra.mxu0 %v3835
  %v5622 = vpop.f32.mrf.mxu0
  %v5623 = vadd.f32 %v5480, %v5622
  %5624 = vmatmul.f32.gmra.mxu0 %v3841
  %v5625 = vpop.f32.mrf.mxu0
  %v5626 = vadd.f32 %v5483, %v5625
  %5627 = vmatmul.f32.gmra.mxu0 %v3847
  %v5628 = vpop.f32.mrf.mxu0
  %v5629 = vadd.f32 %v5486, %v5628
  %5630 = vmatmul.f32.gmra.mxu0 %v3853
  %v5631 = vpop.f32.mrf.mxu0
  %v5632 = vadd.f32 %v5489, %v5631
  %5633 = vmatmul.f32.gmra.mxu0 %v3859
  %v5634 = vpop.f32.mrf.mxu0
  %v5635 = vadd.f32 %v5492, %v5634
  %5636 = vmatmul.f32.gmra.mxu0 %v3865
  %v5637 = vpop.f32.mrf.mxu0
  %v5638 = vadd.f32 %v5495, %v5637
  %5639 = vmatmul.f32.gmra.mxu0 %v3871
  %v5640 = vpop.f32.mrf.mxu0
  %v5641 = vadd.f32 %v5498, %v5640
  %5642 = vmatmul.f32.gmra.mxu0 %v3877
  %v5643 = vpop.f32.mrf.mxu0
  %v5644 = vadd.f32 %v5501, %v5643
  %5645 = vmatmul.f32.gmra.mxu0 %v3883
  %v5646 = vpop.f32.mrf.mxu0
  %v5647 = vadd.f32 %v5504, %v5646
  %5648 = vmatmul.f32.gmra.mxu0 %v3889
  %v5649 = vpop.f32.mrf.mxu0
  %v5650 = vadd.f32 %v5507, %v5649
  %5651 = vmatmul.f32.gmra.mxu0 %v3895
  %v5652 = vpop.f32.mrf.mxu0
  %v5653 = vadd.f32 %v5510, %v5652
  %5654 = vmatmul.f32.gmra.mxu0 %v3901
  %v5655 = vpop.f32.mrf.mxu0
  %v5656 = vadd.f32 %v5513, %v5655
  %5657 = vmatmul.f32.gmra.mxu0 %v3907
  %v5658 = vpop.f32.mrf.mxu0
  %v5659 = vadd.f32 %v5516, %v5658
  %5660 = vmatmul.f32.gmra.mxu0 %v3913
  %v5661 = vpop.f32.mrf.mxu0
  %v5662 = vadd.f32 %v5519, %v5661
  %5663 = vmatmul.f32.gmra.mxu0 %v3919
  %v5664 = vpop.f32.mrf.mxu0
  %v5665 = vadd.f32 %v5522, %v5664
  %5666 = vmatmul.f32.gmra.mxu0 %v3925
  %v5667 = vpop.f32.mrf.mxu0
  %v5668 = vadd.f32 %v5525, %v5667
  %5669 = vmatmul.f32.gmra.mxu0 %v3931
  %v5670 = vpop.f32.mrf.mxu0
  %v5671 = vadd.f32 %v5528, %v5670
  %5672 = vmatmul.f32.gmra.mxu0 %v3937
  %v5673 = vpop.f32.mrf.mxu0
  %v5674 = vadd.f32 %v5531, %v5673
  %5675 = vmatmul.f32.gmra.mxu0 %v3943
  %v5676 = vpop.f32.mrf.mxu0
  %v5677 = vadd.f32 %v5534, %v5676
  %5678 = vmatmul.f32.gmra.mxu0 %v3949
  %v5679 = vpop.f32.mrf.mxu0
  %v5680 = vadd.f32 %v5537, %v5679
  %5681 = vmatmul.f32.gmra.mxu0 %v3955
  %v5682 = vpop.f32.mrf.mxu0
  %v5683 = vadd.f32 %v5540, %v5682
  %5684 = vmatmul.f32.gmra.mxu0 %v3961
  %v5685 = vpop.f32.mrf.mxu0
  %v5686 = vadd.f32 %v5543, %v5685
  %5687 = vmatmul.f32.gmra.mxu0 %v3967
  %v5688 = vpop.f32.mrf.mxu0
  %v5689 = vadd.f32 %v5546, %v5688
  %5690 = vmatmul.f32.gmra.mxu0 %v3973
  %v5691 = vpop.f32.mrf.mxu0
  %v5692 = vadd.f32 %v5549, %v5691
  %5693 = vmatmul.f32.gmra.mxu0 %v3979
  %v5694 = vpop.f32.mrf.mxu0
  %v5695 = vadd.f32 %v5552, %v5694
  %5696 = vmatmul.f32.gmra.mxu0 %v3985
  %v5697 = vpop.f32.mrf.mxu0
  %v5698 = vadd.f32 %v5555, %v5697
  %5699 = vmatmul.f32.gmra.mxu0 %v3991
  %v5700 = vpop.f32.mrf.mxu0
  %v5701 = vadd.f32 %v5558, %v5700
  %5702 = vmatmul.f32.gmra.mxu0 %v3997
  %v5703 = vpop.f32.mrf.mxu0
  %v5704 = vadd.f32 %v5561, %v5703
  %5705 = vmatmul.f32.gmra.mxu0 %v4003
  %v5706 = vpop.f32.mrf.mxu0
  %v5707 = vadd.f32 %v5564, %v5706
  %5708 = vmatmul.f32.gmra.mxu0 %v4009
  %v5709 = vpop.f32.mrf.mxu0
  %v5710 = vadd.f32 %v5567, %v5709
  %5711 = vmatmul.f32.gmra.mxu0 %v4015
  %v5712 = vpop.f32.mrf.mxu0
  %v5713 = vadd.f32 %v5570, %v5712
  %5714 = vmatmul.f32.gmra.mxu0 %v4021
  %v5715 = vpop.f32.mrf.mxu0
  %v5716 = vadd.f32 %v5573, %v5715
  %5717 = vmatmul.f32.gmra.mxu0 %v4027
  %v5718 = vpop.f32.mrf.mxu0
  %v5719 = vadd.f32 %v5576, %v5718
  %5720 = vmatmul.f32.gmra.mxu0 %v4033
  %v5721 = vpop.f32.mrf.mxu0
  %v5722 = vadd.f32 %v5579, %v5721
  %5723 = vmatmul.f32.gmra.mxu0 %v4039
  %v5724 = vpop.f32.mrf.mxu0
  %v5725 = vadd.f32 %v5582, %v5724
  %5726 = vmatmul.f32.gmra.mxu0 %v4045
  %v5727 = vpop.f32.mrf.mxu0
  %v5728 = vadd.f32 %v5585, %v5727
  %5729 = vmatmul.f32.gmra.mxu0 %v4051
  %v5730 = vpop.f32.mrf.mxu0
  %v5731 = vadd.f32 %v5588, %v5730
  %5732 = vmatmul.f32.gmra.mxu0 %v4057
  %v5733 = vpop.f32.mrf.mxu0
  %v5734 = vadd.f32 %v5591, %v5733
  %5735 = vmatmul.f32.gmra.mxu0 %v4063
  %v5736 = vpop.f32.mrf.mxu0
  %v5737 = vadd.f32 %v5594, %v5736
  %5738 = vmatmul.f32.gmra.mxu0 %v4069
  %v5739 = vpop.f32.mrf.mxu0
  %v5740 = vadd.f32 %v5597, %v5739
  %5741 = vmatmul.f32.gmra.mxu0 %v4075
  %v5742 = vpop.f32.mrf.mxu0
  %v5743 = vadd.f32 %v5600, %v5742
  %5744 = vdwg.mxu0
  %5745 = vmatpush.msra.mxu0 %v3632
  %5746 = vmatpush.msra.mxu0 %v3628
  %5747 = vmatpush.msra.mxu0 %v3624
  %5748 = vmatpush.msra.mxu0 %v3620
  %5749 = vmatpush.msra.mxu0 %v3526
  %5750 = vmatpush.msra.mxu0 %v3522
  %5751 = vmatpush.msra.mxu0 %v3518
  %5752 = vmatpush.msra.mxu0 %v3514
  %5753 = vmatpush.msra.mxu0 %v3510
  %5754 = vmatpush.msra.mxu0 %v3506
  %5755 = vmatpush.msra.mxu0 %v3502
  %5756 = vmatpush.msra.mxu0 %v3498
  %5757 = vmatpush.msra.mxu0 %v3494
  %5758 = vmatpush.msra.mxu0 %v3490
  %5759 = vmatpush.msra.mxu0 %v3486
  %5760 = vmatpush.msra.mxu0 %v3482
  %5761 = vmatmul.f32.gmra.mxu0 %v3830
  %v5762 = vpop.f32.mrf.mxu0
  %v5763 = vadd.f32 %v5620, %v5762
  %5764 = vmatmul.f32.gmra.mxu0 %v3836
  %v5765 = vpop.f32.mrf.mxu0
  %v5766 = vadd.f32 %v5623, %v5765
  %5767 = vmatmul.f32.gmra.mxu0 %v3842
  %v5768 = vpop.f32.mrf.mxu0
  %v5769 = vadd.f32 %v5626, %v5768
  %5770 = vmatmul.f32.gmra.mxu0 %v3848
  %v5771 = vpop.f32.mrf.mxu0
  %v5772 = vadd.f32 %v5629, %v5771
  %5773 = vmatmul.f32.gmra.mxu0 %v3854
  %v5774 = vpop.f32.mrf.mxu0
  %v5775 = vadd.f32 %v5632, %v5774
  %5776 = vmatmul.f32.gmra.mxu0 %v3860
  %v5777 = vpop.f32.mrf.mxu0
  %v5778 = vadd.f32 %v5635, %v5777
  %5779 = vmatmul.f32.gmra.mxu0 %v3866
  %v5780 = vpop.f32.mrf.mxu0
  %v5781 = vadd.f32 %v5638, %v5780
  %5782 = vmatmul.f32.gmra.mxu0 %v3872
  %v5783 = vpop.f32.mrf.mxu0
  %v5784 = vadd.f32 %v5641, %v5783
  %5785 = vmatmul.f32.gmra.mxu0 %v3878
  %v5786 = vpop.f32.mrf.mxu0
  %v5787 = vadd.f32 %v5644, %v5786
  %5788 = vmatmul.f32.gmra.mxu0 %v3884
  %v5789 = vpop.f32.mrf.mxu0
  %v5790 = vadd.f32 %v5647, %v5789
  %5791 = vmatmul.f32.gmra.mxu0 %v3890
  %v5792 = vpop.f32.mrf.mxu0
  %v5793 = vadd.f32 %v5650, %v5792
  %5794 = vmatmul.f32.gmra.mxu0 %v3896
  %v5795 = vpop.f32.mrf.mxu0
  %v5796 = vadd.f32 %v5653, %v5795
  %5797 = vmatmul.f32.gmra.mxu0 %v3902
  %v5798 = vpop.f32.mrf.mxu0
  %v5799 = vadd.f32 %v5656, %v5798
  %5800 = vmatmul.f32.gmra.mxu0 %v3908
  %v5801 = vpop.f32.mrf.mxu0
  %v5802 = vadd.f32 %v5659, %v5801
  %5803 = vmatmul.f32.gmra.mxu0 %v3914
  %v5804 = vpop.f32.mrf.mxu0
  %v5805 = vadd.f32 %v5662, %v5804
  %5806 = vmatmul.f32.gmra.mxu0 %v3920
  %v5807 = vpop.f32.mrf.mxu0
  %v5808 = vadd.f32 %v5665, %v5807
  %5809 = vmatmul.f32.gmra.mxu0 %v3926
  %v5810 = vpop.f32.mrf.mxu0
  %v5811 = vadd.f32 %v5668, %v5810
  %5812 = vmatmul.f32.gmra.mxu0 %v3932
  %v5813 = vpop.f32.mrf.mxu0
  %v5814 = vadd.f32 %v5671, %v5813
  %5815 = vmatmul.f32.gmra.mxu0 %v3938
  %v5816 = vpop.f32.mrf.mxu0
  %v5817 = vadd.f32 %v5674, %v5816
  %5818 = vmatmul.f32.gmra.mxu0 %v3944
  %v5819 = vpop.f32.mrf.mxu0
  %v5820 = vadd.f32 %v5677, %v5819
  %5821 = vmatmul.f32.gmra.mxu0 %v3950
  %v5822 = vpop.f32.mrf.mxu0
  %v5823 = vadd.f32 %v5680, %v5822
  %5824 = vmatmul.f32.gmra.mxu0 %v3956
  %v5825 = vpop.f32.mrf.mxu0
  %v5826 = vadd.f32 %v5683, %v5825
  %5827 = vmatmul.f32.gmra.mxu0 %v3962
  %v5828 = vpop.f32.mrf.mxu0
  %v5829 = vadd.f32 %v5686, %v5828
  %5830 = vmatmul.f32.gmra.mxu0 %v3968
  %v5831 = vpop.f32.mrf.mxu0
  %v5832 = vadd.f32 %v5689, %v5831
  %5833 = vmatmul.f32.gmra.mxu0 %v3974
  %v5834 = vpop.f32.mrf.mxu0
  %v5835 = vadd.f32 %v5692, %v5834
  %5836 = vmatmul.f32.gmra.mxu0 %v3980
  %v5837 = vpop.f32.mrf.mxu0
  %v5838 = vadd.f32 %v5695, %v5837
  %5839 = vmatmul.f32.gmra.mxu0 %v3986
  %v5840 = vpop.f32.mrf.mxu0
  %v5841 = vadd.f32 %v5698, %v5840
  %5842 = vmatmul.f32.gmra.mxu0 %v3992
  %v5843 = vpop.f32.mrf.mxu0
  %v5844 = vadd.f32 %v5701, %v5843
  %5845 = vmatmul.f32.gmra.mxu0 %v3998
  %v5846 = vpop.f32.mrf.mxu0
  %v5847 = vadd.f32 %v5704, %v5846
  %5848 = vmatmul.f32.gmra.mxu0 %v4004
  %v5849 = vpop.f32.mrf.mxu0
  %v5850 = vadd.f32 %v5707, %v5849
  %5851 = vmatmul.f32.gmra.mxu0 %v4010
  %v5852 = vpop.f32.mrf.mxu0
  %v5853 = vadd.f32 %v5710, %v5852
  %5854 = vmatmul.f32.gmra.mxu0 %v4016
  %v5855 = vpop.f32.mrf.mxu0
  %v5856 = vadd.f32 %v5713, %v5855
  %5857 = vmatmul.f32.gmra.mxu0 %v4022
  %v5858 = vpop.f32.mrf.mxu0
  %v5859 = vadd.f32 %v5716, %v5858
  %5860 = vmatmul.f32.gmra.mxu0 %v4028
  %v5861 = vpop.f32.mrf.mxu0
  %v5862 = vadd.f32 %v5719, %v5861
  %5863 = vmatmul.f32.gmra.mxu0 %v4034
  %v5864 = vpop.f32.mrf.mxu0
  %v5865 = vadd.f32 %v5722, %v5864
  %5866 = vmatmul.f32.gmra.mxu0 %v4040
  %v5867 = vpop.f32.mrf.mxu0
  %v5868 = vadd.f32 %v5725, %v5867
  %5869 = vmatmul.f32.gmra.mxu0 %v4046
  %v5870 = vpop.f32.mrf.mxu0
  %v5871 = vadd.f32 %v5728, %v5870
  %5872 = vmatmul.f32.gmra.mxu0 %v4052
  %v5873 = vpop.f32.mrf.mxu0
  %v5874 = vadd.f32 %v5731, %v5873
  %5875 = vmatmul.f32.gmra.mxu0 %v4058
  %v5876 = vpop.f32.mrf.mxu0
  %v5877 = vadd.f32 %v5734, %v5876
  %5878 = vmatmul.f32.gmra.mxu0 %v4064
  %v5879 = vpop.f32.mrf.mxu0
  %v5880 = vadd.f32 %v5737, %v5879
  %5881 = vmatmul.f32.gmra.mxu0 %v4070
  %v5882 = vpop.f32.mrf.mxu0
  %v5883 = vadd.f32 %v5740, %v5882
  %5884 = vmatmul.f32.gmra.mxu0 %v4076
  %v5885 = vpop.f32.mrf.mxu0
  %v5886 = vadd.f32 %v5743, %v5885
  %5887 = vdwg.mxu0
  %5888 = vmatpush.msra.mxu0 %v3696
  %5889 = vmatpush.msra.mxu0 %v3692
  %5890 = vmatpush.msra.mxu0 %v3688
  %5891 = vmatpush.msra.mxu0 %v3684
  %5892 = vmatpush.msra.mxu0 %v3680
  %5893 = vmatpush.msra.mxu0 %v3676
  %5894 = vmatpush.msra.mxu0 %v3672
  %5895 = vmatpush.msra.mxu0 %v3668
  %5896 = vmatpush.msra.mxu0 %v3664
  %5897 = vmatpush.msra.mxu0 %v3660
  %5898 = vmatpush.msra.mxu0 %v3656
  %5899 = vmatpush.msra.mxu0 %v3652
  %5900 = vmatpush.msra.mxu0 %v3648
  %5901 = vmatpush.msra.mxu0 %v3644
  %5902 = vmatpush.msra.mxu0 %v3640
  %5903 = vmatpush.msra.mxu0 %v3636
  %5904 = vmatmul.f32.gmra.mxu0 %v3831
  %v5905 = vpop.f32.mrf.mxu0
  %v5906 = vadd.f32 %v5763, %v5905
  %5907 = vmatmul.f32.gmra.mxu0 %v3837
  %v5908 = vpop.f32.mrf.mxu0
  %v5909 = vadd.f32 %v5766, %v5908
  %5910 = vmatmul.f32.gmra.mxu0 %v3843
  %v5911 = vpop.f32.mrf.mxu0
  %v5912 = vadd.f32 %v5769, %v5911
  %5913 = vmatmul.f32.gmra.mxu0 %v3849
  %v5914 = vpop.f32.mrf.mxu0
  %v5915 = vadd.f32 %v5772, %v5914
  %5916 = vmatmul.f32.gmra.mxu0 %v3855
  %v5917 = vpop.f32.mrf.mxu0
  %v5918 = vadd.f32 %v5775, %v5917
  %5919 = vmatmul.f32.gmra.mxu0 %v3861
  %v5920 = vpop.f32.mrf.mxu0
  %v5921 = vadd.f32 %v5778, %v5920
  %5922 = vmatmul.f32.gmra.mxu0 %v3867
  %v5923 = vpop.f32.mrf.mxu0
  %v5924 = vadd.f32 %v5781, %v5923
  %5925 = vmatmul.f32.gmra.mxu0 %v3873
  %v5926 = vpop.f32.mrf.mxu0
  %v5927 = vadd.f32 %v5784, %v5926
  %5928 = vmatmul.f32.gmra.mxu0 %v3879
  %v5929 = vpop.f32.mrf.mxu0
  %v5930 = vadd.f32 %v5787, %v5929
  %5931 = vmatmul.f32.gmra.mxu0 %v3885
  %v5932 = vpop.f32.mrf.mxu0
  %v5933 = vadd.f32 %v5790, %v5932
  %5934 = vmatmul.f32.gmra.mxu0 %v3891
  %v5935 = vpop.f32.mrf.mxu0
  %v5936 = vadd.f32 %v5793, %v5935
  %5937 = vmatmul.f32.gmra.mxu0 %v3897
  %v5938 = vpop.f32.mrf.mxu0
  %v5939 = vadd.f32 %v5796, %v5938
  %5940 = vmatmul.f32.gmra.mxu0 %v3903
  %v5941 = vpop.f32.mrf.mxu0
  %v5942 = vadd.f32 %v5799, %v5941
  %5943 = vmatmul.f32.gmra.mxu0 %v3909
  %v5944 = vpop.f32.mrf.mxu0
  %v5945 = vadd.f32 %v5802, %v5944
  %5946 = vmatmul.f32.gmra.mxu0 %v3915
  %v5947 = vpop.f32.mrf.mxu0
  %v5948 = vadd.f32 %v5805, %v5947
  %5949 = vmatmul.f32.gmra.mxu0 %v3921
  %v5950 = vpop.f32.mrf.mxu0
  %v5951 = vadd.f32 %v5808, %v5950
  %5952 = vmatmul.f32.gmra.mxu0 %v3927
  %v5953 = vpop.f32.mrf.mxu0
  %v5954 = vadd.f32 %v5811, %v5953
  %5955 = vmatmul.f32.gmra.mxu0 %v3933
  %v5956 = vpop.f32.mrf.mxu0
  %v5957 = vadd.f32 %v5814, %v5956
  %5958 = vmatmul.f32.gmra.mxu0 %v3939
  %v5959 = vpop.f32.mrf.mxu0
  %v5960 = vadd.f32 %v5817, %v5959
  %5961 = vmatmul.f32.gmra.mxu0 %v3945
  %v5962 = vpop.f32.mrf.mxu0
  %v5963 = vadd.f32 %v5820, %v5962
  %5964 = vmatmul.f32.gmra.mxu0 %v3951
  %v5965 = vpop.f32.mrf.mxu0
  %v5966 = vadd.f32 %v5823, %v5965
  %5967 = vmatmul.f32.gmra.mxu0 %v3957
  %v5968 = vpop.f32.mrf.mxu0
  %v5969 = vadd.f32 %v5826, %v5968
  %5970 = vmatmul.f32.gmra.mxu0 %v3963
  %v5971 = vpop.f32.mrf.mxu0
  %v5972 = vadd.f32 %v5829, %v5971
  %5973 = vmatmul.f32.gmra.mxu0 %v3969
  %v5974 = vpop.f32.mrf.mxu0
  %v5975 = vadd.f32 %v5832, %v5974
  %5976 = vmatmul.f32.gmra.mxu0 %v3975
  %v5977 = vpop.f32.mrf.mxu0
  %v5978 = vadd.f32 %v5835, %v5977
  %5979 = vmatmul.f32.gmra.mxu0 %v3981
  %v5980 = vpop.f32.mrf.mxu0
  %v5981 = vadd.f32 %v5838, %v5980
  %5982 = vmatmul.f32.gmra.mxu0 %v3987
  %v5983 = vpop.f32.mrf.mxu0
  %v5984 = vadd.f32 %v5841, %v5983
  %5985 = vmatmul.f32.gmra.mxu0 %v3993
  %v5986 = vpop.f32.mrf.mxu0
  %v5987 = vadd.f32 %v5844, %v5986
  %5988 = vmatmul.f32.gmra.mxu0 %v3999
  %v5989 = vpop.f32.mrf.mxu0
  %v5990 = vadd.f32 %v5847, %v5989
  %5991 = vmatmul.f32.gmra.mxu0 %v4005
  %v5992 = vpop.f32.mrf.mxu0
  %v5993 = vadd.f32 %v5850, %v5992
  %5994 = vmatmul.f32.gmra.mxu0 %v4011
  %v5995 = vpop.f32.mrf.mxu0
  %v5996 = vadd.f32 %v5853, %v5995
  %5997 = vmatmul.f32.gmra.mxu0 %v4017
  %v5998 = vpop.f32.mrf.mxu0
  %v5999 = vadd.f32 %v5856, %v5998
  %6000 = vmatmul.f32.gmra.mxu0 %v4023
  %v6001 = vpop.f32.mrf.mxu0
  %v6002 = vadd.f32 %v5859, %v6001
  %6003 = vmatmul.f32.gmra.mxu0 %v4029
  %v6004 = vpop.f32.mrf.mxu0
  %v6005 = vadd.f32 %v5862, %v6004
  %6006 = vmatmul.f32.gmra.mxu0 %v4035
  %v6007 = vpop.f32.mrf.mxu0
  %v6008 = vadd.f32 %v5865, %v6007
  %6009 = vmatmul.f32.gmra.mxu0 %v4041
  %v6010 = vpop.f32.mrf.mxu0
  %v6011 = vadd.f32 %v5868, %v6010
  %6012 = vmatmul.f32.gmra.mxu0 %v4047
  %v6013 = vpop.f32.mrf.mxu0
  %v6014 = vadd.f32 %v5871, %v6013
  %6015 = vmatmul.f32.gmra.mxu0 %v4053
  %v6016 = vpop.f32.mrf.mxu0
  %v6017 = vadd.f32 %v5874, %v6016
  %6018 = vmatmul.f32.gmra.mxu0 %v4059
  %v6019 = vpop.f32.mrf.mxu0
  %v6020 = vadd.f32 %v5877, %v6019
  %6021 = vmatmul.f32.gmra.mxu0 %v4065
  %v6022 = vpop.f32.mrf.mxu0
  %v6023 = vadd.f32 %v5880, %v6022
  %6024 = vmatmul.f32.gmra.mxu0 %v4071
  %v6025 = vpop.f32.mrf.mxu0
  %v6026 = vadd.f32 %v5883, %v6025
  %6027 = vmatmul.f32.gmra.mxu0 %v4077
  %v6028 = vpop.f32.mrf.mxu0
  %v6029 = vadd.f32 %v5886, %v6028
  %6030 = vdwg.mxu0
  %6031 = vmatpush.msra.mxu0 0.0
  %6032 = vmatpush.msra.mxu0 0.0
  %6033 = vmatpush.msra.mxu0 0.0
  %6034 = vmatpush.msra.mxu0 0.0
  %6035 = vmatpush.msra.mxu0 0.0
  %6036 = vmatpush.msra.mxu0 0.0
  %6037 = vmatpush.msra.mxu0 %v3736
  %6038 = vmatpush.msra.mxu0 %v3732
  %6039 = vmatpush.msra.mxu0 %v3728
  %6040 = vmatpush.msra.mxu0 %v3724
  %6041 = vmatpush.msra.mxu0 %v3720
  %6042 = vmatpush.msra.mxu0 %v3716
  %6043 = vmatpush.msra.mxu0 %v3712
  %6044 = vmatpush.msra.mxu0 %v3708
  %6045 = vmatpush.msra.mxu0 %v3704
  %6046 = vmatpush.msra.mxu0 %v3700
  %6047 = vmatmul.f32.gmra.mxu0 %v4333
  %v6048 = vpop.f32.mrf.mxu0
  %v6049 = vadd.f32 %v5906, %v6048
  %6050 = vmatmul.f32.gmra.mxu0 %v4336
  %v6051 = vpop.f32.mrf.mxu0
  %v6052 = vadd.f32 %v5909, %v6051
  %6053 = vmatmul.f32.gmra.mxu0 %v4339
  %v6054 = vpop.f32.mrf.mxu0
  %v6055 = vadd.f32 %v5912, %v6054
  %6056 = vmatmul.f32.gmra.mxu0 %v4342
  %v6057 = vpop.f32.mrf.mxu0
  %v6058 = vadd.f32 %v5915, %v6057
  %6059 = vmatmul.f32.gmra.mxu0 %v4345
  %v6060 = vpop.f32.mrf.mxu0
  %v6061 = vadd.f32 %v5918, %v6060
  %6062 = vmatmul.f32.gmra.mxu0 %v4348
  %v6063 = vpop.f32.mrf.mxu0
  %v6064 = vadd.f32 %v5921, %v6063
  %6065 = vmatmul.f32.gmra.mxu0 %v4351
  %v6066 = vpop.f32.mrf.mxu0
  %v6067 = vadd.f32 %v5924, %v6066
  %6068 = vmatmul.f32.gmra.mxu0 %v4354
  %v6069 = vpop.f32.mrf.mxu0
  %v6070 = vadd.f32 %v5927, %v6069
  %6071 = vmatmul.f32.gmra.mxu0 %v4357
  %v6072 = vpop.f32.mrf.mxu0
  %v6073 = vadd.f32 %v5930, %v6072
  %6074 = vmatmul.f32.gmra.mxu0 %v4360
  %v6075 = vpop.f32.mrf.mxu0
  %v6076 = vadd.f32 %v5933, %v6075
  %6077 = vmatmul.f32.gmra.mxu0 %v4363
  %v6078 = vpop.f32.mrf.mxu0
  %v6079 = vadd.f32 %v5936, %v6078
  %6080 = vmatmul.f32.gmra.mxu0 %v4366
  %v6081 = vpop.f32.mrf.mxu0
  %v6082 = vadd.f32 %v5939, %v6081
  %6083 = vmatmul.f32.gmra.mxu0 %v4369
  %v6084 = vpop.f32.mrf.mxu0
  %v6085 = vadd.f32 %v5942, %v6084
  %6086 = vmatmul.f32.gmra.mxu0 %v4372
  %v6087 = vpop.f32.mrf.mxu0
  %v6088 = vadd.f32 %v5945, %v6087
  %6089 = vmatmul.f32.gmra.mxu0 %v4375
  %v6090 = vpop.f32.mrf.mxu0
  %v6091 = vadd.f32 %v5948, %v6090
  %6092 = vmatmul.f32.gmra.mxu0 %v4378
  %v6093 = vpop.f32.mrf.mxu0
  %v6094 = vadd.f32 %v5951, %v6093
  %6095 = vmatmul.f32.gmra.mxu0 %v4381
  %v6096 = vpop.f32.mrf.mxu0
  %v6097 = vadd.f32 %v5954, %v6096
  %6098 = vmatmul.f32.gmra.mxu0 %v4384
  %v6099 = vpop.f32.mrf.mxu0
  %v6100 = vadd.f32 %v5957, %v6099
  %6101 = vmatmul.f32.gmra.mxu0 %v4387
  %v6102 = vpop.f32.mrf.mxu0
  %v6103 = vadd.f32 %v5960, %v6102
  %6104 = vmatmul.f32.gmra.mxu0 %v4390
  %v6105 = vpop.f32.mrf.mxu0
  %v6106 = vadd.f32 %v5963, %v6105
  %6107 = vmatmul.f32.gmra.mxu0 %v4393
  %v6108 = vpop.f32.mrf.mxu0
  %v6109 = vadd.f32 %v5966, %v6108
  %6110 = vmatmul.f32.gmra.mxu0 %v4396
  %v6111 = vpop.f32.mrf.mxu0
  %v6112 = vadd.f32 %v5969, %v6111
  %6113 = vmatmul.f32.gmra.mxu0 %v4399
  %v6114 = vpop.f32.mrf.mxu0
  %v6115 = vadd.f32 %v5972, %v6114
  %6116 = vmatmul.f32.gmra.mxu0 %v4402
  %v6117 = vpop.f32.mrf.mxu0
  %v6118 = vadd.f32 %v5975, %v6117
  %6119 = vmatmul.f32.gmra.mxu0 %v4405
  %v6120 = vpop.f32.mrf.mxu0
  %v6121 = vadd.f32 %v5978, %v6120
  %6122 = vmatmul.f32.gmra.mxu0 %v4408
  %v6123 = vpop.f32.mrf.mxu0
  %v6124 = vadd.f32 %v5981, %v6123
  %6125 = vmatmul.f32.gmra.mxu0 %v4411
  %v6126 = vpop.f32.mrf.mxu0
  %v6127 = vadd.f32 %v5984, %v6126
  %6128 = vmatmul.f32.gmra.mxu0 %v4414
  %v6129 = vpop.f32.mrf.mxu0
  %v6130 = vadd.f32 %v5987, %v6129
  %6131 = vmatmul.f32.gmra.mxu0 %v4417
  %v6132 = vpop.f32.mrf.mxu0
  %v6133 = vadd.f32 %v5990, %v6132
  %6134 = vmatmul.f32.gmra.mxu0 %v4420
  %v6135 = vpop.f32.mrf.mxu0
  %v6136 = vadd.f32 %v5993, %v6135
  %6137 = vmatmul.f32.gmra.mxu0 %v4423
  %v6138 = vpop.f32.mrf.mxu0
  %v6139 = vadd.f32 %v5996, %v6138
  %6140 = vmatmul.f32.gmra.mxu0 %v4426
  %v6141 = vpop.f32.mrf.mxu0
  %v6142 = vadd.f32 %v5999, %v6141
  %6143 = vmatmul.f32.gmra.mxu0 %v4429
  %v6144 = vpop.f32.mrf.mxu0
  %v6145 = vadd.f32 %v6002, %v6144
  %6146 = vmatmul.f32.gmra.mxu0 %v4432
  %v6147 = vpop.f32.mrf.mxu0
  %v6148 = vadd.f32 %v6005, %v6147
  %6149 = vmatmul.f32.gmra.mxu0 %v4435
  %v6150 = vpop.f32.mrf.mxu0
  %v6151 = vadd.f32 %v6008, %v6150
  %6152 = vmatmul.f32.gmra.mxu0 %v4438
  %v6153 = vpop.f32.mrf.mxu0
  %v6154 = vadd.f32 %v6011, %v6153
  %6155 = vmatmul.f32.gmra.mxu0 %v4441
  %v6156 = vpop.f32.mrf.mxu0
  %v6157 = vadd.f32 %v6014, %v6156
  %6158 = vmatmul.f32.gmra.mxu0 %v4444
  %v6159 = vpop.f32.mrf.mxu0
  %v6160 = vadd.f32 %v6017, %v6159
  %6161 = vmatmul.f32.gmra.mxu0 %v4447
  %v6162 = vpop.f32.mrf.mxu0
  %v6163 = vadd.f32 %v6020, %v6162
  %6164 = vmatmul.f32.gmra.mxu0 %v4450
  %v6165 = vpop.f32.mrf.mxu0
  %v6166 = vadd.f32 %v6023, %v6165
  %6167 = vmatmul.f32.gmra.mxu0 %v4453
  %v6168 = vpop.f32.mrf.mxu0
  %v6169 = vadd.f32 %v6026, %v6168
  %6170 = vmatmul.f32.gmra.mxu0 %v4456
  %v6171 = vpop.f32.mrf.mxu0
  %v6172 = vadd.f32 %v6029, %v6171
  %6173 = vdwg.mxu0
  %v6174 = vmax.f32 %v5191, 0.0
  %v6175 = vmax.f32 %v6049, 0.0
  %v6176 = vmax.f32 %v5194, 0.0
  %v6177 = vmax.f32 %v6052, 0.0
  %v6178 = vmax.f32 %v5197, 0.0
  %v6179 = vmax.f32 %v6055, 0.0
  %v6180 = vmax.f32 %v5200, 0.0
  %v6181 = vmax.f32 %v6058, 0.0
  %v6182 = vmax.f32 %v5203, 0.0
  %v6183 = vmax.f32 %v6061, 0.0
  %v6184 = vmax.f32 %v5206, 0.0
  %v6185 = vmax.f32 %v6064, 0.0
  %v6186 = vmax.f32 %v5209, 0.0
  %v6187 = vmax.f32 %v6067, 0.0
  %v6188 = vmax.f32 %v5212, 0.0
  %v6189 = vmax.f32 %v6070, 0.0
  %v6190 = vmax.f32 %v5215, 0.0
  %v6191 = vmax.f32 %v6073, 0.0
  %v6192 = vmax.f32 %v5218, 0.0
  %v6193 = vmax.f32 %v6076, 0.0
  %v6194 = vmax.f32 %v5221, 0.0
  %v6195 = vmax.f32 %v6079, 0.0
  %v6196 = vmax.f32 %v5224, 0.0
  %v6197 = vmax.f32 %v6082, 0.0
  %v6198 = vmax.f32 %v5227, 0.0
  %v6199 = vmax.f32 %v6085, 0.0
  %v6200 = vmax.f32 %v5230, 0.0
  %v6201 = vmax.f32 %v6088, 0.0
  %v6202 = vmax.f32 %v5233, 0.0
  %v6203 = vmax.f32 %v6091, 0.0
  %v6204 = vmax.f32 %v5236, 0.0
  %v6205 = vmax.f32 %v6094, 0.0
  %v6206 = vmax.f32 %v5239, 0.0
  %v6207 = vmax.f32 %v6097, 0.0
  %v6208 = vmax.f32 %v5242, 0.0
  %v6209 = vmax.f32 %v6100, 0.0
  %v6210 = vmax.f32 %v5245, 0.0
  %v6211 = vmax.f32 %v6103, 0.0
  %v6212 = vmax.f32 %v5248, 0.0
  %v6213 = vmax.f32 %v6106, 0.0
  %v6214 = vmax.f32 %v5251, 0.0
  %v6215 = vmax.f32 %v6109, 0.0
  %v6216 = vmax.f32 %v5254, 0.0
  %v6217 = vmax.f32 %v6112, 0.0
  %v6218 = vmax.f32 %v5257, 0.0
  %v6219 = vmax.f32 %v6115, 0.0
  %v6220 = vmax.f32 %v5260, 0.0
  %v6221 = vmax.f32 %v6118, 0.0
  %v6222 = vmax.f32 %v5263, 0.0
  %v6223 = vmax.f32 %v6121, 0.0
  %v6224 = vmax.f32 %v5266, 0.0
  %v6225 = vmax.f32 %v6124, 0.0
  %v6226 = vmax.f32 %v5269, 0.0
  %v6227 = vmax.f32 %v6127, 0.0
  %v6228 = vmax.f32 %v5272, 0.0
  %v6229 = vmax.f32 %v6130, 0.0
  %v6230 = vmax.f32 %v5275, 0.0
  %v6231 = vmax.f32 %v6133, 0.0
  %v6232 = vmax.f32 %v5278, 0.0
  %v6233 = vmax.f32 %v6136, 0.0
  %v6234 = vmax.f32 %v5281, 0.0
  %v6235 = vmax.f32 %v6139, 0.0
  %v6236 = vmax.f32 %v5284, 0.0
  %v6237 = vmax.f32 %v6142, 0.0
  %v6238 = vmax.f32 %v5287, 0.0
  %v6239 = vmax.f32 %v6145, 0.0
  %v6240 = vmax.f32 %v5290, 0.0
  %v6241 = vmax.f32 %v6148, 0.0
  %v6242 = vmax.f32 %v5293, 0.0
  %v6243 = vmax.f32 %v6151, 0.0
  %v6244 = vmax.f32 %v5296, 0.0
  %v6245 = vmax.f32 %v6154, 0.0
  %v6246 = vmax.f32 %v5299, 0.0
  %v6247 = vmax.f32 %v6157, 0.0
  %v6248 = vmax.f32 %v5302, 0.0
  %v6249 = vmax.f32 %v6160, 0.0
  %v6250 = vmax.f32 %v5305, 0.0
  %v6251 = vmax.f32 %v6163, 0.0
  %v6252 = vmax.f32 %v5308, 0.0
  %v6253 = vmax.f32 %v6166, 0.0
  %v6254 = vmax.f32 %v5311, 0.0
  %v6255 = vmax.f32 %v6169, 0.0
  %v6256 = vmax.f32 %v5314, 0.0
  %v6257 = vmax.f32 %v6172, 0.0
  %v6258 = vld [vmem:[%s7] sm:$0xff]
  %v6259 = vld [vmem:[%s7 + $0x8] sm:$0xff]
  %v6260 = vld [vmem:[%s7 + $0x10] sm:$0xff]
  %v6261 = vld [vmem:[%s7 + $0x18] sm:$0xff]
  %v6262 = vld [vmem:[%s7 + $0x20] sm:$0xff]
  %v6263 = vld [vmem:[%s7 + $0x28] sm:$0xff]
  %v6264 = vld [vmem:[%s7 + $0x30] sm:$0xff]
  %v6265 = vld [vmem:[%s7 + $0x38] sm:$0xff]
  %v6266 = vld [vmem:[%s7 + $0x40] sm:$0xff]
  %v6267 = vld [vmem:[%s7 + $0x48] sm:$0xff]
  %v6268 = vld [vmem:[%s7 + $0x50] sm:$0xff]
  %v6269 = vld [vmem:[%s7 + $0x58] sm:$0xff]
  %v6270 = vld [vmem:[%s7 + $0x60] sm:$0xff]
  %v6271 = vld [vmem:[%s7 + $0x68] sm:$0xff]
  %v6272 = vld [vmem:[%s7 + $0x70] sm:$0xff]
  %v6273 = vld [vmem:[%s7 + $0x78] sm:$0xff]
  %v6274 = vld [vmem:[%s7 + $0x80] sm:$0xff]
  %v6275 = vld [vmem:[%s7 + $0x88] sm:$0xff]
  %v6276 = vld [vmem:[%s7 + $0x90] sm:$0xff]
  %v6277 = vld [vmem:[%s7 + $0x98] sm:$0xff]
  %v6278 = vld [vmem:[%s7 + $0xa0] sm:$0xff]
  %v6279 = vld [vmem:[%s7 + $0xa8] sm:$0xff]
  %v6280 = vld [vmem:[%s7 + $0xb0] sm:$0xff]
  %v6281 = vld [vmem:[%s7 + $0xb8] sm:$0xff]
  %v6282 = vld [vmem:[%s7 + $0xc0] sm:$0xff]
  %v6283 = vld [vmem:[%s7 + $0xc8] sm:$0xff]
  %v6284 = vld [vmem:[%s7 + $0xd0] sm:$0xff]
  %v6285 = vld [vmem:[%s7 + $0xd8] sm:$0xff]
  %v6286 = vld [vmem:[%s7 + $0xe0] sm:$0xff]
  %v6287 = vld [vmem:[%s7 + $0xe8] sm:$0xff]
  %v6288 = vld [vmem:[%s7 + $0xf0] sm:$0xff]
  %v6289 = vld [vmem:[%s7 + $0xf8] sm:$0xff]
  %v6290 = vld [vmem:[%s7 + $0x100] sm:$0xff]
  %v6291 = vld [vmem:[%s7 + $0x108] sm:$0xff]
  %v6292 = vld [vmem:[%s7 + $0x110] sm:$0xff]
  %v6293 = vld [vmem:[%s7 + $0x118] sm:$0xff]
  %v6294 = vld [vmem:[%s7 + $0x120] sm:$0xff]
  %v6295 = vld [vmem:[%s7 + $0x128] sm:$0xff]
  %v6296 = vld [vmem:[%s7 + $0x130] sm:$0xff]
  %v6297 = vld [vmem:[%s7 + $0x138] sm:$0xff]
  %v6298 = vld [vmem:[%s7 + $0x140] sm:$0xff]
  %v6299 = vld [vmem:[%s7 + $0x148] sm:$0xff]
  %v6300 = vld [vmem:[%s7 + $0x150] sm:$0xff]
  %v6301 = vld [vmem:[%s7 + $0x158] sm:$0xff]
  %vm6302 = vcmask 392192
  %v6304 = vsel %vm6302, %v6175, 0
  %v6307 = vsel %vm6302, %v6177, 0
  %v6310 = vsel %vm6302, %v6179, 0
  %v6313 = vsel %vm6302, %v6181, 0
  %v6316 = vsel %vm6302, %v6183, 0
  %v6319 = vsel %vm6302, %v6185, 0
  %v6322 = vsel %vm6302, %v6187, 0
  %v6325 = vsel %vm6302, %v6189, 0
  %v6328 = vsel %vm6302, %v6191, 0
  %v6331 = vsel %vm6302, %v6193, 0
  %v6334 = vsel %vm6302, %v6195, 0
  %v6337 = vsel %vm6302, %v6197, 0
  %v6340 = vsel %vm6302, %v6199, 0
  %v6343 = vsel %vm6302, %v6201, 0
  %v6346 = vsel %vm6302, %v6203, 0
  %v6349 = vsel %vm6302, %v6205, 0
  %v6352 = vsel %vm6302, %v6207, 0
  %v6355 = vsel %vm6302, %v6209, 0
  %v6358 = vsel %vm6302, %v6211, 0
  %v6361 = vsel %vm6302, %v6213, 0
  %v6364 = vsel %vm6302, %v6215, 0
  %v6367 = vsel %vm6302, %v6217, 0
  %v6370 = vsel %vm6302, %v6219, 0
  %v6373 = vsel %vm6302, %v6221, 0
  %v6376 = vsel %vm6302, %v6223, 0
  %v6379 = vsel %vm6302, %v6225, 0
  %v6382 = vsel %vm6302, %v6227, 0
  %v6385 = vsel %vm6302, %v6229, 0
  %v6388 = vsel %vm6302, %v6231, 0
  %v6391 = vsel %vm6302, %v6233, 0
  %v6394 = vsel %vm6302, %v6235, 0
  %v6397 = vsel %vm6302, %v6237, 0
  %v6400 = vsel %vm6302, %v6239, 0
  %v6403 = vsel %vm6302, %v6241, 0
  %v6406 = vsel %vm6302, %v6243, 0
  %v6409 = vsel %vm6302, %v6245, 0
  %v6412 = vsel %vm6302, %v6247, 0
  %v6415 = vsel %vm6302, %v6249, 0
  %v6418 = vsel %vm6302, %v6251, 0
  %v6421 = vsel %vm6302, %v6253, 0
  %v6424 = vsel %vm6302, %v6255, 0
  %v6427 = vsel %vm6302, %v6257, 0
  %6429 = vmatpush.msra.mxu0 %v6288
  %6430 = vmatpush.msra.mxu0 %v6286
  %6431 = vmatpush.msra.mxu0 %v6284
  %6432 = vmatpush.msra.mxu0 %v6282
  %6433 = vmatpush.msra.mxu0 %v6280
  %6434 = vmatpush.msra.mxu0 %v6278
  %6435 = vmatpush.msra.mxu0 %v6276
  %6436 = vmatpush.msra.mxu0 %v6274
  %6437 = vmatpush.msra.mxu0 %v6272
  %6438 = vmatpush.msra.mxu0 %v6270
  %6439 = vmatpush.msra.mxu0 %v6268
  %6440 = vmatpush.msra.mxu0 %v6266
  %6441 = vmatpush.msra.mxu0 %v6264
  %6442 = vmatpush.msra.mxu0 %v6262
  %6443 = vmatpush.msra.mxu0 %v6260
  %6444 = vmatpush.msra.mxu0 %v6258
  %6445 = vmatmul.f32.gmra.mxu0 %v6174
  %v6446 = vpop.f32.mrf.mxu0
  %v6447 = vadd.f32 0.0, %v6446
  %6448 = vmatmul.f32.gmra.mxu0 %v6176
  %v6449 = vpop.f32.mrf.mxu0
  %v6450 = vadd.f32 0.0, %v6449
  %6451 = vmatmul.f32.gmra.mxu0 %v6178
  %v6452 = vpop.f32.mrf.mxu0
  %v6453 = vadd.f32 0.0, %v6452
  %6454 = vmatmul.f32.gmra.mxu0 %v6180
  %v6455 = vpop.f32.mrf.mxu0
  %v6456 = vadd.f32 0.0, %v6455
  %6457 = vmatmul.f32.gmra.mxu0 %v6182
  %v6458 = vpop.f32.mrf.mxu0
  %v6459 = vadd.f32 0.0, %v6458
  %6460 = vmatmul.f32.gmra.mxu0 %v6184
  %v6461 = vpop.f32.mrf.mxu0
  %v6462 = vadd.f32 0.0, %v6461
  %6463 = vmatmul.f32.gmra.mxu0 %v6186
  %v6464 = vpop.f32.mrf.mxu0
  %v6465 = vadd.f32 0.0, %v6464
  %6466 = vmatmul.f32.gmra.mxu0 %v6188
  %v6467 = vpop.f32.mrf.mxu0
  %v6468 = vadd.f32 0.0, %v6467
  %6469 = vmatmul.f32.gmra.mxu0 %v6190
  %v6470 = vpop.f32.mrf.mxu0
  %v6471 = vadd.f32 0.0, %v6470
  %6472 = vmatmul.f32.gmra.mxu0 %v6192
  %v6473 = vpop.f32.mrf.mxu0
  %v6474 = vadd.f32 0.0, %v6473
  %6475 = vmatmul.f32.gmra.mxu0 %v6194
  %v6476 = vpop.f32.mrf.mxu0
  %v6477 = vadd.f32 0.0, %v6476
  %6478 = vmatmul.f32.gmra.mxu0 %v6196
  %v6479 = vpop.f32.mrf.mxu0
  %v6480 = vadd.f32 0.0, %v6479
  %6481 = vmatmul.f32.gmra.mxu0 %v6198
  %v6482 = vpop.f32.mrf.mxu0
  %v6483 = vadd.f32 0.0, %v6482
  %6484 = vmatmul.f32.gmra.mxu0 %v6200
  %v6485 = vpop.f32.mrf.mxu0
  %v6486 = vadd.f32 0.0, %v6485
  %6487 = vmatmul.f32.gmra.mxu0 %v6202
  %v6488 = vpop.f32.mrf.mxu0
  %v6489 = vadd.f32 0.0, %v6488
  %6490 = vmatmul.f32.gmra.mxu0 %v6204
  %v6491 = vpop.f32.mrf.mxu0
  %v6492 = vadd.f32 0.0, %v6491
  %6493 = vmatmul.f32.gmra.mxu0 %v6206
  %v6494 = vpop.f32.mrf.mxu0
  %v6495 = vadd.f32 0.0, %v6494
  %6496 = vmatmul.f32.gmra.mxu0 %v6208
  %v6497 = vpop.f32.mrf.mxu0
  %v6498 = vadd.f32 0.0, %v6497
  %6499 = vmatmul.f32.gmra.mxu0 %v6210
  %v6500 = vpop.f32.mrf.mxu0
  %v6501 = vadd.f32 0.0, %v6500
  %6502 = vmatmul.f32.gmra.mxu0 %v6212
  %v6503 = vpop.f32.mrf.mxu0
  %v6504 = vadd.f32 0.0, %v6503
  %6505 = vmatmul.f32.gmra.mxu0 %v6214
  %v6506 = vpop.f32.mrf.mxu0
  %v6507 = vadd.f32 0.0, %v6506
  %6508 = vmatmul.f32.gmra.mxu0 %v6216
  %v6509 = vpop.f32.mrf.mxu0
  %v6510 = vadd.f32 0.0, %v6509
  %6511 = vmatmul.f32.gmra.mxu0 %v6218
  %v6512 = vpop.f32.mrf.mxu0
  %v6513 = vadd.f32 0.0, %v6512
  %6514 = vmatmul.f32.gmra.mxu0 %v6220
  %v6515 = vpop.f32.mrf.mxu0
  %v6516 = vadd.f32 0.0, %v6515
  %6517 = vmatmul.f32.gmra.mxu0 %v6222
  %v6518 = vpop.f32.mrf.mxu0
  %v6519 = vadd.f32 0.0, %v6518
  %6520 = vmatmul.f32.gmra.mxu0 %v6224
  %v6521 = vpop.f32.mrf.mxu0
  %v6522 = vadd.f32 0.0, %v6521
  %6523 = vmatmul.f32.gmra.mxu0 %v6226
  %v6524 = vpop.f32.mrf.mxu0
  %v6525 = vadd.f32 0.0, %v6524
  %6526 = vmatmul.f32.gmra.mxu0 %v6228
  %v6527 = vpop.f32.mrf.mxu0
  %v6528 = vadd.f32 0.0, %v6527
  %6529 = vmatmul.f32.gmra.mxu0 %v6230
  %v6530 = vpop.f32.mrf.mxu0
  %v6531 = vadd.f32 0.0, %v6530
  %6532 = vmatmul.f32.gmra.mxu0 %v6232
  %v6533 = vpop.f32.mrf.mxu0
  %v6534 = vadd.f32 0.0, %v6533
  %6535 = vmatmul.f32.gmra.mxu0 %v6234
  %v6536 = vpop.f32.mrf.mxu0
  %v6537 = vadd.f32 0.0, %v6536
  %6538 = vmatmul.f32.gmra.mxu0 %v6236
  %v6539 = vpop.f32.mrf.mxu0
  %v6540 = vadd.f32 0.0, %v6539
  %6541 = vmatmul.f32.gmra.mxu0 %v6238
  %v6542 = vpop.f32.mrf.mxu0
  %v6543 = vadd.f32 0.0, %v6542
  %6544 = vmatmul.f32.gmra.mxu0 %v6240
  %v6545 = vpop.f32.mrf.mxu0
  %v6546 = vadd.f32 0.0, %v6545
  %6547 = vmatmul.f32.gmra.mxu0 %v6242
  %v6548 = vpop.f32.mrf.mxu0
  %v6549 = vadd.f32 0.0, %v6548
  %6550 = vmatmul.f32.gmra.mxu0 %v6244
  %v6551 = vpop.f32.mrf.mxu0
  %v6552 = vadd.f32 0.0, %v6551
  %6553 = vmatmul.f32.gmra.mxu0 %v6246
  %v6554 = vpop.f32.mrf.mxu0
  %v6555 = vadd.f32 0.0, %v6554
  %6556 = vmatmul.f32.gmra.mxu0 %v6248
  %v6557 = vpop.f32.mrf.mxu0
  %v6558 = vadd.f32 0.0, %v6557
  %6559 = vmatmul.f32.gmra.mxu0 %v6250
  %v6560 = vpop.f32.mrf.mxu0
  %v6561 = vadd.f32 0.0, %v6560
  %6562 = vmatmul.f32.gmra.mxu0 %v6252
  %v6563 = vpop.f32.mrf.mxu0
  %v6564 = vadd.f32 0.0, %v6563
  %6565 = vmatmul.f32.gmra.mxu0 %v6254
  %v6566 = vpop.f32.mrf.mxu0
  %v6567 = vadd.f32 0.0, %v6566
  %6568 = vmatmul.f32.gmra.mxu0 %v6256
  %v6569 = vpop.f32.mrf.mxu0
  %v6570 = vadd.f32 0.0, %v6569
  %6571 = vdwg.mxu0
  %6572 = vmatpush.msra.mxu0 0.0
  %6573 = vmatpush.msra.mxu0 0.0
  %6574 = vmatpush.msra.mxu0 0.0
  %6575 = vmatpush.msra.mxu0 0.0
  %6576 = vmatpush.msra.mxu0 0.0
  %6577 = vmatpush.msra.mxu0 0.0
  %6578 = vmatpush.msra.mxu0 0.0
  %6579 = vmatpush.msra.mxu0 0.0
  %6580 = vmatpush.msra.mxu0 0.0
  %6581 = vmatpush.msra.mxu0 0.0
  %6582 = vmatpush.msra.mxu0 %v6300
  %6583 = vmatpush.msra.mxu0 %v6298
  %6584 = vmatpush.msra.mxu0 %v6296
  %6585 = vmatpush.msra.mxu0 %v6294
  %6586 = vmatpush.msra.mxu0 %v6292
  %6587 = vmatpush.msra.mxu0 %v6290
  %6588 = vmatmul.f32.gmra.mxu0 %v6304
  %v6589 = vpop.f32.mrf.mxu0
  %v6590 = vadd.f32 %v6447, %v6589
  %6591 = vmatmul.f32.gmra.mxu0 %v6307
  %v6592 = vpop.f32.mrf.mxu0
  %v6593 = vadd.f32 %v6450, %v6592
  %6594 = vmatmul.f32.gmra.mxu0 %v6310
  %v6595 = vpop.f32.mrf.mxu0
  %v6596 = vadd.f32 %v6453, %v6595
  %6597 = vmatmul.f32.gmra.mxu0 %v6313
  %v6598 = vpop.f32.mrf.mxu0
  %v6599 = vadd.f32 %v6456, %v6598
  %6600 = vmatmul.f32.gmra.mxu0 %v6316
  %v6601 = vpop.f32.mrf.mxu0
  %v6602 = vadd.f32 %v6459, %v6601
  %6603 = vmatmul.f32.gmra.mxu0 %v6319
  %v6604 = vpop.f32.mrf.mxu0
  %v6605 = vadd.f32 %v6462, %v6604
  %6606 = vmatmul.f32.gmra.mxu0 %v6322
  %v6607 = vpop.f32.mrf.mxu0
  %v6608 = vadd.f32 %v6465, %v6607
  %6609 = vmatmul.f32.gmra.mxu0 %v6325
  %v6610 = vpop.f32.mrf.mxu0
  %v6611 = vadd.f32 %v6468, %v6610
  %6612 = vmatmul.f32.gmra.mxu0 %v6328
  %v6613 = vpop.f32.mrf.mxu0
  %v6614 = vadd.f32 %v6471, %v6613
  %6615 = vmatmul.f32.gmra.mxu0 %v6331
  %v6616 = vpop.f32.mrf.mxu0
  %v6617 = vadd.f32 %v6474, %v6616
  %6618 = vmatmul.f32.gmra.mxu0 %v6334
  %v6619 = vpop.f32.mrf.mxu0
  %v6620 = vadd.f32 %v6477, %v6619
  %6621 = vmatmul.f32.gmra.mxu0 %v6337
  %v6622 = vpop.f32.mrf.mxu0
  %v6623 = vadd.f32 %v6480, %v6622
  %6624 = vmatmul.f32.gmra.mxu0 %v6340
  %v6625 = vpop.f32.mrf.mxu0
  %v6626 = vadd.f32 %v6483, %v6625
  %6627 = vmatmul.f32.gmra.mxu0 %v6343
  %v6628 = vpop.f32.mrf.mxu0
  %v6629 = vadd.f32 %v6486, %v6628
  %6630 = vmatmul.f32.gmra.mxu0 %v6346
  %v6631 = vpop.f32.mrf.mxu0
  %v6632 = vadd.f32 %v6489, %v6631
  %6633 = vmatmul.f32.gmra.mxu0 %v6349
  %v6634 = vpop.f32.mrf.mxu0
  %v6635 = vadd.f32 %v6492, %v6634
  %6636 = vmatmul.f32.gmra.mxu0 %v6352
  %v6637 = vpop.f32.mrf.mxu0
  %v6638 = vadd.f32 %v6495, %v6637
  %6639 = vmatmul.f32.gmra.mxu0 %v6355
  %v6640 = vpop.f32.mrf.mxu0
  %v6641 = vadd.f32 %v6498, %v6640
  %6642 = vmatmul.f32.gmra.mxu0 %v6358
  %v6643 = vpop.f32.mrf.mxu0
  %v6644 = vadd.f32 %v6501, %v6643
  %6645 = vmatmul.f32.gmra.mxu0 %v6361
  %v6646 = vpop.f32.mrf.mxu0
  %v6647 = vadd.f32 %v6504, %v6646
  %6648 = vmatmul.f32.gmra.mxu0 %v6364
  %v6649 = vpop.f32.mrf.mxu0
  %v6650 = vadd.f32 %v6507, %v6649
  %6651 = vmatmul.f32.gmra.mxu0 %v6367
  %v6652 = vpop.f32.mrf.mxu0
  %v6653 = vadd.f32 %v6510, %v6652
  %6654 = vmatmul.f32.gmra.mxu0 %v6370
  %v6655 = vpop.f32.mrf.mxu0
  %v6656 = vadd.f32 %v6513, %v6655
  %6657 = vmatmul.f32.gmra.mxu0 %v6373
  %v6658 = vpop.f32.mrf.mxu0
  %v6659 = vadd.f32 %v6516, %v6658
  %6660 = vmatmul.f32.gmra.mxu0 %v6376
  %v6661 = vpop.f32.mrf.mxu0
  %v6662 = vadd.f32 %v6519, %v6661
  %6663 = vmatmul.f32.gmra.mxu0 %v6379
  %v6664 = vpop.f32.mrf.mxu0
  %v6665 = vadd.f32 %v6522, %v6664
  %6666 = vmatmul.f32.gmra.mxu0 %v6382
  %v6667 = vpop.f32.mrf.mxu0
  %v6668 = vadd.f32 %v6525, %v6667
  %6669 = vmatmul.f32.gmra.mxu0 %v6385
  %v6670 = vpop.f32.mrf.mxu0
  %v6671 = vadd.f32 %v6528, %v6670
  %6672 = vmatmul.f32.gmra.mxu0 %v6388
  %v6673 = vpop.f32.mrf.mxu0
  %v6674 = vadd.f32 %v6531, %v6673
  %6675 = vmatmul.f32.gmra.mxu0 %v6391
  %v6676 = vpop.f32.mrf.mxu0
  %v6677 = vadd.f32 %v6534, %v6676
  %6678 = vmatmul.f32.gmra.mxu0 %v6394
  %v6679 = vpop.f32.mrf.mxu0
  %v6680 = vadd.f32 %v6537, %v6679
  %6681 = vmatmul.f32.gmra.mxu0 %v6397
  %v6682 = vpop.f32.mrf.mxu0
  %v6683 = vadd.f32 %v6540, %v6682
  %6684 = vmatmul.f32.gmra.mxu0 %v6400
  %v6685 = vpop.f32.mrf.mxu0
  %v6686 = vadd.f32 %v6543, %v6685
  %6687 = vmatmul.f32.gmra.mxu0 %v6403
  %v6688 = vpop.f32.mrf.mxu0
  %v6689 = vadd.f32 %v6546, %v6688
  %6690 = vmatmul.f32.gmra.mxu0 %v6406
  %v6691 = vpop.f32.mrf.mxu0
  %v6692 = vadd.f32 %v6549, %v6691
  %6693 = vmatmul.f32.gmra.mxu0 %v6409
  %v6694 = vpop.f32.mrf.mxu0
  %v6695 = vadd.f32 %v6552, %v6694
  %6696 = vmatmul.f32.gmra.mxu0 %v6412
  %v6697 = vpop.f32.mrf.mxu0
  %v6698 = vadd.f32 %v6555, %v6697
  %6699 = vmatmul.f32.gmra.mxu0 %v6415
  %v6700 = vpop.f32.mrf.mxu0
  %v6701 = vadd.f32 %v6558, %v6700
  %6702 = vmatmul.f32.gmra.mxu0 %v6418
  %v6703 = vpop.f32.mrf.mxu0
  %v6704 = vadd.f32 %v6561, %v6703
  %6705 = vmatmul.f32.gmra.mxu0 %v6421
  %v6706 = vpop.f32.mrf.mxu0
  %v6707 = vadd.f32 %v6564, %v6706
  %6708 = vmatmul.f32.gmra.mxu0 %v6424
  %v6709 = vpop.f32.mrf.mxu0
  %v6710 = vadd.f32 %v6567, %v6709
  %6711 = vmatmul.f32.gmra.mxu0 %v6427
  %v6712 = vpop.f32.mrf.mxu0
  %v6713 = vadd.f32 %v6570, %v6712
  %6714 = vdwg.mxu0
  %6715 = vmatpush.msra.mxu0 %v6289
  %6716 = vmatpush.msra.mxu0 %v6287
  %6717 = vmatpush.msra.mxu0 %v6285
  %6718 = vmatpush.msra.mxu0 %v6283
  %6719 = vmatpush.msra.mxu0 %v6281
  %6720 = vmatpush.msra.mxu0 %v6279
  %6721 = vmatpush.msra.mxu0 %v6277
  %6722 = vmatpush.msra.mxu0 %v6275
  %6723 = vmatpush.msra.mxu0 %v6273
  %6724 = vmatpush.msra.mxu0 %v6271
  %6725 = vmatpush.msra.mxu0 %v6269
  %6726 = vmatpush.msra.mxu0 %v6267
  %6727 = vmatpush.msra.mxu0 %v6265
  %6728 = vmatpush.msra.mxu0 %v6263
  %6729 = vmatpush.msra.mxu0 %v6261
  %6730 = vmatpush.msra.mxu0 %v6259
  %6731 = vmatmul.f32.gmra.mxu0 %v6174
  %v6732 = vpop.f32.mrf.mxu0
  %v6733 = vadd.f32 0.0, %v6732
  %6734 = vmatmul.f32.gmra.mxu0 %v6176
  %v6735 = vpop.f32.mrf.mxu0
  %v6736 = vadd.f32 0.0, %v6735
  %6737 = vmatmul.f32.gmra.mxu0 %v6178
  %v6738 = vpop.f32.mrf.mxu0
  %v6739 = vadd.f32 0.0, %v6738
  %6740 = vmatmul.f32.gmra.mxu0 %v6180
  %v6741 = vpop.f32.mrf.mxu0
  %v6742 = vadd.f32 0.0, %v6741
  %6743 = vmatmul.f32.gmra.mxu0 %v6182
  %v6744 = vpop.f32.mrf.mxu0
  %v6745 = vadd.f32 0.0, %v6744
  %6746 = vmatmul.f32.gmra.mxu0 %v6184
  %v6747 = vpop.f32.mrf.mxu0
  %v6748 = vadd.f32 0.0, %v6747
  %6749 = vmatmul.f32.gmra.mxu0 %v6186
  %v6750 = vpop.f32.mrf.mxu0
  %v6751 = vadd.f32 0.0, %v6750
  %6752 = vmatmul.f32.gmra.mxu0 %v6188
  %v6753 = vpop.f32.mrf.mxu0
  %v6754 = vadd.f32 0.0, %v6753
  %6755 = vmatmul.f32.gmra.mxu0 %v6190
  %v6756 = vpop.f32.mrf.mxu0
  %v6757 = vadd.f32 0.0, %v6756
  %6758 = vmatmul.f32.gmra.mxu0 %v6192
  %v6759 = vpop.f32.mrf.mxu0
  %v6760 = vadd.f32 0.0, %v6759
  %6761 = vmatmul.f32.gmra.mxu0 %v6194
  %v6762 = vpop.f32.mrf.mxu0
  %v6763 = vadd.f32 0.0, %v6762
  %6764 = vmatmul.f32.gmra.mxu0 %v6196
  %v6765 = vpop.f32.mrf.mxu0
  %v6766 = vadd.f32 0.0, %v6765
  %6767 = vmatmul.f32.gmra.mxu0 %v6198
  %v6768 = vpop.f32.mrf.mxu0
  %v6769 = vadd.f32 0.0, %v6768
  %6770 = vmatmul.f32.gmra.mxu0 %v6200
  %v6771 = vpop.f32.mrf.mxu0
  %v6772 = vadd.f32 0.0, %v6771
  %6773 = vmatmul.f32.gmra.mxu0 %v6202
  %v6774 = vpop.f32.mrf.mxu0
  %v6775 = vadd.f32 0.0, %v6774
  %6776 = vmatmul.f32.gmra.mxu0 %v6204
  %v6777 = vpop.f32.mrf.mxu0
  %v6778 = vadd.f32 0.0, %v6777
  %6779 = vmatmul.f32.gmra.mxu0 %v6206
  %v6780 = vpop.f32.mrf.mxu0
  %v6781 = vadd.f32 0.0, %v6780
  %6782 = vmatmul.f32.gmra.mxu0 %v6208
  %v6783 = vpop.f32.mrf.mxu0
  %v6784 = vadd.f32 0.0, %v6783
  %6785 = vmatmul.f32.gmra.mxu0 %v6210
  %v6786 = vpop.f32.mrf.mxu0
  %v6787 = vadd.f32 0.0, %v6786
  %6788 = vmatmul.f32.gmra.mxu0 %v6212
  %v6789 = vpop.f32.mrf.mxu0
  %v6790 = vadd.f32 0.0, %v6789
  %6791 = vmatmul.f32.gmra.mxu0 %v6214
  %v6792 = vpop.f32.mrf.mxu0
  %v6793 = vadd.f32 0.0, %v6792
  %6794 = vmatmul.f32.gmra.mxu0 %v6216
  %v6795 = vpop.f32.mrf.mxu0
  %v6796 = vadd.f32 0.0, %v6795
  %6797 = vmatmul.f32.gmra.mxu0 %v6218
  %v6798 = vpop.f32.mrf.mxu0
  %v6799 = vadd.f32 0.0, %v6798
  %6800 = vmatmul.f32.gmra.mxu0 %v6220
  %v6801 = vpop.f32.mrf.mxu0
  %v6802 = vadd.f32 0.0, %v6801
  %6803 = vmatmul.f32.gmra.mxu0 %v6222
  %v6804 = vpop.f32.mrf.mxu0
  %v6805 = vadd.f32 0.0, %v6804
  %6806 = vmatmul.f32.gmra.mxu0 %v6224
  %v6807 = vpop.f32.mrf.mxu0
  %v6808 = vadd.f32 0.0, %v6807
  %6809 = vmatmul.f32.gmra.mxu0 %v6226
  %v6810 = vpop.f32.mrf.mxu0
  %v6811 = vadd.f32 0.0, %v6810
  %6812 = vmatmul.f32.gmra.mxu0 %v6228
  %v6813 = vpop.f32.mrf.mxu0
  %v6814 = vadd.f32 0.0, %v6813
  %6815 = vmatmul.f32.gmra.mxu0 %v6230
  %v6816 = vpop.f32.mrf.mxu0
  %v6817 = vadd.f32 0.0, %v6816
  %6818 = vmatmul.f32.gmra.mxu0 %v6232
  %v6819 = vpop.f32.mrf.mxu0
  %v6820 = vadd.f32 0.0, %v6819
  %6821 = vmatmul.f32.gmra.mxu0 %v6234
  %v6822 = vpop.f32.mrf.mxu0
  %v6823 = vadd.f32 0.0, %v6822
  %6824 = vmatmul.f32.gmra.mxu0 %v6236
  %v6825 = vpop.f32.mrf.mxu0
  %v6826 = vadd.f32 0.0, %v6825
  %6827 = vmatmul.f32.gmra.mxu0 %v6238
  %v6828 = vpop.f32.mrf.mxu0
  %v6829 = vadd.f32 0.0, %v6828
  %6830 = vmatmul.f32.gmra.mxu0 %v6240
  %v6831 = vpop.f32.mrf.mxu0
  %v6832 = vadd.f32 0.0, %v6831
  %6833 = vmatmul.f32.gmra.mxu0 %v6242
  %v6834 = vpop.f32.mrf.mxu0
  %v6835 = vadd.f32 0.0, %v6834
  %6836 = vmatmul.f32.gmra.mxu0 %v6244
  %v6837 = vpop.f32.mrf.mxu0
  %v6838 = vadd.f32 0.0, %v6837
  %6839 = vmatmul.f32.gmra.mxu0 %v6246
  %v6840 = vpop.f32.mrf.mxu0
  %v6841 = vadd.f32 0.0, %v6840
  %6842 = vmatmul.f32.gmra.mxu0 %v6248
  %v6843 = vpop.f32.mrf.mxu0
  %v6844 = vadd.f32 0.0, %v6843
  %6845 = vmatmul.f32.gmra.mxu0 %v6250
  %v6846 = vpop.f32.mrf.mxu0
  %v6847 = vadd.f32 0.0, %v6846
  %6848 = vmatmul.f32.gmra.mxu0 %v6252
  %v6849 = vpop.f32.mrf.mxu0
  %v6850 = vadd.f32 0.0, %v6849
  %6851 = vmatmul.f32.gmra.mxu0 %v6254
  %v6852 = vpop.f32.mrf.mxu0
  %v6853 = vadd.f32 0.0, %v6852
  %6854 = vmatmul.f32.gmra.mxu0 %v6256
  %v6855 = vpop.f32.mrf.mxu0
  %v6856 = vadd.f32 0.0, %v6855
  %6857 = vdwg.mxu0
  %6858 = vmatpush.msra.mxu0 0.0
  %6859 = vmatpush.msra.mxu0 0.0
  %6860 = vmatpush.msra.mxu0 0.0
  %6861 = vmatpush.msra.mxu0 0.0
  %6862 = vmatpush.msra.mxu0 0.0
  %6863 = vmatpush.msra.mxu0 0.0
  %6864 = vmatpush.msra.mxu0 0.0
  %6865 = vmatpush.msra.mxu0 0.0
  %6866 = vmatpush.msra.mxu0 0.0
  %6867 = vmatpush.msra.mxu0 0.0
  %6868 = vmatpush.msra.mxu0 %v6301
  %6869 = vmatpush.msra.mxu0 %v6299
  %6870 = vmatpush.msra.mxu0 %v6297
  %6871 = vmatpush.msra.mxu0 %v6295
  %6872 = vmatpush.msra.mxu0 %v6293
  %6873 = vmatpush.msra.mxu0 %v6291
  %6874 = vmatmul.f32.gmra.mxu0 %v6304
  %v6875 = vpop.f32.mrf.mxu0
  %v6876 = vadd.f32 %v6733, %v6875
  %6877 = vmatmul.f32.gmra.mxu0 %v6307
  %v6878 = vpop.f32.mrf.mxu0
  %v6879 = vadd.f32 %v6736, %v6878
  %6880 = vmatmul.f32.gmra.mxu0 %v6310
  %v6881 = vpop.f32.mrf.mxu0
  %v6882 = vadd.f32 %v6739, %v6881
  %6883 = vmatmul.f32.gmra.mxu0 %v6313
  %v6884 = vpop.f32.mrf.mxu0
  %v6885 = vadd.f32 %v6742, %v6884
  %6886 = vmatmul.f32.gmra.mxu0 %v6316
  %v6887 = vpop.f32.mrf.mxu0
  %v6888 = vadd.f32 %v6745, %v6887
  %6889 = vmatmul.f32.gmra.mxu0 %v6319
  %v6890 = vpop.f32.mrf.mxu0
  %v6891 = vadd.f32 %v6748, %v6890
  %6892 = vmatmul.f32.gmra.mxu0 %v6322
  %v6893 = vpop.f32.mrf.mxu0
  %v6894 = vadd.f32 %v6751, %v6893
  %6895 = vmatmul.f32.gmra.mxu0 %v6325
  %v6896 = vpop.f32.mrf.mxu0
  %v6897 = vadd.f32 %v6754, %v6896
  %6898 = vmatmul.f32.gmra.mxu0 %v6328
  %v6899 = vpop.f32.mrf.mxu0
  %v6900 = vadd.f32 %v6757, %v6899
  %6901 = vmatmul.f32.gmra.mxu0 %v6331
  %v6902 = vpop.f32.mrf.mxu0
  %v6903 = vadd.f32 %v6760, %v6902
  %6904 = vmatmul.f32.gmra.mxu0 %v6334
  %v6905 = vpop.f32.mrf.mxu0
  %v6906 = vadd.f32 %v6763, %v6905
  %6907 = vmatmul.f32.gmra.mxu0 %v6337
  %v6908 = vpop.f32.mrf.mxu0
  %v6909 = vadd.f32 %v6766, %v6908
  %6910 = vmatmul.f32.gmra.mxu0 %v6340
  %v6911 = vpop.f32.mrf.mxu0
  %v6912 = vadd.f32 %v6769, %v6911
  %6913 = vmatmul.f32.gmra.mxu0 %v6343
  %v6914 = vpop.f32.mrf.mxu0
  %v6915 = vadd.f32 %v6772, %v6914
  %6916 = vmatmul.f32.gmra.mxu0 %v6346
  %v6917 = vpop.f32.mrf.mxu0
  %v6918 = vadd.f32 %v6775, %v6917
  %6919 = vmatmul.f32.gmra.mxu0 %v6349
  %v6920 = vpop.f32.mrf.mxu0
  %v6921 = vadd.f32 %v6778, %v6920
  %6922 = vmatmul.f32.gmra.mxu0 %v6352
  %v6923 = vpop.f32.mrf.mxu0
  %v6924 = vadd.f32 %v6781, %v6923
  %6925 = vmatmul.f32.gmra.mxu0 %v6355
  %v6926 = vpop.f32.mrf.mxu0
  %v6927 = vadd.f32 %v6784, %v6926
  %6928 = vmatmul.f32.gmra.mxu0 %v6358
  %v6929 = vpop.f32.mrf.mxu0
  %v6930 = vadd.f32 %v6787, %v6929
  %6931 = vmatmul.f32.gmra.mxu0 %v6361
  %v6932 = vpop.f32.mrf.mxu0
  %v6933 = vadd.f32 %v6790, %v6932
  %6934 = vmatmul.f32.gmra.mxu0 %v6364
  %v6935 = vpop.f32.mrf.mxu0
  %v6936 = vadd.f32 %v6793, %v6935
  %6937 = vmatmul.f32.gmra.mxu0 %v6367
  %v6938 = vpop.f32.mrf.mxu0
  %v6939 = vadd.f32 %v6796, %v6938
  %6940 = vmatmul.f32.gmra.mxu0 %v6370
  %v6941 = vpop.f32.mrf.mxu0
  %v6942 = vadd.f32 %v6799, %v6941
  %6943 = vmatmul.f32.gmra.mxu0 %v6373
  %v6944 = vpop.f32.mrf.mxu0
  %v6945 = vadd.f32 %v6802, %v6944
  %6946 = vmatmul.f32.gmra.mxu0 %v6376
  %v6947 = vpop.f32.mrf.mxu0
  %v6948 = vadd.f32 %v6805, %v6947
  %6949 = vmatmul.f32.gmra.mxu0 %v6379
  %v6950 = vpop.f32.mrf.mxu0
  %v6951 = vadd.f32 %v6808, %v6950
  %6952 = vmatmul.f32.gmra.mxu0 %v6382
  %v6953 = vpop.f32.mrf.mxu0
  %v6954 = vadd.f32 %v6811, %v6953
  %6955 = vmatmul.f32.gmra.mxu0 %v6385
  %v6956 = vpop.f32.mrf.mxu0
  %v6957 = vadd.f32 %v6814, %v6956
  %6958 = vmatmul.f32.gmra.mxu0 %v6388
  %v6959 = vpop.f32.mrf.mxu0
  %v6960 = vadd.f32 %v6817, %v6959
  %6961 = vmatmul.f32.gmra.mxu0 %v6391
  %v6962 = vpop.f32.mrf.mxu0
  %v6963 = vadd.f32 %v6820, %v6962
  %6964 = vmatmul.f32.gmra.mxu0 %v6394
  %v6965 = vpop.f32.mrf.mxu0
  %v6966 = vadd.f32 %v6823, %v6965
  %6967 = vmatmul.f32.gmra.mxu0 %v6397
  %v6968 = vpop.f32.mrf.mxu0
  %v6969 = vadd.f32 %v6826, %v6968
  %6970 = vmatmul.f32.gmra.mxu0 %v6400
  %v6971 = vpop.f32.mrf.mxu0
  %v6972 = vadd.f32 %v6829, %v6971
  %6973 = vmatmul.f32.gmra.mxu0 %v6403
  %v6974 = vpop.f32.mrf.mxu0
  %v6975 = vadd.f32 %v6832, %v6974
  %6976 = vmatmul.f32.gmra.mxu0 %v6406
  %v6977 = vpop.f32.mrf.mxu0
  %v6978 = vadd.f32 %v6835, %v6977
  %6979 = vmatmul.f32.gmra.mxu0 %v6409
  %v6980 = vpop.f32.mrf.mxu0
  %v6981 = vadd.f32 %v6838, %v6980
  %6982 = vmatmul.f32.gmra.mxu0 %v6412
  %v6983 = vpop.f32.mrf.mxu0
  %v6984 = vadd.f32 %v6841, %v6983
  %6985 = vmatmul.f32.gmra.mxu0 %v6415
  %v6986 = vpop.f32.mrf.mxu0
  %v6987 = vadd.f32 %v6844, %v6986
  %6988 = vmatmul.f32.gmra.mxu0 %v6418
  %v6989 = vpop.f32.mrf.mxu0
  %v6990 = vadd.f32 %v6847, %v6989
  %6991 = vmatmul.f32.gmra.mxu0 %v6421
  %v6992 = vpop.f32.mrf.mxu0
  %v6993 = vadd.f32 %v6850, %v6992
  %6994 = vmatmul.f32.gmra.mxu0 %v6424
  %v6995 = vpop.f32.mrf.mxu0
  %v6996 = vadd.f32 %v6853, %v6995
  %6997 = vmatmul.f32.gmra.mxu0 %v6427
  %v6998 = vpop.f32.mrf.mxu0
  %v6999 = vadd.f32 %v6856, %v6998
  %7000 = vdwg.mxu0
  %v7001 = vld [vmem:[%s8] sm:$0xff]
  %v7002 = vld [vmem:[%s8 + $0x8] sm:$0xff]
  %v7003 = vld [vmem:[%s8 + $0x10] sm:$0xff]
  %v7004 = vld [vmem:[%s8 + $0x18] sm:$0xff]
  %v7005 = vld [vmem:[%s8 + $0x20] sm:$0xff]
  %v7006 = vld [vmem:[%s8 + $0x28] sm:$0xff]
  %v7007 = vld [vmem:[%s8 + $0x30] sm:$0xff]
  %v7008 = vld [vmem:[%s8 + $0x38] sm:$0xff]
  %v7009 = vld [vmem:[%s8 + $0x40] sm:$0xff]
  %v7010 = vld [vmem:[%s8 + $0x48] sm:$0xff]
  %v7011 = vld [vmem:[%s8 + $0x50] sm:$0xff]
  %v7012 = vld [vmem:[%s8 + $0x58] sm:$0xff]
  %v7013 = vld [vmem:[%s8 + $0x60] sm:$0xff]
  %v7014 = vld [vmem:[%s8 + $0x68] sm:$0xff]
  %v7015 = vld [vmem:[%s8 + $0x70] sm:$0xff]
  %v7016 = vld [vmem:[%s8 + $0x78] sm:$0xff]
  %v7017 = vld [vmem:[%s8 + $0x80] sm:$0xff]
  %v7018 = vld [vmem:[%s8 + $0x88] sm:$0xff]
  %v7019 = vld [vmem:[%s8 + $0x90] sm:$0xff]
  %v7020 = vld [vmem:[%s8 + $0x98] sm:$0xff]
  %v7021 = vld [vmem:[%s8 + $0xa0] sm:$0xff]
  %v7022 = vld [vmem:[%s8 + $0xa8] sm:$0xff]
  %v7023 = vld [vmem:[%s8 + $0xb0] sm:$0xff]
  %v7024 = vld [vmem:[%s8 + $0xb8] sm:$0xff]
  %v7025 = vld [vmem:[%s8 + $0xc0] sm:$0xff]
  %v7026 = vld [vmem:[%s8 + $0xc8] sm:$0xff]
  %v7027 = vld [vmem:[%s8 + $0xd0] sm:$0xff]
  %v7028 = vld [vmem:[%s8 + $0xd8] sm:$0xff]
  %v7029 = vld [vmem:[%s8 + $0xe0] sm:$0xff]
  %v7030 = vld [vmem:[%s8 + $0xe8] sm:$0xff]
  %v7031 = vld [vmem:[%s8 + $0xf0] sm:$0xff]
  %v7032 = vld [vmem:[%s8 + $0xf8] sm:$0xff]
  %v7033 = vld [vmem:[%s8 + $0x100] sm:$0xff]
  %v7034 = vld [vmem:[%s8 + $0x108] sm:$0xff]
  %v7035 = vld [vmem:[%s8 + $0x110] sm:$0xff]
  %v7036 = vld [vmem:[%s8 + $0x118] sm:$0xff]
  %v7037 = vld [vmem:[%s8 + $0x120] sm:$0xff]
  %v7038 = vld [vmem:[%s8 + $0x128] sm:$0xff]
  %v7039 = vld [vmem:[%s8 + $0x130] sm:$0xff]
  %v7040 = vld [vmem:[%s8 + $0x138] sm:$0xff]
  %v7041 = vld [vmem:[%s8 + $0x140] sm:$0xff]
  %v7042 = vld [vmem:[%s8 + $0x148] sm:$0xff]
  %v7043 = vld [vmem:[%s8 + $0x150] sm:$0xff]
  %v7044 = vld [vmem:[%s8 + $0x158] sm:$0xff]
  %7045 = vmatpush.msra.mxu0 %v7031
  %7046 = vmatpush.msra.mxu0 %v7029
  %7047 = vmatpush.msra.mxu0 %v7027
  %7048 = vmatpush.msra.mxu0 %v7025
  %7049 = vmatpush.msra.mxu0 %v7023
  %7050 = vmatpush.msra.mxu0 %v7021
  %7051 = vmatpush.msra.mxu0 %v7019
  %7052 = vmatpush.msra.mxu0 %v7017
  %7053 = vmatpush.msra.mxu0 %v7015
  %7054 = vmatpush.msra.mxu0 %v7013
  %7055 = vmatpush.msra.mxu0 %v7011
  %7056 = vmatpush.msra.mxu0 %v7009
  %7057 = vmatpush.msra.mxu0 %v7007
  %7058 = vmatpush.msra.mxu0 %v7005
  %7059 = vmatpush.msra.mxu0 %v7003
  %7060 = vmatpush.msra.mxu0 %v7001
  %7061 = vmatmul.f32.gmra.mxu0 %v6174
  %v7062 = vpop.f32.mrf.mxu0
  %v7063 = vadd.f32 0.0, %v7062
  %7064 = vmatmul.f32.gmra.mxu0 %v6176
  %v7065 = vpop.f32.mrf.mxu0
  %v7066 = vadd.f32 0.0, %v7065
  %7067 = vmatmul.f32.gmra.mxu0 %v6178
  %v7068 = vpop.f32.mrf.mxu0
  %v7069 = vadd.f32 0.0, %v7068
  %7070 = vmatmul.f32.gmra.mxu0 %v6180
  %v7071 = vpop.f32.mrf.mxu0
  %v7072 = vadd.f32 0.0, %v7071
  %7073 = vmatmul.f32.gmra.mxu0 %v6182
  %v7074 = vpop.f32.mrf.mxu0
  %v7075 = vadd.f32 0.0, %v7074
  %7076 = vmatmul.f32.gmra.mxu0 %v6184
  %v7077 = vpop.f32.mrf.mxu0
  %v7078 = vadd.f32 0.0, %v7077
  %7079 = vmatmul.f32.gmra.mxu0 %v6186
  %v7080 = vpop.f32.mrf.mxu0
  %v7081 = vadd.f32 0.0, %v7080
  %7082 = vmatmul.f32.gmra.mxu0 %v6188
  %v7083 = vpop.f32.mrf.mxu0
  %v7084 = vadd.f32 0.0, %v7083
  %7085 = vmatmul.f32.gmra.mxu0 %v6190
  %v7086 = vpop.f32.mrf.mxu0
  %v7087 = vadd.f32 0.0, %v7086
  %7088 = vmatmul.f32.gmra.mxu0 %v6192
  %v7089 = vpop.f32.mrf.mxu0
  %v7090 = vadd.f32 0.0, %v7089
  %7091 = vmatmul.f32.gmra.mxu0 %v6194
  %v7092 = vpop.f32.mrf.mxu0
  %v7093 = vadd.f32 0.0, %v7092
  %7094 = vmatmul.f32.gmra.mxu0 %v6196
  %v7095 = vpop.f32.mrf.mxu0
  %v7096 = vadd.f32 0.0, %v7095
  %7097 = vmatmul.f32.gmra.mxu0 %v6198
  %v7098 = vpop.f32.mrf.mxu0
  %v7099 = vadd.f32 0.0, %v7098
  %7100 = vmatmul.f32.gmra.mxu0 %v6200
  %v7101 = vpop.f32.mrf.mxu0
  %v7102 = vadd.f32 0.0, %v7101
  %7103 = vmatmul.f32.gmra.mxu0 %v6202
  %v7104 = vpop.f32.mrf.mxu0
  %v7105 = vadd.f32 0.0, %v7104
  %7106 = vmatmul.f32.gmra.mxu0 %v6204
  %v7107 = vpop.f32.mrf.mxu0
  %v7108 = vadd.f32 0.0, %v7107
  %7109 = vmatmul.f32.gmra.mxu0 %v6206
  %v7110 = vpop.f32.mrf.mxu0
  %v7111 = vadd.f32 0.0, %v7110
  %7112 = vmatmul.f32.gmra.mxu0 %v6208
  %v7113 = vpop.f32.mrf.mxu0
  %v7114 = vadd.f32 0.0, %v7113
  %7115 = vmatmul.f32.gmra.mxu0 %v6210
  %v7116 = vpop.f32.mrf.mxu0
  %v7117 = vadd.f32 0.0, %v7116
  %7118 = vmatmul.f32.gmra.mxu0 %v6212
  %v7119 = vpop.f32.mrf.mxu0
  %v7120 = vadd.f32 0.0, %v7119
  %7121 = vmatmul.f32.gmra.mxu0 %v6214
  %v7122 = vpop.f32.mrf.mxu0
  %v7123 = vadd.f32 0.0, %v7122
  %7124 = vmatmul.f32.gmra.mxu0 %v6216
  %v7125 = vpop.f32.mrf.mxu0
  %v7126 = vadd.f32 0.0, %v7125
  %7127 = vmatmul.f32.gmra.mxu0 %v6218
  %v7128 = vpop.f32.mrf.mxu0
  %v7129 = vadd.f32 0.0, %v7128
  %7130 = vmatmul.f32.gmra.mxu0 %v6220
  %v7131 = vpop.f32.mrf.mxu0
  %v7132 = vadd.f32 0.0, %v7131
  %7133 = vmatmul.f32.gmra.mxu0 %v6222
  %v7134 = vpop.f32.mrf.mxu0
  %v7135 = vadd.f32 0.0, %v7134
  %7136 = vmatmul.f32.gmra.mxu0 %v6224
  %v7137 = vpop.f32.mrf.mxu0
  %v7138 = vadd.f32 0.0, %v7137
  %7139 = vmatmul.f32.gmra.mxu0 %v6226
  %v7140 = vpop.f32.mrf.mxu0
  %v7141 = vadd.f32 0.0, %v7140
  %7142 = vmatmul.f32.gmra.mxu0 %v6228
  %v7143 = vpop.f32.mrf.mxu0
  %v7144 = vadd.f32 0.0, %v7143
  %7145 = vmatmul.f32.gmra.mxu0 %v6230
  %v7146 = vpop.f32.mrf.mxu0
  %v7147 = vadd.f32 0.0, %v7146
  %7148 = vmatmul.f32.gmra.mxu0 %v6232
  %v7149 = vpop.f32.mrf.mxu0
  %v7150 = vadd.f32 0.0, %v7149
  %7151 = vmatmul.f32.gmra.mxu0 %v6234
  %v7152 = vpop.f32.mrf.mxu0
  %v7153 = vadd.f32 0.0, %v7152
  %7154 = vmatmul.f32.gmra.mxu0 %v6236
  %v7155 = vpop.f32.mrf.mxu0
  %v7156 = vadd.f32 0.0, %v7155
  %7157 = vmatmul.f32.gmra.mxu0 %v6238
  %v7158 = vpop.f32.mrf.mxu0
  %v7159 = vadd.f32 0.0, %v7158
  %7160 = vmatmul.f32.gmra.mxu0 %v6240
  %v7161 = vpop.f32.mrf.mxu0
  %v7162 = vadd.f32 0.0, %v7161
  %7163 = vmatmul.f32.gmra.mxu0 %v6242
  %v7164 = vpop.f32.mrf.mxu0
  %v7165 = vadd.f32 0.0, %v7164
  %7166 = vmatmul.f32.gmra.mxu0 %v6244
  %v7167 = vpop.f32.mrf.mxu0
  %v7168 = vadd.f32 0.0, %v7167
  %7169 = vmatmul.f32.gmra.mxu0 %v6246
  %v7170 = vpop.f32.mrf.mxu0
  %v7171 = vadd.f32 0.0, %v7170
  %7172 = vmatmul.f32.gmra.mxu0 %v6248
  %v7173 = vpop.f32.mrf.mxu0
  %v7174 = vadd.f32 0.0, %v7173
  %7175 = vmatmul.f32.gmra.mxu0 %v6250
  %v7176 = vpop.f32.mrf.mxu0
  %v7177 = vadd.f32 0.0, %v7176
  %7178 = vmatmul.f32.gmra.mxu0 %v6252
  %v7179 = vpop.f32.mrf.mxu0
  %v7180 = vadd.f32 0.0, %v7179
  %7181 = vmatmul.f32.gmra.mxu0 %v6254
  %v7182 = vpop.f32.mrf.mxu0
  %v7183 = vadd.f32 0.0, %v7182
  %7184 = vmatmul.f32.gmra.mxu0 %v6256
  %v7185 = vpop.f32.mrf.mxu0
  %v7186 = vadd.f32 0.0, %v7185
  %7187 = vdwg.mxu0
  %7188 = vmatpush.msra.mxu0 0.0
  %7189 = vmatpush.msra.mxu0 0.0
  %7190 = vmatpush.msra.mxu0 0.0
  %7191 = vmatpush.msra.mxu0 0.0
  %7192 = vmatpush.msra.mxu0 0.0
  %7193 = vmatpush.msra.mxu0 0.0
  %7194 = vmatpush.msra.mxu0 0.0
  %7195 = vmatpush.msra.mxu0 0.0
  %7196 = vmatpush.msra.mxu0 0.0
  %7197 = vmatpush.msra.mxu0 0.0
  %7198 = vmatpush.msra.mxu0 %v7043
  %7199 = vmatpush.msra.mxu0 %v7041
  %7200 = vmatpush.msra.mxu0 %v7039
  %7201 = vmatpush.msra.mxu0 %v7037
  %7202 = vmatpush.msra.mxu0 %v7035
  %7203 = vmatpush.msra.mxu0 %v7033
  %7204 = vmatmul.f32.gmra.mxu0 %v6304
  %v7205 = vpop.f32.mrf.mxu0
  %v7206 = vadd.f32 %v7063, %v7205
  %7207 = vmatmul.f32.gmra.mxu0 %v6307
  %v7208 = vpop.f32.mrf.mxu0
  %v7209 = vadd.f32 %v7066, %v7208
  %7210 = vmatmul.f32.gmra.mxu0 %v6310
  %v7211 = vpop.f32.mrf.mxu0
  %v7212 = vadd.f32 %v7069, %v7211
  %7213 = vmatmul.f32.gmra.mxu0 %v6313
  %v7214 = vpop.f32.mrf.mxu0
  %v7215 = vadd.f32 %v7072, %v7214
  %7216 = vmatmul.f32.gmra.mxu0 %v6316
  %v7217 = vpop.f32.mrf.mxu0
  %v7218 = vadd.f32 %v7075, %v7217
  %7219 = vmatmul.f32.gmra.mxu0 %v6319
  %v7220 = vpop.f32.mrf.mxu0
  %v7221 = vadd.f32 %v7078, %v7220
  %7222 = vmatmul.f32.gmra.mxu0 %v6322
  %v7223 = vpop.f32.mrf.mxu0
  %v7224 = vadd.f32 %v7081, %v7223
  %7225 = vmatmul.f32.gmra.mxu0 %v6325
  %v7226 = vpop.f32.mrf.mxu0
  %v7227 = vadd.f32 %v7084, %v7226
  %7228 = vmatmul.f32.gmra.mxu0 %v6328
  %v7229 = vpop.f32.mrf.mxu0
  %v7230 = vadd.f32 %v7087, %v7229
  %7231 = vmatmul.f32.gmra.mxu0 %v6331
  %v7232 = vpop.f32.mrf.mxu0
  %v7233 = vadd.f32 %v7090, %v7232
  %7234 = vmatmul.f32.gmra.mxu0 %v6334
  %v7235 = vpop.f32.mrf.mxu0
  %v7236 = vadd.f32 %v7093, %v7235
  %7237 = vmatmul.f32.gmra.mxu0 %v6337
  %v7238 = vpop.f32.mrf.mxu0
  %v7239 = vadd.f32 %v7096, %v7238
  %7240 = vmatmul.f32.gmra.mxu0 %v6340
  %v7241 = vpop.f32.mrf.mxu0
  %v7242 = vadd.f32 %v7099, %v7241
  %7243 = vmatmul.f32.gmra.mxu0 %v6343
  %v7244 = vpop.f32.mrf.mxu0
  %v7245 = vadd.f32 %v7102, %v7244
  %7246 = vmatmul.f32.gmra.mxu0 %v6346
  %v7247 = vpop.f32.mrf.mxu0
  %v7248 = vadd.f32 %v7105, %v7247
  %7249 = vmatmul.f32.gmra.mxu0 %v6349
  %v7250 = vpop.f32.mrf.mxu0
  %v7251 = vadd.f32 %v7108, %v7250
  %7252 = vmatmul.f32.gmra.mxu0 %v6352
  %v7253 = vpop.f32.mrf.mxu0
  %v7254 = vadd.f32 %v7111, %v7253
  %7255 = vmatmul.f32.gmra.mxu0 %v6355
  %v7256 = vpop.f32.mrf.mxu0
  %v7257 = vadd.f32 %v7114, %v7256
  %7258 = vmatmul.f32.gmra.mxu0 %v6358
  %v7259 = vpop.f32.mrf.mxu0
  %v7260 = vadd.f32 %v7117, %v7259
  %7261 = vmatmul.f32.gmra.mxu0 %v6361
  %v7262 = vpop.f32.mrf.mxu0
  %v7263 = vadd.f32 %v7120, %v7262
  %7264 = vmatmul.f32.gmra.mxu0 %v6364
  %v7265 = vpop.f32.mrf.mxu0
  %v7266 = vadd.f32 %v7123, %v7265
  %7267 = vmatmul.f32.gmra.mxu0 %v6367
  %v7268 = vpop.f32.mrf.mxu0
  %v7269 = vadd.f32 %v7126, %v7268
  %7270 = vmatmul.f32.gmra.mxu0 %v6370
  %v7271 = vpop.f32.mrf.mxu0
  %v7272 = vadd.f32 %v7129, %v7271
  %7273 = vmatmul.f32.gmra.mxu0 %v6373
  %v7274 = vpop.f32.mrf.mxu0
  %v7275 = vadd.f32 %v7132, %v7274
  %7276 = vmatmul.f32.gmra.mxu0 %v6376
  %v7277 = vpop.f32.mrf.mxu0
  %v7278 = vadd.f32 %v7135, %v7277
  %7279 = vmatmul.f32.gmra.mxu0 %v6379
  %v7280 = vpop.f32.mrf.mxu0
  %v7281 = vadd.f32 %v7138, %v7280
  %7282 = vmatmul.f32.gmra.mxu0 %v6382
  %v7283 = vpop.f32.mrf.mxu0
  %v7284 = vadd.f32 %v7141, %v7283
  %7285 = vmatmul.f32.gmra.mxu0 %v6385
  %v7286 = vpop.f32.mrf.mxu0
  %v7287 = vadd.f32 %v7144, %v7286
  %7288 = vmatmul.f32.gmra.mxu0 %v6388
  %v7289 = vpop.f32.mrf.mxu0
  %v7290 = vadd.f32 %v7147, %v7289
  %7291 = vmatmul.f32.gmra.mxu0 %v6391
  %v7292 = vpop.f32.mrf.mxu0
  %v7293 = vadd.f32 %v7150, %v7292
  %7294 = vmatmul.f32.gmra.mxu0 %v6394
  %v7295 = vpop.f32.mrf.mxu0
  %v7296 = vadd.f32 %v7153, %v7295
  %7297 = vmatmul.f32.gmra.mxu0 %v6397
  %v7298 = vpop.f32.mrf.mxu0
  %v7299 = vadd.f32 %v7156, %v7298
  %7300 = vmatmul.f32.gmra.mxu0 %v6400
  %v7301 = vpop.f32.mrf.mxu0
  %v7302 = vadd.f32 %v7159, %v7301
  %7303 = vmatmul.f32.gmra.mxu0 %v6403
  %v7304 = vpop.f32.mrf.mxu0
  %v7305 = vadd.f32 %v7162, %v7304
  %7306 = vmatmul.f32.gmra.mxu0 %v6406
  %v7307 = vpop.f32.mrf.mxu0
  %v7308 = vadd.f32 %v7165, %v7307
  %7309 = vmatmul.f32.gmra.mxu0 %v6409
  %v7310 = vpop.f32.mrf.mxu0
  %v7311 = vadd.f32 %v7168, %v7310
  %7312 = vmatmul.f32.gmra.mxu0 %v6412
  %v7313 = vpop.f32.mrf.mxu0
  %v7314 = vadd.f32 %v7171, %v7313
  %7315 = vmatmul.f32.gmra.mxu0 %v6415
  %v7316 = vpop.f32.mrf.mxu0
  %v7317 = vadd.f32 %v7174, %v7316
  %7318 = vmatmul.f32.gmra.mxu0 %v6418
  %v7319 = vpop.f32.mrf.mxu0
  %v7320 = vadd.f32 %v7177, %v7319
  %7321 = vmatmul.f32.gmra.mxu0 %v6421
  %v7322 = vpop.f32.mrf.mxu0
  %v7323 = vadd.f32 %v7180, %v7322
  %7324 = vmatmul.f32.gmra.mxu0 %v6424
  %v7325 = vpop.f32.mrf.mxu0
  %v7326 = vadd.f32 %v7183, %v7325
  %7327 = vmatmul.f32.gmra.mxu0 %v6427
  %v7328 = vpop.f32.mrf.mxu0
  %v7329 = vadd.f32 %v7186, %v7328
  %7330 = vdwg.mxu0
  %7331 = vmatpush.msra.mxu0 %v7032
  %7332 = vmatpush.msra.mxu0 %v7030
  %7333 = vmatpush.msra.mxu0 %v7028
  %7334 = vmatpush.msra.mxu0 %v7026
  %7335 = vmatpush.msra.mxu0 %v7024
  %7336 = vmatpush.msra.mxu0 %v7022
  %7337 = vmatpush.msra.mxu0 %v7020
  %7338 = vmatpush.msra.mxu0 %v7018
  %7339 = vmatpush.msra.mxu0 %v7016
  %7340 = vmatpush.msra.mxu0 %v7014
  %7341 = vmatpush.msra.mxu0 %v7012
  %7342 = vmatpush.msra.mxu0 %v7010
  %7343 = vmatpush.msra.mxu0 %v7008
  %7344 = vmatpush.msra.mxu0 %v7006
  %7345 = vmatpush.msra.mxu0 %v7004
  %7346 = vmatpush.msra.mxu0 %v7002
  %7347 = vmatmul.f32.gmra.mxu0 %v6174
  %v7348 = vpop.f32.mrf.mxu0
  %v7349 = vadd.f32 0.0, %v7348
  %7350 = vmatmul.f32.gmra.mxu0 %v6176
  %v7351 = vpop.f32.mrf.mxu0
  %v7352 = vadd.f32 0.0, %v7351
  %7353 = vmatmul.f32.gmra.mxu0 %v6178
  %v7354 = vpop.f32.mrf.mxu0
  %v7355 = vadd.f32 0.0, %v7354
  %7356 = vmatmul.f32.gmra.mxu0 %v6180
  %v7357 = vpop.f32.mrf.mxu0
  %v7358 = vadd.f32 0.0, %v7357
  %7359 = vmatmul.f32.gmra.mxu0 %v6182
  %v7360 = vpop.f32.mrf.mxu0
  %v7361 = vadd.f32 0.0, %v7360
  %7362 = vmatmul.f32.gmra.mxu0 %v6184
  %v7363 = vpop.f32.mrf.mxu0
  %v7364 = vadd.f32 0.0, %v7363
  %7365 = vmatmul.f32.gmra.mxu0 %v6186
  %v7366 = vpop.f32.mrf.mxu0
  %v7367 = vadd.f32 0.0, %v7366
  %7368 = vmatmul.f32.gmra.mxu0 %v6188
  %v7369 = vpop.f32.mrf.mxu0
  %v7370 = vadd.f32 0.0, %v7369
  %7371 = vmatmul.f32.gmra.mxu0 %v6190
  %v7372 = vpop.f32.mrf.mxu0
  %v7373 = vadd.f32 0.0, %v7372
  %7374 = vmatmul.f32.gmra.mxu0 %v6192
  %v7375 = vpop.f32.mrf.mxu0
  %v7376 = vadd.f32 0.0, %v7375
  %7377 = vmatmul.f32.gmra.mxu0 %v6194
  %v7378 = vpop.f32.mrf.mxu0
  %v7379 = vadd.f32 0.0, %v7378
  %7380 = vmatmul.f32.gmra.mxu0 %v6196
  %v7381 = vpop.f32.mrf.mxu0
  %v7382 = vadd.f32 0.0, %v7381
  %7383 = vmatmul.f32.gmra.mxu0 %v6198
  %v7384 = vpop.f32.mrf.mxu0
  %v7385 = vadd.f32 0.0, %v7384
  %7386 = vmatmul.f32.gmra.mxu0 %v6200
  %v7387 = vpop.f32.mrf.mxu0
  %v7388 = vadd.f32 0.0, %v7387
  %7389 = vmatmul.f32.gmra.mxu0 %v6202
  %v7390 = vpop.f32.mrf.mxu0
  %v7391 = vadd.f32 0.0, %v7390
  %7392 = vmatmul.f32.gmra.mxu0 %v6204
  %v7393 = vpop.f32.mrf.mxu0
  %v7394 = vadd.f32 0.0, %v7393
  %7395 = vmatmul.f32.gmra.mxu0 %v6206
  %v7396 = vpop.f32.mrf.mxu0
  %v7397 = vadd.f32 0.0, %v7396
  %7398 = vmatmul.f32.gmra.mxu0 %v6208
  %v7399 = vpop.f32.mrf.mxu0
  %v7400 = vadd.f32 0.0, %v7399
  %7401 = vmatmul.f32.gmra.mxu0 %v6210
  %v7402 = vpop.f32.mrf.mxu0
  %v7403 = vadd.f32 0.0, %v7402
  %7404 = vmatmul.f32.gmra.mxu0 %v6212
  %v7405 = vpop.f32.mrf.mxu0
  %v7406 = vadd.f32 0.0, %v7405
  %7407 = vmatmul.f32.gmra.mxu0 %v6214
  %v7408 = vpop.f32.mrf.mxu0
  %v7409 = vadd.f32 0.0, %v7408
  %7410 = vmatmul.f32.gmra.mxu0 %v6216
  %v7411 = vpop.f32.mrf.mxu0
  %v7412 = vadd.f32 0.0, %v7411
  %7413 = vmatmul.f32.gmra.mxu0 %v6218
  %v7414 = vpop.f32.mrf.mxu0
  %v7415 = vadd.f32 0.0, %v7414
  %7416 = vmatmul.f32.gmra.mxu0 %v6220
  %v7417 = vpop.f32.mrf.mxu0
  %v7418 = vadd.f32 0.0, %v7417
  %7419 = vmatmul.f32.gmra.mxu0 %v6222
  %v7420 = vpop.f32.mrf.mxu0
  %v7421 = vadd.f32 0.0, %v7420
  %7422 = vmatmul.f32.gmra.mxu0 %v6224
  %v7423 = vpop.f32.mrf.mxu0
  %v7424 = vadd.f32 0.0, %v7423
  %7425 = vmatmul.f32.gmra.mxu0 %v6226
  %v7426 = vpop.f32.mrf.mxu0
  %v7427 = vadd.f32 0.0, %v7426
  %7428 = vmatmul.f32.gmra.mxu0 %v6228
  %v7429 = vpop.f32.mrf.mxu0
  %v7430 = vadd.f32 0.0, %v7429
  %7431 = vmatmul.f32.gmra.mxu0 %v6230
  %v7432 = vpop.f32.mrf.mxu0
  %v7433 = vadd.f32 0.0, %v7432
  %7434 = vmatmul.f32.gmra.mxu0 %v6232
  %v7435 = vpop.f32.mrf.mxu0
  %v7436 = vadd.f32 0.0, %v7435
  %7437 = vmatmul.f32.gmra.mxu0 %v6234
  %v7438 = vpop.f32.mrf.mxu0
  %v7439 = vadd.f32 0.0, %v7438
  %7440 = vmatmul.f32.gmra.mxu0 %v6236
  %v7441 = vpop.f32.mrf.mxu0
  %v7442 = vadd.f32 0.0, %v7441
  %7443 = vmatmul.f32.gmra.mxu0 %v6238
  %v7444 = vpop.f32.mrf.mxu0
  %v7445 = vadd.f32 0.0, %v7444
  %7446 = vmatmul.f32.gmra.mxu0 %v6240
  %v7447 = vpop.f32.mrf.mxu0
  %v7448 = vadd.f32 0.0, %v7447
  %7449 = vmatmul.f32.gmra.mxu0 %v6242
  %v7450 = vpop.f32.mrf.mxu0
  %v7451 = vadd.f32 0.0, %v7450
  %7452 = vmatmul.f32.gmra.mxu0 %v6244
  %v7453 = vpop.f32.mrf.mxu0
  %v7454 = vadd.f32 0.0, %v7453
  %7455 = vmatmul.f32.gmra.mxu0 %v6246
  %v7456 = vpop.f32.mrf.mxu0
  %v7457 = vadd.f32 0.0, %v7456
  %7458 = vmatmul.f32.gmra.mxu0 %v6248
  %v7459 = vpop.f32.mrf.mxu0
  %v7460 = vadd.f32 0.0, %v7459
  %7461 = vmatmul.f32.gmra.mxu0 %v6250
  %v7462 = vpop.f32.mrf.mxu0
  %v7463 = vadd.f32 0.0, %v7462
  %7464 = vmatmul.f32.gmra.mxu0 %v6252
  %v7465 = vpop.f32.mrf.mxu0
  %v7466 = vadd.f32 0.0, %v7465
  %7467 = vmatmul.f32.gmra.mxu0 %v6254
  %v7468 = vpop.f32.mrf.mxu0
  %v7469 = vadd.f32 0.0, %v7468
  %7470 = vmatmul.f32.gmra.mxu0 %v6256
  %v7471 = vpop.f32.mrf.mxu0
  %v7472 = vadd.f32 0.0, %v7471
  %7473 = vdwg.mxu0
  %7474 = vmatpush.msra.mxu0 0.0
  %7475 = vmatpush.msra.mxu0 0.0
  %7476 = vmatpush.msra.mxu0 0.0
  %7477 = vmatpush.msra.mxu0 0.0
  %7478 = vmatpush.msra.mxu0 0.0
  %7479 = vmatpush.msra.mxu0 0.0
  %7480 = vmatpush.msra.mxu0 0.0
  %7481 = vmatpush.msra.mxu0 0.0
  %7482 = vmatpush.msra.mxu0 0.0
  %7483 = vmatpush.msra.mxu0 0.0
  %7484 = vmatpush.msra.mxu0 %v7044
  %7485 = vmatpush.msra.mxu0 %v7042
  %7486 = vmatpush.msra.mxu0 %v7040
  %7487 = vmatpush.msra.mxu0 %v7038
  %7488 = vmatpush.msra.mxu0 %v7036
  %7489 = vmatpush.msra.mxu0 %v7034
  %7490 = vmatmul.f32.gmra.mxu0 %v6304
  %v7491 = vpop.f32.mrf.mxu0
  %v7492 = vadd.f32 %v7349, %v7491
  %7493 = vmatmul.f32.gmra.mxu0 %v6307
  %v7494 = vpop.f32.mrf.mxu0
  %v7495 = vadd.f32 %v7352, %v7494
  %7496 = vmatmul.f32.gmra.mxu0 %v6310
  %v7497 = vpop.f32.mrf.mxu0
  %v7498 = vadd.f32 %v7355, %v7497
  %7499 = vmatmul.f32.gmra.mxu0 %v6313
  %v7500 = vpop.f32.mrf.mxu0
  %v7501 = vadd.f32 %v7358, %v7500
  %7502 = vmatmul.f32.gmra.mxu0 %v6316
  %v7503 = vpop.f32.mrf.mxu0
  %v7504 = vadd.f32 %v7361, %v7503
  %7505 = vmatmul.f32.gmra.mxu0 %v6319
  %v7506 = vpop.f32.mrf.mxu0
  %v7507 = vadd.f32 %v7364, %v7506
  %7508 = vmatmul.f32.gmra.mxu0 %v6322
  %v7509 = vpop.f32.mrf.mxu0
  %v7510 = vadd.f32 %v7367, %v7509
  %7511 = vmatmul.f32.gmra.mxu0 %v6325
  %v7512 = vpop.f32.mrf.mxu0
  %v7513 = vadd.f32 %v7370, %v7512
  %7514 = vmatmul.f32.gmra.mxu0 %v6328
  %v7515 = vpop.f32.mrf.mxu0
  %v7516 = vadd.f32 %v7373, %v7515
  %7517 = vmatmul.f32.gmra.mxu0 %v6331
  %v7518 = vpop.f32.mrf.mxu0
  %v7519 = vadd.f32 %v7376, %v7518
  %7520 = vmatmul.f32.gmra.mxu0 %v6334
  %v7521 = vpop.f32.mrf.mxu0
  %v7522 = vadd.f32 %v7379, %v7521
  %7523 = vmatmul.f32.gmra.mxu0 %v6337
  %v7524 = vpop.f32.mrf.mxu0
  %v7525 = vadd.f32 %v7382, %v7524
  %7526 = vmatmul.f32.gmra.mxu0 %v6340
  %v7527 = vpop.f32.mrf.mxu0
  %v7528 = vadd.f32 %v7385, %v7527
  %7529 = vmatmul.f32.gmra.mxu0 %v6343
  %v7530 = vpop.f32.mrf.mxu0
  %v7531 = vadd.f32 %v7388, %v7530
  %7532 = vmatmul.f32.gmra.mxu0 %v6346
  %v7533 = vpop.f32.mrf.mxu0
  %v7534 = vadd.f32 %v7391, %v7533
  %7535 = vmatmul.f32.gmra.mxu0 %v6349
  %v7536 = vpop.f32.mrf.mxu0
  %v7537 = vadd.f32 %v7394, %v7536
  %7538 = vmatmul.f32.gmra.mxu0 %v6352
  %v7539 = vpop.f32.mrf.mxu0
  %v7540 = vadd.f32 %v7397, %v7539
  %7541 = vmatmul.f32.gmra.mxu0 %v6355
  %v7542 = vpop.f32.mrf.mxu0
  %v7543 = vadd.f32 %v7400, %v7542
  %7544 = vmatmul.f32.gmra.mxu0 %v6358
  %v7545 = vpop.f32.mrf.mxu0
  %v7546 = vadd.f32 %v7403, %v7545
  %7547 = vmatmul.f32.gmra.mxu0 %v6361
  %v7548 = vpop.f32.mrf.mxu0
  %v7549 = vadd.f32 %v7406, %v7548
  %7550 = vmatmul.f32.gmra.mxu0 %v6364
  %v7551 = vpop.f32.mrf.mxu0
  %v7552 = vadd.f32 %v7409, %v7551
  %7553 = vmatmul.f32.gmra.mxu0 %v6367
  %v7554 = vpop.f32.mrf.mxu0
  %v7555 = vadd.f32 %v7412, %v7554
  %7556 = vmatmul.f32.gmra.mxu0 %v6370
  %v7557 = vpop.f32.mrf.mxu0
  %v7558 = vadd.f32 %v7415, %v7557
  %7559 = vmatmul.f32.gmra.mxu0 %v6373
  %v7560 = vpop.f32.mrf.mxu0
  %v7561 = vadd.f32 %v7418, %v7560
  %7562 = vmatmul.f32.gmra.mxu0 %v6376
  %v7563 = vpop.f32.mrf.mxu0
  %v7564 = vadd.f32 %v7421, %v7563
  %7565 = vmatmul.f32.gmra.mxu0 %v6379
  %v7566 = vpop.f32.mrf.mxu0
  %v7567 = vadd.f32 %v7424, %v7566
  %7568 = vmatmul.f32.gmra.mxu0 %v6382
  %v7569 = vpop.f32.mrf.mxu0
  %v7570 = vadd.f32 %v7427, %v7569
  %7571 = vmatmul.f32.gmra.mxu0 %v6385
  %v7572 = vpop.f32.mrf.mxu0
  %v7573 = vadd.f32 %v7430, %v7572
  %7574 = vmatmul.f32.gmra.mxu0 %v6388
  %v7575 = vpop.f32.mrf.mxu0
  %v7576 = vadd.f32 %v7433, %v7575
  %7577 = vmatmul.f32.gmra.mxu0 %v6391
  %v7578 = vpop.f32.mrf.mxu0
  %v7579 = vadd.f32 %v7436, %v7578
  %7580 = vmatmul.f32.gmra.mxu0 %v6394
  %v7581 = vpop.f32.mrf.mxu0
  %v7582 = vadd.f32 %v7439, %v7581
  %7583 = vmatmul.f32.gmra.mxu0 %v6397
  %v7584 = vpop.f32.mrf.mxu0
  %v7585 = vadd.f32 %v7442, %v7584
  %7586 = vmatmul.f32.gmra.mxu0 %v6400
  %v7587 = vpop.f32.mrf.mxu0
  %v7588 = vadd.f32 %v7445, %v7587
  %7589 = vmatmul.f32.gmra.mxu0 %v6403
  %v7590 = vpop.f32.mrf.mxu0
  %v7591 = vadd.f32 %v7448, %v7590
  %7592 = vmatmul.f32.gmra.mxu0 %v6406
  %v7593 = vpop.f32.mrf.mxu0
  %v7594 = vadd.f32 %v7451, %v7593
  %7595 = vmatmul.f32.gmra.mxu0 %v6409
  %v7596 = vpop.f32.mrf.mxu0
  %v7597 = vadd.f32 %v7454, %v7596
  %7598 = vmatmul.f32.gmra.mxu0 %v6412
  %v7599 = vpop.f32.mrf.mxu0
  %v7600 = vadd.f32 %v7457, %v7599
  %7601 = vmatmul.f32.gmra.mxu0 %v6415
  %v7602 = vpop.f32.mrf.mxu0
  %v7603 = vadd.f32 %v7460, %v7602
  %7604 = vmatmul.f32.gmra.mxu0 %v6418
  %v7605 = vpop.f32.mrf.mxu0
  %v7606 = vadd.f32 %v7463, %v7605
  %7607 = vmatmul.f32.gmra.mxu0 %v6421
  %v7608 = vpop.f32.mrf.mxu0
  %v7609 = vadd.f32 %v7466, %v7608
  %7610 = vmatmul.f32.gmra.mxu0 %v6424
  %v7611 = vpop.f32.mrf.mxu0
  %v7612 = vadd.f32 %v7469, %v7611
  %7613 = vmatmul.f32.gmra.mxu0 %v6427
  %v7614 = vpop.f32.mrf.mxu0
  %v7615 = vadd.f32 %v7472, %v7614
  %7616 = vdwg.mxu0
  %v7617 = vmax.f32 %v6590, %v7206
  %v7618 = vmax.f32 %v6876, %v7492
  %v7619 = vmax.f32 %v6593, %v7209
  %v7620 = vmax.f32 %v6879, %v7495
  %v7621 = vmax.f32 %v6596, %v7212
  %v7622 = vmax.f32 %v6882, %v7498
  %v7623 = vmax.f32 %v6599, %v7215
  %v7624 = vmax.f32 %v6885, %v7501
  %v7625 = vmax.f32 %v6602, %v7218
  %v7626 = vmax.f32 %v6888, %v7504
  %v7627 = vmax.f32 %v6605, %v7221
  %v7628 = vmax.f32 %v6891, %v7507
  %v7629 = vmax.f32 %v6608, %v7224
  %v7630 = vmax.f32 %v6894, %v7510
  %v7631 = vmax.f32 %v6611, %v7227
  %v7632 = vmax.f32 %v6897, %v7513
  %v7633 = vmax.f32 %v6614, %v7230
  %v7634 = vmax.f32 %v6900, %v7516
  %v7635 = vmax.f32 %v6617, %v7233
  %v7636 = vmax.f32 %v6903, %v7519
  %v7637 = vmax.f32 %v6620, %v7236
  %v7638 = vmax.f32 %v6906, %v7522
  %v7639 = vmax.f32 %v6623, %v7239
  %v7640 = vmax.f32 %v6909, %v7525
  %v7641 = vmax.f32 %v6626, %v7242
  %v7642 = vmax.f32 %v6912, %v7528
  %v7643 = vmax.f32 %v6629, %v7245
  %v7644 = vmax.f32 %v6915, %v7531
  %v7645 = vmax.f32 %v6632, %v7248
  %v7646 = vmax.f32 %v6918, %v7534
  %v7647 = vmax.f32 %v6635, %v7251
  %v7648 = vmax.f32 %v6921, %v7537
  %v7649 = vmax.f32 %v6638, %v7254
  %v7650 = vmax.f32 %v6924, %v7540
  %v7651 = vmax.f32 %v6641, %v7257
  %v7652 = vmax.f32 %v6927, %v7543
  %v7653 = vmax.f32 %v6644, %v7260
  %v7654 = vmax.f32 %v6930, %v7546
  %v7655 = vmax.f32 %v6647, %v7263
  %v7656 = vmax.f32 %v6933, %v7549
  %v7657 = vmax.f32 %v6650, %v7266
  %v7658 = vmax.f32 %v6936, %v7552
  %v7659 = vmax.f32 %v6653, %v7269
  %v7660 = vmax.f32 %v6939, %v7555
  %v7661 = vmax.f32 %v6656, %v7272
  %v7662 = vmax.f32 %v6942, %v7558
  %v7663 = vmax.f32 %v6659, %v7275
  %v7664 = vmax.f32 %v6945, %v7561
  %v7665 = vmax.f32 %v6662, %v7278
  %v7666 = vmax.f32 %v6948, %v7564
  %v7667 = vmax.f32 %v6665, %v7281
  %v7668 = vmax.f32 %v6951, %v7567
  %v7669 = vmax.f32 %v6668, %v7284
  %v7670 = vmax.f32 %v6954, %v7570
  %v7671 = vmax.f32 %v6671, %v7287
  %v7672 = vmax.f32 %v6957, %v7573
  %v7673 = vmax.f32 %v6674, %v7290
  %v7674 = vmax.f32 %v6960, %v7576
  %v7675 = vmax.f32 %v6677, %v7293
  %v7676 = vmax.f32 %v6963, %v7579
  %v7677 = vmax.f32 %v6680, %v7296
  %v7678 = vmax.f32 %v6966, %v7582
  %v7679 = vmax.f32 %v6683, %v7299
  %v7680 = vmax.f32 %v6969, %v7585
  %v7681 = vmax.f32 %v6686, %v7302
  %v7682 = vmax.f32 %v6972, %v7588
  %v7683 = vmax.f32 %v6689, %v7305
  %v7684 = vmax.f32 %v6975, %v7591
  %v7685 = vmax.f32 %v6692, %v7308
  %v7686 = vmax.f32 %v6978, %v7594
  %v7687 = vmax.f32 %v6695, %v7311
  %v7688 = vmax.f32 %v6981, %v7597
  %v7689 = vmax.f32 %v6698, %v7314
  %v7690 = vmax.f32 %v6984, %v7600
  %v7691 = vmax.f32 %v6701, %v7317
  %v7692 = vmax.f32 %v6987, %v7603
  %v7693 = vmax.f32 %v6704, %v7320
  %v7694 = vmax.f32 %v6990, %v7606
  %v7695 = vmax.f32 %v6707, %v7323
  %v7696 = vmax.f32 %v6993, %v7609
  %v7697 = vmax.f32 %v6710, %v7326
  %v7698 = vmax.f32 %v6996, %v7612
  %v7699 = vmax.f32 %v6713, %v7329
  %v7700 = vmax.f32 %v6999, %v7615
  %v7701 = vld [vmem:[%s9] sm:$0xff]
  %v7702 = vld [vmem:[%s9 + $0x8] sm:$0xff]
  %v7703 = vld [vmem:[%s9 + $0x10] sm:$0xff]
  %v7704 = vld [vmem:[%s9 + $0x18] sm:$0xff]
  %v7705 = vld [vmem:[%s9 + $0x20] sm:$0xff]
  %v7706 = vld [vmem:[%s9 + $0x28] sm:$0xff]
  %v7707 = vld [vmem:[%s9 + $0x30] sm:$0xff]
  %v7708 = vld [vmem:[%s9 + $0x38] sm:$0xff]
  %v7709 = vld [vmem:[%s9 + $0x40] sm:$0xff]
  %v7710 = vld [vmem:[%s9 + $0x48] sm:$0xff]
  %v7711 = vld [vmem:[%s9 + $0x50] sm:$0xff]
  %v7712 = vld [vmem:[%s9 + $0x58] sm:$0xff]
  %v7713 = vld [vmem:[%s9 + $0x60] sm:$0xff]
  %v7714 = vld [vmem:[%s9 + $0x68] sm:$0xff]
  %v7715 = vld [vmem:[%s9 + $0x70] sm:$0xff]
  %v7716 = vld [vmem:[%s9 + $0x78] sm:$0xff]
  %v7717 = vld [vmem:[%s9 + $0x80] sm:$0xff]
  %v7718 = vld [vmem:[%s9 + $0x88] sm:$0xff]
  %v7719 = vld [vmem:[%s9 + $0x90] sm:$0xff]
  %v7720 = vld [vmem:[%s9 + $0x98] sm:$0xff]
  %v7721 = vld [vmem:[%s9 + $0xa0] sm:$0xff]
  %v7722 = vld [vmem:[%s9 + $0xa8] sm:$0xff]
  %v7723 = vld [vmem:[%s9 + $0xb0] sm:$0xff]
  %v7724 = vld [vmem:[%s9 + $0xb8] sm:$0xff]
  %v7725 = vld [vmem:[%s9 + $0xc0] sm:$0xff]
  %v7726 = vld [vmem:[%s9 + $0xc8] sm:$0xff]
  %v7727 = vld [vmem:[%s9 + $0xd0] sm:$0xff]
  %v7728 = vld [vmem:[%s9 + $0xd8] sm:$0xff]
  %v7729 = vld [vmem:[%s9 + $0xe0] sm:$0xff]
  %v7730 = vld [vmem:[%s9 + $0xe8] sm:$0xff]
  %v7731 = vld [vmem:[%s9 + $0xf0] sm:$0xff]
  %v7732 = vld [vmem:[%s9 + $0xf8] sm:$0xff]
  %v7733 = vld [vmem:[%s9 + $0x100] sm:$0xff]
  %v7734 = vld [vmem:[%s9 + $0x108] sm:$0xff]
  %v7735 = vld [vmem:[%s9 + $0x110] sm:$0xff]
  %v7736 = vld [vmem:[%s9 + $0x118] sm:$0xff]
  %v7737 = vld [vmem:[%s9 + $0x120] sm:$0xff]
  %v7738 = vld [vmem:[%s9 + $0x128] sm:$0xff]
  %v7739 = vld [vmem:[%s9 + $0x130] sm:$0xff]
  %v7740 = vld [vmem:[%s9 + $0x138] sm:$0xff]
  %v7741 = vld [vmem:[%s9 + $0x140] sm:$0xff]
  %v7742 = vld [vmem:[%s9 + $0x148] sm:$0xff]
  %v7743 = vld [vmem:[%s9 + $0x150] sm:$0xff]
  %v7744 = vld [vmem:[%s9 + $0x158] sm:$0xff]
  %v7745 = vld [vmem:[%s9 + $0x160] sm:$0xff]
  %v7746 = vld [vmem:[%s9 + $0x168] sm:$0xff]
  %v7747 = vld [vmem:[%s9 + $0x170] sm:$0xff]
  %v7748 = vld [vmem:[%s9 + $0x178] sm:$0xff]
  %v7749 = vld [vmem:[%s9 + $0x180] sm:$0xff]
  %v7750 = vld [vmem:[%s9 + $0x188] sm:$0xff]
  %v7751 = vld [vmem:[%s9 + $0x190] sm:$0xff]
  %v7752 = vld [vmem:[%s9 + $0x198] sm:$0xff]
  %v7753 = vld [vmem:[%s9 + $0x1a0] sm:$0xff]
  %v7754 = vld [vmem:[%s9 + $0x1a8] sm:$0xff]
  %v7755 = vld [vmem:[%s9 + $0x1b0] sm:$0xff]
  %v7756 = vld [vmem:[%s9 + $0x1b8] sm:$0xff]
  %v7757 = vld [vmem:[%s9 + $0x1c0] sm:$0xff]
  %v7758 = vld [vmem:[%s9 + $0x1c8] sm:$0xff]
  %v7759 = vld [vmem:[%s9 + $0x1d0] sm:$0xff]
  %v7760 = vld [vmem:[%s9 + $0x1d8] sm:$0xff]
  %v7761 = vld [vmem:[%s9 + $0x1e0] sm:$0x1f]
  %v7762 = vld [vmem:[%s9 + $0x1e8] sm:$0x1f]
  %v7763 = vld [vmem:[%s9 + $0x1f0] sm:$0x1f]
  %vm7764 = vcmask 605184
  %v7766 = vsel %vm7764, %v7703, 0
  %v7769 = vsel %vm7764, %v7706, 0
  %v7772 = vsel %vm7764, %v7709, 0
  %v7775 = vsel %vm7764, %v7712, 0
  %v7778 = vsel %vm7764, %v7715, 0
  %v7781 = vsel %vm7764, %v7718, 0
  %v7784 = vsel %vm7764, %v7721, 0
  %v7787 = vsel %vm7764, %v7724, 0
  %v7790 = vsel %vm7764, %v7727, 0
  %v7793 = vsel %vm7764, %v7730, 0
  %v7796 = vsel %vm7764, %v7733, 0
  %v7799 = vsel %vm7764, %v7736, 0
  %v7802 = vsel %vm7764, %v7739, 0
  %v7805 = vsel %vm7764, %v7742, 0
  %v7808 = vsel %vm7764, %v7745, 0
  %v7811 = vsel %vm7764, %v7748, 0
  %v7814 = vsel %vm7764, %v7751, 0
  %v7817 = vsel %vm7764, %v7754, 0
  %v7820 = vsel %vm7764, %v7757, 0
  %v7823 = vsel %vm7764, %v7760, 0
  %v7826 = vsel %vm7764, %v7763, 0
  %vm7828 = vcmask 1041408
  %v7830 = vsel %vm7828, %v7699, 0
  %v7833 = vsel %vm7828, %v7700, 0
  %7835 = vmatpush.msra.mxu0 %v7647
  %7836 = vmatpush.msra.mxu0 %v7645
  %7837 = vmatpush.msra.mxu0 %v7643
  %7838 = vmatpush.msra.mxu0 %v7641
  %7839 = vmatpush.msra.mxu0 %v7639
  %7840 = vmatpush.msra.mxu0 %v7637
  %7841 = vmatpush.msra.mxu0 %v7635
  %7842 = vmatpush.msra.mxu0 %v7633
  %7843 = vmatpush.msra.mxu0 %v7631
  %7844 = vmatpush.msra.mxu0 %v7629
  %7845 = vmatpush.msra.mxu0 %v7627
  %7846 = vmatpush.msra.mxu0 %v7625
  %7847 = vmatpush.msra.mxu0 %v7623
  %7848 = vmatpush.msra.mxu0 %v7621
  %7849 = vmatpush.msra.mxu0 %v7619
  %7850 = vmatpush.msra.mxu0 %v7617
  %7851 = vmatmul.f32.gmra.mxu0 %v7701
  %v7852 = vpop.f32.mrf.mxu0
  %v7853 = vadd.f32 0.0, %v7852
  %7854 = vmatmul.f32.gmra.mxu0 %v7704
  %v7855 = vpop.f32.mrf.mxu0
  %v7856 = vadd.f32 0.0, %v7855
  %7857 = vmatmul.f32.gmra.mxu0 %v7707
  %v7858 = vpop.f32.mrf.mxu0
  %v7859 = vadd.f32 0.0, %v7858
  %7860 = vmatmul.f32.gmra.mxu0 %v7710
  %v7861 = vpop.f32.mrf.mxu0
  %v7862 = vadd.f32 0.0, %v7861
  %7863 = vmatmul.f32.gmra.mxu0 %v7713
  %v7864 = vpop.f32.mrf.mxu0
  %v7865 = vadd.f32 0.0, %v7864
  %7866 = vmatmul.f32.gmra.mxu0 %v7716
  %v7867 = vpop.f32.mrf.mxu0
  %v7868 = vadd.f32 0.0, %v7867
  %7869 = vmatmul.f32.gmra.mxu0 %v7719
  %v7870 = vpop.f32.mrf.mxu0
  %v7871 = vadd.f32 0.0, %v7870
  %7872 = vmatmul.f32.gmra.mxu0 %v7722
  %v7873 = vpop.f32.mrf.mxu0
  %v7874 = vadd.f32 0.0, %v7873
  %7875 = vmatmul.f32.gmra.mxu0 %v7725
  %v7876 = vpop.f32.mrf.mxu0
  %v7877 = vadd.f32 0.0, %v7876
  %7878 = vmatmul.f32.gmra.mxu0 %v7728
  %v7879 = vpop.f32.mrf.mxu0
  %v7880 = vadd.f32 0.0, %v7879
  %7881 = vmatmul.f32.gmra.mxu0 %v7731
  %v7882 = vpop.f32.mrf.mxu0
  %v7883 = vadd.f32 0.0, %v7882
  %7884 = vmatmul.f32.gmra.mxu0 %v7734
  %v7885 = vpop.f32.mrf.mxu0
  %v7886 = vadd.f32 0.0, %v7885
  %7887 = vmatmul.f32.gmra.mxu0 %v7737
  %v7888 = vpop.f32.mrf.mxu0
  %v7889 = vadd.f32 0.0, %v7888
  %7890 = vmatmul.f32.gmra.mxu0 %v7740
  %v7891 = vpop.f32.mrf.mxu0
  %v7892 = vadd.f32 0.0, %v7891
  %7893 = vmatmul.f32.gmra.mxu0 %v7743
  %v7894 = vpop.f32.mrf.mxu0
  %v7895 = vadd.f32 0.0, %v7894
  %7896 = vmatmul.f32.gmra.mxu0 %v7746
  %v7897 = vpop.f32.mrf.mxu0
  %v7898 = vadd.f32 0.0, %v7897
  %7899 = vmatmul.f32.gmra.mxu0 %v7749
  %v7900 = vpop.f32.mrf.mxu0
  %v7901 = vadd.f32 0.0, %v7900
  %7902 = vmatmul.f32.gmra.mxu0 %v7752
  %v7903 = vpop.f32.mrf.mxu0
  %v7904 = vadd.f32 0.0, %v7903
  %7905 = vmatmul.f32.gmra.mxu0 %v7755
  %v7906 = vpop.f32.mrf.mxu0
  %v7907 = vadd.f32 0.0, %v7906
  %7908 = vmatmul.f32.gmra.mxu0 %v7758
  %v7909 = vpop.f32.mrf.mxu0
  %v7910 = vadd.f32 0.0, %v7909
  %7911 = vmatmul.f32.gmra.mxu0 %v7761
  %v7912 = vpop.f32.mrf.mxu0
  %v7913 = vadd.f32 0.0, %v7912
  %7914 = vdwg.mxu0
  %7915 = vmatpush.msra.mxu0 %v7679
  %7916 = vmatpush.msra.mxu0 %v7677
  %7917 = vmatpush.msra.mxu0 %v7675
  %7918 = vmatpush.msra.mxu0 %v7673
  %7919 = vmatpush.msra.mxu0 %v7671
  %7920 = vmatpush.msra.mxu0 %v7669
  %7921 = vmatpush.msra.mxu0 %v7667
  %7922 = vmatpush.msra.mxu0 %v7665
  %7923 = vmatpush.msra.mxu0 %v7663
  %7924 = vmatpush.msra.mxu0 %v7661
  %7925 = vmatpush.msra.mxu0 %v7659
  %7926 = vmatpush.msra.mxu0 %v7657
  %7927 = vmatpush.msra.mxu0 %v7655
  %7928 = vmatpush.msra.mxu0 %v7653
  %7929 = vmatpush.msra.mxu0 %v7651
  %7930 = vmatpush.msra.mxu0 %v7649
  %7931 = vmatmul.f32.gmra.mxu0 %v7702
  %v7932 = vpop.f32.mrf.mxu0
  %v7933 = vadd.f32 %v7853, %v7932
  %7934 = vmatmul.f32.gmra.mxu0 %v7705
  %v7935 = vpop.f32.mrf.mxu0
  %v7936 = vadd.f32 %v7856, %v7935
  %7937 = vmatmul.f32.gmra.mxu0 %v7708
  %v7938 = vpop.f32.mrf.mxu0
  %v7939 = vadd.f32 %v7859, %v7938
  %7940 = vmatmul.f32.gmra.mxu0 %v7711
  %v7941 = vpop.f32.mrf.mxu0
  %v7942 = vadd.f32 %v7862, %v7941
  %7943 = vmatmul.f32.gmra.mxu0 %v7714
  %v7944 = vpop.f32.mrf.mxu0
  %v7945 = vadd.f32 %v7865, %v7944
  %7946 = vmatmul.f32.gmra.mxu0 %v7717
  %v7947 = vpop.f32.mrf.mxu0
  %v7948 = vadd.f32 %v7868, %v7947
  %7949 = vmatmul.f32.gmra.mxu0 %v7720
  %v7950 = vpop.f32.mrf.mxu0
  %v7951 = vadd.f32 %v7871, %v7950
  %7952 = vmatmul.f32.gmra.mxu0 %v7723
  %v7953 = vpop.f32.mrf.mxu0
  %v7954 = vadd.f32 %v7874, %v7953
  %7955 = vmatmul.f32.gmra.mxu0 %v7726
  %v7956 = vpop.f32.mrf.mxu0
  %v7957 = vadd.f32 %v7877, %v7956
  %7958 = vmatmul.f32.gmra.mxu0 %v7729
  %v7959 = vpop.f32.mrf.mxu0
  %v7960 = vadd.f32 %v7880, %v7959
  %7961 = vmatmul.f32.gmra.mxu0 %v7732
  %v7962 = vpop.f32.mrf.mxu0
  %v7963 = vadd.f32 %v7883, %v7962
  %7964 = vmatmul.f32.gmra.mxu0 %v7735
  %v7965 = vpop.f32.mrf.mxu0
  %v7966 = vadd.f32 %v7886, %v7965
  %7967 = vmatmul.f32.gmra.mxu0 %v7738
  %v7968 = vpop.f32.mrf.mxu0
  %v7969 = vadd.f32 %v7889, %v7968
  %7970 = vmatmul.f32.gmra.mxu0 %v7741
  %v7971 = vpop.f32.mrf.mxu0
  %v7972 = vadd.f32 %v7892, %v7971
  %7973 = vmatmul.f32.gmra.mxu0 %v7744
  %v7974 = vpop.f32.mrf.mxu0
  %v7975 = vadd.f32 %v7895, %v7974
  %7976 = vmatmul.f32.gmra.mxu0 %v7747
  %v7977 = vpop.f32.mrf.mxu0
  %v7978 = vadd.f32 %v7898, %v7977
  %7979 = vmatmul.f32.gmra.mxu0 %v7750
  %v7980 = vpop.f32.mrf.mxu0
  %v7981 = vadd.f32 %v7901, %v7980
  %7982 = vmatmul.f32.gmra.mxu0 %v7753
  %v7983 = vpop.f32.mrf.mxu0
  %v7984 = vadd.f32 %v7904, %v7983
  %7985 = vmatmul.f32.gmra.mxu0 %v7756
  %v7986 = vpop.f32.mrf.mxu0
  %v7987 = vadd.f32 %v7907, %v7986
  %7988 = vmatmul.f32.gmra.mxu0 %v7759
  %v7989 = vpop.f32.mrf.mxu0
  %v7990 = vadd.f32 %v7910, %v7989
  %7991 = vmatmul.f32.gmra.mxu0 %v7762
  %v7992 = vpop.f32.mrf.mxu0
  %v7993 = vadd.f32 %v7913, %v7992
  %7994 = vdwg.mxu0
  %7995 = vmatpush.msra.mxu0 0.0
  %7996 = vmatpush.msra.mxu0 0.0
  %7997 = vmatpush.msra.mxu0 0.0
  %7998 = vmatpush.msra.mxu0 0.0
  %7999 = vmatpush.msra.mxu0 0.0
  %8000 = vmatpush.msra.mxu0 0.0
  %8001 = vmatpush.msra.mxu0 %v7830
  %8002 = vmatpush.msra.mxu0 %v7697
  %8003 = vmatpush.msra.mxu0 %v7695
  %8004 = vmatpush.msra.mxu0 %v7693
  %8005 = vmatpush.msra.mxu0 %v7691
  %8006 = vmatpush.msra.mxu0 %v7689
  %8007 = vmatpush.msra.mxu0 %v7687
  %8008 = vmatpush.msra.mxu0 %v7685
  %8009 = vmatpush.msra.mxu0 %v7683
  %8010 = vmatpush.msra.mxu0 %v7681
  %8011 = vmatmul.f32.gmra.mxu0 %v7766
  %v8012 = vpop.f32.mrf.mxu0
  %v8013 = vadd.f32 %v7933, %v8012
  %8014 = vmatmul.f32.gmra.mxu0 %v7769
  %v8015 = vpop.f32.mrf.mxu0
  %v8016 = vadd.f32 %v7936, %v8015
  %8017 = vmatmul.f32.gmra.mxu0 %v7772
  %v8018 = vpop.f32.mrf.mxu0
  %v8019 = vadd.f32 %v7939, %v8018
  %8020 = vmatmul.f32.gmra.mxu0 %v7775
  %v8021 = vpop.f32.mrf.mxu0
  %v8022 = vadd.f32 %v7942, %v8021
  %8023 = vmatmul.f32.gmra.mxu0 %v7778
  %v8024 = vpop.f32.mrf.mxu0
  %v8025 = vadd.f32 %v7945, %v8024
  %8026 = vmatmul.f32.gmra.mxu0 %v7781
  %v8027 = vpop.f32.mrf.mxu0
  %v8028 = vadd.f32 %v7948, %v8027
  %8029 = vmatmul.f32.gmra.mxu0 %v7784
  %v8030 = vpop.f32.mrf.mxu0
  %v8031 = vadd.f32 %v7951, %v8030
  %8032 = vmatmul.f32.gmra.mxu0 %v7787
  %v8033 = vpop.f32.mrf.mxu0
  %v8034 = vadd.f32 %v7954, %v8033
  %8035 = vmatmul.f32.gmra.mxu0 %v7790
  %v8036 = vpop.f32.mrf.mxu0
  %v8037 = vadd.f32 %v7957, %v8036
  %8038 = vmatmul.f32.gmra.mxu0 %v7793
  %v8039 = vpop.f32.mrf.mxu0
  %v8040 = vadd.f32 %v7960, %v8039
  %8041 = vmatmul.f32.gmra.mxu0 %v7796
  %v8042 = vpop.f32.mrf.mxu0
  %v8043 = vadd.f32 %v7963, %v8042
  %8044 = vmatmul.f32.gmra.mxu0 %v7799
  %v8045 = vpop.f32.mrf.mxu0
  %v8046 = vadd.f32 %v7966, %v8045
  %8047 = vmatmul.f32.gmra.mxu0 %v7802
  %v8048 = vpop.f32.mrf.mxu0
  %v8049 = vadd.f32 %v7969, %v8048
  %8050 = vmatmul.f32.gmra.mxu0 %v7805
  %v8051 = vpop.f32.mrf.mxu0
  %v8052 = vadd.f32 %v7972, %v8051
  %8053 = vmatmul.f32.gmra.mxu0 %v7808
  %v8054 = vpop.f32.mrf.mxu0
  %v8055 = vadd.f32 %v7975, %v8054
  %8056 = vmatmul.f32.gmra.mxu0 %v7811
  %v8057 = vpop.f32.mrf.mxu0
  %v8058 = vadd.f32 %v7978, %v8057
  %8059 = vmatmul.f32.gmra.mxu0 %v7814
  %v8060 = vpop.f32.mrf.mxu0
  %v8061 = vadd.f32 %v7981, %v8060
  %8062 = vmatmul.f32.gmra.mxu0 %v7817
  %v8063 = vpop.f32.mrf.mxu0
  %v8064 = vadd.f32 %v7984, %v8063
  %8065 = vmatmul.f32.gmra.mxu0 %v7820
  %v8066 = vpop.f32.mrf.mxu0
  %v8067 = vadd.f32 %v7987, %v8066
  %8068 = vmatmul.f32.gmra.mxu0 %v7823
  %v8069 = vpop.f32.mrf.mxu0
  %v8070 = vadd.f32 %v7990, %v8069
  %8071 = vmatmul.f32.gmra.mxu0 %v7826
  %v8072 = vpop.f32.mrf.mxu0
  %v8073 = vadd.f32 %v7993, %v8072
  %8074 = vdwg.mxu0
  %8075 = vmatpush.msra.mxu0 %v7648
  %8076 = vmatpush.msra.mxu0 %v7646
  %8077 = vmatpush.msra.mxu0 %v7644
  %8078 = vmatpush.msra.mxu0 %v7642
  %8079 = vmatpush.msra.mxu0 %v7640
  %8080 = vmatpush.msra.mxu0 %v7638
  %8081 = vmatpush.msra.mxu0 %v7636
  %8082 = vmatpush.msra.mxu0 %v7634
  %8083 = vmatpush.msra.mxu0 %v7632
  %8084 = vmatpush.msra.mxu0 %v7630
  %8085 = vmatpush.msra.mxu0 %v7628
  %8086 = vmatpush.msra.mxu0 %v7626
  %8087 = vmatpush.msra.mxu0 %v7624
  %8088 = vmatpush.msra.mxu0 %v7622
  %8089 = vmatpush.msra.mxu0 %v7620
  %8090 = vmatpush.msra.mxu0 %v7618
  %8091 = vmatmul.f32.gmra.mxu0 %v7701
  %v8092 = vpop.f32.mrf.mxu0
  %v8093 = vadd.f32 0.0, %v8092
  %8094 = vmatmul.f32.gmra.mxu0 %v7704
  %v8095 = vpop.f32.mrf.mxu0
  %v8096 = vadd.f32 0.0, %v8095
  %8097 = vmatmul.f32.gmra.mxu0 %v7707
  %v8098 = vpop.f32.mrf.mxu0
  %v8099 = vadd.f32 0.0, %v8098
  %8100 = vmatmul.f32.gmra.mxu0 %v7710
  %v8101 = vpop.f32.mrf.mxu0
  %v8102 = vadd.f32 0.0, %v8101
  %8103 = vmatmul.f32.gmra.mxu0 %v7713
  %v8104 = vpop.f32.mrf.mxu0
  %v8105 = vadd.f32 0.0, %v8104
  %8106 = vmatmul.f32.gmra.mxu0 %v7716
  %v8107 = vpop.f32.mrf.mxu0
  %v8108 = vadd.f32 0.0, %v8107
  %8109 = vmatmul.f32.gmra.mxu0 %v7719
  %v8110 = vpop.f32.mrf.mxu0
  %v8111 = vadd.f32 0.0, %v8110
  %8112 = vmatmul.f32.gmra.mxu0 %v7722
  %v8113 = vpop.f32.mrf.mxu0
  %v8114 = vadd.f32 0.0, %v8113
  %8115 = vmatmul.f32.gmra.mxu0 %v7725
  %v8116 = vpop.f32.mrf.mxu0
  %v8117 = vadd.f32 0.0, %v8116
  %8118 = vmatmul.f32.gmra.mxu0 %v7728
  %v8119 = vpop.f32.mrf.mxu0
  %v8120 = vadd.f32 0.0, %v8119
  %8121 = vmatmul.f32.gmra.mxu0 %v7731
  %v8122 = vpop.f32.mrf.mxu0
  %v8123 = vadd.f32 0.0, %v8122
  %8124 = vmatmul.f32.gmra.mxu0 %v7734
  %v8125 = vpop.f32.mrf.mxu0
  %v8126 = vadd.f32 0.0, %v8125
  %8127 = vmatmul.f32.gmra.mxu0 %v7737
  %v8128 = vpop.f32.mrf.mxu0
  %v8129 = vadd.f32 0.0, %v8128
  %8130 = vmatmul.f32.gmra.mxu0 %v7740
  %v8131 = vpop.f32.mrf.mxu0
  %v8132 = vadd.f32 0.0, %v8131
  %8133 = vmatmul.f32.gmra.mxu0 %v7743
  %v8134 = vpop.f32.mrf.mxu0
  %v8135 = vadd.f32 0.0, %v8134
  %8136 = vmatmul.f32.gmra.mxu0 %v7746
  %v8137 = vpop.f32.mrf.mxu0
  %v8138 = vadd.f32 0.0, %v8137
  %8139 = vmatmul.f32.gmra.mxu0 %v7749
  %v8140 = vpop.f32.mrf.mxu0
  %v8141 = vadd.f32 0.0, %v8140
  %8142 = vmatmul.f32.gmra.mxu0 %v7752
  %v8143 = vpop.f32.mrf.mxu0
  %v8144 = vadd.f32 0.0, %v8143
  %8145 = vmatmul.f32.gmra.mxu0 %v7755
  %v8146 = vpop.f32.mrf.mxu0
  %v8147 = vadd.f32 0.0, %v8146
  %8148 = vmatmul.f32.gmra.mxu0 %v7758
  %v8149 = vpop.f32.mrf.mxu0
  %v8150 = vadd.f32 0.0, %v8149
  %8151 = vmatmul.f32.gmra.mxu0 %v7761
  %v8152 = vpop.f32.mrf.mxu0
  %v8153 = vadd.f32 0.0, %v8152
  %8154 = vdwg.mxu0
  %8155 = vmatpush.msra.mxu0 %v7680
  %8156 = vmatpush.msra.mxu0 %v7678
  %8157 = vmatpush.msra.mxu0 %v7676
  %8158 = vmatpush.msra.mxu0 %v7674
  %8159 = vmatpush.msra.mxu0 %v7672
  %8160 = vmatpush.msra.mxu0 %v7670
  %8161 = vmatpush.msra.mxu0 %v7668
  %8162 = vmatpush.msra.mxu0 %v7666
  %8163 = vmatpush.msra.mxu0 %v7664
  %8164 = vmatpush.msra.mxu0 %v7662
  %8165 = vmatpush.msra.mxu0 %v7660
  %8166 = vmatpush.msra.mxu0 %v7658
  %8167 = vmatpush.msra.mxu0 %v7656
  %8168 = vmatpush.msra.mxu0 %v7654
  %8169 = vmatpush.msra.mxu0 %v7652
  %8170 = vmatpush.msra.mxu0 %v7650
  %8171 = vmatmul.f32.gmra.mxu0 %v7702
  %v8172 = vpop.f32.mrf.mxu0
  %v8173 = vadd.f32 %v8093, %v8172
  %8174 = vmatmul.f32.gmra.mxu0 %v7705
  %v8175 = vpop.f32.mrf.mxu0
  %v8176 = vadd.f32 %v8096, %v8175
  %8177 = vmatmul.f32.gmra.mxu0 %v7708
  %v8178 = vpop.f32.mrf.mxu0
  %v8179 = vadd.f32 %v8099, %v8178
  %8180 = vmatmul.f32.gmra.mxu0 %v7711
  %v8181 = vpop.f32.mrf.mxu0
  %v8182 = vadd.f32 %v8102, %v8181
  %8183 = vmatmul.f32.gmra.mxu0 %v7714
  %v8184 = vpop.f32.mrf.mxu0
  %v8185 = vadd.f32 %v8105, %v8184
  %8186 = vmatmul.f32.gmra.mxu0 %v7717
  %v8187 = vpop.f32.mrf.mxu0
  %v8188 = vadd.f32 %v8108, %v8187
  %8189 = vmatmul.f32.gmra.mxu0 %v7720
  %v8190 = vpop.f32.mrf.mxu0
  %v8191 = vadd.f32 %v8111, %v8190
  %8192 = vmatmul.f32.gmra.mxu0 %v7723
  %v8193 = vpop.f32.mrf.mxu0
  %v8194 = vadd.f32 %v8114, %v8193
  %8195 = vmatmul.f32.gmra.mxu0 %v7726
  %v8196 = vpop.f32.mrf.mxu0
  %v8197 = vadd.f32 %v8117, %v8196
  %8198 = vmatmul.f32.gmra.mxu0 %v7729
  %v8199 = vpop.f32.mrf.mxu0
  %v8200 = vadd.f32 %v8120, %v8199
  %8201 = vmatmul.f32.gmra.mxu0 %v7732
  %v8202 = vpop.f32.mrf.mxu0
  %v8203 = vadd.f32 %v8123, %v8202
  %8204 = vmatmul.f32.gmra.mxu0 %v7735
  %v8205 = vpop.f32.mrf.mxu0
  %v8206 = vadd.f32 %v8126, %v8205
  %8207 = vmatmul.f32.gmra.mxu0 %v7738
  %v8208 = vpop.f32.mrf.mxu0
  %v8209 = vadd.f32 %v8129, %v8208
  %8210 = vmatmul.f32.gmra.mxu0 %v7741
  %v8211 = vpop.f32.mrf.mxu0
  %v8212 = vadd.f32 %v8132, %v8211
  %8213 = vmatmul.f32.gmra.mxu0 %v7744
  %v8214 = vpop.f32.mrf.mxu0
  %v8215 = vadd.f32 %v8135, %v8214
  %8216 = vmatmul.f32.gmra.mxu0 %v7747
  %v8217 = vpop.f32.mrf.mxu0
  %v8218 = vadd.f32 %v8138, %v8217
  %8219 = vmatmul.f32.gmra.mxu0 %v7750
  %v8220 = vpop.f32.mrf.mxu0
  %v8221 = vadd.f32 %v8141, %v8220
  %8222 = vmatmul.f32.gmra.mxu0 %v7753
  %v8223 = vpop.f32.mrf.mxu0
  %v8224 = vadd.f32 %v8144, %v8223
  %8225 = vmatmul.f32.gmra.mxu0 %v7756
  %v8226 = vpop.f32.mrf.mxu0
  %v8227 = vadd.f32 %v8147, %v8226
  %8228 = vmatmul.f32.gmra.mxu0 %v7759
  %v8229 = vpop.f32.mrf.mxu0
  %v8230 = vadd.f32 %v8150, %v8229
  %8231 = vmatmul.f32.gmra.mxu0 %v7762
  %v8232 = vpop.f32.mrf.mxu0
  %v8233 = vadd.f32 %v8153, %v8232
  %8234 = vdwg.mxu0
  %8235 = vmatpush.msra.mxu0 0.0
  %8236 = vmatpush.msra.mxu0 0.0
  %8237 = vmatpush.msra.mxu0 0.0
  %8238 = vmatpush.msra.mxu0 0.0
  %8239 = vmatpush.msra.mxu0 0.0
  %8240 = vmatpush.msra.mxu0 0.0
  %8241 = vmatpush.msra.mxu0 %v7833
  %8242 = vmatpush.msra.mxu0 %v7698
  %8243 = vmatpush.msra.mxu0 %v7696
  %8244 = vmatpush.msra.mxu0 %v7694
  %8245 = vmatpush.msra.mxu0 %v7692
  %8246 = vmatpush.msra.mxu0 %v7690
  %8247 = vmatpush.msra.mxu0 %v7688
  %8248 = vmatpush.msra.mxu0 %v7686
  %8249 = vmatpush.msra.mxu0 %v7684
  %8250 = vmatpush.msra.mxu0 %v7682
  %8251 = vmatmul.f32.gmra.mxu0 %v7766
  %v8252 = vpop.f32.mrf.mxu0
  %v8253 = vadd.f32 %v8173, %v8252
  %8254 = vmatmul.f32.gmra.mxu0 %v7769
  %v8255 = vpop.f32.mrf.mxu0
  %v8256 = vadd.f32 %v8176, %v8255
  %8257 = vmatmul.f32.gmra.mxu0 %v7772
  %v8258 = vpop.f32.mrf.mxu0
  %v8259 = vadd.f32 %v8179, %v8258
  %8260 = vmatmul.f32.gmra.mxu0 %v7775
  %v8261 = vpop.f32.mrf.mxu0
  %v8262 = vadd.f32 %v8182, %v8261
  %8263 = vmatmul.f32.gmra.mxu0 %v7778
  %v8264 = vpop.f32.mrf.mxu0
  %v8265 = vadd.f32 %v8185, %v8264
  %8266 = vmatmul.f32.gmra.mxu0 %v7781
  %v8267 = vpop.f32.mrf.mxu0
  %v8268 = vadd.f32 %v8188, %v8267
  %8269 = vmatmul.f32.gmra.mxu0 %v7784
  %v8270 = vpop.f32.mrf.mxu0
  %v8271 = vadd.f32 %v8191, %v8270
  %8272 = vmatmul.f32.gmra.mxu0 %v7787
  %v8273 = vpop.f32.mrf.mxu0
  %v8274 = vadd.f32 %v8194, %v8273
  %8275 = vmatmul.f32.gmra.mxu0 %v7790
  %v8276 = vpop.f32.mrf.mxu0
  %v8277 = vadd.f32 %v8197, %v8276
  %8278 = vmatmul.f32.gmra.mxu0 %v7793
  %v8279 = vpop.f32.mrf.mxu0
  %v8280 = vadd.f32 %v8200, %v8279
  %8281 = vmatmul.f32.gmra.mxu0 %v7796
  %v8282 = vpop.f32.mrf.mxu0
  %v8283 = vadd.f32 %v8203, %v8282
  %8284 = vmatmul.f32.gmra.mxu0 %v7799
  %v8285 = vpop.f32.mrf.mxu0
  %v8286 = vadd.f32 %v8206, %v8285
  %8287 = vmatmul.f32.gmra.mxu0 %v7802
  %v8288 = vpop.f32.mrf.mxu0
  %v8289 = vadd.f32 %v8209, %v8288
  %8290 = vmatmul.f32.gmra.mxu0 %v7805
  %v8291 = vpop.f32.mrf.mxu0
  %v8292 = vadd.f32 %v8212, %v8291
  %8293 = vmatmul.f32.gmra.mxu0 %v7808
  %v8294 = vpop.f32.mrf.mxu0
  %v8295 = vadd.f32 %v8215, %v8294
  %8296 = vmatmul.f32.gmra.mxu0 %v7811
  %v8297 = vpop.f32.mrf.mxu0
  %v8298 = vadd.f32 %v8218, %v8297
  %8299 = vmatmul.f32.gmra.mxu0 %v7814
  %v8300 = vpop.f32.mrf.mxu0
  %v8301 = vadd.f32 %v8221, %v8300
  %8302 = vmatmul.f32.gmra.mxu0 %v7817
  %v8303 = vpop.f32.mrf.mxu0
  %v8304 = vadd.f32 %v8224, %v8303
  %8305 = vmatmul.f32.gmra.mxu0 %v7820
  %v8306 = vpop.f32.mrf.mxu0
  %v8307 = vadd.f32 %v8227, %v8306
  %8308 = vmatmul.f32.gmra.mxu0 %v7823
  %v8309 = vpop.f32.mrf.mxu0
  %v8310 = vadd.f32 %v8230, %v8309
  %8311 = vmatmul.f32.gmra.mxu0 %v7826
  %v8312 = vpop.f32.mrf.mxu0
  %v8313 = vadd.f32 %v8233, %v8312
  %8314 = vdwg.mxu0
  %v8315 = vld [vmem:[%s10] sm:$0xff]
  %v8316 = vld [vmem:[%s10 + $0x8] sm:$0xff]
  %v8317 = vld [vmem:[%s10 + $0x10] sm:$0xff]
  %v8318 = vld [vmem:[%s10 + $0x18] sm:$0xff]
  %v8319 = vld [vmem:[%s10 + $0x20] sm:$0xff]
  %v8320 = vld [vmem:[%s10 + $0x28] sm:$0xff]
  %v8321 = vld [vmem:[%s10 + $0x30] sm:$0xff]
  %v8322 = vld [vmem:[%s10 + $0x38] sm:$0xff]
  %v8323 = vld [vmem:[%s10 + $0x40] sm:$0xff]
  %v8324 = vld [vmem:[%s10 + $0x48] sm:$0xff]
  %v8325 = vld [vmem:[%s10 + $0x50] sm:$0xff]
  %v8326 = vld [vmem:[%s10 + $0x58] sm:$0xff]
  %v8327 = vld [vmem:[%s10 + $0x60] sm:$0xff]
  %v8328 = vld [vmem:[%s10 + $0x68] sm:$0xff]
  %v8329 = vld [vmem:[%s10 + $0x70] sm:$0xff]
  %v8330 = vld [vmem:[%s10 + $0x78] sm:$0xff]
  %v8331 = vld [vmem:[%s10 + $0x80] sm:$0xff]
  %v8332 = vld [vmem:[%s10 + $0x88] sm:$0xff]
  %v8333 = vld [vmem:[%s10 + $0x90] sm:$0xff]
  %v8334 = vld [vmem:[%s10 + $0x98] sm:$0xff]
  %v8335 = vld [vmem:[%s10 + $0xa0] sm:$0xff]
  %v8336 = vld [vmem:[%s10 + $0xa8] sm:$0xff]
  %v8337 = vld [vmem:[%s10 + $0xb0] sm:$0xff]
  %v8338 = vld [vmem:[%s10 + $0xb8] sm:$0xff]
  %v8339 = vld [vmem:[%s10 + $0xc0] sm:$0xff]
  %v8340 = vld [vmem:[%s10 + $0xc8] sm:$0xff]
  %v8341 = vld [vmem:[%s10 + $0xd0] sm:$0xff]
  %v8342 = vld [vmem:[%s10 + $0xd8] sm:$0xff]
  %v8343 = vld [vmem:[%s10 + $0xe0] sm:$0xff]
  %v8344 = vld [vmem:[%s10 + $0xe8] sm:$0xff]
  %v8345 = vld [vmem:[%s10 + $0xf0] sm:$0xff]
  %v8346 = vld [vmem:[%s10 + $0xf8] sm:$0xff]
  %v8347 = vld [vmem:[%s10 + $0x100] sm:$0xff]
  %v8348 = vld [vmem:[%s10 + $0x108] sm:$0xff]
  %v8349 = vld [vmem:[%s10 + $0x110] sm:$0xff]
  %v8350 = vld [vmem:[%s10 + $0x118] sm:$0xff]
  %v8351 = vld [vmem:[%s10 + $0x120] sm:$0xff]
  %v8352 = vld [vmem:[%s10 + $0x128] sm:$0xff]
  %v8353 = vld [vmem:[%s10 + $0x130] sm:$0xff]
  %v8354 = vld [vmem:[%s10 + $0x138] sm:$0xff]
  %v8355 = vld [vmem:[%s10 + $0x140] sm:$0xff]
  %v8356 = vld [vmem:[%s10 + $0x148] sm:$0xff]
  %v8357 = vld [vmem:[%s10 + $0x150] sm:$0xff]
  %v8358 = vld [vmem:[%s10 + $0x158] sm:$0xff]
  %v8359 = vld [vmem:[%s10 + $0x160] sm:$0xff]
  %v8360 = vld [vmem:[%s10 + $0x168] sm:$0xff]
  %v8361 = vld [vmem:[%s10 + $0x170] sm:$0xff]
  %v8362 = vld [vmem:[%s10 + $0x178] sm:$0xff]
  %v8363 = vld [vmem:[%s10 + $0x180] sm:$0xff]
  %v8364 = vld [vmem:[%s10 + $0x188] sm:$0xff]
  %v8365 = vld [vmem:[%s10 + $0x190] sm:$0xff]
  %v8366 = vld [vmem:[%s10 + $0x198] sm:$0xff]
  %v8367 = vld [vmem:[%s10 + $0x1a0] sm:$0xff]
  %v8368 = vld [vmem:[%s10 + $0x1a8] sm:$0xff]
  %v8369 = vld [vmem:[%s10 + $0x1b0] sm:$0xff]
  %v8370 = vld [vmem:[%s10 + $0x1b8] sm:$0xff]
  %v8371 = vld [vmem:[%s10 + $0x1c0] sm:$0xff]
  %v8372 = vld [vmem:[%s10 + $0x1c8] sm:$0xff]
  %v8373 = vld [vmem:[%s10 + $0x1d0] sm:$0xff]
  %v8374 = vld [vmem:[%s10 + $0x1d8] sm:$0xff]
  %v8375 = vld [vmem:[%s10 + $0x1e0] sm:$0x1f]
  %v8376 = vld [vmem:[%s10 + $0x1e8] sm:$0x1f]
  %v8377 = vld [vmem:[%s10 + $0x1f0] sm:$0x1f]
  %v8379 = vsel %vm7764, %v8317, 0
  %v8382 = vsel %vm7764, %v8320, 0
  %v8385 = vsel %vm7764, %v8323, 0
  %v8388 = vsel %vm7764, %v8326, 0
  %v8391 = vsel %vm7764, %v8329, 0
  %v8394 = vsel %vm7764, %v8332, 0
  %v8397 = vsel %vm7764, %v8335, 0
  %v8400 = vsel %vm7764, %v8338, 0
  %v8403 = vsel %vm7764, %v8341, 0
  %v8406 = vsel %vm7764, %v8344, 0
  %v8409 = vsel %vm7764, %v8347, 0
  %v8412 = vsel %vm7764, %v8350, 0
  %v8415 = vsel %vm7764, %v8353, 0
  %v8418 = vsel %vm7764, %v8356, 0
  %v8421 = vsel %vm7764, %v8359, 0
  %v8424 = vsel %vm7764, %v8362, 0
  %v8427 = vsel %vm7764, %v8365, 0
  %v8430 = vsel %vm7764, %v8368, 0
  %v8433 = vsel %vm7764, %v8371, 0
  %v8436 = vsel %vm7764, %v8374, 0
  %v8439 = vsel %vm7764, %v8377, 0
  %8441 = vmatpush.msra.mxu0 %v7647
  %8442 = vmatpush.msra.mxu0 %v7645
  %8443 = vmatpush.msra.mxu0 %v7643
  %8444 = vmatpush.msra.mxu0 %v7641
  %8445 = vmatpush.msra.mxu0 %v7639
  %8446 = vmatpush.msra.mxu0 %v7637
  %8447 = vmatpush.msra.mxu0 %v7635
  %8448 = vmatpush.msra.mxu0 %v7633
  %8449 = vmatpush.msra.mxu0 %v7631
  %8450 = vmatpush.msra.mxu0 %v7629
  %8451 = vmatpush.msra.mxu0 %v7627
  %8452 = vmatpush.msra.mxu0 %v7625
  %8453 = vmatpush.msra.mxu0 %v7623
  %8454 = vmatpush.msra.mxu0 %v7621
  %8455 = vmatpush.msra.mxu0 %v7619
  %8456 = vmatpush.msra.mxu0 %v7617
  %8457 = vmatmul.f32.gmra.mxu0 %v8315
  %v8458 = vpop.f32.mrf.mxu0
  %v8459 = vadd.f32 0.0, %v8458
  %8460 = vmatmul.f32.gmra.mxu0 %v8318
  %v8461 = vpop.f32.mrf.mxu0
  %v8462 = vadd.f32 0.0, %v8461
  %8463 = vmatmul.f32.gmra.mxu0 %v8321
  %v8464 = vpop.f32.mrf.mxu0
  %v8465 = vadd.f32 0.0, %v8464
  %8466 = vmatmul.f32.gmra.mxu0 %v8324
  %v8467 = vpop.f32.mrf.mxu0
  %v8468 = vadd.f32 0.0, %v8467
  %8469 = vmatmul.f32.gmra.mxu0 %v8327
  %v8470 = vpop.f32.mrf.mxu0
  %v8471 = vadd.f32 0.0, %v8470
  %8472 = vmatmul.f32.gmra.mxu0 %v8330
  %v8473 = vpop.f32.mrf.mxu0
  %v8474 = vadd.f32 0.0, %v8473
  %8475 = vmatmul.f32.gmra.mxu0 %v8333
  %v8476 = vpop.f32.mrf.mxu0
  %v8477 = vadd.f32 0.0, %v8476
  %8478 = vmatmul.f32.gmra.mxu0 %v8336
  %v8479 = vpop.f32.mrf.mxu0
  %v8480 = vadd.f32 0.0, %v8479
  %8481 = vmatmul.f32.gmra.mxu0 %v8339
  %v8482 = vpop.f32.mrf.mxu0
  %v8483 = vadd.f32 0.0, %v8482
  %8484 = vmatmul.f32.gmra.mxu0 %v8342
  %v8485 = vpop.f32.mrf.mxu0
  %v8486 = vadd.f32 0.0, %v8485
  %8487 = vmatmul.f32.gmra.mxu0 %v8345
  %v8488 = vpop.f32.mrf.mxu0
  %v8489 = vadd.f32 0.0, %v8488
  %8490 = vmatmul.f32.gmra.mxu0 %v8348
  %v8491 = vpop.f32.mrf.mxu0
  %v8492 = vadd.f32 0.0, %v8491
  %8493 = vmatmul.f32.gmra.mxu0 %v8351
  %v8494 = vpop.f32.mrf.mxu0
  %v8495 = vadd.f32 0.0, %v8494
  %8496 = vmatmul.f32.gmra.mxu0 %v8354
  %v8497 = vpop.f32.mrf.mxu0
  %v8498 = vadd.f32 0.0, %v8497
  %8499 = vmatmul.f32.gmra.mxu0 %v8357
  %v8500 = vpop.f32.mrf.mxu0
  %v8501 = vadd.f32 0.0, %v8500
  %8502 = vmatmul.f32.gmra.mxu0 %v8360
  %v8503 = vpop.f32.mrf.mxu0
  %v8504 = vadd.f32 0.0, %v8503
  %8505 = vmatmul.f32.gmra.mxu0 %v8363
  %v8506 = vpop.f32.mrf.mxu0
  %v8507 = vadd.f32 0.0, %v8506
  %8508 = vmatmul.f32.gmra.mxu0 %v8366
  %v8509 = vpop.f32.mrf.mxu0
  %v8510 = vadd.f32 0.0, %v8509
  %8511 = vmatmul.f32.gmra.mxu0 %v8369
  %v8512 = vpop.f32.mrf.mxu0
  %v8513 = vadd.f32 0.0, %v8512
  %8514 = vmatmul.f32.gmra.mxu0 %v8372
  %v8515 = vpop.f32.mrf.mxu0
  %v8516 = vadd.f32 0.0, %v8515
  %8517 = vmatmul.f32.gmra.mxu0 %v8375
  %v8518 = vpop.f32.mrf.mxu0
  %v8519 = vadd.f32 0.0, %v8518
  %8520 = vdwg.mxu0
  %8521 = vmatpush.msra.mxu0 %v7679
  %8522 = vmatpush.msra.mxu0 %v7677
  %8523 = vmatpush.msra.mxu0 %v7675
  %8524 = vmatpush.msra.mxu0 %v7673
  %8525 = vmatpush.msra.mxu0 %v7671
  %8526 = vmatpush.msra.mxu0 %v7669
  %8527 = vmatpush.msra.mxu0 %v7667
  %8528 = vmatpush.msra.mxu0 %v7665
  %8529 = vmatpush.msra.mxu0 %v7663
  %8530 = vmatpush.msra.mxu0 %v7661
  %8531 = vmatpush.msra.mxu0 %v7659
  %8532 = vmatpush.msra.mxu0 %v7657
  %8533 = vmatpush.msra.mxu0 %v7655
  %8534 = vmatpush.msra.mxu0 %v7653
  %8535 = vmatpush.msra.mxu0 %v7651
  %8536 = vmatpush.msra.mxu0 %v7649
  %8537 = vmatmul.f32.gmra.mxu0 %v8316
  %v8538 = vpop.f32.mrf.mxu0
  %v8539 = vadd.f32 %v8459, %v8538
  %8540 = vmatmul.f32.gmra.mxu0 %v8319
  %v8541 = vpop.f32.mrf.mxu0
  %v8542 = vadd.f32 %v8462, %v8541
  %8543 = vmatmul.f32.gmra.mxu0 %v8322
  %v8544 = vpop.f32.mrf.mxu0
  %v8545 = vadd.f32 %v8465, %v8544
  %8546 = vmatmul.f32.gmra.mxu0 %v8325
  %v8547 = vpop.f32.mrf.mxu0
  %v8548 = vadd.f32 %v8468, %v8547
  %8549 = vmatmul.f32.gmra.mxu0 %v8328
  %v8550 = vpop.f32.mrf.mxu0
  %v8551 = vadd.f32 %v8471, %v8550
  %8552 = vmatmul.f32.gmra.mxu0 %v8331
  %v8553 = vpop.f32.mrf.mxu0
  %v8554 = vadd.f32 %v8474, %v8553
  %8555 = vmatmul.f32.gmra.mxu0 %v8334
  %v8556 = vpop.f32.mrf.mxu0
  %v8557 = vadd.f32 %v8477, %v8556
  %8558 = vmatmul.f32.gmra.mxu0 %v8337
  %v8559 = vpop.f32.mrf.mxu0
  %v8560 = vadd.f32 %v8480, %v8559
  %8561 = vmatmul.f32.gmra.mxu0 %v8340
  %v8562 = vpop.f32.mrf.mxu0
  %v8563 = vadd.f32 %v8483, %v8562
  %8564 = vmatmul.f32.gmra.mxu0 %v8343
  %v8565 = vpop.f32.mrf.mxu0
  %v8566 = vadd.f32 %v8486, %v8565
  %8567 = vmatmul.f32.gmra.mxu0 %v8346
  %v8568 = vpop.f32.mrf.mxu0
  %v8569 = vadd.f32 %v8489, %v8568
  %8570 = vmatmul.f32.gmra.mxu0 %v8349
  %v8571 = vpop.f32.mrf.mxu0
  %v8572 = vadd.f32 %v8492, %v8571
  %8573 = vmatmul.f32.gmra.mxu0 %v8352
  %v8574 = vpop.f32.mrf.mxu0
  %v8575 = vadd.f32 %v8495, %v8574
  %8576 = vmatmul.f32.gmra.mxu0 %v8355
  %v8577 = vpop.f32.mrf.mxu0
  %v8578 = vadd.f32 %v8498, %v8577
  %8579 = vmatmul.f32.gmra.mxu0 %v8358
  %v8580 = vpop.f32.mrf.mxu0
  %v8581 = vadd.f32 %v8501, %v8580
  %8582 = vmatmul.f32.gmra.mxu0 %v8361
  %v8583 = vpop.f32.mrf.mxu0
  %v8584 = vadd.f32 %v8504, %v8583
  %8585 = vmatmul.f32.gmra.mxu0 %v8364
  %v8586 = vpop.f32.mrf.mxu0
  %v8587 = vadd.f32 %v8507, %v8586
  %8588 = vmatmul.f32.gmra.mxu0 %v8367
  %v8589 = vpop.f32.mrf.mxu0
  %v8590 = vadd.f32 %v8510, %v8589
  %8591 = vmatmul.f32.gmra.mxu0 %v8370
  %v8592 = vpop.f32.mrf.mxu0
  %v8593 = vadd.f32 %v8513, %v8592
  %8594 = vmatmul.f32.gmra.mxu0 %v8373
  %v8595 = vpop.f32.mrf.mxu0
  %v8596 = vadd.f32 %v8516, %v8595
  %8597 = vmatmul.f32.gmra.mxu0 %v8376
  %v8598 = vpop.f32.mrf.mxu0
  %v8599 = vadd.f32 %v8519, %v8598
  %8600 = vdwg.mxu0
  %8601 = vmatpush.msra.mxu0 0.0
  %8602 = vmatpush.msra.mxu0 0.0
  %8603 = vmatpush.msra.mxu0 0.0
  %8604 = vmatpush.msra.mxu0 0.0
  %8605 = vmatpush.msra.mxu0 0.0
  %8606 = vmatpush.msra.mxu0 0.0
  %8607 = vmatpush.msra.mxu0 %v7830
  %8608 = vmatpush.msra.mxu0 %v7697
  %8609 = vmatpush.msra.mxu0 %v7695
  %8610 = vmatpush.msra.mxu0 %v7693
  %8611 = vmatpush.msra.mxu0 %v7691
  %8612 = vmatpush.msra.mxu0 %v7689
  %8613 = vmatpush.msra.mxu0 %v7687
  %8614 = vmatpush.msra.mxu0 %v7685
  %8615 = vmatpush.msra.mxu0 %v7683
  %8616 = vmatpush.msra.mxu0 %v7681
  %8617 = vmatmul.f32.gmra.mxu0 %v8379
  %v8618 = vpop.f32.mrf.mxu0
  %v8619 = vadd.f32 %v8539, %v8618
  %8620 = vmatmul.f32.gmra.mxu0 %v8382
  %v8621 = vpop.f32.mrf.mxu0
  %v8622 = vadd.f32 %v8542, %v8621
  %8623 = vmatmul.f32.gmra.mxu0 %v8385
  %v8624 = vpop.f32.mrf.mxu0
  %v8625 = vadd.f32 %v8545, %v8624
  %8626 = vmatmul.f32.gmra.mxu0 %v8388
  %v8627 = vpop.f32.mrf.mxu0
  %v8628 = vadd.f32 %v8548, %v8627
  %8629 = vmatmul.f32.gmra.mxu0 %v8391
  %v8630 = vpop.f32.mrf.mxu0
  %v8631 = vadd.f32 %v8551, %v8630
  %8632 = vmatmul.f32.gmra.mxu0 %v8394
  %v8633 = vpop.f32.mrf.mxu0
  %v8634 = vadd.f32 %v8554, %v8633
  %8635 = vmatmul.f32.gmra.mxu0 %v8397
  %v8636 = vpop.f32.mrf.mxu0
  %v8637 = vadd.f32 %v8557, %v8636
  %8638 = vmatmul.f32.gmra.mxu0 %v8400
  %v8639 = vpop.f32.mrf.mxu0
  %v8640 = vadd.f32 %v8560, %v8639
  %8641 = vmatmul.f32.gmra.mxu0 %v8403
  %v8642 = vpop.f32.mrf.mxu0
  %v8643 = vadd.f32 %v8563, %v8642
  %8644 = vmatmul.f32.gmra.mxu0 %v8406
  %v8645 = vpop.f32.mrf.mxu0
  %v8646 = vadd.f32 %v8566, %v8645
  %8647 = vmatmul.f32.gmra.mxu0 %v8409
  %v8648 = vpop.f32.mrf.mxu0
  %v8649 = vadd.f32 %v8569, %v8648
  %8650 = vmatmul.f32.gmra.mxu0 %v8412
  %v8651 = vpop.f32.mrf.mxu0
  %v8652 = vadd.f32 %v8572, %v8651
  %8653 = vmatmul.f32.gmra.mxu0 %v8415
  %v8654 = vpop.f32.mrf.mxu0
  %v8655 = vadd.f32 %v8575, %v8654
  %8656 = vmatmul.f32.gmra.mxu0 %v8418
  %v8657 = vpop.f32.mrf.mxu0
  %v8658 = vadd.f32 %v8578, %v8657
  %8659 = vmatmul.f32.gmra.mxu0 %v8421
  %v8660 = vpop.f32.mrf.mxu0
  %v8661 = vadd.f32 %v8581, %v8660
  %8662 = vmatmul.f32.gmra.mxu0 %v8424
  %v8663 = vpop.f32.mrf.mxu0
  %v8664 = vadd.f32 %v8584, %v8663
  %8665 = vmatmul.f32.gmra.mxu0 %v8427
  %v8666 = vpop.f32.mrf.mxu0
  %v8667 = vadd.f32 %v8587, %v8666
  %8668 = vmatmul.f32.gmra.mxu0 %v8430
  %v8669 = vpop.f32.mrf.mxu0
  %v8670 = vadd.f32 %v8590, %v8669
  %8671 = vmatmul.f32.gmra.mxu0 %v8433
  %v8672 = vpop.f32.mrf.mxu0
  %v8673 = vadd.f32 %v8593, %v8672
  %8674 = vmatmul.f32.gmra.mxu0 %v8436
  %v8675 = vpop.f32.mrf.mxu0
  %v8676 = vadd.f32 %v8596, %v8675
  %8677 = vmatmul.f32.gmra.mxu0 %v8439
  %v8678 = vpop.f32.mrf.mxu0
  %v8679 = vadd.f32 %v8599, %v8678
  %8680 = vdwg.mxu0
  %8681 = vmatpush.msra.mxu0 %v7648
  %8682 = vmatpush.msra.mxu0 %v7646
  %8683 = vmatpush.msra.mxu0 %v7644
  %8684 = vmatpush.msra.mxu0 %v7642
  %8685 = vmatpush.msra.mxu0 %v7640
  %8686 = vmatpush.msra.mxu0 %v7638
  %8687 = vmatpush.msra.mxu0 %v7636
  %8688 = vmatpush.msra.mxu0 %v7634
  %8689 = vmatpush.msra.mxu0 %v7632
  %8690 = vmatpush.msra.mxu0 %v7630
  %8691 = vmatpush.msra.mxu0 %v7628
  %8692 = vmatpush.msra.mxu0 %v7626
  %8693 = vmatpush.msra.mxu0 %v7624
  %8694 = vmatpush.msra.mxu0 %v7622
  %8695 = vmatpush.msra.mxu0 %v7620
  %8696 = vmatpush.msra.mxu0 %v7618
  %8697 = vmatmul.f32.gmra.mxu0 %v8315
  %v8698 = vpop.f32.mrf.mxu0
  %v8699 = vadd.f32 0.0, %v8698
  %8700 = vmatmul.f32.gmra.mxu0 %v8318
  %v8701 = vpop.f32.mrf.mxu0
  %v8702 = vadd.f32 0.0, %v8701
  %8703 = vmatmul.f32.gmra.mxu0 %v8321
  %v8704 = vpop.f32.mrf.mxu0
  %v8705 = vadd.f32 0.0, %v8704
  %8706 = vmatmul.f32.gmra.mxu0 %v8324
  %v8707 = vpop.f32.mrf.mxu0
  %v8708 = vadd.f32 0.0, %v8707
  %8709 = vmatmul.f32.gmra.mxu0 %v8327
  %v8710 = vpop.f32.mrf.mxu0
  %v8711 = vadd.f32 0.0, %v8710
  %8712 = vmatmul.f32.gmra.mxu0 %v8330
  %v8713 = vpop.f32.mrf.mxu0
  %v8714 = vadd.f32 0.0, %v8713
  %8715 = vmatmul.f32.gmra.mxu0 %v8333
  %v8716 = vpop.f32.mrf.mxu0
  %v8717 = vadd.f32 0.0, %v8716
  %8718 = vmatmul.f32.gmra.mxu0 %v8336
  %v8719 = vpop.f32.mrf.mxu0
  %v8720 = vadd.f32 0.0, %v8719
  %8721 = vmatmul.f32.gmra.mxu0 %v8339
  %v8722 = vpop.f32.mrf.mxu0
  %v8723 = vadd.f32 0.0, %v8722
  %8724 = vmatmul.f32.gmra.mxu0 %v8342
  %v8725 = vpop.f32.mrf.mxu0
  %v8726 = vadd.f32 0.0, %v8725
  %8727 = vmatmul.f32.gmra.mxu0 %v8345
  %v8728 = vpop.f32.mrf.mxu0
  %v8729 = vadd.f32 0.0, %v8728
  %8730 = vmatmul.f32.gmra.mxu0 %v8348
  %v8731 = vpop.f32.mrf.mxu0
  %v8732 = vadd.f32 0.0, %v8731
  %8733 = vmatmul.f32.gmra.mxu0 %v8351
  %v8734 = vpop.f32.mrf.mxu0
  %v8735 = vadd.f32 0.0, %v8734
  %8736 = vmatmul.f32.gmra.mxu0 %v8354
  %v8737 = vpop.f32.mrf.mxu0
  %v8738 = vadd.f32 0.0, %v8737
  %8739 = vmatmul.f32.gmra.mxu0 %v8357
  %v8740 = vpop.f32.mrf.mxu0
  %v8741 = vadd.f32 0.0, %v8740
  %8742 = vmatmul.f32.gmra.mxu0 %v8360
  %v8743 = vpop.f32.mrf.mxu0
  %v8744 = vadd.f32 0.0, %v8743
  %8745 = vmatmul.f32.gmra.mxu0 %v8363
  %v8746 = vpop.f32.mrf.mxu0
  %v8747 = vadd.f32 0.0, %v8746
  %8748 = vmatmul.f32.gmra.mxu0 %v8366
  %v8749 = vpop.f32.mrf.mxu0
  %v8750 = vadd.f32 0.0, %v8749
  %8751 = vmatmul.f32.gmra.mxu0 %v8369
  %v8752 = vpop.f32.mrf.mxu0
  %v8753 = vadd.f32 0.0, %v8752
  %8754 = vmatmul.f32.gmra.mxu0 %v8372
  %v8755 = vpop.f32.mrf.mxu0
  %v8756 = vadd.f32 0.0, %v8755
  %8757 = vmatmul.f32.gmra.mxu0 %v8375
  %v8758 = vpop.f32.mrf.mxu0
  %v8759 = vadd.f32 0.0, %v8758
  %8760 = vdwg.mxu0
  %8761 = vmatpush.msra.mxu0 %v7680
  %8762 = vmatpush.msra.mxu0 %v7678
  %8763 = vmatpush.msra.mxu0 %v7676
  %8764 = vmatpush.msra.mxu0 %v7674
  %8765 = vmatpush.msra.mxu0 %v7672
  %8766 = vmatpush.msra.mxu0 %v7670
  %8767 = vmatpush.msra.mxu0 %v7668
  %8768 = vmatpush.msra.mxu0 %v7666
  %8769 = vmatpush.msra.mxu0 %v7664
  %8770 = vmatpush.msra.mxu0 %v7662
  %8771 = vmatpush.msra.mxu0 %v7660
  %8772 = vmatpush.msra.mxu0 %v7658
  %8773 = vmatpush.msra.mxu0 %v7656
  %8774 = vmatpush.msra.mxu0 %v7654
  %8775 = vmatpush.msra.mxu0 %v7652
  %8776 = vmatpush.msra.mxu0 %v7650
  %8777 = vmatmul.f32.gmra.mxu0 %v8316
  %v8778 = vpop.f32.mrf.mxu0
  %v8779 = vadd.f32 %v8699, %v8778
  %8780 = vmatmul.f32.gmra.mxu0 %v8319
  %v8781 = vpop.f32.mrf.mxu0
  %v8782 = vadd.f32 %v8702, %v8781
  %8783 = vmatmul.f32.gmra.mxu0 %v8322
  %v8784 = vpop.f32.mrf.mxu0
  %v8785 = vadd.f32 %v8705, %v8784
  %8786 = vmatmul.f32.gmra.mxu0 %v8325
  %v8787 = vpop.f32.mrf.mxu0
  %v8788 = vadd.f32 %v8708, %v8787
  %8789 = vmatmul.f32.gmra.mxu0 %v8328
  %v8790 = vpop.f32.mrf.mxu0
  %v8791 = vadd.f32 %v8711, %v8790
  %8792 = vmatmul.f32.gmra.mxu0 %v8331
  %v8793 = vpop.f32.mrf.mxu0
  %v8794 = vadd.f32 %v8714, %v8793
  %8795 = vmatmul.f32.gmra.mxu0 %v8334
  %v8796 = vpop.f32.mrf.mxu0
  %v8797 = vadd.f32 %v8717, %v8796
  %8798 = vmatmul.f32.gmra.mxu0 %v8337
  %v8799 = vpop.f32.mrf.mxu0
  %v8800 = vadd.f32 %v8720, %v8799
  %8801 = vmatmul.f32.gmra.mxu0 %v8340
  %v8802 = vpop.f32.mrf.mxu0
  %v8803 = vadd.f32 %v8723, %v8802
  %8804 = vmatmul.f32.gmra.mxu0 %v8343
  %v8805 = vpop.f32.mrf.mxu0
  %v8806 = vadd.f32 %v8726, %v8805
  %8807 = vmatmul.f32.gmra.mxu0 %v8346
  %v8808 = vpop.f32.mrf.mxu0
  %v8809 = vadd.f32 %v8729, %v8808
  %8810 = vmatmul.f32.gmra.mxu0 %v8349
  %v8811 = vpop.f32.mrf.mxu0
  %v8812 = vadd.f32 %v8732, %v8811
  %8813 = vmatmul.f32.gmra.mxu0 %v8352
  %v8814 = vpop.f32.mrf.mxu0
  %v8815 = vadd.f32 %v8735, %v8814
  %8816 = vmatmul.f32.gmra.mxu0 %v8355
  %v8817 = vpop.f32.mrf.mxu0
  %v8818 = vadd.f32 %v8738, %v8817
  %8819 = vmatmul.f32.gmra.mxu0 %v8358
  %v8820 = vpop.f32.mrf.mxu0
  %v8821 = vadd.f32 %v8741, %v8820
  %8822 = vmatmul.f32.gmra.mxu0 %v8361
  %v8823 = vpop.f32.mrf.mxu0
  %v8824 = vadd.f32 %v8744, %v8823
  %8825 = vmatmul.f32.gmra.mxu0 %v8364
  %v8826 = vpop.f32.mrf.mxu0
  %v8827 = vadd.f32 %v8747, %v8826
  %8828 = vmatmul.f32.gmra.mxu0 %v8367
  %v8829 = vpop.f32.mrf.mxu0
  %v8830 = vadd.f32 %v8750, %v8829
  %8831 = vmatmul.f32.gmra.mxu0 %v8370
  %v8832 = vpop.f32.mrf.mxu0
  %v8833 = vadd.f32 %v8753, %v8832
  %8834 = vmatmul.f32.gmra.mxu0 %v8373
  %v8835 = vpop.f32.mrf.mxu0
  %v8836 = vadd.f32 %v8756, %v8835
  %8837 = vmatmul.f32.gmra.mxu0 %v8376
  %v8838 = vpop.f32.mrf.mxu0
  %v8839 = vadd.f32 %v8759, %v8838
  %8840 = vdwg.mxu0
  %8841 = vmatpush.msra.mxu0 0.0
  %8842 = vmatpush.msra.mxu0 0.0
  %8843 = vmatpush.msra.mxu0 0.0
  %8844 = vmatpush.msra.mxu0 0.0
  %8845 = vmatpush.msra.mxu0 0.0
  %8846 = vmatpush.msra.mxu0 0.0
  %8847 = vmatpush.msra.mxu0 %v7833
  %8848 = vmatpush.msra.mxu0 %v7698
  %8849 = vmatpush.msra.mxu0 %v7696
  %8850 = vmatpush.msra.mxu0 %v7694
  %8851 = vmatpush.msra.mxu0 %v7692
  %8852 = vmatpush.msra.mxu0 %v7690
  %8853 = vmatpush.msra.mxu0 %v7688
  %8854 = vmatpush.msra.mxu0 %v7686
  %8855 = vmatpush.msra.mxu0 %v7684
  %8856 = vmatpush.msra.mxu0 %v7682
  %8857 = vmatmul.f32.gmra.mxu0 %v8379
  %v8858 = vpop.f32.mrf.mxu0
  %v8859 = vadd.f32 %v8779, %v8858
  %8860 = vmatmul.f32.gmra.mxu0 %v8382
  %v8861 = vpop.f32.mrf.mxu0
  %v8862 = vadd.f32 %v8782, %v8861
  %8863 = vmatmul.f32.gmra.mxu0 %v8385
  %v8864 = vpop.f32.mrf.mxu0
  %v8865 = vadd.f32 %v8785, %v8864
  %8866 = vmatmul.f32.gmra.mxu0 %v8388
  %v8867 = vpop.f32.mrf.mxu0
  %v8868 = vadd.f32 %v8788, %v8867
  %8869 = vmatmul.f32.gmra.mxu0 %v8391
  %v8870 = vpop.f32.mrf.mxu0
  %v8871 = vadd.f32 %v8791, %v8870
  %8872 = vmatmul.f32.gmra.mxu0 %v8394
  %v8873 = vpop.f32.mrf.mxu0
  %v8874 = vadd.f32 %v8794, %v8873
  %8875 = vmatmul.f32.gmra.mxu0 %v8397
  %v8876 = vpop.f32.mrf.mxu0
  %v8877 = vadd.f32 %v8797, %v8876
  %8878 = vmatmul.f32.gmra.mxu0 %v8400
  %v8879 = vpop.f32.mrf.mxu0
  %v8880 = vadd.f32 %v8800, %v8879
  %8881 = vmatmul.f32.gmra.mxu0 %v8403
  %v8882 = vpop.f32.mrf.mxu0
  %v8883 = vadd.f32 %v8803, %v8882
  %8884 = vmatmul.f32.gmra.mxu0 %v8406
  %v8885 = vpop.f32.mrf.mxu0
  %v8886 = vadd.f32 %v8806, %v8885
  %8887 = vmatmul.f32.gmra.mxu0 %v8409
  %v8888 = vpop.f32.mrf.mxu0
  %v8889 = vadd.f32 %v8809, %v8888
  %8890 = vmatmul.f32.gmra.mxu0 %v8412
  %v8891 = vpop.f32.mrf.mxu0
  %v8892 = vadd.f32 %v8812, %v8891
  %8893 = vmatmul.f32.gmra.mxu0 %v8415
  %v8894 = vpop.f32.mrf.mxu0
  %v8895 = vadd.f32 %v8815, %v8894
  %8896 = vmatmul.f32.gmra.mxu0 %v8418
  %v8897 = vpop.f32.mrf.mxu0
  %v8898 = vadd.f32 %v8818, %v8897
  %8899 = vmatmul.f32.gmra.mxu0 %v8421
  %v8900 = vpop.f32.mrf.mxu0
  %v8901 = vadd.f32 %v8821, %v8900
  %8902 = vmatmul.f32.gmra.mxu0 %v8424
  %v8903 = vpop.f32.mrf.mxu0
  %v8904 = vadd.f32 %v8824, %v8903
  %8905 = vmatmul.f32.gmra.mxu0 %v8427
  %v8906 = vpop.f32.mrf.mxu0
  %v8907 = vadd.f32 %v8827, %v8906
  %8908 = vmatmul.f32.gmra.mxu0 %v8430
  %v8909 = vpop.f32.mrf.mxu0
  %v8910 = vadd.f32 %v8830, %v8909
  %8911 = vmatmul.f32.gmra.mxu0 %v8433
  %v8912 = vpop.f32.mrf.mxu0
  %v8913 = vadd.f32 %v8833, %v8912
  %8914 = vmatmul.f32.gmra.mxu0 %v8436
  %v8915 = vpop.f32.mrf.mxu0
  %v8916 = vadd.f32 %v8836, %v8915
  %8917 = vmatmul.f32.gmra.mxu0 %v8439
  %v8918 = vpop.f32.mrf.mxu0
  %v8919 = vadd.f32 %v8839, %v8918
  %8920 = vdwg.mxu0
  %v8921 = vmax.f32 %v8013, %v8619
  %v8922 = vmax.f32 %v8253, %v8859
  %v8923 = vmax.f32 %v8016, %v8622
  %v8924 = vmax.f32 %v8256, %v8862
  %v8925 = vmax.f32 %v8019, %v8625
  %v8926 = vmax.f32 %v8259, %v8865
  %v8927 = vmax.f32 %v8022, %v8628
  %v8928 = vmax.f32 %v8262, %v8868
  %v8929 = vmax.f32 %v8025, %v8631
  %v8930 = vmax.f32 %v8265, %v8871
  %v8931 = vmax.f32 %v8028, %v8634
  %v8932 = vmax.f32 %v8268, %v8874
  %v8933 = vmax.f32 %v8031, %v8637
  %v8934 = vmax.f32 %v8271, %v8877
  %v8935 = vmax.f32 %v8034, %v8640
  %v8936 = vmax.f32 %v8274, %v8880
  %v8937 = vmax.f32 %v8037, %v8643
  %v8938 = vmax.f32 %v8277, %v8883
  %v8939 = vmax.f32 %v8040, %v8646
  %v8940 = vmax.f32 %v8280, %v8886
  %v8941 = vmax.f32 %v8043, %v8649
  %v8942 = vmax.f32 %v8283, %v8889
  %v8943 = vmax.f32 %v8046, %v8652
  %v8944 = vmax.f32 %v8286, %v8892
  %v8945 = vmax.f32 %v8049, %v8655
  %v8946 = vmax.f32 %v8289, %v8895
  %v8947 = vmax.f32 %v8052, %v8658
  %v8948 = vmax.f32 %v8292, %v8898
  %v8949 = vmax.f32 %v8055, %v8661
  %v8950 = vmax.f32 %v8295, %v8901
  %v8951 = vmax.f32 %v8058, %v8664
  %v8952 = vmax.f32 %v8298, %v8904
  %v8953 = vmax.f32 %v8061, %v8667
  %v8954 = vmax.f32 %v8301, %v8907
  %v8955 = vmax.f32 %v8064, %v8670
  %v8956 = vmax.f32 %v8304, %v8910
  %v8957 = vmax.f32 %v8067, %v8673
  %v8958 = vmax.f32 %v8307, %v8913
  %v8959 = vmax.f32 %v8070, %v8676
  %v8960 = vmax.f32 %v8310, %v8916
  %v8961 = vmax.f32 %v8073, %v8679
  %v8962 = vmax.f32 %v8313, %v8919
  %v8963 = vld [vmem:[%s11] sm:$0xff]
  %v8964 = vld [vmem:[%s11 + $0x8] sm:$0xff]
  %v8965 = vld [vmem:[%s11 + $0x10] sm:$0xff]
  %v8966 = vld [vmem:[%s11 + $0x18] sm:$0xff]
  %v8967 = vld [vmem:[%s11 + $0x20] sm:$0xff]
  %v8968 = vld [vmem:[%s11 + $0x28] sm:$0xff]
  %v8969 = vld [vmem:[%s11 + $0x30] sm:$0xff]
  %v8970 = vld [vmem:[%s11 + $0x38] sm:$0xff]
  %v8971 = vld [vmem:[%s11 + $0x40] sm:$0xff]
  %v8972 = vld [vmem:[%s11 + $0x48] sm:$0xff]
  %v8973 = vld [vmem:[%s11 + $0x50] sm:$0xff]
  %v8974 = vld [vmem:[%s11 + $0x58] sm:$0xff]
  %v8975 = vld [vmem:[%s11 + $0x60] sm:$0xff]
  %v8976 = vld [vmem:[%s11 + $0x68] sm:$0xff]
  %v8977 = vld [vmem:[%s11 + $0x70] sm:$0xff]
  %v8978 = vld [vmem:[%s11 + $0x78] sm:$0xff]
  %v8979 = vld [vmem:[%s11 + $0x80] sm:$0xff]
  %v8980 = vld [vmem:[%s11 + $0x88] sm:$0xff]
  %v8981 = vld [vmem:[%s11 + $0x90] sm:$0xff]
  %v8982 = vld [vmem:[%s11 + $0x98] sm:$0xff]
  %v8983 = vld [vmem:[%s11 + $0xa0] sm:$0xff]
  %v8984 = vld [vmem:[%s11 + $0xa8] sm:$0xff]
  %v8985 = vld [vmem:[%s11 + $0xb0] sm:$0xff]
  %v8986 = vld [vmem:[%s11 + $0xb8] sm:$0xff]
  %v8987 = vld [vmem:[%s11 + $0xc0] sm:$0xff]
  %v8988 = vld [vmem:[%s11 + $0xc8] sm:$0xff]
  %v8989 = vld [vmem:[%s11 + $0xd0] sm:$0xff]
  %v8990 = vld [vmem:[%s11 + $0xd8] sm:$0xff]
  %v8991 = vld [vmem:[%s12] sm:$0xff]
  %v8992 = vld [vmem:[%s12 + $0x8] sm:$0xff]
  %v8993 = vld [vmem:[%s12 + $0x10] sm:$0xff]
  %v8994 = vld [vmem:[%s12 + $0x18] sm:$0xff]
  %v8995 = vld [vmem:[%s12 + $0x20] sm:$0xff]
  %v8996 = vld [vmem:[%s12 + $0x28] sm:$0xff]
  %v8997 = vld [vmem:[%s12 + $0x30] sm:$0xff]
  %v8998 = vld [vmem:[%s12 + $0x38] sm:$0xff]
  %v8999 = vld [vmem:[%s12 + $0x40] sm:$0xff]
  %v9000 = vld [vmem:[%s12 + $0x48] sm:$0xff]
  %v9001 = vld [vmem:[%s12 + $0x50] sm:$0xff]
  %v9002 = vld [vmem:[%s12 + $0x58] sm:$0xff]
  %v9003 = vld [vmem:[%s12 + $0x60] sm:$0xff]
  %v9004 = vld [vmem:[%s12 + $0x68] sm:$0xff]
  %9006 = vset.pattern.permute.xlu0 0
  %9007 = vperm.xlu0 %9006, %v8991
  %v9008 = vpop.permute.xlu0 %9007
  %9011 = vset.pattern.permute.xlu0 0
  %9012 = vperm.xlu0 %9011, %v8992
  %v9013 = vpop.permute.xlu0 %9012
  %9016 = vset.pattern.permute.xlu0 0
  %9017 = vperm.xlu0 %9016, %v8993
  %v9018 = vpop.permute.xlu0 %9017
  %9021 = vset.pattern.permute.xlu0 0
  %9022 = vperm.xlu0 %9021, %v8994
  %v9023 = vpop.permute.xlu0 %9022
  %9026 = vset.pattern.permute.xlu0 0
  %9027 = vperm.xlu0 %9026, %v8995
  %v9028 = vpop.permute.xlu0 %9027
  %9031 = vset.pattern.permute.xlu0 0
  %9032 = vperm.xlu0 %9031, %v8996
  %v9033 = vpop.permute.xlu0 %9032
  %9036 = vset.pattern.permute.xlu0 0
  %9037 = vperm.xlu0 %9036, %v8997
  %v9038 = vpop.permute.xlu0 %9037
  %9041 = vset.pattern.permute.xlu0 0
  %9042 = vperm.xlu0 %9041, %v8998
  %v9043 = vpop.permute.xlu0 %9042
  %9046 = vset.pattern.permute.xlu0 0
  %9047 = vperm.xlu0 %9046, %v8999
  %v9048 = vpop.permute.xlu0 %9047
  %9051 = vset.pattern.permute.xlu0 0
  %9052 = vperm.xlu0 %9051, %v9000
  %v9053 = vpop.permute.xlu0 %9052
  %9056 = vset.pattern.permute.xlu0 0
  %9057 = vperm.xlu0 %9056, %v9001
  %v9058 = vpop.permute.xlu0 %9057
  %9061 = vset.pattern.permute.xlu0 0
  %9062 = vperm.xlu0 %9061, %v9002
  %v9063 = vpop.permute.xlu0 %9062
  %9066 = vset.pattern.permute.xlu0 0
  %9067 = vperm.xlu0 %9066, %v9003
  %v9068 = vpop.permute.xlu0 %9067
  %9071 = vset.pattern.permute.xlu0 0
  %9072 = vperm.xlu0 %9071, %v9004
  %v9073 = vpop.permute.xlu0 %9072
  %vm9075 = vcmask 302080
  %v9077 = vsel %vm9075, %v8964, 0
  %v9080 = vsel %vm9075, %v8966, 0
  %v9083 = vsel %vm9075, %v8968, 0
  %v9086 = vsel %vm9075, %v8970, 0
  %v9089 = vsel %vm9075, %v8972, 0
  %v9092 = vsel %vm9075, %v8974, 0
  %v9095 = vsel %vm9075, %v8976, 0
  %v9098 = vsel %vm9075, %v8978, 0
  %v9101 = vsel %vm9075, %v8980, 0
  %v9104 = vsel %vm9075, %v8982, 0
  %v9107 = vsel %vm9075, %v8984, 0
  %v9110 = vsel %vm9075, %v8986, 0
  %v9113 = vsel %vm9075, %v8988, 0
  %v9116 = vsel %vm9075, %v8990, 0
  %vm9118 = vcmask 1044480
  %v9120 = vsel %vm9118, %v8961, 0
  %v9123 = vsel %vm9118, %v8962, 0
  %9125 = vmatpush.msra.mxu0 %v8951
  %9126 = vmatpush.msra.mxu0 %v8949
  %9127 = vmatpush.msra.mxu0 %v8947
  %9128 = vmatpush.msra.mxu0 %v8945
  %9129 = vmatpush.msra.mxu0 %v8943
  %9130 = vmatpush.msra.mxu0 %v8941
  %9131 = vmatpush.msra.mxu0 %v8939
  %9132 = vmatpush.msra.mxu0 %v8937
  %9133 = vmatpush.msra.mxu0 %v8935
  %9134 = vmatpush.msra.mxu0 %v8933
  %9135 = vmatpush.msra.mxu0 %v8931
  %9136 = vmatpush.msra.mxu0 %v8929
  %9137 = vmatpush.msra.mxu0 %v8927
  %9138 = vmatpush.msra.mxu0 %v8925
  %9139 = vmatpush.msra.mxu0 %v8923
  %9140 = vmatpush.msra.mxu0 %v8921
  %9141 = vmatmul.f32.gmra.mxu0 %v8963
  %v9142 = vpop.f32.mrf.mxu0
  %v9143 = vadd.f32 %v9008, %v9142
  %9144 = vmatmul.f32.gmra.mxu0 %v8965
  %v9145 = vpop.f32.mrf.mxu0
  %v9146 = vadd.f32 %v9013, %v9145
  %9147 = vmatmul.f32.gmra.mxu0 %v8967
  %v9148 = vpop.f32.mrf.mxu0
  %v9149 = vadd.f32 %v9018, %v9148
  %9150 = vmatmul.f32.gmra.mxu0 %v8969
  %v9151 = vpop.f32.mrf.mxu0
  %v9152 = vadd.f32 %v9023, %v9151
  %9153 = vmatmul.f32.gmra.mxu0 %v8971
  %v9154 = vpop.f32.mrf.mxu0
  %v9155 = vadd.f32 %v9028, %v9154
  %9156 = vmatmul.f32.gmra.mxu0 %v8973
  %v9157 = vpop.f32.mrf.mxu0
  %v9158 = vadd.f32 %v9033, %v9157
  %9159 = vmatmul.f32.gmra.mxu0 %v8975
  %v9160 = vpop.f32.mrf.mxu0
  %v9161 = vadd.f32 %v9038, %v9160
  %9162 = vmatmul.f32.gmra.mxu0 %v8977
  %v9163 = vpop.f32.mrf.mxu0
  %v9164 = vadd.f32 %v9043, %v9163
  %9165 = vmatmul.f32.gmra.mxu0 %v8979
  %v9166 = vpop.f32.mrf.mxu0
  %v9167 = vadd.f32 %v9048, %v9166
  %9168 = vmatmul.f32.gmra.mxu0 %v8981
  %v9169 = vpop.f32.mrf.mxu0
  %v9170 = vadd.f32 %v9053, %v9169
  %9171 = vmatmul.f32.gmra.mxu0 %v8983
  %v9172 = vpop.f32.mrf.mxu0
  %v9173 = vadd.f32 %v9058, %v9172
  %9174 = vmatmul.f32.gmra.mxu0 %v8985
  %v9175 = vpop.f32.mrf.mxu0
  %v9176 = vadd.f32 %v9063, %v9175
  %9177 = vmatmul.f32.gmra.mxu0 %v8987
  %v9178 = vpop.f32.mrf.mxu0
  %v9179 = vadd.f32 %v9068, %v9178
  %9180 = vmatmul.f32.gmra.mxu0 %v8989
  %v9181 = vpop.f32.mrf.mxu0
  %v9182 = vadd.f32 %v9073, %v9181
  %9183 = vdwg.mxu0
  %9184 = vmatpush.msra.mxu0 0.0
  %9185 = vmatpush.msra.mxu0 0.0
  %9186 = vmatpush.msra.mxu0 0.0
  %9187 = vmatpush.msra.mxu0 0.0
  %9188 = vmatpush.msra.mxu0 0.0
  %9189 = vmatpush.msra.mxu0 0.0
  %9190 = vmatpush.msra.mxu0 0.0
  %9191 = vmatpush.msra.mxu0 0.0
  %9192 = vmatpush.msra.mxu0 0.0
  %9193 = vmatpush.msra.mxu0 0.0
  %9194 = vmatpush.msra.mxu0 0.0
  %9195 = vmatpush.msra.mxu0 %v9120
  %9196 = vmatpush.msra.mxu0 %v8959
  %9197 = vmatpush.msra.mxu0 %v8957
  %9198 = vmatpush.msra.mxu0 %v8955
  %9199 = vmatpush.msra.mxu0 %v8953
  %9200 = vmatmul.f32.gmra.mxu0 %v9077
  %v9201 = vpop.f32.mrf.mxu0
  %v9202 = vadd.f32 %v9143, %v9201
  %9203 = vmatmul.f32.gmra.mxu0 %v9080
  %v9204 = vpop.f32.mrf.mxu0
  %v9205 = vadd.f32 %v9146, %v9204
  %9206 = vmatmul.f32.gmra.mxu0 %v9083
  %v9207 = vpop.f32.mrf.mxu0
  %v9208 = vadd.f32 %v9149, %v9207
  %9209 = vmatmul.f32.gmra.mxu0 %v9086
  %v9210 = vpop.f32.mrf.mxu0
  %v9211 = vadd.f32 %v9152, %v9210
  %9212 = vmatmul.f32.gmra.mxu0 %v9089
  %v9213 = vpop.f32.mrf.mxu0
  %v9214 = vadd.f32 %v9155, %v9213
  %9215 = vmatmul.f32.gmra.mxu0 %v9092
  %v9216 = vpop.f32.mrf.mxu0
  %v9217 = vadd.f32 %v9158, %v9216
  %9218 = vmatmul.f32.gmra.mxu0 %v9095
  %v9219 = vpop.f32.mrf.mxu0
  %v9220 = vadd.f32 %v9161, %v9219
  %9221 = vmatmul.f32.gmra.mxu0 %v9098
  %v9222 = vpop.f32.mrf.mxu0
  %v9223 = vadd.f32 %v9164, %v9222
  %9224 = vmatmul.f32.gmra.mxu0 %v9101
  %v9225 = vpop.f32.mrf.mxu0
  %v9226 = vadd.f32 %v9167, %v9225
  %9227 = vmatmul.f32.gmra.mxu0 %v9104
  %v9228 = vpop.f32.mrf.mxu0
  %v9229 = vadd.f32 %v9170, %v9228
  %9230 = vmatmul.f32.gmra.mxu0 %v9107
  %v9231 = vpop.f32.mrf.mxu0
  %v9232 = vadd.f32 %v9173, %v9231
  %9233 = vmatmul.f32.gmra.mxu0 %v9110
  %v9234 = vpop.f32.mrf.mxu0
  %v9235 = vadd.f32 %v9176, %v9234
  %9236 = vmatmul.f32.gmra.mxu0 %v9113
  %v9237 = vpop.f32.mrf.mxu0
  %v9238 = vadd.f32 %v9179, %v9237
  %9239 = vmatmul.f32.gmra.mxu0 %v9116
  %v9240 = vpop.f32.mrf.mxu0
  %v9241 = vadd.f32 %v9182, %v9240
  %9242 = vdwg.mxu0
  %9243 = vmatpush.msra.mxu0 %v8952
  %9244 = vmatpush.msra.mxu0 %v8950
  %9245 = vmatpush.msra.mxu0 %v8948
  %9246 = vmatpush.msra.mxu0 %v8946
  %9247 = vmatpush.msra.mxu0 %v8944
  %9248 = vmatpush.msra.mxu0 %v8942
  %9249 = vmatpush.msra.mxu0 %v8940
  %9250 = vmatpush.msra.mxu0 %v8938
  %9251 = vmatpush.msra.mxu0 %v8936
  %9252 = vmatpush.msra.mxu0 %v8934
  %9253 = vmatpush.msra.mxu0 %v8932
  %9254 = vmatpush.msra.mxu0 %v8930
  %9255 = vmatpush.msra.mxu0 %v8928
  %9256 = vmatpush.msra.mxu0 %v8926
  %9257 = vmatpush.msra.mxu0 %v8924
  %9258 = vmatpush.msra.mxu0 %v8922
  %9259 = vmatmul.f32.gmra.mxu0 %v8963
  %v9260 = vpop.f32.mrf.mxu0
  %v9261 = vadd.f32 %v9008, %v9260
  %9262 = vmatmul.f32.gmra.mxu0 %v8965
  %v9263 = vpop.f32.mrf.mxu0
  %v9264 = vadd.f32 %v9013, %v9263
  %9265 = vmatmul.f32.gmra.mxu0 %v8967
  %v9266 = vpop.f32.mrf.mxu0
  %v9267 = vadd.f32 %v9018, %v9266
  %9268 = vmatmul.f32.gmra.mxu0 %v8969
  %v9269 = vpop.f32.mrf.mxu0
  %v9270 = vadd.f32 %v9023, %v9269
  %9271 = vmatmul.f32.gmra.mxu0 %v8971
  %v9272 = vpop.f32.mrf.mxu0
  %v9273 = vadd.f32 %v9028, %v9272
  %9274 = vmatmul.f32.gmra.mxu0 %v8973
  %v9275 = vpop.f32.mrf.mxu0
  %v9276 = vadd.f32 %v9033, %v9275
  %9277 = vmatmul.f32.gmra.mxu0 %v8975
  %v9278 = vpop.f32.mrf.mxu0
  %v9279 = vadd.f32 %v9038, %v9278
  %9280 = vmatmul.f32.gmra.mxu0 %v8977
  %v9281 = vpop.f32.mrf.mxu0
  %v9282 = vadd.f32 %v9043, %v9281
  %9283 = vmatmul.f32.gmra.mxu0 %v8979
  %v9284 = vpop.f32.mrf.mxu0
  %v9285 = vadd.f32 %v9048, %v9284
  %9286 = vmatmul.f32.gmra.mxu0 %v8981
  %v9287 = vpop.f32.mrf.mxu0
  %v9288 = vadd.f32 %v9053, %v9287
  %9289 = vmatmul.f32.gmra.mxu0 %v8983
  %v9290 = vpop.f32.mrf.mxu0
  %v9291 = vadd.f32 %v9058, %v9290
  %9292 = vmatmul.f32.gmra.mxu0 %v8985
  %v9293 = vpop.f32.mrf.mxu0
  %v9294 = vadd.f32 %v9063, %v9293
  %9295 = vmatmul.f32.gmra.mxu0 %v8987
  %v9296 = vpop.f32.mrf.mxu0
  %v9297 = vadd.f32 %v9068, %v9296
  %9298 = vmatmul.f32.gmra.mxu0 %v8989
  %v9299 = vpop.f32.mrf.mxu0
  %v9300 = vadd.f32 %v9073, %v9299
  %9301 = vdwg.mxu0
  %9302 = vmatpush.msra.mxu0 0.0
  %9303 = vmatpush.msra.mxu0 0.0
  %9304 = vmatpush.msra.mxu0 0.0
  %9305 = vmatpush.msra.mxu0 0.0
  %9306 = vmatpush.msra.mxu0 0.0
  %9307 = vmatpush.msra.mxu0 0.0
  %9308 = vmatpush.msra.mxu0 0.0
  %9309 = vmatpush.msra.mxu0 0.0
  %9310 = vmatpush.msra.mxu0 0.0
  %9311 = vmatpush.msra.mxu0 0.0
  %9312 = vmatpush.msra.mxu0 0.0
  %9313 = vmatpush.msra.mxu0 %v9123
  %9314 = vmatpush.msra.mxu0 %v8960
  %9315 = vmatpush.msra.mxu0 %v8958
  %9316 = vmatpush.msra.mxu0 %v8956
  %9317 = vmatpush.msra.mxu0 %v8954
  %9318 = vmatmul.f32.gmra.mxu0 %v9077
  %v9319 = vpop.f32.mrf.mxu0
  %v9320 = vadd.f32 %v9261, %v9319
  %9321 = vmatmul.f32.gmra.mxu0 %v9080
  %v9322 = vpop.f32.mrf.mxu0
  %v9323 = vadd.f32 %v9264, %v9322
  %9324 = vmatmul.f32.gmra.mxu0 %v9083
  %v9325 = vpop.f32.mrf.mxu0
  %v9326 = vadd.f32 %v9267, %v9325
  %9327 = vmatmul.f32.gmra.mxu0 %v9086
  %v9328 = vpop.f32.mrf.mxu0
  %v9329 = vadd.f32 %v9270, %v9328
  %9330 = vmatmul.f32.gmra.mxu0 %v9089
  %v9331 = vpop.f32.mrf.mxu0
  %v9332 = vadd.f32 %v9273, %v9331
  %9333 = vmatmul.f32.gmra.mxu0 %v9092
  %v9334 = vpop.f32.mrf.mxu0
  %v9335 = vadd.f32 %v9276, %v9334
  %9336 = vmatmul.f32.gmra.mxu0 %v9095
  %v9337 = vpop.f32.mrf.mxu0
  %v9338 = vadd.f32 %v9279, %v9337
  %9339 = vmatmul.f32.gmra.mxu0 %v9098
  %v9340 = vpop.f32.mrf.mxu0
  %v9341 = vadd.f32 %v9282, %v9340
  %9342 = vmatmul.f32.gmra.mxu0 %v9101
  %v9343 = vpop.f32.mrf.mxu0
  %v9344 = vadd.f32 %v9285, %v9343
  %9345 = vmatmul.f32.gmra.mxu0 %v9104
  %v9346 = vpop.f32.mrf.mxu0
  %v9347 = vadd.f32 %v9288, %v9346
  %9348 = vmatmul.f32.gmra.mxu0 %v9107
  %v9349 = vpop.f32.mrf.mxu0
  %v9350 = vadd.f32 %v9291, %v9349
  %9351 = vmatmul.f32.gmra.mxu0 %v9110
  %v9352 = vpop.f32.mrf.mxu0
  %v9353 = vadd.f32 %v9294, %v9352
  %9354 = vmatmul.f32.gmra.mxu0 %v9113
  %v9355 = vpop.f32.mrf.mxu0
  %v9356 = vadd.f32 %v9297, %v9355
  %9357 = vmatmul.f32.gmra.mxu0 %v9116
  %v9358 = vpop.f32.mrf.mxu0
  %v9359 = vadd.f32 %v9300, %v9358
  %9360 = vdwg.mxu0
  %v9361 = vmax.f32 %v9202, 0.0
  %v9362 = vmax.f32 %v9320, 0.0
  %v9363 = vmax.f32 %v9205, 0.0
  %v9364 = vmax.f32 %v9323, 0.0
  %v9365 = vmax.f32 %v9208, 0.0
  %v9366 = vmax.f32 %v9326, 0.0
  %v9367 = vmax.f32 %v9211, 0.0
  %v9368 = vmax.f32 %v9329, 0.0
  %v9369 = vmax.f32 %v9214, 0.0
  %v9370 = vmax.f32 %v9332, 0.0
  %v9371 = vmax.f32 %v9217, 0.0
  %v9372 = vmax.f32 %v9335, 0.0
  %v9373 = vmax.f32 %v9220, 0.0
  %v9374 = vmax.f32 %v9338, 0.0
  %v9375 = vmax.f32 %v9223, 0.0
  %v9376 = vmax.f32 %v9341, 0.0
  %v9377 = vmax.f32 %v9226, 0.0
  %v9378 = vmax.f32 %v9344, 0.0
  %v9379 = vmax.f32 %v9229, 0.0
  %v9380 = vmax.f32 %v9347, 0.0
  %v9381 = vmax.f32 %v9232, 0.0
  %v9382 = vmax.f32 %v9350, 0.0
  %v9383 = vmax.f32 %v9235, 0.0
  %v9384 = vmax.f32 %v9353, 0.0
  %v9385 = vmax.f32 %v9238, 0.0
  %v9386 = vmax.f32 %v9356, 0.0
  %v9387 = vmax.f32 %v9241, 0.0
  %v9388 = vmax.f32 %v9359, 0.0
  %v9389 = vld [vmem:[%s13] sm:$0x3]
  %v9391 = vperm.slane %v9389, 0
  %v9392 = vperm.slane %v9389, 1
  %v9395 = vmul.f32 %v9361, %v9391
  %v9396 = vmul.f32 %v9362, %v9392
  %v9397 = vmul.f32 %v9363, %v9391
  %v9398 = vmul.f32 %v9364, %v9392
  %v9399 = vmul.f32 %v9365, %v9391
  %v9400 = vmul.f32 %v9366, %v9392
  %v9401 = vmul.f32 %v9367, %v9391
  %v9402 = vmul.f32 %v9368, %v9392
  %v9403 = vmul.f32 %v9369, %v9391
  %v9404 = vmul.f32 %v9370, %v9392
  %v9405 = vmul.f32 %v9371, %v9391
  %v9406 = vmul.f32 %v9372, %v9392
  %v9407 = vmul.f32 %v9373, %v9391
  %v9408 = vmul.f32 %v9374, %v9392
  %v9409 = vmul.f32 %v9375, %v9391
  %v9410 = vmul.f32 %v9376, %v9392
  %v9411 = vmul.f32 %v9377, %v9391
  %v9412 = vmul.f32 %v9378, %v9392
  %v9413 = vmul.f32 %v9379, %v9391
  %v9414 = vmul.f32 %v9380, %v9392
  %v9415 = vmul.f32 %v9381, %v9391
  %v9416 = vmul.f32 %v9382, %v9392
  %v9417 = vmul.f32 %v9383, %v9391
  %v9418 = vmul.f32 %v9384, %v9392
  %v9419 = vmul.f32 %v9385, %v9391
  %v9420 = vmul.f32 %v9386, %v9392
  %v9421 = vmul.f32 %v9387, %v9391
  %v9422 = vmul.f32 %v9388, %v9392
  %9437 = vrot.lane.b32.xlu0 %v9395, 112
  %v9438 = vpop.permute.xlu0 %9437
  %9439 = vrot.lane.b32.xlu0 %v9397, 112
  %v9440 = vpop.permute.xlu0 %9439
  %9441 = vrot.lane.b32.xlu0 %v9399, 112
  %v9442 = vpop.permute.xlu0 %9441
  %9443 = vrot.lane.b32.xlu0 %v9401, 112
  %v9444 = vpop.permute.xlu0 %9443
  %9445 = vrot.lane.b32.xlu0 %v9403, 112
  %v9446 = vpop.permute.xlu0 %9445
  %9447 = vrot.lane.b32.xlu0 %v9405, 112
  %v9448 = vpop.permute.xlu0 %9447
  %9449 = vrot.lane.b32.xlu0 %v9407, 112
  %v9450 = vpop.permute.xlu0 %9449
  %9451 = vrot.lane.b32.xlu0 %v9409, 112
  %v9452 = vpop.permute.xlu0 %9451
  %9453 = vrot.lane.b32.xlu0 %v9411, 112
  %v9454 = vpop.permute.xlu0 %9453
  %9455 = vrot.lane.b32.xlu0 %v9413, 112
  %v9456 = vpop.permute.xlu0 %9455
  %9457 = vrot.lane.b32.xlu0 %v9415, 112
  %v9458 = vpop.permute.xlu0 %9457
  %9459 = vrot.lane.b32.xlu0 %v9417, 112
  %v9460 = vpop.permute.xlu0 %9459
  %9461 = vrot.lane.b32.xlu0 %v9419, 112
  %v9462 = vpop.permute.xlu0 %9461
  %9463 = vrot.lane.b32.xlu0 %v9421, 112
  %v9464 = vpop.permute.xlu0 %9463
  %9493 = vrot.lane.b32.xlu0 %v9395, 96
  %v9494 = vpop.permute.xlu0 %9493
  %9495 = vrot.lane.b32.xlu0 %v9396, 96
  %v9496 = vpop.permute.xlu0 %9495
  %9497 = vrot.lane.b32.xlu0 %v9397, 96
  %v9498 = vpop.permute.xlu0 %9497
  %9499 = vrot.lane.b32.xlu0 %v9398, 96
  %v9500 = vpop.permute.xlu0 %9499
  %9501 = vrot.lane.b32.xlu0 %v9399, 96
  %v9502 = vpop.permute.xlu0 %9501
  %9503 = vrot.lane.b32.xlu0 %v9400, 96
  %v9504 = vpop.permute.xlu0 %9503
  %9505 = vrot.lane.b32.xlu0 %v9401, 96
  %v9506 = vpop.permute.xlu0 %9505
  %9507 = vrot.lane.b32.xlu0 %v9402, 96
  %v9508 = vpop.permute.xlu0 %9507
  %9509 = vrot.lane.b32.xlu0 %v9403, 96
  %v9510 = vpop.permute.xlu0 %9509
  %9511 = vrot.lane.b32.xlu0 %v9404, 96
  %v9512 = vpop.permute.xlu0 %9511
  %9513 = vrot.lane.b32.xlu0 %v9405, 96
  %v9514 = vpop.permute.xlu0 %9513
  %9515 = vrot.lane.b32.xlu0 %v9406, 96
  %v9516 = vpop.permute.xlu0 %9515
  %9517 = vrot.lane.b32.xlu0 %v9407, 96
  %v9518 = vpop.permute.xlu0 %9517
  %9519 = vrot.lane.b32.xlu0 %v9408, 96
  %v9520 = vpop.permute.xlu0 %9519
  %9521 = vrot.lane.b32.xlu0 %v9409, 96
  %v9522 = vpop.permute.xlu0 %9521
  %9523 = vrot.lane.b32.xlu0 %v9410, 96
  %v9524 = vpop.permute.xlu0 %9523
  %9525 = vrot.lane.b32.xlu0 %v9411, 96
  %v9526 = vpop.permute.xlu0 %9525
  %9527 = vrot.lane.b32.xlu0 %v9412, 96
  %v9528 = vpop.permute.xlu0 %9527
  %9529 = vrot.lane.b32.xlu0 %v9413, 96
  %v9530 = vpop.permute.xlu0 %9529
  %9531 = vrot.lane.b32.xlu0 %v9414, 96
  %v9532 = vpop.permute.xlu0 %9531
  %9533 = vrot.lane.b32.xlu0 %v9415, 96
  %v9534 = vpop.permute.xlu0 %9533
  %9535 = vrot.lane.b32.xlu0 %v9416, 96
  %v9536 = vpop.permute.xlu0 %9535
  %9537 = vrot.lane.b32.xlu0 %v9417, 96
  %v9538 = vpop.permute.xlu0 %9537
  %9539 = vrot.lane.b32.xlu0 %v9418, 96
  %v9540 = vpop.permute.xlu0 %9539
  %9541 = vrot.lane.b32.xlu0 %v9419, 96
  %v9542 = vpop.permute.xlu0 %9541
  %9543 = vrot.lane.b32.xlu0 %v9420, 96
  %v9544 = vpop.permute.xlu0 %9543
  %9545 = vrot.lane.b32.xlu0 %v9421, 96
  %v9546 = vpop.permute.xlu0 %9545
  %9547 = vrot.lane.b32.xlu0 %v9422, 96
  %v9548 = vpop.permute.xlu0 %9547
  %v9549 = vsel %vm382, %v9494, %v9496
  %v9550 = vsel %vm382, %v9498, %v9500
  %v9551 = vsel %vm382, %v9502, %v9504
  %v9552 = vsel %vm382, %v9506, %v9508
  %v9553 = vsel %vm382, %v9510, %v9512
  %v9554 = vsel %vm382, %v9514, %v9516
  %v9555 = vsel %vm382, %v9518, %v9520
  %v9556 = vsel %vm382, %v9522, %v9524
  %v9557 = vsel %vm382, %v9526, %v9528
  %v9558 = vsel %vm382, %v9530, %v9532
  %v9559 = vsel %vm382, %v9534, %v9536
  %v9560 = vsel %vm382, %v9538, %v9540
  %v9561 = vsel %vm382, %v9542, %v9544
  %v9562 = vsel %vm382, %v9546, %v9548
  %v9577 = vld [vmem:[%s14] sm:$0xff]
  %v9578 = vld [vmem:[%s14 + $0x8] sm:$0xff]
  %v9579 = vld [vmem:[%s14 + $0x10] sm:$0xff]
  %v9580 = vld [vmem:[%s14 + $0x18] sm:$0xff]
  %v9581 = vld [vmem:[%s14 + $0x20] sm:$0xff]
  %v9582 = vld [vmem:[%s14 + $0x28] sm:$0xff]
  %v9583 = vld [vmem:[%s14 + $0x30] sm:$0xff]
  %v9584 = vld [vmem:[%s14 + $0x38] sm:$0xff]
  %v9585 = vld [vmem:[%s14 + $0x40] sm:$0xff]
  %v9586 = vld [vmem:[%s14 + $0x48] sm:$0xff]
  %v9587 = vld [vmem:[%s14 + $0x50] sm:$0xff]
  %v9588 = vld [vmem:[%s14 + $0x58] sm:$0xff]
  %v9589 = vld [vmem:[%s14 + $0x60] sm:$0xff]
  %v9590 = vld [vmem:[%s14 + $0x68] sm:$0xff]
  %v9591 = vld [vmem:[%s14 + $0x70] sm:$0xff]
  %v9592 = vld [vmem:[%s14 + $0x78] sm:$0xff]
  %v9593 = vld [vmem:[%s14 + $0x80] sm:$0xff]
  %v9594 = vld [vmem:[%s14 + $0x88] sm:$0xff]
  %v9595 = vld [vmem:[%s14 + $0x90] sm:$0xff]
  %v9596 = vld [vmem:[%s14 + $0x98] sm:$0xff]
  %v9597 = vld [vmem:[%s14 + $0xa0] sm:$0xff]
  %v9598 = vld [vmem:[%s14 + $0xa8] sm:$0xff]
  %v9599 = vld [vmem:[%s14 + $0xb0] sm:$0xff]
  %v9600 = vld [vmem:[%s14 + $0xb8] sm:$0xff]
  %v9601 = vld [vmem:[%s14 + $0xc0] sm:$0xff]
  %v9602 = vld [vmem:[%s14 + $0xc8] sm:$0xff]
  %v9603 = vld [vmem:[%s14 + $0xd0] sm:$0xff]
  %v9604 = vld [vmem:[%s14 + $0xd8] sm:$0xff]
  %v9605 = vld [vmem:[%s14 + $0xe0] sm:$0xff]
  %v9606 = vld [vmem:[%s14 + $0xe8] sm:$0xff]
  %v9607 = vld [vmem:[%s14 + $0xf0] sm:$0xff]
  %v9608 = vld [vmem:[%s14 + $0xf8] sm:$0xff]
  %v9609 = vld [vmem:[%s14 + $0x100] sm:$0xff]
  %v9610 = vld [vmem:[%s14 + $0x108] sm:$0xff]
  %v9611 = vld [vmem:[%s14 + $0x110] sm:$0xff]
  %v9612 = vld [vmem:[%s14 + $0x118] sm:$0xff]
  %v9613 = vld [vmem:[%s15] sm:$0xff]
  %v9614 = vld [vmem:[%s15 + $0x8] sm:$0xff]
  %v9615 = vld [vmem:[%s15 + $0x10] sm:$0xff]
  %v9616 = vld [vmem:[%s15 + $0x18] sm:$0xff]
  %v9617 = vld [vmem:[%s15 + $0x20] sm:$0xff]
  %v9618 = vld [vmem:[%s15 + $0x28] sm:$0xff]
  %v9619 = vld [vmem:[%s15 + $0x30] sm:$0xff]
  %v9620 = vld [vmem:[%s15 + $0x38] sm:$0xff]
  %v9621 = vld [vmem:[%s15 + $0x40] sm:$0xff]
  %v9622 = vld [vmem:[%s15 + $0x48] sm:$0xff]
  %v9623 = vld [vmem:[%s15 + $0x50] sm:$0xff]
  %v9624 = vld [vmem:[%s15 + $0x58] sm:$0xff]
  %9626 = vset.pattern.permute.xlu0 0
  %9627 = vperm.xlu0 %9626, %v9613
  %v9628 = vpop.permute.xlu0 %9627
  %9631 = vset.pattern.permute.xlu0 0
  %9632 = vperm.xlu0 %9631, %v9614
  %v9633 = vpop.permute.xlu0 %9632
  %9636 = vset.pattern.permute.xlu0 0
  %9637 = vperm.xlu0 %9636, %v9615
  %v9638 = vpop.permute.xlu0 %9637
  %9641 = vset.pattern.permute.xlu0 0
  %9642 = vperm.xlu0 %9641, %v9616
  %v9643 = vpop.permute.xlu0 %9642
  %9646 = vset.pattern.permute.xlu0 0
  %9647 = vperm.xlu0 %9646, %v9617
  %v9648 = vpop.permute.xlu0 %9647
  %9651 = vset.pattern.permute.xlu0 0
  %9652 = vperm.xlu0 %9651, %v9618
  %v9653 = vpop.permute.xlu0 %9652
  %9656 = vset.pattern.permute.xlu0 0
  %9657 = vperm.xlu0 %9656, %v9619
  %v9658 = vpop.permute.xlu0 %9657
  %9661 = vset.pattern.permute.xlu0 0
  %9662 = vperm.xlu0 %9661, %v9620
  %v9663 = vpop.permute.xlu0 %9662
  %9666 = vset.pattern.permute.xlu0 0
  %9667 = vperm.xlu0 %9666, %v9621
  %v9668 = vpop.permute.xlu0 %9667
  %9671 = vset.pattern.permute.xlu0 0
  %9672 = vperm.xlu0 %9671, %v9622
  %v9673 = vpop.permute.xlu0 %9672
  %9676 = vset.pattern.permute.xlu0 0
  %9677 = vperm.xlu0 %9676, %v9623
  %v9678 = vpop.permute.xlu0 %9677
  %9681 = vset.pattern.permute.xlu0 0
  %9682 = vperm.xlu0 %9681, %v9624
  %v9683 = vpop.permute.xlu0 %9682
  %v9686 = vsel %vm4331, %v9579, 0
  %v9689 = vsel %vm4331, %v9582, 0
  %v9692 = vsel %vm4331, %v9585, 0
  %v9695 = vsel %vm4331, %v9588, 0
  %v9698 = vsel %vm4331, %v9591, 0
  %v9701 = vsel %vm4331, %v9594, 0
  %v9704 = vsel %vm4331, %v9597, 0
  %v9707 = vsel %vm4331, %v9600, 0
  %v9710 = vsel %vm4331, %v9603, 0
  %v9713 = vsel %vm4331, %v9606, 0
  %v9716 = vsel %vm4331, %v9609, 0
  %v9719 = vsel %vm4331, %v9612, 0
  %9721 = vmatpush.msra.mxu0 %v9440
  %9722 = vmatpush.msra.mxu0 %v9438
  %9723 = vmatpush.msra.mxu0 %v9421
  %9724 = vmatpush.msra.mxu0 %v9419
  %9725 = vmatpush.msra.mxu0 %v9417
  %9726 = vmatpush.msra.mxu0 %v9415
  %9727 = vmatpush.msra.mxu0 %v9413
  %9728 = vmatpush.msra.mxu0 %v9411
  %9729 = vmatpush.msra.mxu0 %v9409
  %9730 = vmatpush.msra.mxu0 %v9407
  %9731 = vmatpush.msra.mxu0 %v9405
  %9732 = vmatpush.msra.mxu0 %v9403
  %9733 = vmatpush.msra.mxu0 %v9401
  %9734 = vmatpush.msra.mxu0 %v9399
  %9735 = vmatpush.msra.mxu0 %v9397
  %9736 = vmatpush.msra.mxu0 %v9395
  %9737 = vmatmul.f32.gmra.mxu0 %v9577
  %v9738 = vpop.f32.mrf.mxu0
  %v9739 = vadd.f32 %v9628, %v9738
  %9740 = vmatmul.f32.gmra.mxu0 %v9580
  %v9741 = vpop.f32.mrf.mxu0
  %v9742 = vadd.f32 %v9633, %v9741
  %9743 = vmatmul.f32.gmra.mxu0 %v9583
  %v9744 = vpop.f32.mrf.mxu0
  %v9745 = vadd.f32 %v9638, %v9744
  %9746 = vmatmul.f32.gmra.mxu0 %v9586
  %v9747 = vpop.f32.mrf.mxu0
  %v9748 = vadd.f32 %v9643, %v9747
  %9749 = vmatmul.f32.gmra.mxu0 %v9589
  %v9750 = vpop.f32.mrf.mxu0
  %v9751 = vadd.f32 %v9648, %v9750
  %9752 = vmatmul.f32.gmra.mxu0 %v9592
  %v9753 = vpop.f32.mrf.mxu0
  %v9754 = vadd.f32 %v9653, %v9753
  %9755 = vmatmul.f32.gmra.mxu0 %v9595
  %v9756 = vpop.f32.mrf.mxu0
  %v9757 = vadd.f32 %v9658, %v9756
  %9758 = vmatmul.f32.gmra.mxu0 %v9598
  %v9759 = vpop.f32.mrf.mxu0
  %v9760 = vadd.f32 %v9663, %v9759
  %9761 = vmatmul.f32.gmra.mxu0 %v9601
  %v9762 = vpop.f32.mrf.mxu0
  %v9763 = vadd.f32 %v9668, %v9762
  %9764 = vmatmul.f32.gmra.mxu0 %v9604
  %v9765 = vpop.f32.mrf.mxu0
  %v9766 = vadd.f32 %v9673, %v9765
  %9767 = vmatmul.f32.gmra.mxu0 %v9607
  %v9768 = vpop.f32.mrf.mxu0
  %v9769 = vadd.f32 %v9678, %v9768
  %9770 = vmatmul.f32.gmra.mxu0 %v9610
  %v9771 = vpop.f32.mrf.mxu0
  %v9772 = vadd.f32 %v9683, %v9771
  %9773 = vdwg.mxu0
  %9774 = vmatpush.msra.mxu0 %v9552
  %9775 = vmatpush.msra.mxu0 %v9551
  %9776 = vmatpush.msra.mxu0 %v9550
  %9777 = vmatpush.msra.mxu0 %v9549
  %9778 = vmatpush.msra.mxu0 %v9464
  %9779 = vmatpush.msra.mxu0 %v9462
  %9780 = vmatpush.msra.mxu0 %v9460
  %9781 = vmatpush.msra.mxu0 %v9458
  %9782 = vmatpush.msra.mxu0 %v9456
  %9783 = vmatpush.msra.mxu0 %v9454
  %9784 = vmatpush.msra.mxu0 %v9452
  %9785 = vmatpush.msra.mxu0 %v9450
  %9786 = vmatpush.msra.mxu0 %v9448
  %9787 = vmatpush.msra.mxu0 %v9446
  %9788 = vmatpush.msra.mxu0 %v9444
  %9789 = vmatpush.msra.mxu0 %v9442
  %9790 = vmatmul.f32.gmra.mxu0 %v9578
  %v9791 = vpop.f32.mrf.mxu0
  %v9792 = vadd.f32 %v9739, %v9791
  %9793 = vmatmul.f32.gmra.mxu0 %v9581
  %v9794 = vpop.f32.mrf.mxu0
  %v9795 = vadd.f32 %v9742, %v9794
  %9796 = vmatmul.f32.gmra.mxu0 %v9584
  %v9797 = vpop.f32.mrf.mxu0
  %v9798 = vadd.f32 %v9745, %v9797
  %9799 = vmatmul.f32.gmra.mxu0 %v9587
  %v9800 = vpop.f32.mrf.mxu0
  %v9801 = vadd.f32 %v9748, %v9800
  %9802 = vmatmul.f32.gmra.mxu0 %v9590
  %v9803 = vpop.f32.mrf.mxu0
  %v9804 = vadd.f32 %v9751, %v9803
  %9805 = vmatmul.f32.gmra.mxu0 %v9593
  %v9806 = vpop.f32.mrf.mxu0
  %v9807 = vadd.f32 %v9754, %v9806
  %9808 = vmatmul.f32.gmra.mxu0 %v9596
  %v9809 = vpop.f32.mrf.mxu0
  %v9810 = vadd.f32 %v9757, %v9809
  %9811 = vmatmul.f32.gmra.mxu0 %v9599
  %v9812 = vpop.f32.mrf.mxu0
  %v9813 = vadd.f32 %v9760, %v9812
  %9814 = vmatmul.f32.gmra.mxu0 %v9602
  %v9815 = vpop.f32.mrf.mxu0
  %v9816 = vadd.f32 %v9763, %v9815
  %9817 = vmatmul.f32.gmra.mxu0 %v9605
  %v9818 = vpop.f32.mrf.mxu0
  %v9819 = vadd.f32 %v9766, %v9818
  %9820 = vmatmul.f32.gmra.mxu0 %v9608
  %v9821 = vpop.f32.mrf.mxu0
  %v9822 = vadd.f32 %v9769, %v9821
  %9823 = vmatmul.f32.gmra.mxu0 %v9611
  %v9824 = vpop.f32.mrf.mxu0
  %v9825 = vadd.f32 %v9772, %v9824
  %9826 = vdwg.mxu0
  %9827 = vmatpush.msra.mxu0 0.0
  %9828 = vmatpush.msra.mxu0 0.0
  %9829 = vmatpush.msra.mxu0 0.0
  %9830 = vmatpush.msra.mxu0 0.0
  %9831 = vmatpush.msra.mxu0 0.0
  %9832 = vmatpush.msra.mxu0 0.0
  %9833 = vmatpush.msra.mxu0 %v9562
  %9834 = vmatpush.msra.mxu0 %v9561
  %9835 = vmatpush.msra.mxu0 %v9560
  %9836 = vmatpush.msra.mxu0 %v9559
  %9837 = vmatpush.msra.mxu0 %v9558
  %9838 = vmatpush.msra.mxu0 %v9557
  %9839 = vmatpush.msra.mxu0 %v9556
  %9840 = vmatpush.msra.mxu0 %v9555
  %9841 = vmatpush.msra.mxu0 %v9554
  %9842 = vmatpush.msra.mxu0 %v9553
  %9843 = vmatmul.f32.gmra.mxu0 %v9686
  %v9844 = vpop.f32.mrf.mxu0
  %v9845 = vadd.f32 %v9792, %v9844
  %9846 = vmatmul.f32.gmra.mxu0 %v9689
  %v9847 = vpop.f32.mrf.mxu0
  %v9848 = vadd.f32 %v9795, %v9847
  %9849 = vmatmul.f32.gmra.mxu0 %v9692
  %v9850 = vpop.f32.mrf.mxu0
  %v9851 = vadd.f32 %v9798, %v9850
  %9852 = vmatmul.f32.gmra.mxu0 %v9695
  %v9853 = vpop.f32.mrf.mxu0
  %v9854 = vadd.f32 %v9801, %v9853
  %9855 = vmatmul.f32.gmra.mxu0 %v9698
  %v9856 = vpop.f32.mrf.mxu0
  %v9857 = vadd.f32 %v9804, %v9856
  %9858 = vmatmul.f32.gmra.mxu0 %v9701
  %v9859 = vpop.f32.mrf.mxu0
  %v9860 = vadd.f32 %v9807, %v9859
  %9861 = vmatmul.f32.gmra.mxu0 %v9704
  %v9862 = vpop.f32.mrf.mxu0
  %v9863 = vadd.f32 %v9810, %v9862
  %9864 = vmatmul.f32.gmra.mxu0 %v9707
  %v9865 = vpop.f32.mrf.mxu0
  %v9866 = vadd.f32 %v9813, %v9865
  %9867 = vmatmul.f32.gmra.mxu0 %v9710
  %v9868 = vpop.f32.mrf.mxu0
  %v9869 = vadd.f32 %v9816, %v9868
  %9870 = vmatmul.f32.gmra.mxu0 %v9713
  %v9871 = vpop.f32.mrf.mxu0
  %v9872 = vadd.f32 %v9819, %v9871
  %9873 = vmatmul.f32.gmra.mxu0 %v9716
  %v9874 = vpop.f32.mrf.mxu0
  %v9875 = vadd.f32 %v9822, %v9874
  %9876 = vmatmul.f32.gmra.mxu0 %v9719
  %v9877 = vpop.f32.mrf.mxu0
  %v9878 = vadd.f32 %v9825, %v9877
  %9879 = vdwg.mxu0
  %v9880 = vmax.f32 %v9845, 0.0
  %v9881 = vmax.f32 %v9848, 0.0
  %v9882 = vmax.f32 %v9851, 0.0
  %v9883 = vmax.f32 %v9854, 0.0
  %v9884 = vmax.f32 %v9857, 0.0
  %v9885 = vmax.f32 %v9860, 0.0
  %v9886 = vmax.f32 %v9863, 0.0
  %v9887 = vmax.f32 %v9866, 0.0
  %v9888 = vmax.f32 %v9869, 0.0
  %v9889 = vmax.f32 %v9872, 0.0
  %v9890 = vmax.f32 %v9875, 0.0
  %v9891 = vmax.f32 %v9878, 0.0
  %v9892 = vld [vmem:[%s16] sm:$0x1]
  %v9894 = vperm.slane %v9892, 0
  %v9896 = vmul.f32 %v9880, %v9894
  %v9897 = vmul.f32 %v9881, %v9894
  %v9898 = vmul.f32 %v9882, %v9894
  %v9899 = vmul.f32 %v9883, %v9894
  %v9900 = vmul.f32 %v9884, %v9894
  %v9901 = vmul.f32 %v9885, %v9894
  %v9902 = vmul.f32 %v9886, %v9894
  %v9903 = vmul.f32 %v9887, %v9894
  %v9904 = vmul.f32 %v9888, %v9894
  %v9905 = vmul.f32 %v9889, %v9894
  %v9906 = vmul.f32 %v9890, %v9894
  %v9907 = vmul.f32 %v9891, %v9894
  %9920 = vrot.lane.b32.xlu0 %v9896, 112
  %v9921 = vpop.permute.xlu0 %9920
  %9922 = vrot.lane.b32.xlu0 %v9897, 112
  %v9923 = vpop.permute.xlu0 %9922
  %9924 = vrot.lane.b32.xlu0 %v9898, 112
  %v9925 = vpop.permute.xlu0 %9924
  %9926 = vrot.lane.b32.xlu0 %v9899, 112
  %v9927 = vpop.permute.xlu0 %9926
  %9928 = vrot.lane.b32.xlu0 %v9900, 112
  %v9929 = vpop.permute.xlu0 %9928
  %9930 = vrot.lane.b32.xlu0 %v9901, 112
  %v9931 = vpop.permute.xlu0 %9930
  %9932 = vrot.lane.b32.xlu0 %v9902, 112
  %v9933 = vpop.permute.xlu0 %9932
  %9934 = vrot.lane.b32.xlu0 %v9903, 112
  %v9935 = vpop.permute.xlu0 %9934
  %9936 = vrot.lane.b32.xlu0 %v9904, 112
  %v9937 = vpop.permute.xlu0 %9936
  %9938 = vrot.lane.b32.xlu0 %v9905, 112
  %v9939 = vpop.permute.xlu0 %9938
  %9940 = vrot.lane.b32.xlu0 %v9906, 112
  %v9941 = vpop.permute.xlu0 %9940
  %9942 = vrot.lane.b32.xlu0 %v9907, 112
  %v9943 = vpop.permute.xlu0 %9942
  %9956 = vrot.lane.b32.xlu0 %v9896, 96
  %v9957 = vpop.permute.xlu0 %9956
  %9958 = vrot.lane.b32.xlu0 %v9897, 96
  %v9959 = vpop.permute.xlu0 %9958
  %9960 = vrot.lane.b32.xlu0 %v9898, 96
  %v9961 = vpop.permute.xlu0 %9960
  %9962 = vrot.lane.b32.xlu0 %v9899, 96
  %v9963 = vpop.permute.xlu0 %9962
  %9964 = vrot.lane.b32.xlu0 %v9900, 96
  %v9965 = vpop.permute.xlu0 %9964
  %9966 = vrot.lane.b32.xlu0 %v9901, 96
  %v9967 = vpop.permute.xlu0 %9966
  %9968 = vrot.lane.b32.xlu0 %v9902, 96
  %v9969 = vpop.permute.xlu0 %9968
  %9970 = vrot.lane.b32.xlu0 %v9903, 96
  %v9971 = vpop.permute.xlu0 %9970
  %9972 = vrot.lane.b32.xlu0 %v9904, 96
  %v9973 = vpop.permute.xlu0 %9972
  %9974 = vrot.lane.b32.xlu0 %v9905, 96
  %v9975 = vpop.permute.xlu0 %9974
  %9976 = vrot.lane.b32.xlu0 %v9906, 96
  %v9977 = vpop.permute.xlu0 %9976
  %9978 = vrot.lane.b32.xlu0 %v9907, 96
  %v9979 = vpop.permute.xlu0 %9978
  %v9992 = vld [vmem:[%s17] sm:$0xff]
  %v9993 = vld [vmem:[%s17 + $0x8] sm:$0xff]
  %v9994 = vld [vmem:[%s17 + $0x10] sm:$0xff]
  %v9995 = vld [vmem:[%s17 + $0x18] sm:$0xff]
  %v9996 = vld [vmem:[%s17 + $0x20] sm:$0xff]
  %v9997 = vld [vmem:[%s17 + $0x28] sm:$0xff]
  %v9998 = vld [vmem:[%s17 + $0x30] sm:$0xff]
  %v9999 = vld [vmem:[%s17 + $0x38] sm:$0xff]
  %v10000 = vld [vmem:[%s17 + $0x40] sm:$0xff]
  %v10001 = vld [vmem:[%s17 + $0x48] sm:$0xff]
  %v10002 = vld [vmem:[%s17 + $0x50] sm:$0xff]
  %v10003 = vld [vmem:[%s17 + $0x58] sm:$0xff]
  %v10004 = vld [vmem:[%s17 + $0x60] sm:$0xff]
  %v10005 = vld [vmem:[%s17 + $0x68] sm:$0xff]
  %v10006 = vld [vmem:[%s17 + $0x70] sm:$0xff]
  %v10007 = vld [vmem:[%s17 + $0x78] sm:$0xff]
  %v10008 = vld [vmem:[%s17 + $0x80] sm:$0xff]
  %v10009 = vld [vmem:[%s17 + $0x88] sm:$0xff]
  %v10010 = vld [vmem:[%s17 + $0x90] sm:$0xff]
  %v10011 = vld [vmem:[%s17 + $0x98] sm:$0xff]
  %v10012 = vld [vmem:[%s17 + $0xa0] sm:$0xff]
  %v10013 = vld [vmem:[%s17 + $0xa8] sm:$0xff]
  %v10014 = vld [vmem:[%s17 + $0xb0] sm:$0xff]
  %v10015 = vld [vmem:[%s17 + $0xb8] sm:$0xff]
  %v10016 = vld [vmem:[%s17 + $0xc0] sm:$0xff]
  %v10017 = vld [vmem:[%s17 + $0xc8] sm:$0xff]
  %v10018 = vld [vmem:[%s17 + $0xd0] sm:$0xff]
  %v10019 = vld [vmem:[%s18] sm:$0xff]
  %v10020 = vld [vmem:[%s18 + $0x8] sm:$0xff]
  %v10021 = vld [vmem:[%s18 + $0x10] sm:$0xff]
  %v10022 = vld [vmem:[%s18 + $0x18] sm:$0xff]
  %v10023 = vld [vmem:[%s18 + $0x20] sm:$0xff]
  %v10024 = vld [vmem:[%s18 + $0x28] sm:$0xff]
  %v10025 = vld [vmem:[%s18 + $0x30] sm:$0xff]
  %v10026 = vld [vmem:[%s18 + $0x38] sm:$0xff]
  %v10027 = vld [vmem:[%s18 + $0x40] sm:$0xff]
  %10029 = vset.pattern.permute.xlu0 0
  %10030 = vperm.xlu0 %10029, %v10019
  %v10031 = vpop.permute.xlu0 %10030
  %10034 = vset.pattern.permute.xlu0 0
  %10035 = vperm.xlu0 %10034, %v10020
  %v10036 = vpop.permute.xlu0 %10035
  %10039 = vset.pattern.permute.xlu0 0
  %10040 = vperm.xlu0 %10039, %v10021
  %v10041 = vpop.permute.xlu0 %10040
  %10044 = vset.pattern.permute.xlu0 0
  %10045 = vperm.xlu0 %10044, %v10022
  %v10046 = vpop.permute.xlu0 %10045
  %10049 = vset.pattern.permute.xlu0 0
  %10050 = vperm.xlu0 %10049, %v10023
  %v10051 = vpop.permute.xlu0 %10050
  %10054 = vset.pattern.permute.xlu0 0
  %10055 = vperm.xlu0 %10054, %v10024
  %v10056 = vpop.permute.xlu0 %10055
  %10059 = vset.pattern.permute.xlu0 0
  %10060 = vperm.xlu0 %10059, %v10025
  %v10061 = vpop.permute.xlu0 %10060
  %10064 = vset.pattern.permute.xlu0 0
  %10065 = vperm.xlu0 %10064, %v10026
  %v10066 = vpop.permute.xlu0 %10065
  %10069 = vset.pattern.permute.xlu0 0
  %10070 = vperm.xlu0 %10069, %v10027
  %v10071 = vpop.permute.xlu0 %10070
  %vm10073 = vcmask 261120
  %v10075 = vsel %vm10073, %v9994, 0
  %v10078 = vsel %vm10073, %v9997, 0
  %v10081 = vsel %vm10073, %v10000, 0
  %v10084 = vsel %vm10073, %v10003, 0
  %v10087 = vsel %vm10073, %v10006, 0
  %v10090 = vsel %vm10073, %v10009, 0
  %v10093 = vsel %vm10073, %v10012, 0
  %v10096 = vsel %vm10073, %v10015, 0
  %v10099 = vsel %vm10073, %v10018, 0
  %10101 = vmatpush.msra.mxu0 %v9927
  %10102 = vmatpush.msra.mxu0 %v9925
  %10103 = vmatpush.msra.mxu0 %v9923
  %10104 = vmatpush.msra.mxu0 %v9921
  %10105 = vmatpush.msra.mxu0 %v9907
  %10106 = vmatpush.msra.mxu0 %v9906
  %10107 = vmatpush.msra.mxu0 %v9905
  %10108 = vmatpush.msra.mxu0 %v9904
  %10109 = vmatpush.msra.mxu0 %v9903
  %10110 = vmatpush.msra.mxu0 %v9902
  %10111 = vmatpush.msra.mxu0 %v9901
  %10112 = vmatpush.msra.mxu0 %v9900
  %10113 = vmatpush.msra.mxu0 %v9899
  %10114 = vmatpush.msra.mxu0 %v9898
  %10115 = vmatpush.msra.mxu0 %v9897
  %10116 = vmatpush.msra.mxu0 %v9896
  %10117 = vmatmul.f32.gmra.mxu0 %v9992
  %v10118 = vpop.f32.mrf.mxu0
  %v10119 = vadd.f32 %v10031, %v10118
  %10120 = vmatmul.f32.gmra.mxu0 %v9995
  %v10121 = vpop.f32.mrf.mxu0
  %v10122 = vadd.f32 %v10036, %v10121
  %10123 = vmatmul.f32.gmra.mxu0 %v9998
  %v10124 = vpop.f32.mrf.mxu0
  %v10125 = vadd.f32 %v10041, %v10124
  %10126 = vmatmul.f32.gmra.mxu0 %v10001
  %v10127 = vpop.f32.mrf.mxu0
  %v10128 = vadd.f32 %v10046, %v10127
  %10129 = vmatmul.f32.gmra.mxu0 %v10004
  %v10130 = vpop.f32.mrf.mxu0
  %v10131 = vadd.f32 %v10051, %v10130
  %10132 = vmatmul.f32.gmra.mxu0 %v10007
  %v10133 = vpop.f32.mrf.mxu0
  %v10134 = vadd.f32 %v10056, %v10133
  %10135 = vmatmul.f32.gmra.mxu0 %v10010
  %v10136 = vpop.f32.mrf.mxu0
  %v10137 = vadd.f32 %v10061, %v10136
  %10138 = vmatmul.f32.gmra.mxu0 %v10013
  %v10139 = vpop.f32.mrf.mxu0
  %v10140 = vadd.f32 %v10066, %v10139
  %10141 = vmatmul.f32.gmra.mxu0 %v10016
  %v10142 = vpop.f32.mrf.mxu0
  %v10143 = vadd.f32 %v10071, %v10142
  %10144 = vdwg.mxu0
  %10145 = vmatpush.msra.mxu0 %v9971
  %10146 = vmatpush.msra.mxu0 %v9969
  %10147 = vmatpush.msra.mxu0 %v9967
  %10148 = vmatpush.msra.mxu0 %v9965
  %10149 = vmatpush.msra.mxu0 %v9963
  %10150 = vmatpush.msra.mxu0 %v9961
  %10151 = vmatpush.msra.mxu0 %v9959
  %10152 = vmatpush.msra.mxu0 %v9957
  %10153 = vmatpush.msra.mxu0 %v9943
  %10154 = vmatpush.msra.mxu0 %v9941
  %10155 = vmatpush.msra.mxu0 %v9939
  %10156 = vmatpush.msra.mxu0 %v9937
  %10157 = vmatpush.msra.mxu0 %v9935
  %10158 = vmatpush.msra.mxu0 %v9933
  %10159 = vmatpush.msra.mxu0 %v9931
  %10160 = vmatpush.msra.mxu0 %v9929
  %10161 = vmatmul.f32.gmra.mxu0 %v9993
  %v10162 = vpop.f32.mrf.mxu0
  %v10163 = vadd.f32 %v10119, %v10162
  %10164 = vmatmul.f32.gmra.mxu0 %v9996
  %v10165 = vpop.f32.mrf.mxu0
  %v10166 = vadd.f32 %v10122, %v10165
  %10167 = vmatmul.f32.gmra.mxu0 %v9999
  %v10168 = vpop.f32.mrf.mxu0
  %v10169 = vadd.f32 %v10125, %v10168
  %10170 = vmatmul.f32.gmra.mxu0 %v10002
  %v10171 = vpop.f32.mrf.mxu0
  %v10172 = vadd.f32 %v10128, %v10171
  %10173 = vmatmul.f32.gmra.mxu0 %v10005
  %v10174 = vpop.f32.mrf.mxu0
  %v10175 = vadd.f32 %v10131, %v10174
  %10176 = vmatmul.f32.gmra.mxu0 %v10008
  %v10177 = vpop.f32.mrf.mxu0
  %v10178 = vadd.f32 %v10134, %v10177
  %10179 = vmatmul.f32.gmra.mxu0 %v10011
  %v10180 = vpop.f32.mrf.mxu0
  %v10181 = vadd.f32 %v10137, %v10180
  %10182 = vmatmul.f32.gmra.mxu0 %v10014
  %v10183 = vpop.f32.mrf.mxu0
  %v10184 = vadd.f32 %v10140, %v10183
  %10185 = vmatmul.f32.gmra.mxu0 %v10017
  %v10186 = vpop.f32.mrf.mxu0
  %v10187 = vadd.f32 %v10143, %v10186
  %10188 = vdwg.mxu0
  %10189 = vmatpush.msra.mxu0 0.0
  %10190 = vmatpush.msra.mxu0 0.0
  %10191 = vmatpush.msra.mxu0 0.0
  %10192 = vmatpush.msra.mxu0 0.0
  %10193 = vmatpush.msra.mxu0 0.0
  %10194 = vmatpush.msra.mxu0 0.0
  %10195 = vmatpush.msra.mxu0 0.0
  %10196 = vmatpush.msra.mxu0 0.0
  %10197 = vmatpush.msra.mxu0 0.0
  %10198 = vmatpush.msra.mxu0 0.0
  %10199 = vmatpush.msra.mxu0 0.0
  %10200 = vmatpush.msra.mxu0 0.0
  %10201 = vmatpush.msra.mxu0 %v9979
  %10202 = vmatpush.msra.mxu0 %v9977
  %10203 = vmatpush.msra.mxu0 %v9975
  %10204 = vmatpush.msra.mxu0 %v9973
  %10205 = vmatmul.f32.gmra.mxu0 %v10075
  %v10206 = vpop.f32.mrf.mxu0
  %v10207 = vadd.f32 %v10163, %v10206
  %10208 = vmatmul.f32.gmra.mxu0 %v10078
  %v10209 = vpop.f32.mrf.mxu0
  %v10210 = vadd.f32 %v10166, %v10209
  %10211 = vmatmul.f32.gmra.mxu0 %v10081
  %v10212 = vpop.f32.mrf.mxu0
  %v10213 = vadd.f32 %v10169, %v10212
  %10214 = vmatmul.f32.gmra.mxu0 %v10084
  %v10215 = vpop.f32.mrf.mxu0
  %v10216 = vadd.f32 %v10172, %v10215
  %10217 = vmatmul.f32.gmra.mxu0 %v10087
  %v10218 = vpop.f32.mrf.mxu0
  %v10219 = vadd.f32 %v10175, %v10218
  %10220 = vmatmul.f32.gmra.mxu0 %v10090
  %v10221 = vpop.f32.mrf.mxu0
  %v10222 = vadd.f32 %v10178, %v10221
  %10223 = vmatmul.f32.gmra.mxu0 %v10093
  %v10224 = vpop.f32.mrf.mxu0
  %v10225 = vadd.f32 %v10181, %v10224
  %10226 = vmatmul.f32.gmra.mxu0 %v10096
  %v10227 = vpop.f32.mrf.mxu0
  %v10228 = vadd.f32 %v10184, %v10227
  %10229 = vmatmul.f32.gmra.mxu0 %v10099
  %v10230 = vpop.f32.mrf.mxu0
  %v10231 = vadd.f32 %v10187, %v10230
  %10232 = vdwg.mxu0
  %v10233 = vmax.f32 %v10207, 0.0
  %v10234 = vmax.f32 %v10210, 0.0
  %v10235 = vmax.f32 %v10213, 0.0
  %v10236 = vmax.f32 %v10216, 0.0
  %v10237 = vmax.f32 %v10219, 0.0
  %v10238 = vmax.f32 %v10222, 0.0
  %v10239 = vmax.f32 %v10225, 0.0
  %v10240 = vmax.f32 %v10228, 0.0
  %v10241 = vmax.f32 %v10231, 0.0
  %v10242 = vld [vmem:[%s19] sm:$0x1]
  %v10244 = vperm.slane %v10242, 0
  %v10246 = vmul.f32 %v10233, %v10244
  %v10247 = vmul.f32 %v10234, %v10244
  %v10248 = vmul.f32 %v10235, %v10244
  %v10249 = vmul.f32 %v10236, %v10244
  %v10250 = vmul.f32 %v10237, %v10244
  %v10251 = vmul.f32 %v10238, %v10244
  %v10252 = vmul.f32 %v10239, %v10244
  %v10253 = vmul.f32 %v10240, %v10244
  %v10254 = vmul.f32 %v10241, %v10244
  %10264 = vrot.lane.b32.xlu0 %v10246, 112
  %v10265 = vpop.permute.xlu0 %10264
  %10266 = vrot.lane.b32.xlu0 %v10247, 112
  %v10267 = vpop.permute.xlu0 %10266
  %10268 = vrot.lane.b32.xlu0 %v10248, 112
  %v10269 = vpop.permute.xlu0 %10268
  %10270 = vrot.lane.b32.xlu0 %v10249, 112
  %v10271 = vpop.permute.xlu0 %10270
  %10272 = vrot.lane.b32.xlu0 %v10250, 112
  %v10273 = vpop.permute.xlu0 %10272
  %10274 = vrot.lane.b32.xlu0 %v10251, 112
  %v10275 = vpop.permute.xlu0 %10274
  %10276 = vrot.lane.b32.xlu0 %v10252, 112
  %v10277 = vpop.permute.xlu0 %10276
  %10278 = vrot.lane.b32.xlu0 %v10253, 112
  %v10279 = vpop.permute.xlu0 %10278
  %10280 = vrot.lane.b32.xlu0 %v10254, 112
  %v10281 = vpop.permute.xlu0 %10280
  %10291 = vrot.lane.b32.xlu0 %v10246, 96
  %v10292 = vpop.permute.xlu0 %10291
  %10293 = vrot.lane.b32.xlu0 %v10247, 96
  %v10294 = vpop.permute.xlu0 %10293
  %10295 = vrot.lane.b32.xlu0 %v10248, 96
  %v10296 = vpop.permute.xlu0 %10295
  %10297 = vrot.lane.b32.xlu0 %v10249, 96
  %v10298 = vpop.permute.xlu0 %10297
  %10299 = vrot.lane.b32.xlu0 %v10250, 96
  %v10300 = vpop.permute.xlu0 %10299
  %10301 = vrot.lane.b32.xlu0 %v10251, 96
  %v10302 = vpop.permute.xlu0 %10301
  %10303 = vrot.lane.b32.xlu0 %v10252, 96
  %v10304 = vpop.permute.xlu0 %10303
  %10305 = vrot.lane.b32.xlu0 %v10253, 96
  %v10306 = vpop.permute.xlu0 %10305
  %10307 = vrot.lane.b32.xlu0 %v10254, 96
  %v10308 = vpop.permute.xlu0 %10307
  %v10318 = vld [vmem:[%s20] sm:$0xff]
  %v10319 = vld [vmem:[%s20 + $0x8] sm:$0xff]
  %v10320 = vld [vmem:[%s20 + $0x10] sm:$0xff]
  %v10321 = vld [vmem:[%s20 + $0x18] sm:$0xff]
  %v10322 = vld [vmem:[%s20 + $0x20] sm:$0xff]
  %v10323 = vld [vmem:[%s20 + $0x28] sm:$0xff]
  %v10324 = vld [vmem:[%s20 + $0x30] sm:$0xff]
  %v10325 = vld [vmem:[%s20 + $0x38] sm:$0xff]
  %v10326 = vld [vmem:[%s20 + $0x40] sm:$0xff]
  %v10327 = vld [vmem:[%s20 + $0x48] sm:$0xff]
  %v10328 = vld [vmem:[%s20 + $0x50] sm:$0xff]
  %v10329 = vld [vmem:[%s20 + $0x58] sm:$0xff]
  %v10330 = vld [vmem:[%s20 + $0x60] sm:$0x3]
  %v10331 = vld [vmem:[%s20 + $0x68] sm:$0x3]
  %v10332 = vld [vmem:[%s21] sm:$0xff]
  %v10333 = vld [vmem:[%s21 + $0x8] sm:$0xff]
  %v10334 = vld [vmem:[%s21 + $0x10] sm:$0xff]
  %v10335 = vld [vmem:[%s21 + $0x18] sm:$0xff]
  %v10336 = vld [vmem:[%s21 + $0x20] sm:$0xff]
  %v10337 = vld [vmem:[%s21 + $0x28] sm:$0xff]
  %v10338 = vld [vmem:[%s21 + $0x30] sm:$0x3]
  %10340 = vset.pattern.permute.xlu0 0
  %10341 = vperm.xlu0 %10340, %v10332
  %v10342 = vpop.permute.xlu0 %10341
  %10345 = vset.pattern.permute.xlu0 0
  %10346 = vperm.xlu0 %10345, %v10333
  %v10347 = vpop.permute.xlu0 %10346
  %10350 = vset.pattern.permute.xlu0 0
  %10351 = vperm.xlu0 %10350, %v10334
  %v10352 = vpop.permute.xlu0 %10351
  %10355 = vset.pattern.permute.xlu0 0
  %10356 = vperm.xlu0 %10355, %v10335
  %v10357 = vpop.permute.xlu0 %10356
  %10360 = vset.pattern.permute.xlu0 0
  %10361 = vperm.xlu0 %10360, %v10336
  %v10362 = vpop.permute.xlu0 %10361
  %10365 = vset.pattern.permute.xlu0 0
  %10366 = vperm.xlu0 %10365, %v10337
  %v10367 = vpop.permute.xlu0 %10366
  %10370 = vset.pattern.permute.xlu0 0
  %10371 = vperm.xlu0 %10370, %v10338
  %v10372 = vpop.permute.xlu0 %10371
  %vm10374 = vcmask 719872
  %v10376 = vsel %vm10374, %v10319, 0
  %v10379 = vsel %vm10374, %v10321, 0
  %v10382 = vsel %vm10374, %v10323, 0
  %v10385 = vsel %vm10374, %v10325, 0
  %v10388 = vsel %vm10374, %v10327, 0
  %v10391 = vsel %vm10374, %v10329, 0
  %v10394 = vsel %vm10374, %v10331, 0
  %10396 = vmatpush.msra.mxu0 %v10277
  %10397 = vmatpush.msra.mxu0 %v10275
  %10398 = vmatpush.msra.mxu0 %v10273
  %10399 = vmatpush.msra.mxu0 %v10271
  %10400 = vmatpush.msra.mxu0 %v10269
  %10401 = vmatpush.msra.mxu0 %v10267
  %10402 = vmatpush.msra.mxu0 %v10265
  %10403 = vmatpush.msra.mxu0 %v10254
  %10404 = vmatpush.msra.mxu0 %v10253
  %10405 = vmatpush.msra.mxu0 %v10252
  %10406 = vmatpush.msra.mxu0 %v10251
  %10407 = vmatpush.msra.mxu0 %v10250
  %10408 = vmatpush.msra.mxu0 %v10249
  %10409 = vmatpush.msra.mxu0 %v10248
  %10410 = vmatpush.msra.mxu0 %v10247
  %10411 = vmatpush.msra.mxu0 %v10246
  %10412 = vmatmul.f32.gmra.mxu0 %v10318
  %v10413 = vpop.f32.mrf.mxu0
  %v10414 = vadd.f32 %v10342, %v10413
  %10415 = vmatmul.f32.gmra.mxu0 %v10320
  %v10416 = vpop.f32.mrf.mxu0
  %v10417 = vadd.f32 %v10347, %v10416
  %10418 = vmatmul.f32.gmra.mxu0 %v10322
  %v10419 = vpop.f32.mrf.mxu0
  %v10420 = vadd.f32 %v10352, %v10419
  %10421 = vmatmul.f32.gmra.mxu0 %v10324
  %v10422 = vpop.f32.mrf.mxu0
  %v10423 = vadd.f32 %v10357, %v10422
  %10424 = vmatmul.f32.gmra.mxu0 %v10326
  %v10425 = vpop.f32.mrf.mxu0
  %v10426 = vadd.f32 %v10362, %v10425
  %10427 = vmatmul.f32.gmra.mxu0 %v10328
  %v10428 = vpop.f32.mrf.mxu0
  %v10429 = vadd.f32 %v10367, %v10428
  %10430 = vmatmul.f32.gmra.mxu0 %v10330
  %v10431 = vpop.f32.mrf.mxu0
  %v10432 = vadd.f32 %v10372, %v10431
  %10433 = vdwg.mxu0
  %10434 = vmatpush.msra.mxu0 0.0
  %10435 = vmatpush.msra.mxu0 0.0
  %10436 = vmatpush.msra.mxu0 0.0
  %10437 = vmatpush.msra.mxu0 0.0
  %10438 = vmatpush.msra.mxu0 0.0
  %10439 = vmatpush.msra.mxu0 %v10308
  %10440 = vmatpush.msra.mxu0 %v10306
  %10441 = vmatpush.msra.mxu0 %v10304
  %10442 = vmatpush.msra.mxu0 %v10302
  %10443 = vmatpush.msra.mxu0 %v10300
  %10444 = vmatpush.msra.mxu0 %v10298
  %10445 = vmatpush.msra.mxu0 %v10296
  %10446 = vmatpush.msra.mxu0 %v10294
  %10447 = vmatpush.msra.mxu0 %v10292
  %10448 = vmatpush.msra.mxu0 %v10281
  %10449 = vmatpush.msra.mxu0 %v10279
  %10450 = vmatmul.f32.gmra.mxu0 %v10376
  %v10451 = vpop.f32.mrf.mxu0
  %v10452 = vadd.f32 %v10414, %v10451
  %10453 = vmatmul.f32.gmra.mxu0 %v10379
  %v10454 = vpop.f32.mrf.mxu0
  %v10455 = vadd.f32 %v10417, %v10454
  %10456 = vmatmul.f32.gmra.mxu0 %v10382
  %v10457 = vpop.f32.mrf.mxu0
  %v10458 = vadd.f32 %v10420, %v10457
  %10459 = vmatmul.f32.gmra.mxu0 %v10385
  %v10460 = vpop.f32.mrf.mxu0
  %v10461 = vadd.f32 %v10423, %v10460
  %10462 = vmatmul.f32.gmra.mxu0 %v10388
  %v10463 = vpop.f32.mrf.mxu0
  %v10464 = vadd.f32 %v10426, %v10463
  %10465 = vmatmul.f32.gmra.mxu0 %v10391
  %v10466 = vpop.f32.mrf.mxu0
  %v10467 = vadd.f32 %v10429, %v10466
  %10468 = vmatmul.f32.gmra.mxu0 %v10394
  %v10469 = vpop.f32.mrf.mxu0
  %v10470 = vadd.f32 %v10432, %v10469
  %10471 = vdwg.mxu0
  %v10472 = vmax.f32 %v10452, 0.0
  %v10473 = vmax.f32 %v10455, 0.0
  %v10474 = vmax.f32 %v10458, 0.0
  %v10475 = vmax.f32 %v10461, 0.0
  %v10476 = vmax.f32 %v10464, 0.0
  %v10477 = vmax.f32 %v10467, 0.0
  %v10478 = vmax.f32 %v10470, 0.0
  %v10479 = vld [vmem:[%s22] sm:$0xff]
  %v10480 = vld [vmem:[%s22 + $0x8] sm:$0x3]
  %vm10481 = vcmask 408576
  %v10483 = vsel %vm10481, %v10479, 0
  %v10486 = vsel %vm10481, %v10480, 0
  %v10489 = vsel %vm7828, %v10478, 0
  %10491 = vmatpush.msra.mxu0 0.0
  %10492 = vmatpush.msra.mxu0 0.0
  %10493 = vmatpush.msra.mxu0 0.0
  %10494 = vmatpush.msra.mxu0 0.0
  %10495 = vmatpush.msra.mxu0 0.0
  %10496 = vmatpush.msra.mxu0 0.0
  %10497 = vmatpush.msra.mxu0 0.0
  %10498 = vmatpush.msra.mxu0 0.0
  %10499 = vmatpush.msra.mxu0 0.0
  %10500 = vmatpush.msra.mxu0 %v10489
  %10501 = vmatpush.msra.mxu0 %v10477
  %10502 = vmatpush.msra.mxu0 %v10476
  %10503 = vmatpush.msra.mxu0 %v10475
  %10504 = vmatpush.msra.mxu0 %v10474
  %10505 = vmatpush.msra.mxu0 %v10473
  %10506 = vmatpush.msra.mxu0 %v10472
  %10507 = vmatmul.f32.gmra.mxu0 %v10483
  %v10508 = vpop.f32.mrf.mxu0
  %v10509 = vadd.f32 0.0, %v10508
  %10510 = vmatmul.f32.gmra.mxu0 %v10486
  %v10511 = vpop.f32.mrf.mxu0
  %v10512 = vadd.f32 0.0, %v10511
  %10513 = vdwg.mxu0
  %v10514 = vld [vmem:[%s23] sm:$0xff]
  %v10515 = vld [vmem:[%s23 + $0x8] sm:$0xff]
  %v10516 = vld [vmem:[%s23 + $0x10] sm:$0xff]
  %v10517 = vld [vmem:[%s23 + $0x18] sm:$0xff]
  %v10518 = vld [vmem:[%s23 + $0x20] sm:$0xff]
  %vm10519 = vcmask 326656
  %v10521 = vsel %vm10519, %v10509, 0
  %v10524 = vsel %vm10519, %v10512, 0
  %10526 = vmatpush.msra.mxu0 0.0
  %10527 = vmatpush.msra.mxu0 0.0
  %10528 = vmatpush.msra.mxu0 0.0
  %10529 = vmatpush.msra.mxu0 0.0
  %10530 = vmatpush.msra.mxu0 0.0
  %10531 = vmatpush.msra.mxu0 0.0
  %10532 = vmatpush.msra.mxu0 0.0
  %10533 = vmatpush.msra.mxu0 0.0
  %10534 = vmatpush.msra.mxu0 0.0
  %10535 = vmatpush.msra.mxu0 0.0
  %10536 = vmatpush.msra.mxu0 0.0
  %10537 = vmatpush.msra.mxu0 %v10518
  %10538 = vmatpush.msra.mxu0 %v10517
  %10539 = vmatpush.msra.mxu0 %v10516
  %10540 = vmatpush.msra.mxu0 %v10515
  %10541 = vmatpush.msra.mxu0 %v10514
  %10542 = vmatmul.f32.gmra.mxu0 %v10521
  %v10543 = vpop.f32.mrf.mxu0
  %v10544 = vadd.f32 0.0, %v10543
  %10545 = vmatmul.f32.gmra.mxu0 %v10524
  %v10546 = vpop.f32.mrf.mxu0
  %v10547 = vadd.f32 0.0, %v10546
  %10548 = vdwg.mxu0
  %vm10549 = vcmask 64512
  %v10550 = vsel %vm10549, %v10544, -inf
  %vm10551 = vcmask 58368
  %v10552 = vsel %vm10551, %v10547, -inf
  %v10553 = vmax.f32 %v10550, %v10552
  %v10554 = vrot.slane %v10553, 4
  %v10555 = vmax.f32 %v10553, %v10554
  %v10556 = vrot.slane %v10555, 2
  %v10557 = vmax.f32 %v10555, %v10556
  %v10558 = vrot.slane %v10557, 1
  %v10559 = vmax.f32 %v10557, %v10558
  %v10560 = vsub.f32 %v10544, %v10559
  %v10561 = vsub.f32 %v10547, %v10559
  %v10562 = vmul.f32 %v10560, 1.442695
  %v10563 = vpow.pop %v10562
  %v10564 = vmul.f32 %v10561, 1.442695
  %v10565 = vpow.pop %v10564
  %v10566 = vsel %vm10549, %v10563, 0.0
  %v10567 = vsel %vm10551, %v10565, 0.0
  %v10568 = vadd.f32 %v10566, %v10567
  %v10569 = vrot.slane %v10568, 4
  %v10570 = vadd.f32 %v10568, %v10569
  %v10571 = vrot.slane %v10570, 2
  %v10572 = vadd.f32 %v10570, %v10571
  %v10573 = vrot.slane %v10572, 1
  %v10574 = vadd.f32 %v10572, %v10573
  %v10575 = vlog2.pop %v10574
  %v10576 = vmul.f32 %v10575, 0.6931472
  %v10577 = vsub.f32 %v10560, %v10576
  %v10578 = vsub.f32 %v10561, %v10576
  %10579 = vst.msk [vmem:[%s24] sm:$0xff] %vm10549, %v10577
  %10580 = vst.msk [vmem:[%s24 + $0x8] sm:$0x3] %vm10551, %v10578
  // Predicated region
  $region98: #{net_forward.1} parent=0 // pred_check
    _
  $region99: #{net_forward.1} parent=0 // pred_check_branch
    %10582 = sbr.rel (0) target = $region101
  $region100: #{net_forward.1} parent=0 // pred_region
    _
  $region101: #{net_forward.1} parent=0 // pred_fallthru
    _
  // Predicated region
  $region102: #{net_forward.1} parent=0 // pred_check
    _
  $region103: #{net_forward.1} parent=0 // pred_check_branch
    %10584 = sbr.rel (0) target = $region105
  $region104: #{net_forward.1} parent=0 // pred_region
    _
  $region105: #{net_forward.1} parent=0 // pred_fallthru
    _

</llo_original>
